<compile_context>
chip_gen: v6e
topology: v6e:2x2x1
jax: 0.10.0
libtpu: 0.0.40
codegen_flags: <defaults>
</compile_context>

<pallas_src>
import functools
import math

import jax
import jax.numpy as jnp
from jax.experimental import pallas as pl
from jax.experimental.pallas import tpu as pltpu


# --------------------------------------------------------------------------
# Fused MHA kernel: one (batch) tile per grid step.
#   x_ref:    (1, L, E)
#   wkqv_ref: (E, 3E)   columns = [key | query | value]  (PyTorch W^T)
#   bkqv_ref: (1, 3E)
#   wout_ref: (E, E)
#   bout_ref: (1, E)
#   o_ref:    (1, L, E)
# --------------------------------------------------------------------------
def _mha_fused_kernel(x_ref, wkqv_ref, bkqv_ref, wout_ref, bout_ref, o_ref,
                      *, n_head, scale):
    L, E = x_ref.shape[1], x_ref.shape[2]
    hd = E // n_head

    x = x_ref[0]                                                    # (L, E)

    # Fused K/Q/V projection: one wide, MXU-dense matmul; x read once.
    kqv = jnp.dot(x, wkqv_ref[...], preferred_element_type=jnp.float32)
    kqv = kqv + bkqv_ref[...]                                       # (L, 3E)

    # 128-lane-aligned splits (E is a multiple of 128).  Scale folded into K
    # once, on the full (L, E) block (cheap VALU work, off the (L, L) path).
    k_all = kqv[:, :E] * scale                                      # (L, E)
    q_all = kqv[:, E:2 * E]                                         # (L, E)
    v_all = kqv[:, 2 * E:3 * E]                                     # (L, E)

    # Per-head attention, statically unrolled so MXU pushes stay back-to-back.
    ctx_heads = []
    for h in range(n_head):
        kh = k_all[:, h * hd:(h + 1) * hd]                          # (L, hd)
        qh = q_all[:, h * hd:(h + 1) * hd]                          # (L, hd)
        vh = v_all[:, h * hd:(h + 1) * hd]                          # (L, hd)

        # Reference semantics: scores = K @ Q^T (note: not the usual Q K^T).
        scores = jnp.dot(kh, qh.T, preferred_element_type=jnp.float32)  # (L, L)

        # Softmax over the last axis (lane-dense (L, L) work; exp -> EUP).
        m = jnp.max(scores, axis=-1, keepdims=True)
        e = jnp.exp(scores - m)
        denom = jnp.sum(e, axis=-1, keepdims=True)
        attn = e * pl.reciprocal(denom, approx=True)

        ctx_heads.append(
            jnp.dot(attn, vh, preferred_element_type=jnp.float32))  # (L, hd)

    ctx = jnp.concatenate(ctx_heads, axis=-1)                       # (L, E)

    # Output projection (K = E = 384, MXU-dense), lane-dense (1, L, E) store.
    out = jnp.dot(ctx, wout_ref[...], preferred_element_type=jnp.float32)
    out = out + bout_ref[...]
    o_ref[0] = out.astype(o_ref.dtype)


def multi_head_attention(x, params, n_head):
    B, L, E = x.shape
    scale = 1.0 / math.sqrt(E / n_head)

    # Pack K/Q/V weights into a single (E, 3E) operand (and biases (1, 3E)).
    w_kqv = jnp.concatenate(
        [params["key_w_t"], params["query_w_t"], params["value_w_t"]], axis=1)
    b_kqv = jnp.concatenate(
        [params["key_b"], params["query_b"], params["value_b"]],
        axis=0).reshape(1, 3 * E)
    w_out = params["out_w_t"]
    b_out = params["out_b"].reshape(1, E)

    kernel = functools.partial(_mha_fused_kernel, n_head=n_head, scale=scale)

    return pl.pallas_call(
        kernel,
        out_shape=jax.ShapeDtypeStruct((B, L, E), x.dtype),
        grid_spec=pltpu.PrefetchScalarGridSpec(
            num_scalar_prefetch=0,
            grid=(B,),
            in_specs=[
                pl.BlockSpec((1, L, E), lambda b: (b, 0, 0)),       # x
                pl.BlockSpec((E, 3 * E), lambda b: (0, 0)),         # W_kqv (resident)
                pl.BlockSpec((1, 3 * E), lambda b: (0, 0)),         # b_kqv
                pl.BlockSpec((E, E), lambda b: (0, 0)),             # W_out (resident)
                pl.BlockSpec((1, E), lambda b: (0, 0)),             # b_out
            ],
            out_specs=pl.BlockSpec((1, L, E), lambda b: (b, 0, 0)),
        ),
        compiler_params=pltpu.CompilerParams(
            dimension_semantics=("parallel",),   # batch steps shard on megacore
        ),
    )(x, w_kqv, b_kqv, w_out, b_out)


# --------------------------------------------------------------------------
# Pure-JAX reference for verification (mirrors the PyTorch module exactly).
# --------------------------------------------------------------------------
def reference(x, params, n_head):
    B, L, E = x.shape
    hd = E // n_head

    def lin(t, w_t, b):
        return t @ w_t + b

    k = lin(x, params["key_w_t"], params["key_b"])
    q = lin(x, params["query_w_t"], params["query_b"])
    v = lin(x, params["value_w_t"], params["value_b"])

    def split(t):
        return t.reshape(B, L, n_head, hd).transpose(0, 2, 1, 3)

    kh, qh, vh = split(k), split(q), split(v)
    scores = jnp.einsum("bhid,bhjd->bhij", kh, qh) / jnp.sqrt(E / n_head)
    attn = jax.nn.softmax(scores, axis=-1)
    ctx = jnp.einsum("bhij,bhjd->bhid", attn, vh)
    ctx = ctx.transpose(0, 2, 1, 3).reshape(B, L, E)
    return lin(ctx, params["out_w_t"], params["out_b"])


if __name__ == "__main__":
    n_embd = 384
    n_head = 12
    B, L = 2, 128

    key = jax.random.PRNGKey(0)
    keys = jax.random.split(key, 9)

    def init_linear(kw, kb, fan_in, fan_out):
        bound = 1.0 / math.sqrt(fan_in)
        w = jax.random.uniform(kw, (fan_out, fan_in), jnp.float32, -bound, bound)
        b = jax.random.uniform(kb, (fan_out,), jnp.float32, -bound, bound)
        return w.T, b  # store transposed weight (in, out)

    params = {}
    params["key_w_t"], params["key_b"] = init_linear(keys[0], keys[1], n_embd, n_embd)
    params["query_w_t"], params["query_b"] = init_linear(keys[2], keys[3], n_embd, n_embd)
    params["value_w_t"], params["value_b"] = init_linear(keys[4], keys[5], n_embd, n_embd)
    params["out_w_t"], params["out_b"] = init_linear(keys[6], keys[7], n_embd, n_embd)

    x = jax.random.normal(keys[8], (B, L, n_embd), jnp.float32)

    out = multi_head_attention(x, params, n_head)
    out = jax.block_until_ready(out)

    ref = reference(x, params, n_head)
    assert out.shape == (B, L, n_embd)
    # Tolerance covers the EUP approx reciprocal used for the softmax denom.
    assert jnp.allclose(out, ref, atol=2e-3, rtol=2e-3), (
        f"max abs diff {jnp.max(jnp.abs(out - ref))}"
    )

    print("KERNEL_OK")
</pallas_src>

<mosaic_0001>
module attributes {stable_mosaic.version = 11 : i64} {
  func.func @_mha_fused_kernel(%arg0: i32, %arg1: memref<1x128x384xf32, #tpu.memory_space<vmem>>, %arg2: memref<384x1152xf32, #tpu.memory_space<vmem>>, %arg3: memref<1x1152xf32, #tpu.memory_space<vmem>>, %arg4: memref<384x384xf32, #tpu.memory_space<vmem>>, %arg5: memref<1x384xf32, #tpu.memory_space<vmem>>, %arg6: memref<1x128x384xf32, #tpu.memory_space<vmem>>) attributes {dimension_semantics = [#tpu.dimension_semantics<parallel>], iteration_bounds = array<i64: 2>, scalar_prefetch = 0 : i64, scratch_operands = 0 : i64, tpu.core_type = #tpu.core_type<tc>, window_params = [{transform_indices = @transform_0, window_bounds = array<i64: 1, 128, 384>}, {pipeline_mode = #tpu.pipeline_mode<synchronous>, transform_indices = @transform_1, window_bounds = array<i64: 384, 1152>}, {pipeline_mode = #tpu.pipeline_mode<synchronous>, transform_indices = @transform_2, window_bounds = array<i64: 1, 1152>}, {pipeline_mode = #tpu.pipeline_mode<synchronous>, transform_indices = @transform_3, window_bounds = array<i64: 384, 384>}, {pipeline_mode = #tpu.pipeline_mode<synchronous>, transform_indices = @transform_4, window_bounds = array<i64: 1, 384>}, {transform_indices = @transform_5, window_bounds = array<i64: 1, 128, 384>}]} {
    %c0 = arith.constant 0 : index
    %c0_0 = arith.constant 0 : index
    %c0_1 = arith.constant 0 : index
    %0 = vector.load %arg1[%c0, %c0_0, %c0_1] : memref<1x128x384xf32, #tpu.memory_space<vmem>>, vector<1x128x384xf32>
    %1 = vector.shape_cast %0 : vector<1x128x384xf32> to vector<128x384xf32>
    %c0_2 = arith.constant 0 : index
    %c0_3 = arith.constant 0 : index
    %2 = vector.load %arg2[%c0_2, %c0_3] : memref<384x1152xf32, #tpu.memory_space<vmem>>, vector<384x1152xf32>
    %cst = arith.constant dense<0.000000e+00> : vector<128x1152xf32>
    %3 = tpu.matmul %1, %2, %cst {dimension_numbers = #tpu.dot_dimension_numbers<[1], [0], [0], [1], [0, 0, 1, 1], [], []>} : vector<128x384xf32>, vector<384x1152xf32>, vector<128x1152xf32> -> vector<128x1152xf32>
    %c0_4 = arith.constant 0 : index
    %c0_5 = arith.constant 0 : index
    %4 = vector.load %arg3[%c0_4, %c0_5] : memref<1x1152xf32, #tpu.memory_space<vmem>>, vector<1x1152xf32>
    %5 = vector.broadcast %4 : vector<1x1152xf32> to vector<128x1152xf32>
    %6 = arith.addf %3, %5 : vector<128x1152xf32>
    %7 = vector.extract_strided_slice %6 {offsets = [0, 0], sizes = [128, 384], strides = [1, 1]} : vector<128x1152xf32> to vector<128x384xf32>
    %cst_6 = arith.constant 0.176776692 : f32
    %8 = vector.broadcast %cst_6 : f32 to vector<128x384xf32>
    %9 = arith.mulf %7, %8 : vector<128x384xf32>
    %10 = vector.extract_strided_slice %6 {offsets = [0, 384], sizes = [128, 384], strides = [1, 1]} : vector<128x1152xf32> to vector<128x384xf32>
    %11 = vector.extract_strided_slice %6 {offsets = [0, 768], sizes = [128, 384], strides = [1, 1]} : vector<128x1152xf32> to vector<128x384xf32>
    %12 = vector.extract_strided_slice %9 {offsets = [0, 0], sizes = [128, 32], strides = [1, 1]} : vector<128x384xf32> to vector<128x32xf32>
    %13 = vector.extract_strided_slice %10 {offsets = [0, 0], sizes = [128, 32], strides = [1, 1]} : vector<128x384xf32> to vector<128x32xf32>
    %14 = vector.extract_strided_slice %11 {offsets = [0, 0], sizes = [128, 32], strides = [1, 1]} : vector<128x384xf32> to vector<128x32xf32>
    %15 = tpu.transpose %13, [1, 0] : vector<128x32xf32> -> vector<32x128xf32>
    %cst_7 = arith.constant dense<0.000000e+00> : vector<128x128xf32>
    %16 = tpu.matmul %12, %15, %cst_7 {dimension_numbers = #tpu.dot_dimension_numbers<[1], [0], [0], [1], [0, 0, 1, 1], [], []>} : vector<128x32xf32>, vector<32x128xf32>, vector<128x128xf32> -> vector<128x128xf32>
    %cst_8 = arith.constant dense<0xFF800000> : vector<128xf32>
    %17 = vector.multi_reduction <maximumf>, %16, %cst_8 [1] : vector<128x128xf32> to vector<128xf32>
    %18 = vector.shape_cast %17 : vector<128xf32> to vector<128x1xf32>
    %19 = vector.broadcast %18 : vector<128x1xf32> to vector<128x128xf32>
    %20 = arith.subf %16, %19 : vector<128x128xf32>
    %21 = math.exp %20 : vector<128x128xf32>
    %cst_9 = arith.constant dense<0.000000e+00> : vector<128xf32>
    %22 = vector.multi_reduction <add>, %21, %cst_9 [1] : vector<128x128xf32> to vector<128xf32>
    %23 = vector.shape_cast %22 : vector<128xf32> to vector<128x1xf32>
    %24 = tpu.reciprocal %23 {approx = true} : vector<128x1xf32> -> vector<128x1xf32>
    %25 = vector.broadcast %24 : vector<128x1xf32> to vector<128x128xf32>
    %26 = arith.mulf %21, %25 : vector<128x128xf32>
    %cst_10 = arith.constant dense<0.000000e+00> : vector<128x32xf32>
    %27 = tpu.matmul %26, %14, %cst_10 {dimension_numbers = #tpu.dot_dimension_numbers<[1], [0], [0], [1], [0, 0, 1, 1], [], []>} : vector<128x128xf32>, vector<128x32xf32>, vector<128x32xf32> -> vector<128x32xf32>
    %28 = vector.extract_strided_slice %9 {offsets = [0, 32], sizes = [128, 32], strides = [1, 1]} : vector<128x384xf32> to vector<128x32xf32>
    %29 = vector.extract_strided_slice %10 {offsets = [0, 32], sizes = [128, 32], strides = [1, 1]} : vector<128x384xf32> to vector<128x32xf32>
    %30 = vector.extract_strided_slice %11 {offsets = [0, 32], sizes = [128, 32], strides = [1, 1]} : vector<128x384xf32> to vector<128x32xf32>
    %31 = tpu.transpose %29, [1, 0] : vector<128x32xf32> -> vector<32x128xf32>
    %cst_11 = arith.constant dense<0.000000e+00> : vector<128x128xf32>
    %32 = tpu.matmul %28, %31, %cst_11 {dimension_numbers = #tpu.dot_dimension_numbers<[1], [0], [0], [1], [0, 0, 1, 1], [], []>} : vector<128x32xf32>, vector<32x128xf32>, vector<128x128xf32> -> vector<128x128xf32>
    %cst_12 = arith.constant dense<0xFF800000> : vector<128xf32>
    %33 = vector.multi_reduction <maximumf>, %32, %cst_12 [1] : vector<128x128xf32> to vector<128xf32>
    %34 = vector.shape_cast %33 : vector<128xf32> to vector<128x1xf32>
    %35 = vector.broadcast %34 : vector<128x1xf32> to vector<128x128xf32>
    %36 = arith.subf %32, %35 : vector<128x128xf32>
    %37 = math.exp %36 : vector<128x128xf32>
    %cst_13 = arith.constant dense<0.000000e+00> : vector<128xf32>
    %38 = vector.multi_reduction <add>, %37, %cst_13 [1] : vector<128x128xf32> to vector<128xf32>
    %39 = vector.shape_cast %38 : vector<128xf32> to vector<128x1xf32>
    %40 = tpu.reciprocal %39 {approx = true} : vector<128x1xf32> -> vector<128x1xf32>
    %41 = vector.broadcast %40 : vector<128x1xf32> to vector<128x128xf32>
    %42 = arith.mulf %37, %41 : vector<128x128xf32>
    %cst_14 = arith.constant dense<0.000000e+00> : vector<128x32xf32>
    %43 = tpu.matmul %42, %30, %cst_14 {dimension_numbers = #tpu.dot_dimension_numbers<[1], [0], [0], [1], [0, 0, 1, 1], [], []>} : vector<128x128xf32>, vector<128x32xf32>, vector<128x32xf32> -> vector<128x32xf32>
    %44 = vector.extract_strided_slice %9 {offsets = [0, 64], sizes = [128, 32], strides = [1, 1]} : vector<128x384xf32> to vector<128x32xf32>
    %45 = vector.extract_strided_slice %10 {offsets = [0, 64], sizes = [128, 32], strides = [1, 1]} : vector<128x384xf32> to vector<128x32xf32>
    %46 = vector.extract_strided_slice %11 {offsets = [0, 64], sizes = [128, 32], strides = [1, 1]} : vector<128x384xf32> to vector<128x32xf32>
    %47 = tpu.transpose %45, [1, 0] : vector<128x32xf32> -> vector<32x128xf32>
    %cst_15 = arith.constant dense<0.000000e+00> : vector<128x128xf32>
    %48 = tpu.matmul %44, %47, %cst_15 {dimension_numbers = #tpu.dot_dimension_numbers<[1], [0], [0], [1], [0, 0, 1, 1], [], []>} : vector<128x32xf32>, vector<32x128xf32>, vector<128x128xf32> -> vector<128x128xf32>
    %cst_16 = arith.constant dense<0xFF800000> : vector<128xf32>
    %49 = vector.multi_reduction <maximumf>, %48, %cst_16 [1] : vector<128x128xf32> to vector<128xf32>
    %50 = vector.shape_cast %49 : vector<128xf32> to vector<128x1xf32>
    %51 = vector.broadcast %50 : vector<128x1xf32> to vector<128x128xf32>
    %52 = arith.subf %48, %51 : vector<128x128xf32>
    %53 = math.exp %52 : vector<128x128xf32>
    %cst_17 = arith.constant dense<0.000000e+00> : vector<128xf32>
    %54 = vector.multi_reduction <add>, %53, %cst_17 [1] : vector<128x128xf32> to vector<128xf32>
    %55 = vector.shape_cast %54 : vector<128xf32> to vector<128x1xf32>
    %56 = tpu.reciprocal %55 {approx = true} : vector<128x1xf32> -> vector<128x1xf32>
    %57 = vector.broadcast %56 : vector<128x1xf32> to vector<128x128xf32>
    %58 = arith.mulf %53, %57 : vector<128x128xf32>
    %cst_18 = arith.constant dense<0.000000e+00> : vector<128x32xf32>
    %59 = tpu.matmul %58, %46, %cst_18 {dimension_numbers = #tpu.dot_dimension_numbers<[1], [0], [0], [1], [0, 0, 1, 1], [], []>} : vector<128x128xf32>, vector<128x32xf32>, vector<128x32xf32> -> vector<128x32xf32>
    %60 = vector.extract_strided_slice %9 {offsets = [0, 96], sizes = [128, 32], strides = [1, 1]} : vector<128x384xf32> to vector<128x32xf32>
    %61 = vector.extract_strided_slice %10 {offsets = [0, 96], sizes = [128, 32], strides = [1, 1]} : vector<128x384xf32> to vector<128x32xf32>
    %62 = vector.extract_strided_slice %11 {offsets = [0, 96], sizes = [128, 32], strides = [1, 1]} : vector<128x384xf32> to vector<128x32xf32>
    %63 = tpu.transpose %61, [1, 0] : vector<128x32xf32> -> vector<32x128xf32>
    %cst_19 = arith.constant dense<0.000000e+00> : vector<128x128xf32>
    %64 = tpu.matmul %60, %63, %cst_19 {dimension_numbers = #tpu.dot_dimension_numbers<[1], [0], [0], [1], [0, 0, 1, 1], [], []>} : vector<128x32xf32>, vector<32x128xf32>, vector<128x128xf32> -> vector<128x128xf32>
    %cst_20 = arith.constant dense<0xFF800000> : vector<128xf32>
    %65 = vector.multi_reduction <maximumf>, %64, %cst_20 [1] : vector<128x128xf32> to vector<128xf32>
    %66 = vector.shape_cast %65 : vector<128xf32> to vector<128x1xf32>
    %67 = vector.broadcast %66 : vector<128x1xf32> to vector<128x128xf32>
    %68 = arith.subf %64, %67 : vector<128x128xf32>
    %69 = math.exp %68 : vector<128x128xf32>
    %cst_21 = arith.constant dense<0.000000e+00> : vector<128xf32>
    %70 = vector.multi_reduction <add>, %69, %cst_21 [1] : vector<128x128xf32> to vector<128xf32>
    %71 = vector.shape_cast %70 : vector<128xf32> to vector<128x1xf32>
    %72 = tpu.reciprocal %71 {approx = true} : vector<128x1xf32> -> vector<128x1xf32>
    %73 = vector.broadcast %72 : vector<128x1xf32> to vector<128x128xf32>
    %74 = arith.mulf %69, %73 : vector<128x128xf32>
    %cst_22 = arith.constant dense<0.000000e+00> : vector<128x32xf32>
    %75 = tpu.matmul %74, %62, %cst_22 {dimension_numbers = #tpu.dot_dimension_numbers<[1], [0], [0], [1], [0, 0, 1, 1], [], []>} : vector<128x128xf32>, vector<128x32xf32>, vector<128x32xf32> -> vector<128x32xf32>
    %76 = vector.extract_strided_slice %9 {offsets = [0, 128], sizes = [128, 32], strides = [1, 1]} : vector<128x384xf32> to vector<128x32xf32>
    %77 = vector.extract_strided_slice %10 {offsets = [0, 128], sizes = [128, 32], strides = [1, 1]} : vector<128x384xf32> to vector<128x32xf32>
    %78 = vector.extract_strided_slice %11 {offsets = [0, 128], sizes = [128, 32], strides = [1, 1]} : vector<128x384xf32> to vector<128x32xf32>
    %79 = tpu.transpose %77, [1, 0] : vector<128x32xf32> -> vector<32x128xf32>
    %cst_23 = arith.constant dense<0.000000e+00> : vector<128x128xf32>
    %80 = tpu.matmul %76, %79, %cst_23 {dimension_numbers = #tpu.dot_dimension_numbers<[1], [0], [0], [1], [0, 0, 1, 1], [], []>} : vector<128x32xf32>, vector<32x128xf32>, vector<128x128xf32> -> vector<128x128xf32>
    %cst_24 = arith.constant dense<0xFF800000> : vector<128xf32>
    %81 = vector.multi_reduction <maximumf>, %80, %cst_24 [1] : vector<128x128xf32> to vector<128xf32>
    %82 = vector.shape_cast %81 : vector<128xf32> to vector<128x1xf32>
    %83 = vector.broadcast %82 : vector<128x1xf32> to vector<128x128xf32>
    %84 = arith.subf %80, %83 : vector<128x128xf32>
    %85 = math.exp %84 : vector<128x128xf32>
    %cst_25 = arith.constant dense<0.000000e+00> : vector<128xf32>
    %86 = vector.multi_reduction <add>, %85, %cst_25 [1] : vector<128x128xf32> to vector<128xf32>
    %87 = vector.shape_cast %86 : vector<128xf32> to vector<128x1xf32>
    %88 = tpu.reciprocal %87 {approx = true} : vector<128x1xf32> -> vector<128x1xf32>
    %89 = vector.broadcast %88 : vector<128x1xf32> to vector<128x128xf32>
    %90 = arith.mulf %85, %89 : vector<128x128xf32>
    %cst_26 = arith.constant dense<0.000000e+00> : vector<128x32xf32>
    %91 = tpu.matmul %90, %78, %cst_26 {dimension_numbers = #tpu.dot_dimension_numbers<[1], [0], [0], [1], [0, 0, 1, 1], [], []>} : vector<128x128xf32>, vector<128x32xf32>, vector<128x32xf32> -> vector<128x32xf32>
    %92 = vector.extract_strided_slice %9 {offsets = [0, 160], sizes = [128, 32], strides = [1, 1]} : vector<128x384xf32> to vector<128x32xf32>
    %93 = vector.extract_strided_slice %10 {offsets = [0, 160], sizes = [128, 32], strides = [1, 1]} : vector<128x384xf32> to vector<128x32xf32>
    %94 = vector.extract_strided_slice %11 {offsets = [0, 160], sizes = [128, 32], strides = [1, 1]} : vector<128x384xf32> to vector<128x32xf32>
    %95 = tpu.transpose %93, [1, 0] : vector<128x32xf32> -> vector<32x128xf32>
    %cst_27 = arith.constant dense<0.000000e+00> : vector<128x128xf32>
    %96 = tpu.matmul %92, %95, %cst_27 {dimension_numbers = #tpu.dot_dimension_numbers<[1], [0], [0], [1], [0, 0, 1, 1], [], []>} : vector<128x32xf32>, vector<32x128xf32>, vector<128x128xf32> -> vector<128x128xf32>
    %cst_28 = arith.constant dense<0xFF800000> : vector<128xf32>
    %97 = vector.multi_reduction <maximumf>, %96, %cst_28 [1] : vector<128x128xf32> to vector<128xf32>
    %98 = vector.shape_cast %97 : vector<128xf32> to vector<128x1xf32>
    %99 = vector.broadcast %98 : vector<128x1xf32> to vector<128x128xf32>
    %100 = arith.subf %96, %99 : vector<128x128xf32>
    %101 = math.exp %100 : vector<128x128xf32>
    %cst_29 = arith.constant dense<0.000000e+00> : vector<128xf32>
    %102 = vector.multi_reduction <add>, %101, %cst_29 [1] : vector<128x128xf32> to vector<128xf32>
    %103 = vector.shape_cast %102 : vector<128xf32> to vector<128x1xf32>
    %104 = tpu.reciprocal %103 {approx = true} : vector<128x1xf32> -> vector<128x1xf32>
    %105 = vector.broadcast %104 : vector<128x1xf32> to vector<128x128xf32>
    %106 = arith.mulf %101, %105 : vector<128x128xf32>
    %cst_30 = arith.constant dense<0.000000e+00> : vector<128x32xf32>
    %107 = tpu.matmul %106, %94, %cst_30 {dimension_numbers = #tpu.dot_dimension_numbers<[1], [0], [0], [1], [0, 0, 1, 1], [], []>} : vector<128x128xf32>, vector<128x32xf32>, vector<128x32xf32> -> vector<128x32xf32>
    %108 = vector.extract_strided_slice %9 {offsets = [0, 192], sizes = [128, 32], strides = [1, 1]} : vector<128x384xf32> to vector<128x32xf32>
    %109 = vector.extract_strided_slice %10 {offsets = [0, 192], sizes = [128, 32], strides = [1, 1]} : vector<128x384xf32> to vector<128x32xf32>
    %110 = vector.extract_strided_slice %11 {offsets = [0, 192], sizes = [128, 32], strides = [1, 1]} : vector<128x384xf32> to vector<128x32xf32>
    %111 = tpu.transpose %109, [1, 0] : vector<128x32xf32> -> vector<32x128xf32>
    %cst_31 = arith.constant dense<0.000000e+00> : vector<128x128xf32>
    %112 = tpu.matmul %108, %111, %cst_31 {dimension_numbers = #tpu.dot_dimension_numbers<[1], [0], [0], [1], [0, 0, 1, 1], [], []>} : vector<128x32xf32>, vector<32x128xf32>, vector<128x128xf32> -> vector<128x128xf32>
    %cst_32 = arith.constant dense<0xFF800000> : vector<128xf32>
    %113 = vector.multi_reduction <maximumf>, %112, %cst_32 [1] : vector<128x128xf32> to vector<128xf32>
    %114 = vector.shape_cast %113 : vector<128xf32> to vector<128x1xf32>
    %115 = vector.broadcast %114 : vector<128x1xf32> to vector<128x128xf32>
    %116 = arith.subf %112, %115 : vector<128x128xf32>
    %117 = math.exp %116 : vector<128x128xf32>
    %cst_33 = arith.constant dense<0.000000e+00> : vector<128xf32>
    %118 = vector.multi_reduction <add>, %117, %cst_33 [1] : vector<128x128xf32> to vector<128xf32>
    %119 = vector.shape_cast %118 : vector<128xf32> to vector<128x1xf32>
    %120 = tpu.reciprocal %119 {approx = true} : vector<128x1xf32> -> vector<128x1xf32>
    %121 = vector.broadcast %120 : vector<128x1xf32> to vector<128x128xf32>
    %122 = arith.mulf %117, %121 : vector<128x128xf32>
    %cst_34 = arith.constant dense<0.000000e+00> : vector<128x32xf32>
    %123 = tpu.matmul %122, %110, %cst_34 {dimension_numbers = #tpu.dot_dimension_numbers<[1], [0], [0], [1], [0, 0, 1, 1], [], []>} : vector<128x128xf32>, vector<128x32xf32>, vector<128x32xf32> -> vector<128x32xf32>
    %124 = vector.extract_strided_slice %9 {offsets = [0, 224], sizes = [128, 32], strides = [1, 1]} : vector<128x384xf32> to vector<128x32xf32>
    %125 = vector.extract_strided_slice %10 {offsets = [0, 224], sizes = [128, 32], strides = [1, 1]} : vector<128x384xf32> to vector<128x32xf32>
    %126 = vector.extract_strided_slice %11 {offsets = [0, 224], sizes = [128, 32], strides = [1, 1]} : vector<128x384xf32> to vector<128x32xf32>
    %127 = tpu.transpose %125, [1, 0] : vector<128x32xf32> -> vector<32x128xf32>
    %cst_35 = arith.constant dense<0.000000e+00> : vector<128x128xf32>
    %128 = tpu.matmul %124, %127, %cst_35 {dimension_numbers = #tpu.dot_dimension_numbers<[1], [0], [0], [1], [0, 0, 1, 1], [], []>} : vector<128x32xf32>, vector<32x128xf32>, vector<128x128xf32> -> vector<128x128xf32>
    %cst_36 = arith.constant dense<0xFF800000> : vector<128xf32>
    %129 = vector.multi_reduction <maximumf>, %128, %cst_36 [1] : vector<128x128xf32> to vector<128xf32>
    %130 = vector.shape_cast %129 : vector<128xf32> to vector<128x1xf32>
    %131 = vector.broadcast %130 : vector<128x1xf32> to vector<128x128xf32>
    %132 = arith.subf %128, %131 : vector<128x128xf32>
    %133 = math.exp %132 : vector<128x128xf32>
    %cst_37 = arith.constant dense<0.000000e+00> : vector<128xf32>
    %134 = vector.multi_reduction <add>, %133, %cst_37 [1] : vector<128x128xf32> to vector<128xf32>
    %135 = vector.shape_cast %134 : vector<128xf32> to vector<128x1xf32>
    %136 = tpu.reciprocal %135 {approx = true} : vector<128x1xf32> -> vector<128x1xf32>
    %137 = vector.broadcast %136 : vector<128x1xf32> to vector<128x128xf32>
    %138 = arith.mulf %133, %137 : vector<128x128xf32>
    %cst_38 = arith.constant dense<0.000000e+00> : vector<128x32xf32>
    %139 = tpu.matmul %138, %126, %cst_38 {dimension_numbers = #tpu.dot_dimension_numbers<[1], [0], [0], [1], [0, 0, 1, 1], [], []>} : vector<128x128xf32>, vector<128x32xf32>, vector<128x32xf32> -> vector<128x32xf32>
    %140 = vector.extract_strided_slice %9 {offsets = [0, 256], sizes = [128, 32], strides = [1, 1]} : vector<128x384xf32> to vector<128x32xf32>
    %141 = vector.extract_strided_slice %10 {offsets = [0, 256], sizes = [128, 32], strides = [1, 1]} : vector<128x384xf32> to vector<128x32xf32>
    %142 = vector.extract_strided_slice %11 {offsets = [0, 256], sizes = [128, 32], strides = [1, 1]} : vector<128x384xf32> to vector<128x32xf32>
    %143 = tpu.transpose %141, [1, 0] : vector<128x32xf32> -> vector<32x128xf32>
    %cst_39 = arith.constant dense<0.000000e+00> : vector<128x128xf32>
    %144 = tpu.matmul %140, %143, %cst_39 {dimension_numbers = #tpu.dot_dimension_numbers<[1], [0], [0], [1], [0, 0, 1, 1], [], []>} : vector<128x32xf32>, vector<32x128xf32>, vector<128x128xf32> -> vector<128x128xf32>
    %cst_40 = arith.constant dense<0xFF800000> : vector<128xf32>
    %145 = vector.multi_reduction <maximumf>, %144, %cst_40 [1] : vector<128x128xf32> to vector<128xf32>
    %146 = vector.shape_cast %145 : vector<128xf32> to vector<128x1xf32>
    %147 = vector.broadcast %146 : vector<128x1xf32> to vector<128x128xf32>
    %148 = arith.subf %144, %147 : vector<128x128xf32>
    %149 = math.exp %148 : vector<128x128xf32>
    %cst_41 = arith.constant dense<0.000000e+00> : vector<128xf32>
    %150 = vector.multi_reduction <add>, %149, %cst_41 [1] : vector<128x128xf32> to vector<128xf32>
    %151 = vector.shape_cast %150 : vector<128xf32> to vector<128x1xf32>
    %152 = tpu.reciprocal %151 {approx = true} : vector<128x1xf32> -> vector<128x1xf32>
    %153 = vector.broadcast %152 : vector<128x1xf32> to vector<128x128xf32>
    %154 = arith.mulf %149, %153 : vector<128x128xf32>
    %cst_42 = arith.constant dense<0.000000e+00> : vector<128x32xf32>
    %155 = tpu.matmul %154, %142, %cst_42 {dimension_numbers = #tpu.dot_dimension_numbers<[1], [0], [0], [1], [0, 0, 1, 1], [], []>} : vector<128x128xf32>, vector<128x32xf32>, vector<128x32xf32> -> vector<128x32xf32>
    %156 = vector.extract_strided_slice %9 {offsets = [0, 288], sizes = [128, 32], strides = [1, 1]} : vector<128x384xf32> to vector<128x32xf32>
    %157 = vector.extract_strided_slice %10 {offsets = [0, 288], sizes = [128, 32], strides = [1, 1]} : vector<128x384xf32> to vector<128x32xf32>
    %158 = vector.extract_strided_slice %11 {offsets = [0, 288], sizes = [128, 32], strides = [1, 1]} : vector<128x384xf32> to vector<128x32xf32>
    %159 = tpu.transpose %157, [1, 0] : vector<128x32xf32> -> vector<32x128xf32>
    %cst_43 = arith.constant dense<0.000000e+00> : vector<128x128xf32>
    %160 = tpu.matmul %156, %159, %cst_43 {dimension_numbers = #tpu.dot_dimension_numbers<[1], [0], [0], [1], [0, 0, 1, 1], [], []>} : vector<128x32xf32>, vector<32x128xf32>, vector<128x128xf32> -> vector<128x128xf32>
    %cst_44 = arith.constant dense<0xFF800000> : vector<128xf32>
    %161 = vector.multi_reduction <maximumf>, %160, %cst_44 [1] : vector<128x128xf32> to vector<128xf32>
    %162 = vector.shape_cast %161 : vector<128xf32> to vector<128x1xf32>
    %163 = vector.broadcast %162 : vector<128x1xf32> to vector<128x128xf32>
    %164 = arith.subf %160, %163 : vector<128x128xf32>
    %165 = math.exp %164 : vector<128x128xf32>
    %cst_45 = arith.constant dense<0.000000e+00> : vector<128xf32>
    %166 = vector.multi_reduction <add>, %165, %cst_45 [1] : vector<128x128xf32> to vector<128xf32>
    %167 = vector.shape_cast %166 : vector<128xf32> to vector<128x1xf32>
    %168 = tpu.reciprocal %167 {approx = true} : vector<128x1xf32> -> vector<128x1xf32>
    %169 = vector.broadcast %168 : vector<128x1xf32> to vector<128x128xf32>
    %170 = arith.mulf %165, %169 : vector<128x128xf32>
    %cst_46 = arith.constant dense<0.000000e+00> : vector<128x32xf32>
    %171 = tpu.matmul %170, %158, %cst_46 {dimension_numbers = #tpu.dot_dimension_numbers<[1], [0], [0], [1], [0, 0, 1, 1], [], []>} : vector<128x128xf32>, vector<128x32xf32>, vector<128x32xf32> -> vector<128x32xf32>
    %172 = vector.extract_strided_slice %9 {offsets = [0, 320], sizes = [128, 32], strides = [1, 1]} : vector<128x384xf32> to vector<128x32xf32>
    %173 = vector.extract_strided_slice %10 {offsets = [0, 320], sizes = [128, 32], strides = [1, 1]} : vector<128x384xf32> to vector<128x32xf32>
    %174 = vector.extract_strided_slice %11 {offsets = [0, 320], sizes = [128, 32], strides = [1, 1]} : vector<128x384xf32> to vector<128x32xf32>
    %175 = tpu.transpose %173, [1, 0] : vector<128x32xf32> -> vector<32x128xf32>
    %cst_47 = arith.constant dense<0.000000e+00> : vector<128x128xf32>
    %176 = tpu.matmul %172, %175, %cst_47 {dimension_numbers = #tpu.dot_dimension_numbers<[1], [0], [0], [1], [0, 0, 1, 1], [], []>} : vector<128x32xf32>, vector<32x128xf32>, vector<128x128xf32> -> vector<128x128xf32>
    %cst_48 = arith.constant dense<0xFF800000> : vector<128xf32>
    %177 = vector.multi_reduction <maximumf>, %176, %cst_48 [1] : vector<128x128xf32> to vector<128xf32>
    %178 = vector.shape_cast %177 : vector<128xf32> to vector<128x1xf32>
    %179 = vector.broadcast %178 : vector<128x1xf32> to vector<128x128xf32>
    %180 = arith.subf %176, %179 : vector<128x128xf32>
    %181 = math.exp %180 : vector<128x128xf32>
    %cst_49 = arith.constant dense<0.000000e+00> : vector<128xf32>
    %182 = vector.multi_reduction <add>, %181, %cst_49 [1] : vector<128x128xf32> to vector<128xf32>
    %183 = vector.shape_cast %182 : vector<128xf32> to vector<128x1xf32>
    %184 = tpu.reciprocal %183 {approx = true} : vector<128x1xf32> -> vector<128x1xf32>
    %185 = vector.broadcast %184 : vector<128x1xf32> to vector<128x128xf32>
    %186 = arith.mulf %181, %185 : vector<128x128xf32>
    %cst_50 = arith.constant dense<0.000000e+00> : vector<128x32xf32>
    %187 = tpu.matmul %186, %174, %cst_50 {dimension_numbers = #tpu.dot_dimension_numbers<[1], [0], [0], [1], [0, 0, 1, 1], [], []>} : vector<128x128xf32>, vector<128x32xf32>, vector<128x32xf32> -> vector<128x32xf32>
    %188 = vector.extract_strided_slice %9 {offsets = [0, 352], sizes = [128, 32], strides = [1, 1]} : vector<128x384xf32> to vector<128x32xf32>
    %189 = vector.extract_strided_slice %10 {offsets = [0, 352], sizes = [128, 32], strides = [1, 1]} : vector<128x384xf32> to vector<128x32xf32>
    %190 = vector.extract_strided_slice %11 {offsets = [0, 352], sizes = [128, 32], strides = [1, 1]} : vector<128x384xf32> to vector<128x32xf32>
    %191 = tpu.transpose %189, [1, 0] : vector<128x32xf32> -> vector<32x128xf32>
    %cst_51 = arith.constant dense<0.000000e+00> : vector<128x128xf32>
    %192 = tpu.matmul %188, %191, %cst_51 {dimension_numbers = #tpu.dot_dimension_numbers<[1], [0], [0], [1], [0, 0, 1, 1], [], []>} : vector<128x32xf32>, vector<32x128xf32>, vector<128x128xf32> -> vector<128x128xf32>
    %cst_52 = arith.constant dense<0xFF800000> : vector<128xf32>
    %193 = vector.multi_reduction <maximumf>, %192, %cst_52 [1] : vector<128x128xf32> to vector<128xf32>
    %194 = vector.shape_cast %193 : vector<128xf32> to vector<128x1xf32>
    %195 = vector.broadcast %194 : vector<128x1xf32> to vector<128x128xf32>
    %196 = arith.subf %192, %195 : vector<128x128xf32>
    %197 = math.exp %196 : vector<128x128xf32>
    %cst_53 = arith.constant dense<0.000000e+00> : vector<128xf32>
    %198 = vector.multi_reduction <add>, %197, %cst_53 [1] : vector<128x128xf32> to vector<128xf32>
    %199 = vector.shape_cast %198 : vector<128xf32> to vector<128x1xf32>
    %200 = tpu.reciprocal %199 {approx = true} : vector<128x1xf32> -> vector<128x1xf32>
    %201 = vector.broadcast %200 : vector<128x1xf32> to vector<128x128xf32>
    %202 = arith.mulf %197, %201 : vector<128x128xf32>
    %cst_54 = arith.constant dense<0.000000e+00> : vector<128x32xf32>
    %203 = tpu.matmul %202, %190, %cst_54 {dimension_numbers = #tpu.dot_dimension_numbers<[1], [0], [0], [1], [0, 0, 1, 1], [], []>} : vector<128x128xf32>, vector<128x32xf32>, vector<128x32xf32> -> vector<128x32xf32>
    %204 = tpu.concatenate %27, %43, %59, %75, %91, %107, %123, %139, %155, %171, %187, %203 in 1 : vector<128x32xf32>, vector<128x32xf32>, vector<128x32xf32>, vector<128x32xf32>, vector<128x32xf32>, vector<128x32xf32>, vector<128x32xf32>, vector<128x32xf32>, vector<128x32xf32>, vector<128x32xf32>, vector<128x32xf32>, vector<128x32xf32> -> vector<128x384xf32>
    %c0_55 = arith.constant 0 : index
    %c0_56 = arith.constant 0 : index
    %205 = vector.load %arg4[%c0_55, %c0_56] : memref<384x384xf32, #tpu.memory_space<vmem>>, vector<384x384xf32>
    %cst_57 = arith.constant dense<0.000000e+00> : vector<128x384xf32>
    %206 = tpu.matmul %204, %205, %cst_57 {dimension_numbers = #tpu.dot_dimension_numbers<[1], [0], [0], [1], [0, 0, 1, 1], [], []>} : vector<128x384xf32>, vector<384x384xf32>, vector<128x384xf32> -> vector<128x384xf32>
    %c0_58 = arith.constant 0 : index
    %c0_59 = arith.constant 0 : index
    %207 = vector.load %arg5[%c0_58, %c0_59] : memref<1x384xf32, #tpu.memory_space<vmem>>, vector<1x384xf32>
    %208 = vector.broadcast %207 : vector<1x384xf32> to vector<128x384xf32>
    %209 = arith.addf %206, %208 : vector<128x384xf32>
    %c0_60 = arith.constant 0 : index
    %c0_61 = arith.constant 0 : index
    %c0_62 = arith.constant 0 : index
    %210 = vector.load %arg6[%c0_60, %c0_61, %c0_62] : memref<1x128x384xf32, #tpu.memory_space<vmem>>, vector<1x128x384xf32>
    %211 = vector.shape_cast %210 : vector<1x128x384xf32> to vector<128x384xf32>
    %212 = vector.shape_cast %209 : vector<128x384xf32> to vector<1x128x384xf32>
    tpu.vector_store %arg6[%c0_60, %c0_61, %c0_62], %212 {strides = array<i32>} : memref<1x128x384xf32, #tpu.memory_space<vmem>>, vector<1x128x384xf32>,
    return
  }
  func.func @transform_0(%arg0: i32) -> (i32, i32, i32) {
    %c0_i32 = arith.constant 0 : i32
    %c0_i32_0 = arith.constant 0 : i32
    %c0_i32_1 = arith.constant 0 : i32
    return %arg0, %c0_i32, %c0_i32_0 : i32, i32, i32
  }
  func.func @transform_1(%arg0: i32) -> (i32, i32) {
    %c0_i32 = arith.constant 0 : i32
    %c0_i32_0 = arith.constant 0 : i32
    %c0_i32_1 = arith.constant 0 : i32
    return %c0_i32, %c0_i32_0 : i32, i32
  }
  func.func @transform_2(%arg0: i32) -> (i32, i32) {
    %c0_i32 = arith.constant 0 : i32
    %c0_i32_0 = arith.constant 0 : i32
    %c0_i32_1 = arith.constant 0 : i32
    return %c0_i32, %c0_i32_0 : i32, i32
  }
  func.func @transform_3(%arg0: i32) -> (i32, i32) {
    %c0_i32 = arith.constant 0 : i32
    %c0_i32_0 = arith.constant 0 : i32
    %c0_i32_1 = arith.constant 0 : i32
    return %c0_i32, %c0_i32_0 : i32, i32
  }
  func.func @transform_4(%arg0: i32) -> (i32, i32) {
    %c0_i32 = arith.constant 0 : i32
    %c0_i32_0 = arith.constant 0 : i32
    %c0_i32_1 = arith.constant 0 : i32
    return %c0_i32, %c0_i32_0 : i32, i32
  }
  func.func @transform_5(%arg0: i32) -> (i32, i32, i32) {
    %c0_i32 = arith.constant 0 : i32
    %c0_i32_0 = arith.constant 0 : i32
    %c0_i32_1 = arith.constant 0 : i32
    return %arg0, %c0_i32, %c0_i32_0 : i32, i32, i32
  }
}

</mosaic_0001>

<llo_original>
// kernel: tpu_custom_call.1
$region0: #{tpu_custom_call.1}
  #allocation0 [shape = 'u32[]', space=smem, size = 0x4, offset = 0x4, fixed_abs, tag = 'smem constant byte address 0x4 - core index']
  #allocation1 [shape = 'u32[144,128]{1,0:T(1,128)}', space=vmem, size = 0x12000, scoped, tag = 'internal scratch']
  %s0 = inlined_call_operand.hbm [shape: f32[2,128,384], index: 0, kind: input, shape index: {}]
  %s1 = inlined_call_operand.hbm [shape: f32[384,1152], index: 1, kind: input, shape index: {}]
  %s2 = inlined_call_operand.hbm [shape: f32[1,1152], index: 2, kind: input, shape index: {}]
  %s3 = inlined_call_operand.hbm [shape: f32[384,384], index: 3, kind: input, shape index: {}]
  %s4 = inlined_call_operand.hbm [shape: f32[1,384], index: 4, kind: input, shape index: {}]
  %s5 = inlined_call_operand.hbm [shape: f32[2,128,384], index: 5, kind: output, shape index: {}]
  %s6 = sld [smem:[#allocation0]]
  $region73: #{tpu_custom_call.1} parent=0
    _
  %s8 = ssub.s32 1, %s6
  %s9 = scalar_select 0, %s8, %s6
  $region1: #{tpu_custom_call.1} parent=0
    #allocation2 [shape = 'u8[393216]{0}', space=vmem, size = 0x60000, scoped, tag = 'input window, operand 0']
    #allocation3 [shape = 's32[2]{0}', space=sflag, size = 0x8, scoped, tag = 'scoped memory for tpu_custom_call.1']
    #allocation4 [shape = 's32[2]{0}', space=sflag, size = 0x8, scoped, tag = 'scoped memory for tpu_custom_call.1']
    #allocation5 [shape = 'u8[1769472]{0}', space=vmem, size = 0x1b0000, scoped, tag = 'input window, operand 1, single buffered']
    #allocation6 [shape = 's32[1]{0}', space=sflag, size = 0x4, scoped, tag = 'scoped memory for tpu_custom_call.1']
    #allocation7 [shape = 'u8[4608]{0}', space=vmem, size = 0x1400, scoped, tag = 'input window, operand 2, single buffered']
    #allocation8 [shape = 'u8[589824]{0}', space=vmem, size = 0x90000, scoped, tag = 'input window, operand 3, single buffered']
    #allocation9 [shape = 's32[1]{0}', space=sflag, size = 0x4, scoped, tag = 'scoped memory for tpu_custom_call.1']
    #allocation10 [shape = 'u8[1536]{0}', space=vmem, size = 0x800, scoped, tag = 'input window, operand 4, single buffered']
    #allocation11 [shape = 'u8[393216]{0}', space=vmem, size = 0x60000, scoped, tag = 'output window, operand 0']
    %10 = vsyncpa [#allocation3], 0
    %s11 = scalar_lea.sflag [#allocation3], 1
    %12 = vsyncpa %s11, 0
    %13 = vsyncpa [#allocation6], 0
    %14 = vsyncpa [#allocation9], 0
    %15 = vsyncpa [#allocation4], 0
    %s16 = scalar_lea.sflag [#allocation4], 1
    %17 = vsyncpa %s16, 0
    loop: start=0, step=1, limit=4
    $region2: #{tpu_custom_call.1} parent=1 // loop_pre_header
      _
    $region3: #{tpu_custom_call.1} parent=1 // loop_header
      %s19 = sphi 0, %s23
      %p20 = scmp.ge.s32.totalorder %s19, 4
      %s29 = sphi 0, %s31
      %s32 = sphi 0, %s29
      %s33 = sphi 0, %s32
      %s49 = sphi 0, %s33
      %s53 = sphi 0, %s53
      %s55 = sphi 0, %s53
      %s56 = sphi 0, %s55
      %s70 = sphi 0, %s56
      %s74 = sphi 0, %s74
      %s76 = sphi 0, %s74
      %s77 = sphi 0, %s76
      %s91 = sphi 0, %s77
      %s95 = sphi 0, %s95
      %s97 = sphi 0, %s95
      %s98 = sphi 0, %s97
      %s112 = sphi 0, %s98
      %s116 = sphi 0, %s116
      %s118 = sphi 0, %s116
      %s119 = sphi 0, %s118
      %s133 = sphi 0, %s119
      %s139 = sphi 0, %s141
      %s142 = sphi 0, %s139
      %s143 = sphi 0, %s142
      %s159 = sphi 0, %s143
    $region4: #{tpu_custom_call.1} parent=1 // loop_header_branch
      %22 = sbr.rel (%p20) target = $region8
    $region5: #{tpu_custom_call.1} parent=1 // loop_body
      %s24 = ssub.s32 %s19, 1
      %s25 = ssub.s32 %s19, 2
      %s26 = sadd.s32 %s19, 1
      %s27 = ssub.s32 %s19, %s26
      %p28 = scmp.eq.s32.totalorder %s27, 0
      %s30 = sadd.s32 %s29, 1
      %s31 = scalar_select %p28, %s29, %s30
      %p34 = pneg %p28
      %p35 = scmp.eq.s32.totalorder %s19, 1
      %p36 = por %p34, %p35
      %p37 = scmp.ne.s32.totalorder %s29, %s32
      %p38 = scmp.eq.s32.totalorder %s19, 0
      %p39 = por %p37, %p38
      %p40 = scmp.ne.s32.totalorder %s29, %s32
      %p41 = scmp.eq.s32.totalorder %s24, 1
      %p42 = por %p40, %p41
      %p43 = scmp.ne.s32.totalorder %s32, %s33
      %p44 = scmp.eq.s32.totalorder %s24, 0
      %p45 = por %p43, %p44
      %p46 = scmp.ne.s32.totalorder %s32, %s33
      %p47 = scmp.eq.s32.totalorder %s25, 1
      %p48 = por %p46, %p47
      %p50 = scmp.ne.s32.totalorder %s33, %s49
      %p51 = scmp.eq.s32.totalorder %s25, 0
      %p52 = por %p50, %p51
      %s54 = sadd.s32 %s53, 1
      %p57 = scmp.eq.s32.totalorder %s19, 1
      %p58 = scmp.ne.s32.totalorder %s53, %s55
      %p59 = scmp.eq.s32.totalorder %s19, 0
      %p60 = por %p58, %p59
      %p61 = scmp.ne.s32.totalorder %s53, %s55
      %p62 = scmp.eq.s32.totalorder %s24, 1
      %p63 = por %p61, %p62
      %p64 = scmp.ne.s32.totalorder %s55, %s56
      %p65 = scmp.eq.s32.totalorder %s24, 0
      %p66 = por %p64, %p65
      %p67 = scmp.ne.s32.totalorder %s55, %s56
      %p68 = scmp.eq.s32.totalorder %s25, 1
      %p69 = por %p67, %p68
      %p71 = scmp.ne.s32.totalorder %s56, %s70
      %p72 = scmp.eq.s32.totalorder %s25, 0
      %p73 = por %p71, %p72
      %s75 = sadd.s32 %s74, 1
      %p78 = scmp.eq.s32.totalorder %s19, 1
      %p79 = scmp.ne.s32.totalorder %s74, %s76
      %p80 = scmp.eq.s32.totalorder %s19, 0
      %p81 = por %p79, %p80
      %p82 = scmp.ne.s32.totalorder %s74, %s76
      %p83 = scmp.eq.s32.totalorder %s24, 1
      %p84 = por %p82, %p83
      %p85 = scmp.ne.s32.totalorder %s76, %s77
      %p86 = scmp.eq.s32.totalorder %s24, 0
      %p87 = por %p85, %p86
      %p88 = scmp.ne.s32.totalorder %s76, %s77
      %p89 = scmp.eq.s32.totalorder %s25, 1
      %p90 = por %p88, %p89
      %p92 = scmp.ne.s32.totalorder %s77, %s91
      %p93 = scmp.eq.s32.totalorder %s25, 0
      %p94 = por %p92, %p93
      %s96 = sadd.s32 %s95, 1
      %p99 = scmp.eq.s32.totalorder %s19, 1
      %p100 = scmp.ne.s32.totalorder %s95, %s97
      %p101 = scmp.eq.s32.totalorder %s19, 0
      %p102 = por %p100, %p101
      %p103 = scmp.ne.s32.totalorder %s95, %s97
      %p104 = scmp.eq.s32.totalorder %s24, 1
      %p105 = por %p103, %p104
      %p106 = scmp.ne.s32.totalorder %s97, %s98
      %p107 = scmp.eq.s32.totalorder %s24, 0
      %p108 = por %p106, %p107
      %p109 = scmp.ne.s32.totalorder %s97, %s98
      %p110 = scmp.eq.s32.totalorder %s25, 1
      %p111 = por %p109, %p110
      %p113 = scmp.ne.s32.totalorder %s98, %s112
      %p114 = scmp.eq.s32.totalorder %s25, 0
      %p115 = por %p113, %p114
      %s117 = sadd.s32 %s116, 1
      %p120 = scmp.eq.s32.totalorder %s19, 1
      %p121 = scmp.ne.s32.totalorder %s116, %s118
      %p122 = scmp.eq.s32.totalorder %s19, 0
      %p123 = por %p121, %p122
      %p124 = scmp.ne.s32.totalorder %s116, %s118
      %p125 = scmp.eq.s32.totalorder %s24, 1
      %p126 = por %p124, %p125
      %p127 = scmp.ne.s32.totalorder %s118, %s119
      %p128 = scmp.eq.s32.totalorder %s24, 0
      %p129 = por %p127, %p128
      %p130 = scmp.ne.s32.totalorder %s118, %s119
      %p131 = scmp.eq.s32.totalorder %s25, 1
      %p132 = por %p130, %p131
      %p134 = scmp.ne.s32.totalorder %s119, %s133
      %p135 = scmp.eq.s32.totalorder %s25, 0
      %p136 = por %p134, %p135
      %s137 = ssub.s32 %s19, %s26
      %p138 = scmp.eq.s32.totalorder %s137, 0
      %s140 = sadd.s32 %s139, 1
      %s141 = scalar_select %p138, %s139, %s140
      %p144 = pneg %p138
      %p145 = scmp.eq.s32.totalorder %s19, 1
      %p146 = por %p144, %p145
      %p147 = scmp.ne.s32.totalorder %s139, %s142
      %p148 = scmp.eq.s32.totalorder %s19, 0
      %p149 = por %p147, %p148
      %p150 = scmp.ne.s32.totalorder %s139, %s142
      %p151 = scmp.eq.s32.totalorder %s24, 1
      %p152 = por %p150, %p151
      %p153 = scmp.ne.s32.totalorder %s142, %s143
      %p154 = scmp.eq.s32.totalorder %s24, 0
      %p155 = por %p153, %p154
      %p156 = scmp.ne.s32.totalorder %s142, %s143
      %p157 = scmp.eq.s32.totalorder %s25, 1
      %p158 = por %p156, %p157
      %p160 = scmp.ne.s32.totalorder %s143, %s159
      %p161 = scmp.eq.s32.totalorder %s25, 0
      %p162 = por %p160, %p161
      %p163 = scmp.le.s32.totalorder 1, %s19
      %p164 = scmp.lt.s32.totalorder %s19, 3
      %p165 = pnand %p163, %p164
      %p166 = pneg %p165
      // Predicated region
      $region9: #{tpu_custom_call.1} parent=5 // pred_check
        _
      $region10: #{tpu_custom_call.1} parent=5 // pred_check_branch
        %168 = sbr.rel (%p165) target = $region12
      $region11: #{tpu_custom_call.1} parent=5 // pred_region
        %s169 = ssub.s32 %s19, 1
        // Predicated region
        $region13: #{tpu_custom_call.1} parent=11 // pred_check
          %p170 = pneg %p66
        $region14: #{tpu_custom_call.1} parent=11 // pred_check_branch
          %172 = sbr.rel (%p170) target = $region16
        $region15: #{tpu_custom_call.1} parent=11 // pred_region
          %s174 = ssub.s32 55296, 55296
          %175 = vsyncadd [#allocation6], %s174
          %s176 = sshll.u32 [#allocation5], 4
          %s177 = int_to_ptr.vmem [resolvable:$true] %s176
          %182 = dma.hbm_to_vmem [thread:$0]  %s1, 55296, %s177, [#allocation6], 1152, 1152, 72
        $region16: #{tpu_custom_call.1} parent=11 // pred_fallthru
          _
        // Predicated region
        $region17: #{tpu_custom_call.1} parent=11 // pred_check
          %p183 = pneg %p87
        $region18: #{tpu_custom_call.1} parent=11 // pred_check_branch
          %185 = sbr.rel (%p183) target = $region20
        $region19: #{tpu_custom_call.1} parent=11 // pred_region
          %s187 = ssub.s32 144, 144
          %188 = vsyncadd [#allocation6], %s187
          %s190 = sshll.u32 [#allocation7], 4
          %s191 = int_to_ptr.vmem [resolvable:$true] %s190
          %193 = dma.hbm_to_vmem [thread:$0]  %s2, 144, %s191, [#allocation6]
        $region20: #{tpu_custom_call.1} parent=11 // pred_fallthru
          _
        // Predicated region
        $region21: #{tpu_custom_call.1} parent=11 // pred_check
          %p194 = pneg %p108
        $region22: #{tpu_custom_call.1} parent=11 // pred_check_branch
          %196 = sbr.rel (%p194) target = $region24
        $region23: #{tpu_custom_call.1} parent=11 // pred_region
          %s198 = ssub.s32 18432, 18432
          %199 = vsyncadd [#allocation9], %s198
          %s200 = sshll.u32 [#allocation8], 4
          %s201 = int_to_ptr.vmem [resolvable:$true] %s200
          %206 = dma.hbm_to_vmem [thread:$0]  %s3, 18432, %s201, [#allocation9], 384, 384, 24
        $region24: #{tpu_custom_call.1} parent=11 // pred_fallthru
          _
        // Predicated region
        $region25: #{tpu_custom_call.1} parent=11 // pred_check
          %p207 = pneg %p129
        $region26: #{tpu_custom_call.1} parent=11 // pred_check_branch
          %209 = sbr.rel (%p207) target = $region28
        $region27: #{tpu_custom_call.1} parent=11 // pred_region
          %s211 = ssub.s32 48, 48
          %212 = vsyncadd [#allocation9], %s211
          %s214 = sshll.u32 [#allocation10], 4
          %s215 = int_to_ptr.vmem [resolvable:$true] %s214
          %217 = dma.hbm_to_vmem [thread:$0]  %s4, 48, %s215, [#allocation9]
        $region28: #{tpu_custom_call.1} parent=11 // pred_fallthru
          _
      $region12: #{tpu_custom_call.1} parent=5 // pred_fallthru
        _
      %p218 = scmp.lt.s32.totalorder %s19, 2
      // Predicated region
      $region29: #{tpu_custom_call.1} parent=5 // pred_check
        %p219 = pneg %p218
      $region30: #{tpu_custom_call.1} parent=5 // pred_check_branch
        %221 = sbr.rel (%p219) target = $region32
      $region31: #{tpu_custom_call.1} parent=5 // pred_region
        // Predicated region
        $region33: #{tpu_custom_call.1} parent=31 // pred_check
          %p222 = pneg %p39
        $region34: #{tpu_custom_call.1} parent=31 // pred_check_branch
          %224 = sbr.rel (%p222) target = $region36
        $region35: #{tpu_custom_call.1} parent=31 // pred_region
          %s225 = sand.u32 %s29, 1
          %s226 = scalar_lea.sflag [#allocation3], %s225
          %s227 = sand.u32 %s29, 1
          %s228 = smul.addr %s227, 384
          %s229 = scalar_lea.vmem [#allocation2], %s228
          %s231 = ssub.s32 6144, 6144
          %232 = vsyncadd %s226, %s231
          %s233 = smul.addr %s19, 48
          %s234 = smul.addr %s233, 128
          %s235 = scalar_lea.hbm %s0, %s234
          %s236 = sshll.u32 %s229, 4
          %s237 = int_to_ptr.vmem [resolvable:$true] %s236
          %242 = dma.hbm_to_vmem [thread:$0]  %s235, 6144, %s237, %s226, 384, 384, 24
        $region36: #{tpu_custom_call.1} parent=31 // pred_fallthru
          _
      $region32: #{tpu_custom_call.1} parent=5 // pred_fallthru
        _
      %p243 = scmp.le.s32.totalorder 1, %s19
      %p244 = scmp.lt.s32.totalorder %s19, 3
      %p245 = pnand %p243, %p244
      %p246 = pneg %p245
      // Predicated region
      $region37: #{tpu_custom_call.1} parent=5 // pred_check
        _
      $region38: #{tpu_custom_call.1} parent=5 // pred_check_branch
        %248 = sbr.rel (%p245) target = $region40
      $region39: #{tpu_custom_call.1} parent=5 // pred_region
        %s249 = ssub.s32 %s19, 1
        %s250 = sand.u32 %s32, 1
        %s251 = scalar_lea.sflag [#allocation3], %s250
        %s252 = sand.u32 %s32, 1
        %s253 = smul.addr %s252, 384
        %s254 = scalar_lea.vmem [#allocation2], %s253
        // Predicated region
        $region41: #{tpu_custom_call.1} parent=39 // pred_check
          %p255 = pneg %p45
        $region42: #{tpu_custom_call.1} parent=39 // pred_check_branch
          %257 = sbr.rel (%p255) target = $region44
        $region43: #{tpu_custom_call.1} parent=39 // pred_region
          %258 = dma.done %s251, 6144
        $region44: #{tpu_custom_call.1} parent=39 // pred_fallthru
          _
        // Predicated region
        $region45: #{tpu_custom_call.1} parent=39 // pred_check
          %p259 = pneg %p66
        $region46: #{tpu_custom_call.1} parent=39 // pred_check_branch
          %261 = sbr.rel (%p259) target = $region48
        $region47: #{tpu_custom_call.1} parent=39 // pred_region
          %262 = dma.done [#allocation6], 55296
        $region48: #{tpu_custom_call.1} parent=39 // pred_fallthru
          _
        // Predicated region
        $region49: #{tpu_custom_call.1} parent=39 // pred_check
          %p263 = pneg %p87
        $region50: #{tpu_custom_call.1} parent=39 // pred_check_branch
          %265 = sbr.rel (%p263) target = $region52
        $region51: #{tpu_custom_call.1} parent=39 // pred_region
          %266 = dma.done [#allocation6], 144
        $region52: #{tpu_custom_call.1} parent=39 // pred_fallthru
          _
        // Predicated region
        $region53: #{tpu_custom_call.1} parent=39 // pred_check
          %p267 = pneg %p108
        $region54: #{tpu_custom_call.1} parent=39 // pred_check_branch
          %269 = sbr.rel (%p267) target = $region56
        $region55: #{tpu_custom_call.1} parent=39 // pred_region
          %270 = dma.done [#allocation9], 18432
        $region56: #{tpu_custom_call.1} parent=39 // pred_fallthru
          _
        // Predicated region
        $region57: #{tpu_custom_call.1} parent=39 // pred_check
          %p271 = pneg %p129
        $region58: #{tpu_custom_call.1} parent=39 // pred_check_branch
          %273 = sbr.rel (%p271) target = $region60
        $region59: #{tpu_custom_call.1} parent=39 // pred_region
          %274 = dma.done [#allocation9], 48
        $region60: #{tpu_custom_call.1} parent=39 // pred_fallthru
          _
        %s275 = sand.u32 %s32, 1
        %s276 = scalar_lea.sflag [#allocation3], %s275
        %s277 = sand.u32 %s32, 1
        %s278 = smul.addr %s277, 384
        %s279 = scalar_lea.vmem [#allocation2], %s278
        %p280 = pneg %p45
        %p281 = pneg %p42
        %p282 = pneg %p66
        %p283 = pneg %p63
        %p284 = pneg %p87
        %p285 = pneg %p84
        %p286 = pneg %p108
        %p287 = pneg %p105
        %p288 = pneg %p129
        %p289 = pneg %p126
        %p290 = pneg %p155
        %p291 = pneg %p152
        %s292 = sand.u32 %s142, 1
        %s293 = scalar_lea.sflag [#allocation4], %s292
        %s294 = sand.u32 %s142, 1
        %s295 = smul.addr %s294, 384
        %s296 = scalar_lea.vmem [#allocation11], %s295
        %v297 = vld [vmem:[%s254] sm:$0xff]
        %v298 = vld [vmem:[%s254 + $0x8] sm:$0xff]
        %v299 = vld [vmem:[%s254 + $0x10] sm:$0xff]
        %v300 = vld [vmem:[%s254 + $0x18] sm:$0xff]
        %v301 = vld [vmem:[%s254 + $0x20] sm:$0xff]
        %v302 = vld [vmem:[%s254 + $0x28] sm:$0xff]
        %v303 = vld [vmem:[%s254 + $0x30] sm:$0xff]
        %v304 = vld [vmem:[%s254 + $0x38] sm:$0xff]
        %v305 = vld [vmem:[%s254 + $0x40] sm:$0xff]
        %v306 = vld [vmem:[%s254 + $0x48] sm:$0xff]
        %v307 = vld [vmem:[%s254 + $0x50] sm:$0xff]
        %v308 = vld [vmem:[%s254 + $0x58] sm:$0xff]
        %v309 = vld [vmem:[%s254 + $0x60] sm:$0xff]
        %v310 = vld [vmem:[%s254 + $0x68] sm:$0xff]
        %v311 = vld [vmem:[%s254 + $0x70] sm:$0xff]
        %v312 = vld [vmem:[%s254 + $0x78] sm:$0xff]
        %v313 = vld [vmem:[%s254 + $0x80] sm:$0xff]
        %v314 = vld [vmem:[%s254 + $0x88] sm:$0xff]
        %v315 = vld [vmem:[%s254 + $0x90] sm:$0xff]
        %v316 = vld [vmem:[%s254 + $0x98] sm:$0xff]
        %v317 = vld [vmem:[%s254 + $0xa0] sm:$0xff]
        %v318 = vld [vmem:[%s254 + $0xa8] sm:$0xff]
        %v319 = vld [vmem:[%s254 + $0xb0] sm:$0xff]
        %v320 = vld [vmem:[%s254 + $0xb8] sm:$0xff]
        %v321 = vld [vmem:[%s254 + $0xc0] sm:$0xff]
        %v322 = vld [vmem:[%s254 + $0xc8] sm:$0xff]
        %v323 = vld [vmem:[%s254 + $0xd0] sm:$0xff]
        %v324 = vld [vmem:[%s254 + $0xd8] sm:$0xff]
        %v325 = vld [vmem:[%s254 + $0xe0] sm:$0xff]
        %v326 = vld [vmem:[%s254 + $0xe8] sm:$0xff]
        %v327 = vld [vmem:[%s254 + $0xf0] sm:$0xff]
        %v328 = vld [vmem:[%s254 + $0xf8] sm:$0xff]
        %v329 = vld [vmem:[%s254 + $0x100] sm:$0xff]
        %v330 = vld [vmem:[%s254 + $0x108] sm:$0xff]
        %v331 = vld [vmem:[%s254 + $0x110] sm:$0xff]
        %v332 = vld [vmem:[%s254 + $0x118] sm:$0xff]
        %v333 = vld [vmem:[%s254 + $0x120] sm:$0xff]
        %v334 = vld [vmem:[%s254 + $0x128] sm:$0xff]
        %v335 = vld [vmem:[%s254 + $0x130] sm:$0xff]
        %v336 = vld [vmem:[%s254 + $0x138] sm:$0xff]
        %v337 = vld [vmem:[%s254 + $0x140] sm:$0xff]
        %v338 = vld [vmem:[%s254 + $0x148] sm:$0xff]
        %v339 = vld [vmem:[%s254 + $0x150] sm:$0xff]
        %v340 = vld [vmem:[%s254 + $0x158] sm:$0xff]
        %v341 = vld [vmem:[%s254 + $0x160] sm:$0xff]
        %v342 = vld [vmem:[%s254 + $0x168] sm:$0xff]
        %v343 = vld [vmem:[%s254 + $0x170] sm:$0xff]
        %v344 = vld [vmem:[%s254 + $0x178] sm:$0xff]
        %v345 = vld [vmem:[#allocation5] sm:$0xff]
        %v346 = vld [vmem:[#allocation5 + $0x8] sm:$0xff]
        %v347 = vld [vmem:[#allocation5 + $0x10] sm:$0xff]
        %v348 = vld [vmem:[#allocation5 + $0x18] sm:$0xff]
        %v349 = vld [vmem:[#allocation5 + $0x20] sm:$0xff]
        %v350 = vld [vmem:[#allocation5 + $0x28] sm:$0xff]
        %v351 = vld [vmem:[#allocation5 + $0x30] sm:$0xff]
        %v352 = vld [vmem:[#allocation5 + $0x38] sm:$0xff]
        %v353 = vld [vmem:[#allocation5 + $0x40] sm:$0xff]
        %v354 = vld [vmem:[#allocation5 + $0x48] sm:$0xff]
        %v355 = vld [vmem:[#allocation5 + $0x50] sm:$0xff]
        %v356 = vld [vmem:[#allocation5 + $0x58] sm:$0xff]
        %v357 = vld [vmem:[#allocation5 + $0x60] sm:$0xff]
        %v358 = vld [vmem:[#allocation5 + $0x68] sm:$0xff]
        %v359 = vld [vmem:[#allocation5 + $0x70] sm:$0xff]
        %v360 = vld [vmem:[#allocation5 + $0x78] sm:$0xff]
        %v361 = vld [vmem:[#allocation5 + $0x80] sm:$0xff]
        %v362 = vld [vmem:[#allocation5 + $0x88] sm:$0xff]
        %v363 = vld [vmem:[#allocation5 + $0x90] sm:$0xff]
        %v364 = vld [vmem:[#allocation5 + $0x98] sm:$0xff]
        %v365 = vld [vmem:[#allocation5 + $0xa0] sm:$0xff]
        %v366 = vld [vmem:[#allocation5 + $0xa8] sm:$0xff]
        %v367 = vld [vmem:[#allocation5 + $0xb0] sm:$0xff]
        %v368 = vld [vmem:[#allocation5 + $0xb8] sm:$0xff]
        %v369 = vld [vmem:[#allocation5 + $0xc0] sm:$0xff]
        %v370 = vld [vmem:[#allocation5 + $0xc8] sm:$0xff]
        %v371 = vld [vmem:[#allocation5 + $0xd0] sm:$0xff]
        %v372 = vld [vmem:[#allocation5 + $0xd8] sm:$0xff]
        %v373 = vld [vmem:[#allocation5 + $0xe0] sm:$0xff]
        %v374 = vld [vmem:[#allocation5 + $0xe8] sm:$0xff]
        %v375 = vld [vmem:[#allocation5 + $0xf0] sm:$0xff]
        %v376 = vld [vmem:[#allocation5 + $0xf8] sm:$0xff]
        %v377 = vld [vmem:[#allocation5 + $0x100] sm:$0xff]
        %v378 = vld [vmem:[#allocation5 + $0x108] sm:$0xff]
        %v379 = vld [vmem:[#allocation5 + $0x110] sm:$0xff]
        %v380 = vld [vmem:[#allocation5 + $0x118] sm:$0xff]
        %v381 = vld [vmem:[#allocation5 + $0x120] sm:$0xff]
        %v382 = vld [vmem:[#allocation5 + $0x128] sm:$0xff]
        %v383 = vld [vmem:[#allocation5 + $0x130] sm:$0xff]
        %v384 = vld [vmem:[#allocation5 + $0x138] sm:$0xff]
        %v385 = vld [vmem:[#allocation5 + $0x140] sm:$0xff]
        %v386 = vld [vmem:[#allocation5 + $0x148] sm:$0xff]
        %v387 = vld [vmem:[#allocation5 + $0x150] sm:$0xff]
        %v388 = vld [vmem:[#allocation5 + $0x158] sm:$0xff]
        %v389 = vld [vmem:[#allocation5 + $0x160] sm:$0xff]
        %v390 = vld [vmem:[#allocation5 + $0x168] sm:$0xff]
        %v391 = vld [vmem:[#allocation5 + $0x170] sm:$0xff]
        %v392 = vld [vmem:[#allocation5 + $0x178] sm:$0xff]
        %v393 = vld [vmem:[#allocation5 + $0x180] sm:$0xff]
        %v394 = vld [vmem:[#allocation5 + $0x188] sm:$0xff]
        %v395 = vld [vmem:[#allocation5 + $0x190] sm:$0xff]
        %v396 = vld [vmem:[#allocation5 + $0x198] sm:$0xff]
        %v397 = vld [vmem:[#allocation5 + $0x1a0] sm:$0xff]
        %v398 = vld [vmem:[#allocation5 + $0x1a8] sm:$0xff]
        %v399 = vld [vmem:[#allocation5 + $0x1b0] sm:$0xff]
        %v400 = vld [vmem:[#allocation5 + $0x1b8] sm:$0xff]
        %v401 = vld [vmem:[#allocation5 + $0x1c0] sm:$0xff]
        %v402 = vld [vmem:[#allocation5 + $0x1c8] sm:$0xff]
        %v403 = vld [vmem:[#allocation5 + $0x1d0] sm:$0xff]
        %v404 = vld [vmem:[#allocation5 + $0x1d8] sm:$0xff]
        %v405 = vld [vmem:[#allocation5 + $0x1e0] sm:$0xff]
        %v406 = vld [vmem:[#allocation5 + $0x1e8] sm:$0xff]
        %v407 = vld [vmem:[#allocation5 + $0x1f0] sm:$0xff]
        %v408 = vld [vmem:[#allocation5 + $0x1f8] sm:$0xff]
        %v409 = vld [vmem:[#allocation5 + $0x200] sm:$0xff]
        %v410 = vld [vmem:[#allocation5 + $0x208] sm:$0xff]
        %v411 = vld [vmem:[#allocation5 + $0x210] sm:$0xff]
        %v412 = vld [vmem:[#allocation5 + $0x218] sm:$0xff]
        %v413 = vld [vmem:[#allocation5 + $0x220] sm:$0xff]
        %v414 = vld [vmem:[#allocation5 + $0x228] sm:$0xff]
        %v415 = vld [vmem:[#allocation5 + $0x230] sm:$0xff]
        %v416 = vld [vmem:[#allocation5 + $0x238] sm:$0xff]
        %v417 = vld [vmem:[#allocation5 + $0x240] sm:$0xff]
        %v418 = vld [vmem:[#allocation5 + $0x248] sm:$0xff]
        %v419 = vld [vmem:[#allocation5 + $0x250] sm:$0xff]
        %v420 = vld [vmem:[#allocation5 + $0x258] sm:$0xff]
        %v421 = vld [vmem:[#allocation5 + $0x260] sm:$0xff]
        %v422 = vld [vmem:[#allocation5 + $0x268] sm:$0xff]
        %v423 = vld [vmem:[#allocation5 + $0x270] sm:$0xff]
        %v424 = vld [vmem:[#allocation5 + $0x278] sm:$0xff]
        %v425 = vld [vmem:[#allocation5 + $0x280] sm:$0xff]
        %v426 = vld [vmem:[#allocation5 + $0x288] sm:$0xff]
        %v427 = vld [vmem:[#allocation5 + $0x290] sm:$0xff]
        %v428 = vld [vmem:[#allocation5 + $0x298] sm:$0xff]
        %v429 = vld [vmem:[#allocation5 + $0x2a0] sm:$0xff]
        %v430 = vld [vmem:[#allocation5 + $0x2a8] sm:$0xff]
        %v431 = vld [vmem:[#allocation5 + $0x2b0] sm:$0xff]
        %v432 = vld [vmem:[#allocation5 + $0x2b8] sm:$0xff]
        %v433 = vld [vmem:[#allocation5 + $0x2c0] sm:$0xff]
        %v434 = vld [vmem:[#allocation5 + $0x2c8] sm:$0xff]
        %v435 = vld [vmem:[#allocation5 + $0x2d0] sm:$0xff]
        %v436 = vld [vmem:[#allocation5 + $0x2d8] sm:$0xff]
        %v437 = vld [vmem:[#allocation5 + $0x2e0] sm:$0xff]
        %v438 = vld [vmem:[#allocation5 + $0x2e8] sm:$0xff]
        %v439 = vld [vmem:[#allocation5 + $0x2f0] sm:$0xff]
        %v440 = vld [vmem:[#allocation5 + $0x2f8] sm:$0xff]
        %v441 = vld [vmem:[#allocation5 + $0x300] sm:$0xff]
        %v442 = vld [vmem:[#allocation5 + $0x308] sm:$0xff]
        %v443 = vld [vmem:[#allocation5 + $0x310] sm:$0xff]
        %v444 = vld [vmem:[#allocation5 + $0x318] sm:$0xff]
        %v445 = vld [vmem:[#allocation5 + $0x320] sm:$0xff]
        %v446 = vld [vmem:[#allocation5 + $0x328] sm:$0xff]
        %v447 = vld [vmem:[#allocation5 + $0x330] sm:$0xff]
        %v448 = vld [vmem:[#allocation5 + $0x338] sm:$0xff]
        %v449 = vld [vmem:[#allocation5 + $0x340] sm:$0xff]
        %v450 = vld [vmem:[#allocation5 + $0x348] sm:$0xff]
        %v451 = vld [vmem:[#allocation5 + $0x350] sm:$0xff]
        %v452 = vld [vmem:[#allocation5 + $0x358] sm:$0xff]
        %v453 = vld [vmem:[#allocation5 + $0x360] sm:$0xff]
        %v454 = vld [vmem:[#allocation5 + $0x368] sm:$0xff]
        %v455 = vld [vmem:[#allocation5 + $0x370] sm:$0xff]
        %v456 = vld [vmem:[#allocation5 + $0x378] sm:$0xff]
        %v457 = vld [vmem:[#allocation5 + $0x380] sm:$0xff]
        %v458 = vld [vmem:[#allocation5 + $0x388] sm:$0xff]
        %v459 = vld [vmem:[#allocation5 + $0x390] sm:$0xff]
        %v460 = vld [vmem:[#allocation5 + $0x398] sm:$0xff]
        %v461 = vld [vmem:[#allocation5 + $0x3a0] sm:$0xff]
        %v462 = vld [vmem:[#allocation5 + $0x3a8] sm:$0xff]
        %v463 = vld [vmem:[#allocation5 + $0x3b0] sm:$0xff]
        %v464 = vld [vmem:[#allocation5 + $0x3b8] sm:$0xff]
        %v465 = vld [vmem:[#allocation5 + $0x3c0] sm:$0xff]
        %v466 = vld [vmem:[#allocation5 + $0x3c8] sm:$0xff]
        %v467 = vld [vmem:[#allocation5 + $0x3d0] sm:$0xff]
        %v468 = vld [vmem:[#allocation5 + $0x3d8] sm:$0xff]
        %v469 = vld [vmem:[#allocation5 + $0x3e0] sm:$0xff]
        %v470 = vld [vmem:[#allocation5 + $0x3e8] sm:$0xff]
        %v471 = vld [vmem:[#allocation5 + $0x3f0] sm:$0xff]
        %v472 = vld [vmem:[#allocation5 + $0x3f8] sm:$0xff]
        %v473 = vld [vmem:[#allocation5 + $0x400] sm:$0xff]
        %v474 = vld [vmem:[#allocation5 + $0x408] sm:$0xff]
        %v475 = vld [vmem:[#allocation5 + $0x410] sm:$0xff]
        %v476 = vld [vmem:[#allocation5 + $0x418] sm:$0xff]
        %v477 = vld [vmem:[#allocation5 + $0x420] sm:$0xff]
        %v478 = vld [vmem:[#allocation5 + $0x428] sm:$0xff]
        %v479 = vld [vmem:[#allocation5 + $0x430] sm:$0xff]
        %v480 = vld [vmem:[#allocation5 + $0x438] sm:$0xff]
        %v481 = vld [vmem:[#allocation5 + $0x440] sm:$0xff]
        %v482 = vld [vmem:[#allocation5 + $0x448] sm:$0xff]
        %v483 = vld [vmem:[#allocation5 + $0x450] sm:$0xff]
        %v484 = vld [vmem:[#allocation5 + $0x458] sm:$0xff]
        %v485 = vld [vmem:[#allocation5 + $0x460] sm:$0xff]
        %v486 = vld [vmem:[#allocation5 + $0x468] sm:$0xff]
        %v487 = vld [vmem:[#allocation5 + $0x470] sm:$0xff]
        %v488 = vld [vmem:[#allocation5 + $0x478] sm:$0xff]
        %v489 = vld [vmem:[#allocation5 + $0x480] sm:$0xff]
        %v490 = vld [vmem:[#allocation5 + $0x488] sm:$0xff]
        %v491 = vld [vmem:[#allocation5 + $0x490] sm:$0xff]
        %v492 = vld [vmem:[#allocation5 + $0x498] sm:$0xff]
        %v493 = vld [vmem:[#allocation5 + $0x4a0] sm:$0xff]
        %v494 = vld [vmem:[#allocation5 + $0x4a8] sm:$0xff]
        %v495 = vld [vmem:[#allocation5 + $0x4b0] sm:$0xff]
        %v496 = vld [vmem:[#allocation5 + $0x4b8] sm:$0xff]
        %v497 = vld [vmem:[#allocation5 + $0x4c0] sm:$0xff]
        %v498 = vld [vmem:[#allocation5 + $0x4c8] sm:$0xff]
        %v499 = vld [vmem:[#allocation5 + $0x4d0] sm:$0xff]
        %v500 = vld [vmem:[#allocation5 + $0x4d8] sm:$0xff]
        %v501 = vld [vmem:[#allocation5 + $0x4e0] sm:$0xff]
        %v502 = vld [vmem:[#allocation5 + $0x4e8] sm:$0xff]
        %v503 = vld [vmem:[#allocation5 + $0x4f0] sm:$0xff]
        %v504 = vld [vmem:[#allocation5 + $0x4f8] sm:$0xff]
        %v505 = vld [vmem:[#allocation5 + $0x500] sm:$0xff]
        %v506 = vld [vmem:[#allocation5 + $0x508] sm:$0xff]
        %v507 = vld [vmem:[#allocation5 + $0x510] sm:$0xff]
        %v508 = vld [vmem:[#allocation5 + $0x518] sm:$0xff]
        %v509 = vld [vmem:[#allocation5 + $0x520] sm:$0xff]
        %v510 = vld [vmem:[#allocation5 + $0x528] sm:$0xff]
        %v511 = vld [vmem:[#allocation5 + $0x530] sm:$0xff]
        %v512 = vld [vmem:[#allocation5 + $0x538] sm:$0xff]
        %v513 = vld [vmem:[#allocation5 + $0x540] sm:$0xff]
        %v514 = vld [vmem:[#allocation5 + $0x548] sm:$0xff]
        %v515 = vld [vmem:[#allocation5 + $0x550] sm:$0xff]
        %v516 = vld [vmem:[#allocation5 + $0x558] sm:$0xff]
        %v517 = vld [vmem:[#allocation5 + $0x560] sm:$0xff]
        %v518 = vld [vmem:[#allocation5 + $0x568] sm:$0xff]
        %v519 = vld [vmem:[#allocation5 + $0x570] sm:$0xff]
        %v520 = vld [vmem:[#allocation5 + $0x578] sm:$0xff]
        %v521 = vld [vmem:[#allocation5 + $0x580] sm:$0xff]
        %v522 = vld [vmem:[#allocation5 + $0x588] sm:$0xff]
        %v523 = vld [vmem:[#allocation5 + $0x590] sm:$0xff]
        %v524 = vld [vmem:[#allocation5 + $0x598] sm:$0xff]
        %v525 = vld [vmem:[#allocation5 + $0x5a0] sm:$0xff]
        %v526 = vld [vmem:[#allocation5 + $0x5a8] sm:$0xff]
        %v527 = vld [vmem:[#allocation5 + $0x5b0] sm:$0xff]
        %v528 = vld [vmem:[#allocation5 + $0x5b8] sm:$0xff]
        %v529 = vld [vmem:[#allocation5 + $0x5c0] sm:$0xff]
        %v530 = vld [vmem:[#allocation5 + $0x5c8] sm:$0xff]
        %v531 = vld [vmem:[#allocation5 + $0x5d0] sm:$0xff]
        %v532 = vld [vmem:[#allocation5 + $0x5d8] sm:$0xff]
        %v533 = vld [vmem:[#allocation5 + $0x5e0] sm:$0xff]
        %v534 = vld [vmem:[#allocation5 + $0x5e8] sm:$0xff]
        %v535 = vld [vmem:[#allocation5 + $0x5f0] sm:$0xff]
        %v536 = vld [vmem:[#allocation5 + $0x5f8] sm:$0xff]
        %v537 = vld [vmem:[#allocation5 + $0x600] sm:$0xff]
        %v538 = vld [vmem:[#allocation5 + $0x608] sm:$0xff]
        %v539 = vld [vmem:[#allocation5 + $0x610] sm:$0xff]
        %v540 = vld [vmem:[#allocation5 + $0x618] sm:$0xff]
        %v541 = vld [vmem:[#allocation5 + $0x620] sm:$0xff]
        %v542 = vld [vmem:[#allocation5 + $0x628] sm:$0xff]
        %v543 = vld [vmem:[#allocation5 + $0x630] sm:$0xff]
        %v544 = vld [vmem:[#allocation5 + $0x638] sm:$0xff]
        %v545 = vld [vmem:[#allocation5 + $0x640] sm:$0xff]
        %v546 = vld [vmem:[#allocation5 + $0x648] sm:$0xff]
        %v547 = vld [vmem:[#allocation5 + $0x650] sm:$0xff]
        %v548 = vld [vmem:[#allocation5 + $0x658] sm:$0xff]
        %v549 = vld [vmem:[#allocation5 + $0x660] sm:$0xff]
        %v550 = vld [vmem:[#allocation5 + $0x668] sm:$0xff]
        %v551 = vld [vmem:[#allocation5 + $0x670] sm:$0xff]
        %v552 = vld [vmem:[#allocation5 + $0x678] sm:$0xff]
        %v553 = vld [vmem:[#allocation5 + $0x680] sm:$0xff]
        %v554 = vld [vmem:[#allocation5 + $0x688] sm:$0xff]
        %v555 = vld [vmem:[#allocation5 + $0x690] sm:$0xff]
        %v556 = vld [vmem:[#allocation5 + $0x698] sm:$0xff]
        %v557 = vld [vmem:[#allocation5 + $0x6a0] sm:$0xff]
        %v558 = vld [vmem:[#allocation5 + $0x6a8] sm:$0xff]
        %v559 = vld [vmem:[#allocation5 + $0x6b0] sm:$0xff]
        %v560 = vld [vmem:[#allocation5 + $0x6b8] sm:$0xff]
        %v561 = vld [vmem:[#allocation5 + $0x6c0] sm:$0xff]
        %v562 = vld [vmem:[#allocation5 + $0x6c8] sm:$0xff]
        %v563 = vld [vmem:[#allocation5 + $0x6d0] sm:$0xff]
        %v564 = vld [vmem:[#allocation5 + $0x6d8] sm:$0xff]
        %v565 = vld [vmem:[#allocation5 + $0x6e0] sm:$0xff]
        %v566 = vld [vmem:[#allocation5 + $0x6e8] sm:$0xff]
        %v567 = vld [vmem:[#allocation5 + $0x6f0] sm:$0xff]
        %v568 = vld [vmem:[#allocation5 + $0x6f8] sm:$0xff]
        %v569 = vld [vmem:[#allocation5 + $0x700] sm:$0xff]
        %v570 = vld [vmem:[#allocation5 + $0x708] sm:$0xff]
        %v571 = vld [vmem:[#allocation5 + $0x710] sm:$0xff]
        %v572 = vld [vmem:[#allocation5 + $0x718] sm:$0xff]
        %v573 = vld [vmem:[#allocation5 + $0x720] sm:$0xff]
        %v574 = vld [vmem:[#allocation5 + $0x728] sm:$0xff]
        %v575 = vld [vmem:[#allocation5 + $0x730] sm:$0xff]
        %v576 = vld [vmem:[#allocation5 + $0x738] sm:$0xff]
        %v577 = vld [vmem:[#allocation5 + $0x740] sm:$0xff]
        %v578 = vld [vmem:[#allocation5 + $0x748] sm:$0xff]
        %v579 = vld [vmem:[#allocation5 + $0x750] sm:$0xff]
        %v580 = vld [vmem:[#allocation5 + $0x758] sm:$0xff]
        %v581 = vld [vmem:[#allocation5 + $0x760] sm:$0xff]
        %v582 = vld [vmem:[#allocation5 + $0x768] sm:$0xff]
        %v583 = vld [vmem:[#allocation5 + $0x770] sm:$0xff]
        %v584 = vld [vmem:[#allocation5 + $0x778] sm:$0xff]
        %v585 = vld [vmem:[#allocation5 + $0x780] sm:$0xff]
        %v586 = vld [vmem:[#allocation5 + $0x788] sm:$0xff]
        %v587 = vld [vmem:[#allocation5 + $0x790] sm:$0xff]
        %v588 = vld [vmem:[#allocation5 + $0x798] sm:$0xff]
        %v589 = vld [vmem:[#allocation5 + $0x7a0] sm:$0xff]
        %v590 = vld [vmem:[#allocation5 + $0x7a8] sm:$0xff]
        %v591 = vld [vmem:[#allocation5 + $0x7b0] sm:$0xff]
        %v592 = vld [vmem:[#allocation5 + $0x7b8] sm:$0xff]
        %v593 = vld [vmem:[#allocation5 + $0x7c0] sm:$0xff]
        %v594 = vld [vmem:[#allocation5 + $0x7c8] sm:$0xff]
        %v595 = vld [vmem:[#allocation5 + $0x7d0] sm:$0xff]
        %v596 = vld [vmem:[#allocation5 + $0x7d8] sm:$0xff]
        %v597 = vld [vmem:[#allocation5 + $0x7e0] sm:$0xff]
        %v598 = vld [vmem:[#allocation5 + $0x7e8] sm:$0xff]
        %v599 = vld [vmem:[#allocation5 + $0x7f0] sm:$0xff]
        %v600 = vld [vmem:[#allocation5 + $0x7f8] sm:$0xff]
        %v601 = vld [vmem:[#allocation5 + $0x800] sm:$0xff]
        %v602 = vld [vmem:[#allocation5 + $0x808] sm:$0xff]
        %v603 = vld [vmem:[#allocation5 + $0x810] sm:$0xff]
        %v604 = vld [vmem:[#allocation5 + $0x818] sm:$0xff]
        %v605 = vld [vmem:[#allocation5 + $0x820] sm:$0xff]
        %v606 = vld [vmem:[#allocation5 + $0x828] sm:$0xff]
        %v607 = vld [vmem:[#allocation5 + $0x830] sm:$0xff]
        %v608 = vld [vmem:[#allocation5 + $0x838] sm:$0xff]
        %v609 = vld [vmem:[#allocation5 + $0x840] sm:$0xff]
        %v610 = vld [vmem:[#allocation5 + $0x848] sm:$0xff]
        %v611 = vld [vmem:[#allocation5 + $0x850] sm:$0xff]
        %v612 = vld [vmem:[#allocation5 + $0x858] sm:$0xff]
        %v613 = vld [vmem:[#allocation5 + $0x860] sm:$0xff]
        %v614 = vld [vmem:[#allocation5 + $0x868] sm:$0xff]
        %v615 = vld [vmem:[#allocation5 + $0x870] sm:$0xff]
        %v616 = vld [vmem:[#allocation5 + $0x878] sm:$0xff]
        %v617 = vld [vmem:[#allocation5 + $0x880] sm:$0xff]
        %v618 = vld [vmem:[#allocation5 + $0x888] sm:$0xff]
        %v619 = vld [vmem:[#allocation5 + $0x890] sm:$0xff]
        %v620 = vld [vmem:[#allocation5 + $0x898] sm:$0xff]
        %v621 = vld [vmem:[#allocation5 + $0x8a0] sm:$0xff]
        %v622 = vld [vmem:[#allocation5 + $0x8a8] sm:$0xff]
        %v623 = vld [vmem:[#allocation5 + $0x8b0] sm:$0xff]
        %v624 = vld [vmem:[#allocation5 + $0x8b8] sm:$0xff]
        %v625 = vld [vmem:[#allocation5 + $0x8c0] sm:$0xff]
        %v626 = vld [vmem:[#allocation5 + $0x8c8] sm:$0xff]
        %v627 = vld [vmem:[#allocation5 + $0x8d0] sm:$0xff]
        %v628 = vld [vmem:[#allocation5 + $0x8d8] sm:$0xff]
        %v629 = vld [vmem:[#allocation5 + $0x8e0] sm:$0xff]
        %v630 = vld [vmem:[#allocation5 + $0x8e8] sm:$0xff]
        %v631 = vld [vmem:[#allocation5 + $0x8f0] sm:$0xff]
        %v632 = vld [vmem:[#allocation5 + $0x8f8] sm:$0xff]
        %v633 = vld [vmem:[#allocation5 + $0x900] sm:$0xff]
        %v634 = vld [vmem:[#allocation5 + $0x908] sm:$0xff]
        %v635 = vld [vmem:[#allocation5 + $0x910] sm:$0xff]
        %v636 = vld [vmem:[#allocation5 + $0x918] sm:$0xff]
        %v637 = vld [vmem:[#allocation5 + $0x920] sm:$0xff]
        %v638 = vld [vmem:[#allocation5 + $0x928] sm:$0xff]
        %v639 = vld [vmem:[#allocation5 + $0x930] sm:$0xff]
        %v640 = vld [vmem:[#allocation5 + $0x938] sm:$0xff]
        %v641 = vld [vmem:[#allocation5 + $0x940] sm:$0xff]
        %v642 = vld [vmem:[#allocation5 + $0x948] sm:$0xff]
        %v643 = vld [vmem:[#allocation5 + $0x950] sm:$0xff]
        %v644 = vld [vmem:[#allocation5 + $0x958] sm:$0xff]
        %v645 = vld [vmem:[#allocation5 + $0x960] sm:$0xff]
        %v646 = vld [vmem:[#allocation5 + $0x968] sm:$0xff]
        %v647 = vld [vmem:[#allocation5 + $0x970] sm:$0xff]
        %v648 = vld [vmem:[#allocation5 + $0x978] sm:$0xff]
        %v649 = vld [vmem:[#allocation5 + $0x980] sm:$0xff]
        %v650 = vld [vmem:[#allocation5 + $0x988] sm:$0xff]
        %v651 = vld [vmem:[#allocation5 + $0x990] sm:$0xff]
        %v652 = vld [vmem:[#allocation5 + $0x998] sm:$0xff]
        %v653 = vld [vmem:[#allocation5 + $0x9a0] sm:$0xff]
        %v654 = vld [vmem:[#allocation5 + $0x9a8] sm:$0xff]
        %v655 = vld [vmem:[#allocation5 + $0x9b0] sm:$0xff]
        %v656 = vld [vmem:[#allocation5 + $0x9b8] sm:$0xff]
        %v657 = vld [vmem:[#allocation5 + $0x9c0] sm:$0xff]
        %v658 = vld [vmem:[#allocation5 + $0x9c8] sm:$0xff]
        %v659 = vld [vmem:[#allocation5 + $0x9d0] sm:$0xff]
        %v660 = vld [vmem:[#allocation5 + $0x9d8] sm:$0xff]
        %v661 = vld [vmem:[#allocation5 + $0x9e0] sm:$0xff]
        %v662 = vld [vmem:[#allocation5 + $0x9e8] sm:$0xff]
        %v663 = vld [vmem:[#allocation5 + $0x9f0] sm:$0xff]
        %v664 = vld [vmem:[#allocation5 + $0x9f8] sm:$0xff]
        %v665 = vld [vmem:[#allocation5 + $0xa00] sm:$0xff]
        %v666 = vld [vmem:[#allocation5 + $0xa08] sm:$0xff]
        %v667 = vld [vmem:[#allocation5 + $0xa10] sm:$0xff]
        %v668 = vld [vmem:[#allocation5 + $0xa18] sm:$0xff]
        %v669 = vld [vmem:[#allocation5 + $0xa20] sm:$0xff]
        %v670 = vld [vmem:[#allocation5 + $0xa28] sm:$0xff]
        %v671 = vld [vmem:[#allocation5 + $0xa30] sm:$0xff]
        %v672 = vld [vmem:[#allocation5 + $0xa38] sm:$0xff]
        %v673 = vld [vmem:[#allocation5 + $0xa40] sm:$0xff]
        %v674 = vld [vmem:[#allocation5 + $0xa48] sm:$0xff]
        %v675 = vld [vmem:[#allocation5 + $0xa50] sm:$0xff]
        %v676 = vld [vmem:[#allocation5 + $0xa58] sm:$0xff]
        %v677 = vld [vmem:[#allocation5 + $0xa60] sm:$0xff]
        %v678 = vld [vmem:[#allocation5 + $0xa68] sm:$0xff]
        %v679 = vld [vmem:[#allocation5 + $0xa70] sm:$0xff]
        %v680 = vld [vmem:[#allocation5 + $0xa78] sm:$0xff]
        %v681 = vld [vmem:[#allocation5 + $0xa80] sm:$0xff]
        %v682 = vld [vmem:[#allocation5 + $0xa88] sm:$0xff]
        %v683 = vld [vmem:[#allocation5 + $0xa90] sm:$0xff]
        %v684 = vld [vmem:[#allocation5 + $0xa98] sm:$0xff]
        %v685 = vld [vmem:[#allocation5 + $0xaa0] sm:$0xff]
        %v686 = vld [vmem:[#allocation5 + $0xaa8] sm:$0xff]
        %v687 = vld [vmem:[#allocation5 + $0xab0] sm:$0xff]
        %v688 = vld [vmem:[#allocation5 + $0xab8] sm:$0xff]
        %v689 = vld [vmem:[#allocation5 + $0xac0] sm:$0xff]
        %v690 = vld [vmem:[#allocation5 + $0xac8] sm:$0xff]
        %v691 = vld [vmem:[#allocation5 + $0xad0] sm:$0xff]
        %v692 = vld [vmem:[#allocation5 + $0xad8] sm:$0xff]
        %v693 = vld [vmem:[#allocation5 + $0xae0] sm:$0xff]
        %v694 = vld [vmem:[#allocation5 + $0xae8] sm:$0xff]
        %v695 = vld [vmem:[#allocation5 + $0xaf0] sm:$0xff]
        %v696 = vld [vmem:[#allocation5 + $0xaf8] sm:$0xff]
        %v697 = vld [vmem:[#allocation5 + $0xb00] sm:$0xff]
        %v698 = vld [vmem:[#allocation5 + $0xb08] sm:$0xff]
        %v699 = vld [vmem:[#allocation5 + $0xb10] sm:$0xff]
        %v700 = vld [vmem:[#allocation5 + $0xb18] sm:$0xff]
        %v701 = vld [vmem:[#allocation5 + $0xb20] sm:$0xff]
        %v702 = vld [vmem:[#allocation5 + $0xb28] sm:$0xff]
        %v703 = vld [vmem:[#allocation5 + $0xb30] sm:$0xff]
        %v704 = vld [vmem:[#allocation5 + $0xb38] sm:$0xff]
        %v705 = vld [vmem:[#allocation5 + $0xb40] sm:$0xff]
        %v706 = vld [vmem:[#allocation5 + $0xb48] sm:$0xff]
        %v707 = vld [vmem:[#allocation5 + $0xb50] sm:$0xff]
        %v708 = vld [vmem:[#allocation5 + $0xb58] sm:$0xff]
        %v709 = vld [vmem:[#allocation5 + $0xb60] sm:$0xff]
        %v710 = vld [vmem:[#allocation5 + $0xb68] sm:$0xff]
        %v711 = vld [vmem:[#allocation5 + $0xb70] sm:$0xff]
        %v712 = vld [vmem:[#allocation5 + $0xb78] sm:$0xff]
        %v713 = vld [vmem:[#allocation5 + $0xb80] sm:$0xff]
        %v714 = vld [vmem:[#allocation5 + $0xb88] sm:$0xff]
        %v715 = vld [vmem:[#allocation5 + $0xb90] sm:$0xff]
        %v716 = vld [vmem:[#allocation5 + $0xb98] sm:$0xff]
        %v717 = vld [vmem:[#allocation5 + $0xba0] sm:$0xff]
        %v718 = vld [vmem:[#allocation5 + $0xba8] sm:$0xff]
        %v719 = vld [vmem:[#allocation5 + $0xbb0] sm:$0xff]
        %v720 = vld [vmem:[#allocation5 + $0xbb8] sm:$0xff]
        %v721 = vld [vmem:[#allocation5 + $0xbc0] sm:$0xff]
        %v722 = vld [vmem:[#allocation5 + $0xbc8] sm:$0xff]
        %v723 = vld [vmem:[#allocation5 + $0xbd0] sm:$0xff]
        %v724 = vld [vmem:[#allocation5 + $0xbd8] sm:$0xff]
        %v725 = vld [vmem:[#allocation5 + $0xbe0] sm:$0xff]
        %v726 = vld [vmem:[#allocation5 + $0xbe8] sm:$0xff]
        %v727 = vld [vmem:[#allocation5 + $0xbf0] sm:$0xff]
        %v728 = vld [vmem:[#allocation5 + $0xbf8] sm:$0xff]
        %v729 = vld [vmem:[#allocation5 + $0xc00] sm:$0xff]
        %v730 = vld [vmem:[#allocation5 + $0xc08] sm:$0xff]
        %v731 = vld [vmem:[#allocation5 + $0xc10] sm:$0xff]
        %v732 = vld [vmem:[#allocation5 + $0xc18] sm:$0xff]
        %v733 = vld [vmem:[#allocation5 + $0xc20] sm:$0xff]
        %v734 = vld [vmem:[#allocation5 + $0xc28] sm:$0xff]
        %v735 = vld [vmem:[#allocation5 + $0xc30] sm:$0xff]
        %v736 = vld [vmem:[#allocation5 + $0xc38] sm:$0xff]
        %v737 = vld [vmem:[#allocation5 + $0xc40] sm:$0xff]
        %v738 = vld [vmem:[#allocation5 + $0xc48] sm:$0xff]
        %v739 = vld [vmem:[#allocation5 + $0xc50] sm:$0xff]
        %v740 = vld [vmem:[#allocation5 + $0xc58] sm:$0xff]
        %v741 = vld [vmem:[#allocation5 + $0xc60] sm:$0xff]
        %v742 = vld [vmem:[#allocation5 + $0xc68] sm:$0xff]
        %v743 = vld [vmem:[#allocation5 + $0xc70] sm:$0xff]
        %v744 = vld [vmem:[#allocation5 + $0xc78] sm:$0xff]
        %v745 = vld [vmem:[#allocation5 + $0xc80] sm:$0xff]
        %v746 = vld [vmem:[#allocation5 + $0xc88] sm:$0xff]
        %v747 = vld [vmem:[#allocation5 + $0xc90] sm:$0xff]
        %v748 = vld [vmem:[#allocation5 + $0xc98] sm:$0xff]
        %v749 = vld [vmem:[#allocation5 + $0xca0] sm:$0xff]
        %v750 = vld [vmem:[#allocation5 + $0xca8] sm:$0xff]
        %v751 = vld [vmem:[#allocation5 + $0xcb0] sm:$0xff]
        %v752 = vld [vmem:[#allocation5 + $0xcb8] sm:$0xff]
        %v753 = vld [vmem:[#allocation5 + $0xcc0] sm:$0xff]
        %v754 = vld [vmem:[#allocation5 + $0xcc8] sm:$0xff]
        %v755 = vld [vmem:[#allocation5 + $0xcd0] sm:$0xff]
        %v756 = vld [vmem:[#allocation5 + $0xcd8] sm:$0xff]
        %v757 = vld [vmem:[#allocation5 + $0xce0] sm:$0xff]
        %v758 = vld [vmem:[#allocation5 + $0xce8] sm:$0xff]
        %v759 = vld [vmem:[#allocation5 + $0xcf0] sm:$0xff]
        %v760 = vld [vmem:[#allocation5 + $0xcf8] sm:$0xff]
        %v761 = vld [vmem:[#allocation5 + $0xd00] sm:$0xff]
        %v762 = vld [vmem:[#allocation5 + $0xd08] sm:$0xff]
        %v763 = vld [vmem:[#allocation5 + $0xd10] sm:$0xff]
        %v764 = vld [vmem:[#allocation5 + $0xd18] sm:$0xff]
        %v765 = vld [vmem:[#allocation5 + $0xd20] sm:$0xff]
        %v766 = vld [vmem:[#allocation5 + $0xd28] sm:$0xff]
        %v767 = vld [vmem:[#allocation5 + $0xd30] sm:$0xff]
        %v768 = vld [vmem:[#allocation5 + $0xd38] sm:$0xff]
        %v769 = vld [vmem:[#allocation5 + $0xd40] sm:$0xff]
        %v770 = vld [vmem:[#allocation5 + $0xd48] sm:$0xff]
        %v771 = vld [vmem:[#allocation5 + $0xd50] sm:$0xff]
        %v772 = vld [vmem:[#allocation5 + $0xd58] sm:$0xff]
        %v773 = vld [vmem:[#allocation5 + $0xd60] sm:$0xff]
        %v774 = vld [vmem:[#allocation5 + $0xd68] sm:$0xff]
        %v775 = vld [vmem:[#allocation5 + $0xd70] sm:$0xff]
        %v776 = vld [vmem:[#allocation5 + $0xd78] sm:$0xff]
        %v777 = vld [vmem:[#allocation7] sm:$0xff]
        %v778 = vld [vmem:[#allocation7 + $0x8] sm:$0x1]
        %v781 = vlaneseq
        %v782 = vshrl.u32 %v781, 7
        %v783 = vsub.s32 0, %v782
        %v784 = vrot.slane %v777, %v783
        %v785 = vlaneseq
        %v786 = vshrl.u32 %v785, 7
        %v787 = vsub.s32 1, %v786
        %v788 = vrot.slane %v777, %v787
        %v789 = vlaneseq
        %v790 = vshrl.u32 %v789, 7
        %v791 = vsub.s32 2, %v790
        %v792 = vrot.slane %v777, %v791
        %v793 = vlaneseq
        %v794 = vshrl.u32 %v793, 7
        %v795 = vsub.s32 3, %v794
        %v796 = vrot.slane %v777, %v795
        %v797 = vlaneseq
        %v798 = vshrl.u32 %v797, 7
        %v799 = vsub.s32 4, %v798
        %v800 = vrot.slane %v777, %v799
        %v801 = vlaneseq
        %v802 = vshrl.u32 %v801, 7
        %v803 = vsub.s32 5, %v802
        %v804 = vrot.slane %v777, %v803
        %v805 = vlaneseq
        %v806 = vshrl.u32 %v805, 7
        %v807 = vsub.s32 6, %v806
        %v808 = vrot.slane %v777, %v807
        %v809 = vlaneseq
        %v810 = vshrl.u32 %v809, 7
        %v811 = vsub.s32 7, %v810
        %v812 = vrot.slane %v777, %v811
        %v813 = vlaneseq
        %v814 = vshrl.u32 %v813, 7
        %v815 = vsub.s32 0, %v814
        %v816 = vrot.slane %v778, %v815
        %826 = vmatprep.subr.mxu0 %v481
        %827 = vmatpush1.msra.mxu0 %v480
        %828 = vmatprep.subr.mxu0 %v472
        %829 = vmatpush1.msra.mxu0 %v471
        %830 = vmatprep.subr.mxu0 %v463
        %831 = vmatpush1.msra.mxu0 %v462
        %832 = vmatprep.subr.mxu0 %v454
        %833 = vmatpush1.msra.mxu0 %v453
        %834 = vmatprep.subr.mxu0 %v445
        %835 = vmatpush1.msra.mxu0 %v444
        %836 = vmatprep.subr.mxu0 %v436
        %837 = vmatpush1.msra.mxu0 %v435
        %838 = vmatprep.subr.mxu0 %v427
        %839 = vmatpush1.msra.mxu0 %v426
        %840 = vmatprep.subr.mxu0 %v418
        %841 = vmatpush1.msra.mxu0 %v417
        %842 = vmatprep.subr.mxu0 %v409
        %843 = vmatpush1.msra.mxu0 %v408
        %844 = vmatprep.subr.mxu0 %v400
        %845 = vmatpush1.msra.mxu0 %v399
        %846 = vmatprep.subr.mxu0 %v391
        %847 = vmatpush1.msra.mxu0 %v390
        %848 = vmatprep.subr.mxu0 %v382
        %849 = vmatpush1.msra.mxu0 %v381
        %850 = vmatprep.subr.mxu0 %v373
        %851 = vmatpush1.msra.mxu0 %v372
        %852 = vmatprep.subr.mxu0 %v364
        %853 = vmatpush1.msra.mxu0 %v363
        %854 = vmatprep.subr.mxu0 %v355
        %855 = vmatpush1.msra.mxu0 %v354
        %856 = vmatprep.subr.mxu0 %v346
        %857 = vmatpush1.msra.mxu0 %v345
        %858 = vmatprep.subr.mxu0 %v625
        %859 = vmatpush2.msra.mxu0 %v624
        %860 = vmatprep.subr.mxu0 %v616
        %861 = vmatpush2.msra.mxu0 %v615
        %862 = vmatprep.subr.mxu0 %v607
        %863 = vmatpush2.msra.mxu0 %v606
        %864 = vmatprep.subr.mxu0 %v598
        %865 = vmatpush2.msra.mxu0 %v597
        %866 = vmatprep.subr.mxu0 %v589
        %867 = vmatpush2.msra.mxu0 %v588
        %868 = vmatprep.subr.mxu0 %v580
        %869 = vmatpush2.msra.mxu0 %v579
        %870 = vmatprep.subr.mxu0 %v571
        %871 = vmatpush2.msra.mxu0 %v570
        %872 = vmatprep.subr.mxu0 %v562
        %873 = vmatpush2.msra.mxu0 %v561
        %874 = vmatprep.subr.mxu0 %v553
        %875 = vmatpush2.msra.mxu0 %v552
        %876 = vmatprep.subr.mxu0 %v544
        %877 = vmatpush2.msra.mxu0 %v543
        %878 = vmatprep.subr.mxu0 %v535
        %879 = vmatpush2.msra.mxu0 %v534
        %880 = vmatprep.subr.mxu0 %v526
        %881 = vmatpush2.msra.mxu0 %v525
        %882 = vmatprep.subr.mxu0 %v517
        %883 = vmatpush2.msra.mxu0 %v516
        %884 = vmatprep.subr.mxu0 %v508
        %885 = vmatpush2.msra.mxu0 %v507
        %886 = vmatprep.subr.mxu0 %v499
        %887 = vmatpush2.msra.mxu0 %v498
        %888 = vmatprep.subr.mxu0 %v490
        %889 = vmatpush2.msra.mxu0 %v489
        %890 = vmatprep.mubr.f32.mxu0 %v298
        %891 = vmatmul.mubr.f32.gmra.mxu0 %v297
        %v892 = vpop.f32.mrf.mxu0
        %v893 = vadd.f32 %v784, %v892
        %v894 = vpop.f32.mrf.mxu0
        %v895 = vadd.f32 %v788, %v894
        %896 = vmatprep.mubr.f32.mxu0 %v301
        %897 = vmatmul.mubr.f32.gmra.mxu0 %v300
        %v898 = vpop.f32.mrf.mxu0
        %v899 = vadd.f32 %v784, %v898
        %v900 = vpop.f32.mrf.mxu0
        %v901 = vadd.f32 %v788, %v900
        %902 = vmatprep.mubr.f32.mxu0 %v304
        %903 = vmatmul.mubr.f32.gmra.mxu0 %v303
        %v904 = vpop.f32.mrf.mxu0
        %v905 = vadd.f32 %v784, %v904
        %v906 = vpop.f32.mrf.mxu0
        %v907 = vadd.f32 %v788, %v906
        %908 = vmatprep.mubr.f32.mxu0 %v307
        %909 = vmatmul.mubr.f32.gmra.mxu0 %v306
        %v910 = vpop.f32.mrf.mxu0
        %v911 = vadd.f32 %v784, %v910
        %v912 = vpop.f32.mrf.mxu0
        %v913 = vadd.f32 %v788, %v912
        %914 = vmatprep.mubr.f32.mxu0 %v310
        %915 = vmatmul.mubr.f32.gmra.mxu0 %v309
        %v916 = vpop.f32.mrf.mxu0
        %v917 = vadd.f32 %v784, %v916
        %v918 = vpop.f32.mrf.mxu0
        %v919 = vadd.f32 %v788, %v918
        %920 = vmatprep.mubr.f32.mxu0 %v313
        %921 = vmatmul.mubr.f32.gmra.mxu0 %v312
        %v922 = vpop.f32.mrf.mxu0
        %v923 = vadd.f32 %v784, %v922
        %v924 = vpop.f32.mrf.mxu0
        %v925 = vadd.f32 %v788, %v924
        %926 = vmatprep.mubr.f32.mxu0 %v316
        %927 = vmatmul.mubr.f32.gmra.mxu0 %v315
        %v928 = vpop.f32.mrf.mxu0
        %v929 = vadd.f32 %v784, %v928
        %v930 = vpop.f32.mrf.mxu0
        %v931 = vadd.f32 %v788, %v930
        %932 = vmatprep.mubr.f32.mxu0 %v319
        %933 = vmatmul.mubr.f32.gmra.mxu0 %v318
        %v934 = vpop.f32.mrf.mxu0
        %v935 = vadd.f32 %v784, %v934
        %v936 = vpop.f32.mrf.mxu0
        %v937 = vadd.f32 %v788, %v936
        %938 = vmatprep.mubr.f32.mxu0 %v322
        %939 = vmatmul.mubr.f32.gmra.mxu0 %v321
        %v940 = vpop.f32.mrf.mxu0
        %v941 = vadd.f32 %v784, %v940
        %v942 = vpop.f32.mrf.mxu0
        %v943 = vadd.f32 %v788, %v942
        %944 = vmatprep.mubr.f32.mxu0 %v325
        %945 = vmatmul.mubr.f32.gmra.mxu0 %v324
        %v946 = vpop.f32.mrf.mxu0
        %v947 = vadd.f32 %v784, %v946
        %v948 = vpop.f32.mrf.mxu0
        %v949 = vadd.f32 %v788, %v948
        %950 = vmatprep.mubr.f32.mxu0 %v328
        %951 = vmatmul.mubr.f32.gmra.mxu0 %v327
        %v952 = vpop.f32.mrf.mxu0
        %v953 = vadd.f32 %v784, %v952
        %v954 = vpop.f32.mrf.mxu0
        %v955 = vadd.f32 %v788, %v954
        %956 = vmatprep.mubr.f32.mxu0 %v331
        %957 = vmatmul.mubr.f32.gmra.mxu0 %v330
        %v958 = vpop.f32.mrf.mxu0
        %v959 = vadd.f32 %v784, %v958
        %v960 = vpop.f32.mrf.mxu0
        %v961 = vadd.f32 %v788, %v960
        %962 = vmatprep.mubr.f32.mxu0 %v334
        %963 = vmatmul.mubr.f32.gmra.mxu0 %v333
        %v964 = vpop.f32.mrf.mxu0
        %v965 = vadd.f32 %v784, %v964
        %v966 = vpop.f32.mrf.mxu0
        %v967 = vadd.f32 %v788, %v966
        %968 = vmatprep.mubr.f32.mxu0 %v337
        %969 = vmatmul.mubr.f32.gmra.mxu0 %v336
        %v970 = vpop.f32.mrf.mxu0
        %v971 = vadd.f32 %v784, %v970
        %v972 = vpop.f32.mrf.mxu0
        %v973 = vadd.f32 %v788, %v972
        %974 = vmatprep.mubr.f32.mxu0 %v340
        %975 = vmatmul.mubr.f32.gmra.mxu0 %v339
        %v976 = vpop.f32.mrf.mxu0
        %v977 = vadd.f32 %v784, %v976
        %v978 = vpop.f32.mrf.mxu0
        %v979 = vadd.f32 %v788, %v978
        %980 = vmatprep.mubr.f32.mxu0 %v343
        %981 = vmatmul.mubr.f32.gmra.mxu0 %v342
        %v982 = vpop.f32.mrf.mxu0
        %v983 = vadd.f32 %v784, %v982
        %v984 = vpop.f32.mrf.mxu0
        %v985 = vadd.f32 %v788, %v984
        %986 = vdwg.mxu0
        %987 = vmatprep.subr.mxu0 %v769
        %988 = vmatpush1.msra.mxu0 %v768
        %989 = vmatprep.subr.mxu0 %v760
        %990 = vmatpush1.msra.mxu0 %v759
        %991 = vmatprep.subr.mxu0 %v751
        %992 = vmatpush1.msra.mxu0 %v750
        %993 = vmatprep.subr.mxu0 %v742
        %994 = vmatpush1.msra.mxu0 %v741
        %995 = vmatprep.subr.mxu0 %v733
        %996 = vmatpush1.msra.mxu0 %v732
        %997 = vmatprep.subr.mxu0 %v724
        %998 = vmatpush1.msra.mxu0 %v723
        %999 = vmatprep.subr.mxu0 %v715
        %1000 = vmatpush1.msra.mxu0 %v714
        %1001 = vmatprep.subr.mxu0 %v706
        %1002 = vmatpush1.msra.mxu0 %v705
        %1003 = vmatprep.subr.mxu0 %v697
        %1004 = vmatpush1.msra.mxu0 %v696
        %1005 = vmatprep.subr.mxu0 %v688
        %1006 = vmatpush1.msra.mxu0 %v687
        %1007 = vmatprep.subr.mxu0 %v679
        %1008 = vmatpush1.msra.mxu0 %v678
        %1009 = vmatprep.subr.mxu0 %v670
        %1010 = vmatpush1.msra.mxu0 %v669
        %1011 = vmatprep.subr.mxu0 %v661
        %1012 = vmatpush1.msra.mxu0 %v660
        %1013 = vmatprep.subr.mxu0 %v652
        %1014 = vmatpush1.msra.mxu0 %v651
        %1015 = vmatprep.subr.mxu0 %v643
        %1016 = vmatpush1.msra.mxu0 %v642
        %1017 = vmatprep.subr.mxu0 %v634
        %1018 = vmatpush1.msra.mxu0 %v633
        %1019 = vmatprep.subr.mxu0 0.0
        %1020 = vmatpush2.msra.mxu0 0.0
        %1021 = vmatprep.subr.mxu0 0.0
        %1022 = vmatpush2.msra.mxu0 0.0
        %1023 = vmatprep.subr.mxu0 0.0
        %1024 = vmatpush2.msra.mxu0 0.0
        %1025 = vmatprep.subr.mxu0 0.0
        %1026 = vmatpush2.msra.mxu0 0.0
        %1027 = vmatprep.subr.mxu0 0.0
        %1028 = vmatpush2.msra.mxu0 0.0
        %1029 = vmatprep.subr.mxu0 0.0
        %1030 = vmatpush2.msra.mxu0 0.0
        %1031 = vmatprep.subr.mxu0 0.0
        %1032 = vmatpush2.msra.mxu0 0.0
        %1033 = vmatprep.subr.mxu0 0.0
        %1034 = vmatpush2.msra.mxu0 0.0
        %1035 = vmatprep.subr.mxu0 0.0
        %1036 = vmatpush2.msra.mxu0 0.0
        %1037 = vmatprep.subr.mxu0 0.0
        %1038 = vmatpush2.msra.mxu0 0.0
        %1039 = vmatprep.subr.mxu0 0.0
        %1040 = vmatpush2.msra.mxu0 0.0
        %1041 = vmatprep.subr.mxu0 0.0
        %1042 = vmatpush2.msra.mxu0 0.0
        %1043 = vmatprep.subr.mxu0 0.0
        %1044 = vmatpush2.msra.mxu0 0.0
        %1045 = vmatprep.subr.mxu0 0.0
        %1046 = vmatpush2.msra.mxu0 0.0
        %1047 = vmatprep.subr.mxu0 0.0
        %1048 = vmatpush2.msra.mxu0 0.0
        %1049 = vmatprep.subr.mxu0 0.0
        %1050 = vmatpush2.msra.mxu0 0.0
        %1051 = vmatprep.mubr.f32.mxu0 0.0
        %1052 = vmatmul.mubr.f32.gmra.mxu0 %v299
        %v1053 = vpop.f32.mrf.mxu0
        %v1054 = vadd.f32 %v893, %v1053
        %v1055 = vpop.f32.mrf.mxu0
        %v1056 = vadd.f32 %v895, %v1055
        %1057 = vmatprep.mubr.f32.mxu0 0.0
        %1058 = vmatmul.mubr.f32.gmra.mxu0 %v302
        %v1059 = vpop.f32.mrf.mxu0
        %v1060 = vadd.f32 %v899, %v1059
        %v1061 = vpop.f32.mrf.mxu0
        %v1062 = vadd.f32 %v901, %v1061
        %1063 = vmatprep.mubr.f32.mxu0 0.0
        %1064 = vmatmul.mubr.f32.gmra.mxu0 %v305
        %v1065 = vpop.f32.mrf.mxu0
        %v1066 = vadd.f32 %v905, %v1065
        %v1067 = vpop.f32.mrf.mxu0
        %v1068 = vadd.f32 %v907, %v1067
        %1069 = vmatprep.mubr.f32.mxu0 0.0
        %1070 = vmatmul.mubr.f32.gmra.mxu0 %v308
        %v1071 = vpop.f32.mrf.mxu0
        %v1072 = vadd.f32 %v911, %v1071
        %v1073 = vpop.f32.mrf.mxu0
        %v1074 = vadd.f32 %v913, %v1073
        %1075 = vmatprep.mubr.f32.mxu0 0.0
        %1076 = vmatmul.mubr.f32.gmra.mxu0 %v311
        %v1077 = vpop.f32.mrf.mxu0
        %v1078 = vadd.f32 %v917, %v1077
        %v1079 = vpop.f32.mrf.mxu0
        %v1080 = vadd.f32 %v919, %v1079
        %1081 = vmatprep.mubr.f32.mxu0 0.0
        %1082 = vmatmul.mubr.f32.gmra.mxu0 %v314
        %v1083 = vpop.f32.mrf.mxu0
        %v1084 = vadd.f32 %v923, %v1083
        %v1085 = vpop.f32.mrf.mxu0
        %v1086 = vadd.f32 %v925, %v1085
        %1087 = vmatprep.mubr.f32.mxu0 0.0
        %1088 = vmatmul.mubr.f32.gmra.mxu0 %v317
        %v1089 = vpop.f32.mrf.mxu0
        %v1090 = vadd.f32 %v929, %v1089
        %v1091 = vpop.f32.mrf.mxu0
        %v1092 = vadd.f32 %v931, %v1091
        %1093 = vmatprep.mubr.f32.mxu0 0.0
        %1094 = vmatmul.mubr.f32.gmra.mxu0 %v320
        %v1095 = vpop.f32.mrf.mxu0
        %v1096 = vadd.f32 %v935, %v1095
        %v1097 = vpop.f32.mrf.mxu0
        %v1098 = vadd.f32 %v937, %v1097
        %1099 = vmatprep.mubr.f32.mxu0 0.0
        %1100 = vmatmul.mubr.f32.gmra.mxu0 %v323
        %v1101 = vpop.f32.mrf.mxu0
        %v1102 = vadd.f32 %v941, %v1101
        %v1103 = vpop.f32.mrf.mxu0
        %v1104 = vadd.f32 %v943, %v1103
        %1105 = vmatprep.mubr.f32.mxu0 0.0
        %1106 = vmatmul.mubr.f32.gmra.mxu0 %v326
        %v1107 = vpop.f32.mrf.mxu0
        %v1108 = vadd.f32 %v947, %v1107
        %v1109 = vpop.f32.mrf.mxu0
        %v1110 = vadd.f32 %v949, %v1109
        %1111 = vmatprep.mubr.f32.mxu0 0.0
        %1112 = vmatmul.mubr.f32.gmra.mxu0 %v329
        %v1113 = vpop.f32.mrf.mxu0
        %v1114 = vadd.f32 %v953, %v1113
        %v1115 = vpop.f32.mrf.mxu0
        %v1116 = vadd.f32 %v955, %v1115
        %1117 = vmatprep.mubr.f32.mxu0 0.0
        %1118 = vmatmul.mubr.f32.gmra.mxu0 %v332
        %v1119 = vpop.f32.mrf.mxu0
        %v1120 = vadd.f32 %v959, %v1119
        %v1121 = vpop.f32.mrf.mxu0
        %v1122 = vadd.f32 %v961, %v1121
        %1123 = vmatprep.mubr.f32.mxu0 0.0
        %1124 = vmatmul.mubr.f32.gmra.mxu0 %v335
        %v1125 = vpop.f32.mrf.mxu0
        %v1126 = vadd.f32 %v965, %v1125
        %v1127 = vpop.f32.mrf.mxu0
        %v1128 = vadd.f32 %v967, %v1127
        %1129 = vmatprep.mubr.f32.mxu0 0.0
        %1130 = vmatmul.mubr.f32.gmra.mxu0 %v338
        %v1131 = vpop.f32.mrf.mxu0
        %v1132 = vadd.f32 %v971, %v1131
        %v1133 = vpop.f32.mrf.mxu0
        %v1134 = vadd.f32 %v973, %v1133
        %1135 = vmatprep.mubr.f32.mxu0 0.0
        %1136 = vmatmul.mubr.f32.gmra.mxu0 %v341
        %v1137 = vpop.f32.mrf.mxu0
        %v1138 = vadd.f32 %v977, %v1137
        %v1139 = vpop.f32.mrf.mxu0
        %v1140 = vadd.f32 %v979, %v1139
        %1141 = vmatprep.mubr.f32.mxu0 0.0
        %1142 = vmatmul.mubr.f32.gmra.mxu0 %v344
        %v1143 = vpop.f32.mrf.mxu0
        %v1144 = vadd.f32 %v983, %v1143
        %v1145 = vpop.f32.mrf.mxu0
        %v1146 = vadd.f32 %v985, %v1145
        %1147 = vdwg.mxu0
        %1148 = vmatprep.subr.mxu0 %v483
        %1149 = vmatpush1.msra.mxu0 %v482
        %1150 = vmatprep.subr.mxu0 %v474
        %1151 = vmatpush1.msra.mxu0 %v473
        %1152 = vmatprep.subr.mxu0 %v465
        %1153 = vmatpush1.msra.mxu0 %v464
        %1154 = vmatprep.subr.mxu0 %v456
        %1155 = vmatpush1.msra.mxu0 %v455
        %1156 = vmatprep.subr.mxu0 %v447
        %1157 = vmatpush1.msra.mxu0 %v446
        %1158 = vmatprep.subr.mxu0 %v438
        %1159 = vmatpush1.msra.mxu0 %v437
        %1160 = vmatprep.subr.mxu0 %v429
        %1161 = vmatpush1.msra.mxu0 %v428
        %1162 = vmatprep.subr.mxu0 %v420
        %1163 = vmatpush1.msra.mxu0 %v419
        %1164 = vmatprep.subr.mxu0 %v411
        %1165 = vmatpush1.msra.mxu0 %v410
        %1166 = vmatprep.subr.mxu0 %v402
        %1167 = vmatpush1.msra.mxu0 %v401
        %1168 = vmatprep.subr.mxu0 %v393
        %1169 = vmatpush1.msra.mxu0 %v392
        %1170 = vmatprep.subr.mxu0 %v384
        %1171 = vmatpush1.msra.mxu0 %v383
        %1172 = vmatprep.subr.mxu0 %v375
        %1173 = vmatpush1.msra.mxu0 %v374
        %1174 = vmatprep.subr.mxu0 %v366
        %1175 = vmatpush1.msra.mxu0 %v365
        %1176 = vmatprep.subr.mxu0 %v357
        %1177 = vmatpush1.msra.mxu0 %v356
        %1178 = vmatprep.subr.mxu0 %v348
        %1179 = vmatpush1.msra.mxu0 %v347
        %1180 = vmatprep.subr.mxu0 %v627
        %1181 = vmatpush2.msra.mxu0 %v626
        %1182 = vmatprep.subr.mxu0 %v618
        %1183 = vmatpush2.msra.mxu0 %v617
        %1184 = vmatprep.subr.mxu0 %v609
        %1185 = vmatpush2.msra.mxu0 %v608
        %1186 = vmatprep.subr.mxu0 %v600
        %1187 = vmatpush2.msra.mxu0 %v599
        %1188 = vmatprep.subr.mxu0 %v591
        %1189 = vmatpush2.msra.mxu0 %v590
        %1190 = vmatprep.subr.mxu0 %v582
        %1191 = vmatpush2.msra.mxu0 %v581
        %1192 = vmatprep.subr.mxu0 %v573
        %1193 = vmatpush2.msra.mxu0 %v572
        %1194 = vmatprep.subr.mxu0 %v564
        %1195 = vmatpush2.msra.mxu0 %v563
        %1196 = vmatprep.subr.mxu0 %v555
        %1197 = vmatpush2.msra.mxu0 %v554
        %1198 = vmatprep.subr.mxu0 %v546
        %1199 = vmatpush2.msra.mxu0 %v545
        %1200 = vmatprep.subr.mxu0 %v537
        %1201 = vmatpush2.msra.mxu0 %v536
        %1202 = vmatprep.subr.mxu0 %v528
        %1203 = vmatpush2.msra.mxu0 %v527
        %1204 = vmatprep.subr.mxu0 %v519
        %1205 = vmatpush2.msra.mxu0 %v518
        %1206 = vmatprep.subr.mxu0 %v510
        %1207 = vmatpush2.msra.mxu0 %v509
        %1208 = vmatprep.subr.mxu0 %v501
        %1209 = vmatpush2.msra.mxu0 %v500
        %1210 = vmatprep.subr.mxu0 %v492
        %1211 = vmatpush2.msra.mxu0 %v491
        %1212 = vmatprep.mubr.f32.mxu0 %v298
        %1213 = vmatmul.mubr.f32.gmra.mxu0 %v297
        %v1214 = vpop.f32.mrf.mxu0
        %v1215 = vadd.f32 %v792, %v1214
        %v1216 = vpop.f32.mrf.mxu0
        %v1217 = vadd.f32 %v796, %v1216
        %1218 = vmatprep.mubr.f32.mxu0 %v301
        %1219 = vmatmul.mubr.f32.gmra.mxu0 %v300
        %v1220 = vpop.f32.mrf.mxu0
        %v1221 = vadd.f32 %v792, %v1220
        %v1222 = vpop.f32.mrf.mxu0
        %v1223 = vadd.f32 %v796, %v1222
        %1224 = vmatprep.mubr.f32.mxu0 %v304
        %1225 = vmatmul.mubr.f32.gmra.mxu0 %v303
        %v1226 = vpop.f32.mrf.mxu0
        %v1227 = vadd.f32 %v792, %v1226
        %v1228 = vpop.f32.mrf.mxu0
        %v1229 = vadd.f32 %v796, %v1228
        %1230 = vmatprep.mubr.f32.mxu0 %v307
        %1231 = vmatmul.mubr.f32.gmra.mxu0 %v306
        %v1232 = vpop.f32.mrf.mxu0
        %v1233 = vadd.f32 %v792, %v1232
        %v1234 = vpop.f32.mrf.mxu0
        %v1235 = vadd.f32 %v796, %v1234
        %1236 = vmatprep.mubr.f32.mxu0 %v310
        %1237 = vmatmul.mubr.f32.gmra.mxu0 %v309
        %v1238 = vpop.f32.mrf.mxu0
        %v1239 = vadd.f32 %v792, %v1238
        %v1240 = vpop.f32.mrf.mxu0
        %v1241 = vadd.f32 %v796, %v1240
        %1242 = vmatprep.mubr.f32.mxu0 %v313
        %1243 = vmatmul.mubr.f32.gmra.mxu0 %v312
        %v1244 = vpop.f32.mrf.mxu0
        %v1245 = vadd.f32 %v792, %v1244
        %v1246 = vpop.f32.mrf.mxu0
        %v1247 = vadd.f32 %v796, %v1246
        %1248 = vmatprep.mubr.f32.mxu0 %v316
        %1249 = vmatmul.mubr.f32.gmra.mxu0 %v315
        %v1250 = vpop.f32.mrf.mxu0
        %v1251 = vadd.f32 %v792, %v1250
        %v1252 = vpop.f32.mrf.mxu0
        %v1253 = vadd.f32 %v796, %v1252
        %1254 = vmatprep.mubr.f32.mxu0 %v319
        %1255 = vmatmul.mubr.f32.gmra.mxu0 %v318
        %v1256 = vpop.f32.mrf.mxu0
        %v1257 = vadd.f32 %v792, %v1256
        %v1258 = vpop.f32.mrf.mxu0
        %v1259 = vadd.f32 %v796, %v1258
        %1260 = vmatprep.mubr.f32.mxu0 %v322
        %1261 = vmatmul.mubr.f32.gmra.mxu0 %v321
        %v1262 = vpop.f32.mrf.mxu0
        %v1263 = vadd.f32 %v792, %v1262
        %v1264 = vpop.f32.mrf.mxu0
        %v1265 = vadd.f32 %v796, %v1264
        %1266 = vmatprep.mubr.f32.mxu0 %v325
        %1267 = vmatmul.mubr.f32.gmra.mxu0 %v324
        %v1268 = vpop.f32.mrf.mxu0
        %v1269 = vadd.f32 %v792, %v1268
        %v1270 = vpop.f32.mrf.mxu0
        %v1271 = vadd.f32 %v796, %v1270
        %1272 = vmatprep.mubr.f32.mxu0 %v328
        %1273 = vmatmul.mubr.f32.gmra.mxu0 %v327
        %v1274 = vpop.f32.mrf.mxu0
        %v1275 = vadd.f32 %v792, %v1274
        %v1276 = vpop.f32.mrf.mxu0
        %v1277 = vadd.f32 %v796, %v1276
        %1278 = vmatprep.mubr.f32.mxu0 %v331
        %1279 = vmatmul.mubr.f32.gmra.mxu0 %v330
        %v1280 = vpop.f32.mrf.mxu0
        %v1281 = vadd.f32 %v792, %v1280
        %v1282 = vpop.f32.mrf.mxu0
        %v1283 = vadd.f32 %v796, %v1282
        %1284 = vmatprep.mubr.f32.mxu0 %v334
        %1285 = vmatmul.mubr.f32.gmra.mxu0 %v333
        %v1286 = vpop.f32.mrf.mxu0
        %v1287 = vadd.f32 %v792, %v1286
        %v1288 = vpop.f32.mrf.mxu0
        %v1289 = vadd.f32 %v796, %v1288
        %1290 = vmatprep.mubr.f32.mxu0 %v337
        %1291 = vmatmul.mubr.f32.gmra.mxu0 %v336
        %v1292 = vpop.f32.mrf.mxu0
        %v1293 = vadd.f32 %v792, %v1292
        %v1294 = vpop.f32.mrf.mxu0
        %v1295 = vadd.f32 %v796, %v1294
        %1296 = vmatprep.mubr.f32.mxu0 %v340
        %1297 = vmatmul.mubr.f32.gmra.mxu0 %v339
        %v1298 = vpop.f32.mrf.mxu0
        %v1299 = vadd.f32 %v792, %v1298
        %v1300 = vpop.f32.mrf.mxu0
        %v1301 = vadd.f32 %v796, %v1300
        %1302 = vmatprep.mubr.f32.mxu0 %v343
        %1303 = vmatmul.mubr.f32.gmra.mxu0 %v342
        %v1304 = vpop.f32.mrf.mxu0
        %v1305 = vadd.f32 %v792, %v1304
        %v1306 = vpop.f32.mrf.mxu0
        %v1307 = vadd.f32 %v796, %v1306
        %1308 = vdwg.mxu0
        %1309 = vmatprep.subr.mxu0 %v771
        %1310 = vmatpush1.msra.mxu0 %v770
        %1311 = vmatprep.subr.mxu0 %v762
        %1312 = vmatpush1.msra.mxu0 %v761
        %1313 = vmatprep.subr.mxu0 %v753
        %1314 = vmatpush1.msra.mxu0 %v752
        %1315 = vmatprep.subr.mxu0 %v744
        %1316 = vmatpush1.msra.mxu0 %v743
        %1317 = vmatprep.subr.mxu0 %v735
        %1318 = vmatpush1.msra.mxu0 %v734
        %1319 = vmatprep.subr.mxu0 %v726
        %1320 = vmatpush1.msra.mxu0 %v725
        %1321 = vmatprep.subr.mxu0 %v717
        %1322 = vmatpush1.msra.mxu0 %v716
        %1323 = vmatprep.subr.mxu0 %v708
        %1324 = vmatpush1.msra.mxu0 %v707
        %1325 = vmatprep.subr.mxu0 %v699
        %1326 = vmatpush1.msra.mxu0 %v698
        %1327 = vmatprep.subr.mxu0 %v690
        %1328 = vmatpush1.msra.mxu0 %v689
        %1329 = vmatprep.subr.mxu0 %v681
        %1330 = vmatpush1.msra.mxu0 %v680
        %1331 = vmatprep.subr.mxu0 %v672
        %1332 = vmatpush1.msra.mxu0 %v671
        %1333 = vmatprep.subr.mxu0 %v663
        %1334 = vmatpush1.msra.mxu0 %v662
        %1335 = vmatprep.subr.mxu0 %v654
        %1336 = vmatpush1.msra.mxu0 %v653
        %1337 = vmatprep.subr.mxu0 %v645
        %1338 = vmatpush1.msra.mxu0 %v644
        %1339 = vmatprep.subr.mxu0 %v636
        %1340 = vmatpush1.msra.mxu0 %v635
        %1341 = vmatprep.subr.mxu0 0.0
        %1342 = vmatpush2.msra.mxu0 0.0
        %1343 = vmatprep.subr.mxu0 0.0
        %1344 = vmatpush2.msra.mxu0 0.0
        %1345 = vmatprep.subr.mxu0 0.0
        %1346 = vmatpush2.msra.mxu0 0.0
        %1347 = vmatprep.subr.mxu0 0.0
        %1348 = vmatpush2.msra.mxu0 0.0
        %1349 = vmatprep.subr.mxu0 0.0
        %1350 = vmatpush2.msra.mxu0 0.0
        %1351 = vmatprep.subr.mxu0 0.0
        %1352 = vmatpush2.msra.mxu0 0.0
        %1353 = vmatprep.subr.mxu0 0.0
        %1354 = vmatpush2.msra.mxu0 0.0
        %1355 = vmatprep.subr.mxu0 0.0
        %1356 = vmatpush2.msra.mxu0 0.0
        %1357 = vmatprep.subr.mxu0 0.0
        %1358 = vmatpush2.msra.mxu0 0.0
        %1359 = vmatprep.subr.mxu0 0.0
        %1360 = vmatpush2.msra.mxu0 0.0
        %1361 = vmatprep.subr.mxu0 0.0
        %1362 = vmatpush2.msra.mxu0 0.0
        %1363 = vmatprep.subr.mxu0 0.0
        %1364 = vmatpush2.msra.mxu0 0.0
        %1365 = vmatprep.subr.mxu0 0.0
        %1366 = vmatpush2.msra.mxu0 0.0
        %1367 = vmatprep.subr.mxu0 0.0
        %1368 = vmatpush2.msra.mxu0 0.0
        %1369 = vmatprep.subr.mxu0 0.0
        %1370 = vmatpush2.msra.mxu0 0.0
        %1371 = vmatprep.subr.mxu0 0.0
        %1372 = vmatpush2.msra.mxu0 0.0
        %1373 = vmatprep.mubr.f32.mxu0 0.0
        %1374 = vmatmul.mubr.f32.gmra.mxu0 %v299
        %v1375 = vpop.f32.mrf.mxu0
        %v1376 = vadd.f32 %v1215, %v1375
        %v1377 = vpop.f32.mrf.mxu0
        %v1378 = vadd.f32 %v1217, %v1377
        %1379 = vmatprep.mubr.f32.mxu0 0.0
        %1380 = vmatmul.mubr.f32.gmra.mxu0 %v302
        %v1381 = vpop.f32.mrf.mxu0
        %v1382 = vadd.f32 %v1221, %v1381
        %v1383 = vpop.f32.mrf.mxu0
        %v1384 = vadd.f32 %v1223, %v1383
        %1385 = vmatprep.mubr.f32.mxu0 0.0
        %1386 = vmatmul.mubr.f32.gmra.mxu0 %v305
        %v1387 = vpop.f32.mrf.mxu0
        %v1388 = vadd.f32 %v1227, %v1387
        %v1389 = vpop.f32.mrf.mxu0
        %v1390 = vadd.f32 %v1229, %v1389
        %1391 = vmatprep.mubr.f32.mxu0 0.0
        %1392 = vmatmul.mubr.f32.gmra.mxu0 %v308
        %v1393 = vpop.f32.mrf.mxu0
        %v1394 = vadd.f32 %v1233, %v1393
        %v1395 = vpop.f32.mrf.mxu0
        %v1396 = vadd.f32 %v1235, %v1395
        %1397 = vmatprep.mubr.f32.mxu0 0.0
        %1398 = vmatmul.mubr.f32.gmra.mxu0 %v311
        %v1399 = vpop.f32.mrf.mxu0
        %v1400 = vadd.f32 %v1239, %v1399
        %v1401 = vpop.f32.mrf.mxu0
        %v1402 = vadd.f32 %v1241, %v1401
        %1403 = vmatprep.mubr.f32.mxu0 0.0
        %1404 = vmatmul.mubr.f32.gmra.mxu0 %v314
        %v1405 = vpop.f32.mrf.mxu0
        %v1406 = vadd.f32 %v1245, %v1405
        %v1407 = vpop.f32.mrf.mxu0
        %v1408 = vadd.f32 %v1247, %v1407
        %1409 = vmatprep.mubr.f32.mxu0 0.0
        %1410 = vmatmul.mubr.f32.gmra.mxu0 %v317
        %v1411 = vpop.f32.mrf.mxu0
        %v1412 = vadd.f32 %v1251, %v1411
        %v1413 = vpop.f32.mrf.mxu0
        %v1414 = vadd.f32 %v1253, %v1413
        %1415 = vmatprep.mubr.f32.mxu0 0.0
        %1416 = vmatmul.mubr.f32.gmra.mxu0 %v320
        %v1417 = vpop.f32.mrf.mxu0
        %v1418 = vadd.f32 %v1257, %v1417
        %v1419 = vpop.f32.mrf.mxu0
        %v1420 = vadd.f32 %v1259, %v1419
        %1421 = vmatprep.mubr.f32.mxu0 0.0
        %1422 = vmatmul.mubr.f32.gmra.mxu0 %v323
        %v1423 = vpop.f32.mrf.mxu0
        %v1424 = vadd.f32 %v1263, %v1423
        %v1425 = vpop.f32.mrf.mxu0
        %v1426 = vadd.f32 %v1265, %v1425
        %1427 = vmatprep.mubr.f32.mxu0 0.0
        %1428 = vmatmul.mubr.f32.gmra.mxu0 %v326
        %v1429 = vpop.f32.mrf.mxu0
        %v1430 = vadd.f32 %v1269, %v1429
        %v1431 = vpop.f32.mrf.mxu0
        %v1432 = vadd.f32 %v1271, %v1431
        %1433 = vmatprep.mubr.f32.mxu0 0.0
        %1434 = vmatmul.mubr.f32.gmra.mxu0 %v329
        %v1435 = vpop.f32.mrf.mxu0
        %v1436 = vadd.f32 %v1275, %v1435
        %v1437 = vpop.f32.mrf.mxu0
        %v1438 = vadd.f32 %v1277, %v1437
        %1439 = vmatprep.mubr.f32.mxu0 0.0
        %1440 = vmatmul.mubr.f32.gmra.mxu0 %v332
        %v1441 = vpop.f32.mrf.mxu0
        %v1442 = vadd.f32 %v1281, %v1441
        %v1443 = vpop.f32.mrf.mxu0
        %v1444 = vadd.f32 %v1283, %v1443
        %1445 = vmatprep.mubr.f32.mxu0 0.0
        %1446 = vmatmul.mubr.f32.gmra.mxu0 %v335
        %v1447 = vpop.f32.mrf.mxu0
        %v1448 = vadd.f32 %v1287, %v1447
        %v1449 = vpop.f32.mrf.mxu0
        %v1450 = vadd.f32 %v1289, %v1449
        %1451 = vmatprep.mubr.f32.mxu0 0.0
        %1452 = vmatmul.mubr.f32.gmra.mxu0 %v338
        %v1453 = vpop.f32.mrf.mxu0
        %v1454 = vadd.f32 %v1293, %v1453
        %v1455 = vpop.f32.mrf.mxu0
        %v1456 = vadd.f32 %v1295, %v1455
        %1457 = vmatprep.mubr.f32.mxu0 0.0
        %1458 = vmatmul.mubr.f32.gmra.mxu0 %v341
        %v1459 = vpop.f32.mrf.mxu0
        %v1460 = vadd.f32 %v1299, %v1459
        %v1461 = vpop.f32.mrf.mxu0
        %v1462 = vadd.f32 %v1301, %v1461
        %1463 = vmatprep.mubr.f32.mxu0 0.0
        %1464 = vmatmul.mubr.f32.gmra.mxu0 %v344
        %v1465 = vpop.f32.mrf.mxu0
        %v1466 = vadd.f32 %v1305, %v1465
        %v1467 = vpop.f32.mrf.mxu0
        %v1468 = vadd.f32 %v1307, %v1467
        %1469 = vdwg.mxu0
        %1470 = vmatprep.subr.mxu0 %v485
        %1471 = vmatpush1.msra.mxu0 %v484
        %1472 = vmatprep.subr.mxu0 %v476
        %1473 = vmatpush1.msra.mxu0 %v475
        %1474 = vmatprep.subr.mxu0 %v467
        %1475 = vmatpush1.msra.mxu0 %v466
        %1476 = vmatprep.subr.mxu0 %v458
        %1477 = vmatpush1.msra.mxu0 %v457
        %1478 = vmatprep.subr.mxu0 %v449
        %1479 = vmatpush1.msra.mxu0 %v448
        %1480 = vmatprep.subr.mxu0 %v440
        %1481 = vmatpush1.msra.mxu0 %v439
        %1482 = vmatprep.subr.mxu0 %v431
        %1483 = vmatpush1.msra.mxu0 %v430
        %1484 = vmatprep.subr.mxu0 %v422
        %1485 = vmatpush1.msra.mxu0 %v421
        %1486 = vmatprep.subr.mxu0 %v413
        %1487 = vmatpush1.msra.mxu0 %v412
        %1488 = vmatprep.subr.mxu0 %v404
        %1489 = vmatpush1.msra.mxu0 %v403
        %1490 = vmatprep.subr.mxu0 %v395
        %1491 = vmatpush1.msra.mxu0 %v394
        %1492 = vmatprep.subr.mxu0 %v386
        %1493 = vmatpush1.msra.mxu0 %v385
        %1494 = vmatprep.subr.mxu0 %v377
        %1495 = vmatpush1.msra.mxu0 %v376
        %1496 = vmatprep.subr.mxu0 %v368
        %1497 = vmatpush1.msra.mxu0 %v367
        %1498 = vmatprep.subr.mxu0 %v359
        %1499 = vmatpush1.msra.mxu0 %v358
        %1500 = vmatprep.subr.mxu0 %v350
        %1501 = vmatpush1.msra.mxu0 %v349
        %1502 = vmatprep.subr.mxu0 %v629
        %1503 = vmatpush2.msra.mxu0 %v628
        %1504 = vmatprep.subr.mxu0 %v620
        %1505 = vmatpush2.msra.mxu0 %v619
        %1506 = vmatprep.subr.mxu0 %v611
        %1507 = vmatpush2.msra.mxu0 %v610
        %1508 = vmatprep.subr.mxu0 %v602
        %1509 = vmatpush2.msra.mxu0 %v601
        %1510 = vmatprep.subr.mxu0 %v593
        %1511 = vmatpush2.msra.mxu0 %v592
        %1512 = vmatprep.subr.mxu0 %v584
        %1513 = vmatpush2.msra.mxu0 %v583
        %1514 = vmatprep.subr.mxu0 %v575
        %1515 = vmatpush2.msra.mxu0 %v574
        %1516 = vmatprep.subr.mxu0 %v566
        %1517 = vmatpush2.msra.mxu0 %v565
        %1518 = vmatprep.subr.mxu0 %v557
        %1519 = vmatpush2.msra.mxu0 %v556
        %1520 = vmatprep.subr.mxu0 %v548
        %1521 = vmatpush2.msra.mxu0 %v547
        %1522 = vmatprep.subr.mxu0 %v539
        %1523 = vmatpush2.msra.mxu0 %v538
        %1524 = vmatprep.subr.mxu0 %v530
        %1525 = vmatpush2.msra.mxu0 %v529
        %1526 = vmatprep.subr.mxu0 %v521
        %1527 = vmatpush2.msra.mxu0 %v520
        %1528 = vmatprep.subr.mxu0 %v512
        %1529 = vmatpush2.msra.mxu0 %v511
        %1530 = vmatprep.subr.mxu0 %v503
        %1531 = vmatpush2.msra.mxu0 %v502
        %1532 = vmatprep.subr.mxu0 %v494
        %1533 = vmatpush2.msra.mxu0 %v493
        %1534 = vmatprep.mubr.f32.mxu0 %v298
        %1535 = vmatmul.mubr.f32.gmra.mxu0 %v297
        %v1536 = vpop.f32.mrf.mxu0
        %v1537 = vadd.f32 %v800, %v1536
        %v1538 = vpop.f32.mrf.mxu0
        %v1539 = vadd.f32 %v804, %v1538
        %1540 = vmatprep.mubr.f32.mxu0 %v301
        %1541 = vmatmul.mubr.f32.gmra.mxu0 %v300
        %v1542 = vpop.f32.mrf.mxu0
        %v1543 = vadd.f32 %v800, %v1542
        %v1544 = vpop.f32.mrf.mxu0
        %v1545 = vadd.f32 %v804, %v1544
        %1546 = vmatprep.mubr.f32.mxu0 %v304
        %1547 = vmatmul.mubr.f32.gmra.mxu0 %v303
        %v1548 = vpop.f32.mrf.mxu0
        %v1549 = vadd.f32 %v800, %v1548
        %v1550 = vpop.f32.mrf.mxu0
        %v1551 = vadd.f32 %v804, %v1550
        %1552 = vmatprep.mubr.f32.mxu0 %v307
        %1553 = vmatmul.mubr.f32.gmra.mxu0 %v306
        %v1554 = vpop.f32.mrf.mxu0
        %v1555 = vadd.f32 %v800, %v1554
        %v1556 = vpop.f32.mrf.mxu0
        %v1557 = vadd.f32 %v804, %v1556
        %1558 = vmatprep.mubr.f32.mxu0 %v310
        %1559 = vmatmul.mubr.f32.gmra.mxu0 %v309
        %v1560 = vpop.f32.mrf.mxu0
        %v1561 = vadd.f32 %v800, %v1560
        %v1562 = vpop.f32.mrf.mxu0
        %v1563 = vadd.f32 %v804, %v1562
        %1564 = vmatprep.mubr.f32.mxu0 %v313
        %1565 = vmatmul.mubr.f32.gmra.mxu0 %v312
        %v1566 = vpop.f32.mrf.mxu0
        %v1567 = vadd.f32 %v800, %v1566
        %v1568 = vpop.f32.mrf.mxu0
        %v1569 = vadd.f32 %v804, %v1568
        %1570 = vmatprep.mubr.f32.mxu0 %v316
        %1571 = vmatmul.mubr.f32.gmra.mxu0 %v315
        %v1572 = vpop.f32.mrf.mxu0
        %v1573 = vadd.f32 %v800, %v1572
        %v1574 = vpop.f32.mrf.mxu0
        %v1575 = vadd.f32 %v804, %v1574
        %1576 = vmatprep.mubr.f32.mxu0 %v319
        %1577 = vmatmul.mubr.f32.gmra.mxu0 %v318
        %v1578 = vpop.f32.mrf.mxu0
        %v1579 = vadd.f32 %v800, %v1578
        %v1580 = vpop.f32.mrf.mxu0
        %v1581 = vadd.f32 %v804, %v1580
        %1582 = vmatprep.mubr.f32.mxu0 %v322
        %1583 = vmatmul.mubr.f32.gmra.mxu0 %v321
        %v1584 = vpop.f32.mrf.mxu0
        %v1585 = vadd.f32 %v800, %v1584
        %v1586 = vpop.f32.mrf.mxu0
        %v1587 = vadd.f32 %v804, %v1586
        %1588 = vmatprep.mubr.f32.mxu0 %v325
        %1589 = vmatmul.mubr.f32.gmra.mxu0 %v324
        %v1590 = vpop.f32.mrf.mxu0
        %v1591 = vadd.f32 %v800, %v1590
        %v1592 = vpop.f32.mrf.mxu0
        %v1593 = vadd.f32 %v804, %v1592
        %1594 = vmatprep.mubr.f32.mxu0 %v328
        %1595 = vmatmul.mubr.f32.gmra.mxu0 %v327
        %v1596 = vpop.f32.mrf.mxu0
        %v1597 = vadd.f32 %v800, %v1596
        %v1598 = vpop.f32.mrf.mxu0
        %v1599 = vadd.f32 %v804, %v1598
        %1600 = vmatprep.mubr.f32.mxu0 %v331
        %1601 = vmatmul.mubr.f32.gmra.mxu0 %v330
        %v1602 = vpop.f32.mrf.mxu0
        %v1603 = vadd.f32 %v800, %v1602
        %v1604 = vpop.f32.mrf.mxu0
        %v1605 = vadd.f32 %v804, %v1604
        %1606 = vmatprep.mubr.f32.mxu0 %v334
        %1607 = vmatmul.mubr.f32.gmra.mxu0 %v333
        %v1608 = vpop.f32.mrf.mxu0
        %v1609 = vadd.f32 %v800, %v1608
        %v1610 = vpop.f32.mrf.mxu0
        %v1611 = vadd.f32 %v804, %v1610
        %1612 = vmatprep.mubr.f32.mxu0 %v337
        %1613 = vmatmul.mubr.f32.gmra.mxu0 %v336
        %v1614 = vpop.f32.mrf.mxu0
        %v1615 = vadd.f32 %v800, %v1614
        %v1616 = vpop.f32.mrf.mxu0
        %v1617 = vadd.f32 %v804, %v1616
        %1618 = vmatprep.mubr.f32.mxu0 %v340
        %1619 = vmatmul.mubr.f32.gmra.mxu0 %v339
        %v1620 = vpop.f32.mrf.mxu0
        %v1621 = vadd.f32 %v800, %v1620
        %v1622 = vpop.f32.mrf.mxu0
        %v1623 = vadd.f32 %v804, %v1622
        %1624 = vmatprep.mubr.f32.mxu0 %v343
        %1625 = vmatmul.mubr.f32.gmra.mxu0 %v342
        %v1626 = vpop.f32.mrf.mxu0
        %v1627 = vadd.f32 %v800, %v1626
        %v1628 = vpop.f32.mrf.mxu0
        %v1629 = vadd.f32 %v804, %v1628
        %1630 = vdwg.mxu0
        %1631 = vmatprep.subr.mxu0 %v773
        %1632 = vmatpush1.msra.mxu0 %v772
        %1633 = vmatprep.subr.mxu0 %v764
        %1634 = vmatpush1.msra.mxu0 %v763
        %1635 = vmatprep.subr.mxu0 %v755
        %1636 = vmatpush1.msra.mxu0 %v754
        %1637 = vmatprep.subr.mxu0 %v746
        %1638 = vmatpush1.msra.mxu0 %v745
        %1639 = vmatprep.subr.mxu0 %v737
        %1640 = vmatpush1.msra.mxu0 %v736
        %1641 = vmatprep.subr.mxu0 %v728
        %1642 = vmatpush1.msra.mxu0 %v727
        %1643 = vmatprep.subr.mxu0 %v719
        %1644 = vmatpush1.msra.mxu0 %v718
        %1645 = vmatprep.subr.mxu0 %v710
        %1646 = vmatpush1.msra.mxu0 %v709
        %1647 = vmatprep.subr.mxu0 %v701
        %1648 = vmatpush1.msra.mxu0 %v700
        %1649 = vmatprep.subr.mxu0 %v692
        %1650 = vmatpush1.msra.mxu0 %v691
        %1651 = vmatprep.subr.mxu0 %v683
        %1652 = vmatpush1.msra.mxu0 %v682
        %1653 = vmatprep.subr.mxu0 %v674
        %1654 = vmatpush1.msra.mxu0 %v673
        %1655 = vmatprep.subr.mxu0 %v665
        %1656 = vmatpush1.msra.mxu0 %v664
        %1657 = vmatprep.subr.mxu0 %v656
        %1658 = vmatpush1.msra.mxu0 %v655
        %1659 = vmatprep.subr.mxu0 %v647
        %1660 = vmatpush1.msra.mxu0 %v646
        %1661 = vmatprep.subr.mxu0 %v638
        %1662 = vmatpush1.msra.mxu0 %v637
        %1663 = vmatprep.subr.mxu0 0.0
        %1664 = vmatpush2.msra.mxu0 0.0
        %1665 = vmatprep.subr.mxu0 0.0
        %1666 = vmatpush2.msra.mxu0 0.0
        %1667 = vmatprep.subr.mxu0 0.0
        %1668 = vmatpush2.msra.mxu0 0.0
        %1669 = vmatprep.subr.mxu0 0.0
        %1670 = vmatpush2.msra.mxu0 0.0
        %1671 = vmatprep.subr.mxu0 0.0
        %1672 = vmatpush2.msra.mxu0 0.0
        %1673 = vmatprep.subr.mxu0 0.0
        %1674 = vmatpush2.msra.mxu0 0.0
        %1675 = vmatprep.subr.mxu0 0.0
        %1676 = vmatpush2.msra.mxu0 0.0
        %1677 = vmatprep.subr.mxu0 0.0
        %1678 = vmatpush2.msra.mxu0 0.0
        %1679 = vmatprep.subr.mxu0 0.0
        %1680 = vmatpush2.msra.mxu0 0.0
        %1681 = vmatprep.subr.mxu0 0.0
        %1682 = vmatpush2.msra.mxu0 0.0
        %1683 = vmatprep.subr.mxu0 0.0
        %1684 = vmatpush2.msra.mxu0 0.0
        %1685 = vmatprep.subr.mxu0 0.0
        %1686 = vmatpush2.msra.mxu0 0.0
        %1687 = vmatprep.subr.mxu0 0.0
        %1688 = vmatpush2.msra.mxu0 0.0
        %1689 = vmatprep.subr.mxu0 0.0
        %1690 = vmatpush2.msra.mxu0 0.0
        %1691 = vmatprep.subr.mxu0 0.0
        %1692 = vmatpush2.msra.mxu0 0.0
        %1693 = vmatprep.subr.mxu0 0.0
        %1694 = vmatpush2.msra.mxu0 0.0
        %1695 = vmatprep.mubr.f32.mxu0 0.0
        %1696 = vmatmul.mubr.f32.gmra.mxu0 %v299
        %v1697 = vpop.f32.mrf.mxu0
        %v1698 = vadd.f32 %v1537, %v1697
        %v1699 = vpop.f32.mrf.mxu0
        %v1700 = vadd.f32 %v1539, %v1699
        %1701 = vmatprep.mubr.f32.mxu0 0.0
        %1702 = vmatmul.mubr.f32.gmra.mxu0 %v302
        %v1703 = vpop.f32.mrf.mxu0
        %v1704 = vadd.f32 %v1543, %v1703
        %v1705 = vpop.f32.mrf.mxu0
        %v1706 = vadd.f32 %v1545, %v1705
        %1707 = vmatprep.mubr.f32.mxu0 0.0
        %1708 = vmatmul.mubr.f32.gmra.mxu0 %v305
        %v1709 = vpop.f32.mrf.mxu0
        %v1710 = vadd.f32 %v1549, %v1709
        %v1711 = vpop.f32.mrf.mxu0
        %v1712 = vadd.f32 %v1551, %v1711
        %1713 = vmatprep.mubr.f32.mxu0 0.0
        %1714 = vmatmul.mubr.f32.gmra.mxu0 %v308
        %v1715 = vpop.f32.mrf.mxu0
        %v1716 = vadd.f32 %v1555, %v1715
        %v1717 = vpop.f32.mrf.mxu0
        %v1718 = vadd.f32 %v1557, %v1717
        %1719 = vmatprep.mubr.f32.mxu0 0.0
        %1720 = vmatmul.mubr.f32.gmra.mxu0 %v311
        %v1721 = vpop.f32.mrf.mxu0
        %v1722 = vadd.f32 %v1561, %v1721
        %v1723 = vpop.f32.mrf.mxu0
        %v1724 = vadd.f32 %v1563, %v1723
        %1725 = vmatprep.mubr.f32.mxu0 0.0
        %1726 = vmatmul.mubr.f32.gmra.mxu0 %v314
        %v1727 = vpop.f32.mrf.mxu0
        %v1728 = vadd.f32 %v1567, %v1727
        %v1729 = vpop.f32.mrf.mxu0
        %v1730 = vadd.f32 %v1569, %v1729
        %1731 = vmatprep.mubr.f32.mxu0 0.0
        %1732 = vmatmul.mubr.f32.gmra.mxu0 %v317
        %v1733 = vpop.f32.mrf.mxu0
        %v1734 = vadd.f32 %v1573, %v1733
        %v1735 = vpop.f32.mrf.mxu0
        %v1736 = vadd.f32 %v1575, %v1735
        %1737 = vmatprep.mubr.f32.mxu0 0.0
        %1738 = vmatmul.mubr.f32.gmra.mxu0 %v320
        %v1739 = vpop.f32.mrf.mxu0
        %v1740 = vadd.f32 %v1579, %v1739
        %v1741 = vpop.f32.mrf.mxu0
        %v1742 = vadd.f32 %v1581, %v1741
        %1743 = vmatprep.mubr.f32.mxu0 0.0
        %1744 = vmatmul.mubr.f32.gmra.mxu0 %v323
        %v1745 = vpop.f32.mrf.mxu0
        %v1746 = vadd.f32 %v1585, %v1745
        %v1747 = vpop.f32.mrf.mxu0
        %v1748 = vadd.f32 %v1587, %v1747
        %1749 = vmatprep.mubr.f32.mxu0 0.0
        %1750 = vmatmul.mubr.f32.gmra.mxu0 %v326
        %v1751 = vpop.f32.mrf.mxu0
        %v1752 = vadd.f32 %v1591, %v1751
        %v1753 = vpop.f32.mrf.mxu0
        %v1754 = vadd.f32 %v1593, %v1753
        %1755 = vmatprep.mubr.f32.mxu0 0.0
        %1756 = vmatmul.mubr.f32.gmra.mxu0 %v329
        %v1757 = vpop.f32.mrf.mxu0
        %v1758 = vadd.f32 %v1597, %v1757
        %v1759 = vpop.f32.mrf.mxu0
        %v1760 = vadd.f32 %v1599, %v1759
        %1761 = vmatprep.mubr.f32.mxu0 0.0
        %1762 = vmatmul.mubr.f32.gmra.mxu0 %v332
        %v1763 = vpop.f32.mrf.mxu0
        %v1764 = vadd.f32 %v1603, %v1763
        %v1765 = vpop.f32.mrf.mxu0
        %v1766 = vadd.f32 %v1605, %v1765
        %1767 = vmatprep.mubr.f32.mxu0 0.0
        %1768 = vmatmul.mubr.f32.gmra.mxu0 %v335
        %v1769 = vpop.f32.mrf.mxu0
        %v1770 = vadd.f32 %v1609, %v1769
        %v1771 = vpop.f32.mrf.mxu0
        %v1772 = vadd.f32 %v1611, %v1771
        %1773 = vmatprep.mubr.f32.mxu0 0.0
        %1774 = vmatmul.mubr.f32.gmra.mxu0 %v338
        %v1775 = vpop.f32.mrf.mxu0
        %v1776 = vadd.f32 %v1615, %v1775
        %v1777 = vpop.f32.mrf.mxu0
        %v1778 = vadd.f32 %v1617, %v1777
        %1779 = vmatprep.mubr.f32.mxu0 0.0
        %1780 = vmatmul.mubr.f32.gmra.mxu0 %v341
        %v1781 = vpop.f32.mrf.mxu0
        %v1782 = vadd.f32 %v1621, %v1781
        %v1783 = vpop.f32.mrf.mxu0
        %v1784 = vadd.f32 %v1623, %v1783
        %1785 = vmatprep.mubr.f32.mxu0 0.0
        %1786 = vmatmul.mubr.f32.gmra.mxu0 %v344
        %v1787 = vpop.f32.mrf.mxu0
        %v1788 = vadd.f32 %v1627, %v1787
        %v1789 = vpop.f32.mrf.mxu0
        %v1790 = vadd.f32 %v1629, %v1789
        %1791 = vdwg.mxu0
        %1792 = vmatprep.subr.mxu0 %v487
        %1793 = vmatpush1.msra.mxu0 %v486
        %1794 = vmatprep.subr.mxu0 %v478
        %1795 = vmatpush1.msra.mxu0 %v477
        %1796 = vmatprep.subr.mxu0 %v469
        %1797 = vmatpush1.msra.mxu0 %v468
        %1798 = vmatprep.subr.mxu0 %v460
        %1799 = vmatpush1.msra.mxu0 %v459
        %1800 = vmatprep.subr.mxu0 %v451
        %1801 = vmatpush1.msra.mxu0 %v450
        %1802 = vmatprep.subr.mxu0 %v442
        %1803 = vmatpush1.msra.mxu0 %v441
        %1804 = vmatprep.subr.mxu0 %v433
        %1805 = vmatpush1.msra.mxu0 %v432
        %1806 = vmatprep.subr.mxu0 %v424
        %1807 = vmatpush1.msra.mxu0 %v423
        %1808 = vmatprep.subr.mxu0 %v415
        %1809 = vmatpush1.msra.mxu0 %v414
        %1810 = vmatprep.subr.mxu0 %v406
        %1811 = vmatpush1.msra.mxu0 %v405
        %1812 = vmatprep.subr.mxu0 %v397
        %1813 = vmatpush1.msra.mxu0 %v396
        %1814 = vmatprep.subr.mxu0 %v388
        %1815 = vmatpush1.msra.mxu0 %v387
        %1816 = vmatprep.subr.mxu0 %v379
        %1817 = vmatpush1.msra.mxu0 %v378
        %1818 = vmatprep.subr.mxu0 %v370
        %1819 = vmatpush1.msra.mxu0 %v369
        %1820 = vmatprep.subr.mxu0 %v361
        %1821 = vmatpush1.msra.mxu0 %v360
        %1822 = vmatprep.subr.mxu0 %v352
        %1823 = vmatpush1.msra.mxu0 %v351
        %1824 = vmatprep.subr.mxu0 %v631
        %1825 = vmatpush2.msra.mxu0 %v630
        %1826 = vmatprep.subr.mxu0 %v622
        %1827 = vmatpush2.msra.mxu0 %v621
        %1828 = vmatprep.subr.mxu0 %v613
        %1829 = vmatpush2.msra.mxu0 %v612
        %1830 = vmatprep.subr.mxu0 %v604
        %1831 = vmatpush2.msra.mxu0 %v603
        %1832 = vmatprep.subr.mxu0 %v595
        %1833 = vmatpush2.msra.mxu0 %v594
        %1834 = vmatprep.subr.mxu0 %v586
        %1835 = vmatpush2.msra.mxu0 %v585
        %1836 = vmatprep.subr.mxu0 %v577
        %1837 = vmatpush2.msra.mxu0 %v576
        %1838 = vmatprep.subr.mxu0 %v568
        %1839 = vmatpush2.msra.mxu0 %v567
        %1840 = vmatprep.subr.mxu0 %v559
        %1841 = vmatpush2.msra.mxu0 %v558
        %1842 = vmatprep.subr.mxu0 %v550
        %1843 = vmatpush2.msra.mxu0 %v549
        %1844 = vmatprep.subr.mxu0 %v541
        %1845 = vmatpush2.msra.mxu0 %v540
        %1846 = vmatprep.subr.mxu0 %v532
        %1847 = vmatpush2.msra.mxu0 %v531
        %1848 = vmatprep.subr.mxu0 %v523
        %1849 = vmatpush2.msra.mxu0 %v522
        %1850 = vmatprep.subr.mxu0 %v514
        %1851 = vmatpush2.msra.mxu0 %v513
        %1852 = vmatprep.subr.mxu0 %v505
        %1853 = vmatpush2.msra.mxu0 %v504
        %1854 = vmatprep.subr.mxu0 %v496
        %1855 = vmatpush2.msra.mxu0 %v495
        %1856 = vmatprep.mubr.f32.mxu0 %v298
        %1857 = vmatmul.mubr.f32.gmra.mxu0 %v297
        %v1858 = vpop.f32.mrf.mxu0
        %v1859 = vadd.f32 %v808, %v1858
        %v1860 = vpop.f32.mrf.mxu0
        %v1861 = vadd.f32 %v812, %v1860
        %1862 = vmatprep.mubr.f32.mxu0 %v301
        %1863 = vmatmul.mubr.f32.gmra.mxu0 %v300
        %v1864 = vpop.f32.mrf.mxu0
        %v1865 = vadd.f32 %v808, %v1864
        %v1866 = vpop.f32.mrf.mxu0
        %v1867 = vadd.f32 %v812, %v1866
        %1868 = vmatprep.mubr.f32.mxu0 %v304
        %1869 = vmatmul.mubr.f32.gmra.mxu0 %v303
        %v1870 = vpop.f32.mrf.mxu0
        %v1871 = vadd.f32 %v808, %v1870
        %v1872 = vpop.f32.mrf.mxu0
        %v1873 = vadd.f32 %v812, %v1872
        %1874 = vmatprep.mubr.f32.mxu0 %v307
        %1875 = vmatmul.mubr.f32.gmra.mxu0 %v306
        %v1876 = vpop.f32.mrf.mxu0
        %v1877 = vadd.f32 %v808, %v1876
        %v1878 = vpop.f32.mrf.mxu0
        %v1879 = vadd.f32 %v812, %v1878
        %1880 = vmatprep.mubr.f32.mxu0 %v310
        %1881 = vmatmul.mubr.f32.gmra.mxu0 %v309
        %v1882 = vpop.f32.mrf.mxu0
        %v1883 = vadd.f32 %v808, %v1882
        %v1884 = vpop.f32.mrf.mxu0
        %v1885 = vadd.f32 %v812, %v1884
        %1886 = vmatprep.mubr.f32.mxu0 %v313
        %1887 = vmatmul.mubr.f32.gmra.mxu0 %v312
        %v1888 = vpop.f32.mrf.mxu0
        %v1889 = vadd.f32 %v808, %v1888
        %v1890 = vpop.f32.mrf.mxu0
        %v1891 = vadd.f32 %v812, %v1890
        %1892 = vmatprep.mubr.f32.mxu0 %v316
        %1893 = vmatmul.mubr.f32.gmra.mxu0 %v315
        %v1894 = vpop.f32.mrf.mxu0
        %v1895 = vadd.f32 %v808, %v1894
        %v1896 = vpop.f32.mrf.mxu0
        %v1897 = vadd.f32 %v812, %v1896
        %1898 = vmatprep.mubr.f32.mxu0 %v319
        %1899 = vmatmul.mubr.f32.gmra.mxu0 %v318
        %v1900 = vpop.f32.mrf.mxu0
        %v1901 = vadd.f32 %v808, %v1900
        %v1902 = vpop.f32.mrf.mxu0
        %v1903 = vadd.f32 %v812, %v1902
        %1904 = vmatprep.mubr.f32.mxu0 %v322
        %1905 = vmatmul.mubr.f32.gmra.mxu0 %v321
        %v1906 = vpop.f32.mrf.mxu0
        %v1907 = vadd.f32 %v808, %v1906
        %v1908 = vpop.f32.mrf.mxu0
        %v1909 = vadd.f32 %v812, %v1908
        %1910 = vmatprep.mubr.f32.mxu0 %v325
        %1911 = vmatmul.mubr.f32.gmra.mxu0 %v324
        %v1912 = vpop.f32.mrf.mxu0
        %v1913 = vadd.f32 %v808, %v1912
        %v1914 = vpop.f32.mrf.mxu0
        %v1915 = vadd.f32 %v812, %v1914
        %1916 = vmatprep.mubr.f32.mxu0 %v328
        %1917 = vmatmul.mubr.f32.gmra.mxu0 %v327
        %v1918 = vpop.f32.mrf.mxu0
        %v1919 = vadd.f32 %v808, %v1918
        %v1920 = vpop.f32.mrf.mxu0
        %v1921 = vadd.f32 %v812, %v1920
        %1922 = vmatprep.mubr.f32.mxu0 %v331
        %1923 = vmatmul.mubr.f32.gmra.mxu0 %v330
        %v1924 = vpop.f32.mrf.mxu0
        %v1925 = vadd.f32 %v808, %v1924
        %v1926 = vpop.f32.mrf.mxu0
        %v1927 = vadd.f32 %v812, %v1926
        %1928 = vmatprep.mubr.f32.mxu0 %v334
        %1929 = vmatmul.mubr.f32.gmra.mxu0 %v333
        %v1930 = vpop.f32.mrf.mxu0
        %v1931 = vadd.f32 %v808, %v1930
        %v1932 = vpop.f32.mrf.mxu0
        %v1933 = vadd.f32 %v812, %v1932
        %1934 = vmatprep.mubr.f32.mxu0 %v337
        %1935 = vmatmul.mubr.f32.gmra.mxu0 %v336
        %v1936 = vpop.f32.mrf.mxu0
        %v1937 = vadd.f32 %v808, %v1936
        %v1938 = vpop.f32.mrf.mxu0
        %v1939 = vadd.f32 %v812, %v1938
        %1940 = vmatprep.mubr.f32.mxu0 %v340
        %1941 = vmatmul.mubr.f32.gmra.mxu0 %v339
        %v1942 = vpop.f32.mrf.mxu0
        %v1943 = vadd.f32 %v808, %v1942
        %v1944 = vpop.f32.mrf.mxu0
        %v1945 = vadd.f32 %v812, %v1944
        %1946 = vmatprep.mubr.f32.mxu0 %v343
        %1947 = vmatmul.mubr.f32.gmra.mxu0 %v342
        %v1948 = vpop.f32.mrf.mxu0
        %v1949 = vadd.f32 %v808, %v1948
        %v1950 = vpop.f32.mrf.mxu0
        %v1951 = vadd.f32 %v812, %v1950
        %1952 = vdwg.mxu0
        %1953 = vmatprep.subr.mxu0 %v775
        %1954 = vmatpush1.msra.mxu0 %v774
        %1955 = vmatprep.subr.mxu0 %v766
        %1956 = vmatpush1.msra.mxu0 %v765
        %1957 = vmatprep.subr.mxu0 %v757
        %1958 = vmatpush1.msra.mxu0 %v756
        %1959 = vmatprep.subr.mxu0 %v748
        %1960 = vmatpush1.msra.mxu0 %v747
        %1961 = vmatprep.subr.mxu0 %v739
        %1962 = vmatpush1.msra.mxu0 %v738
        %1963 = vmatprep.subr.mxu0 %v730
        %1964 = vmatpush1.msra.mxu0 %v729
        %1965 = vmatprep.subr.mxu0 %v721
        %1966 = vmatpush1.msra.mxu0 %v720
        %1967 = vmatprep.subr.mxu0 %v712
        %1968 = vmatpush1.msra.mxu0 %v711
        %1969 = vmatprep.subr.mxu0 %v703
        %1970 = vmatpush1.msra.mxu0 %v702
        %1971 = vmatprep.subr.mxu0 %v694
        %1972 = vmatpush1.msra.mxu0 %v693
        %1973 = vmatprep.subr.mxu0 %v685
        %1974 = vmatpush1.msra.mxu0 %v684
        %1975 = vmatprep.subr.mxu0 %v676
        %1976 = vmatpush1.msra.mxu0 %v675
        %1977 = vmatprep.subr.mxu0 %v667
        %1978 = vmatpush1.msra.mxu0 %v666
        %1979 = vmatprep.subr.mxu0 %v658
        %1980 = vmatpush1.msra.mxu0 %v657
        %1981 = vmatprep.subr.mxu0 %v649
        %1982 = vmatpush1.msra.mxu0 %v648
        %1983 = vmatprep.subr.mxu0 %v640
        %1984 = vmatpush1.msra.mxu0 %v639
        %1985 = vmatprep.subr.mxu0 0.0
        %1986 = vmatpush2.msra.mxu0 0.0
        %1987 = vmatprep.subr.mxu0 0.0
        %1988 = vmatpush2.msra.mxu0 0.0
        %1989 = vmatprep.subr.mxu0 0.0
        %1990 = vmatpush2.msra.mxu0 0.0
        %1991 = vmatprep.subr.mxu0 0.0
        %1992 = vmatpush2.msra.mxu0 0.0
        %1993 = vmatprep.subr.mxu0 0.0
        %1994 = vmatpush2.msra.mxu0 0.0
        %1995 = vmatprep.subr.mxu0 0.0
        %1996 = vmatpush2.msra.mxu0 0.0
        %1997 = vmatprep.subr.mxu0 0.0
        %1998 = vmatpush2.msra.mxu0 0.0
        %1999 = vmatprep.subr.mxu0 0.0
        %2000 = vmatpush2.msra.mxu0 0.0
        %2001 = vmatprep.subr.mxu0 0.0
        %2002 = vmatpush2.msra.mxu0 0.0
        %2003 = vmatprep.subr.mxu0 0.0
        %2004 = vmatpush2.msra.mxu0 0.0
        %2005 = vmatprep.subr.mxu0 0.0
        %2006 = vmatpush2.msra.mxu0 0.0
        %2007 = vmatprep.subr.mxu0 0.0
        %2008 = vmatpush2.msra.mxu0 0.0
        %2009 = vmatprep.subr.mxu0 0.0
        %2010 = vmatpush2.msra.mxu0 0.0
        %2011 = vmatprep.subr.mxu0 0.0
        %2012 = vmatpush2.msra.mxu0 0.0
        %2013 = vmatprep.subr.mxu0 0.0
        %2014 = vmatpush2.msra.mxu0 0.0
        %2015 = vmatprep.subr.mxu0 0.0
        %2016 = vmatpush2.msra.mxu0 0.0
        %2017 = vmatprep.mubr.f32.mxu0 0.0
        %2018 = vmatmul.mubr.f32.gmra.mxu0 %v299
        %v2019 = vpop.f32.mrf.mxu0
        %v2020 = vadd.f32 %v1859, %v2019
        %v2021 = vpop.f32.mrf.mxu0
        %v2022 = vadd.f32 %v1861, %v2021
        %2023 = vmatprep.mubr.f32.mxu0 0.0
        %2024 = vmatmul.mubr.f32.gmra.mxu0 %v302
        %v2025 = vpop.f32.mrf.mxu0
        %v2026 = vadd.f32 %v1865, %v2025
        %v2027 = vpop.f32.mrf.mxu0
        %v2028 = vadd.f32 %v1867, %v2027
        %2029 = vmatprep.mubr.f32.mxu0 0.0
        %2030 = vmatmul.mubr.f32.gmra.mxu0 %v305
        %v2031 = vpop.f32.mrf.mxu0
        %v2032 = vadd.f32 %v1871, %v2031
        %v2033 = vpop.f32.mrf.mxu0
        %v2034 = vadd.f32 %v1873, %v2033
        %2035 = vmatprep.mubr.f32.mxu0 0.0
        %2036 = vmatmul.mubr.f32.gmra.mxu0 %v308
        %v2037 = vpop.f32.mrf.mxu0
        %v2038 = vadd.f32 %v1877, %v2037
        %v2039 = vpop.f32.mrf.mxu0
        %v2040 = vadd.f32 %v1879, %v2039
        %2041 = vmatprep.mubr.f32.mxu0 0.0
        %2042 = vmatmul.mubr.f32.gmra.mxu0 %v311
        %v2043 = vpop.f32.mrf.mxu0
        %v2044 = vadd.f32 %v1883, %v2043
        %v2045 = vpop.f32.mrf.mxu0
        %v2046 = vadd.f32 %v1885, %v2045
        %2047 = vmatprep.mubr.f32.mxu0 0.0
        %2048 = vmatmul.mubr.f32.gmra.mxu0 %v314
        %v2049 = vpop.f32.mrf.mxu0
        %v2050 = vadd.f32 %v1889, %v2049
        %v2051 = vpop.f32.mrf.mxu0
        %v2052 = vadd.f32 %v1891, %v2051
        %2053 = vmatprep.mubr.f32.mxu0 0.0
        %2054 = vmatmul.mubr.f32.gmra.mxu0 %v317
        %v2055 = vpop.f32.mrf.mxu0
        %v2056 = vadd.f32 %v1895, %v2055
        %v2057 = vpop.f32.mrf.mxu0
        %v2058 = vadd.f32 %v1897, %v2057
        %2059 = vmatprep.mubr.f32.mxu0 0.0
        %2060 = vmatmul.mubr.f32.gmra.mxu0 %v320
        %v2061 = vpop.f32.mrf.mxu0
        %v2062 = vadd.f32 %v1901, %v2061
        %v2063 = vpop.f32.mrf.mxu0
        %v2064 = vadd.f32 %v1903, %v2063
        %2065 = vmatprep.mubr.f32.mxu0 0.0
        %2066 = vmatmul.mubr.f32.gmra.mxu0 %v323
        %v2067 = vpop.f32.mrf.mxu0
        %v2068 = vadd.f32 %v1907, %v2067
        %v2069 = vpop.f32.mrf.mxu0
        %v2070 = vadd.f32 %v1909, %v2069
        %2071 = vmatprep.mubr.f32.mxu0 0.0
        %2072 = vmatmul.mubr.f32.gmra.mxu0 %v326
        %v2073 = vpop.f32.mrf.mxu0
        %v2074 = vadd.f32 %v1913, %v2073
        %v2075 = vpop.f32.mrf.mxu0
        %v2076 = vadd.f32 %v1915, %v2075
        %2077 = vmatprep.mubr.f32.mxu0 0.0
        %2078 = vmatmul.mubr.f32.gmra.mxu0 %v329
        %v2079 = vpop.f32.mrf.mxu0
        %v2080 = vadd.f32 %v1919, %v2079
        %v2081 = vpop.f32.mrf.mxu0
        %v2082 = vadd.f32 %v1921, %v2081
        %2083 = vmatprep.mubr.f32.mxu0 0.0
        %2084 = vmatmul.mubr.f32.gmra.mxu0 %v332
        %v2085 = vpop.f32.mrf.mxu0
        %v2086 = vadd.f32 %v1925, %v2085
        %v2087 = vpop.f32.mrf.mxu0
        %v2088 = vadd.f32 %v1927, %v2087
        %2089 = vmatprep.mubr.f32.mxu0 0.0
        %2090 = vmatmul.mubr.f32.gmra.mxu0 %v335
        %v2091 = vpop.f32.mrf.mxu0
        %v2092 = vadd.f32 %v1931, %v2091
        %v2093 = vpop.f32.mrf.mxu0
        %v2094 = vadd.f32 %v1933, %v2093
        %2095 = vmatprep.mubr.f32.mxu0 0.0
        %2096 = vmatmul.mubr.f32.gmra.mxu0 %v338
        %v2097 = vpop.f32.mrf.mxu0
        %v2098 = vadd.f32 %v1937, %v2097
        %v2099 = vpop.f32.mrf.mxu0
        %v2100 = vadd.f32 %v1939, %v2099
        %2101 = vmatprep.mubr.f32.mxu0 0.0
        %2102 = vmatmul.mubr.f32.gmra.mxu0 %v341
        %v2103 = vpop.f32.mrf.mxu0
        %v2104 = vadd.f32 %v1943, %v2103
        %v2105 = vpop.f32.mrf.mxu0
        %v2106 = vadd.f32 %v1945, %v2105
        %2107 = vmatprep.mubr.f32.mxu0 0.0
        %2108 = vmatmul.mubr.f32.gmra.mxu0 %v344
        %v2109 = vpop.f32.mrf.mxu0
        %v2110 = vadd.f32 %v1949, %v2109
        %v2111 = vpop.f32.mrf.mxu0
        %v2112 = vadd.f32 %v1951, %v2111
        %2113 = vdwg.mxu0
        %2114 = vmatprep.subr.mxu0 0.0
        %2115 = vmatpush1.msra.mxu0 %v488
        %2116 = vmatprep.subr.mxu0 0.0
        %2117 = vmatpush1.msra.mxu0 %v479
        %2118 = vmatprep.subr.mxu0 0.0
        %2119 = vmatpush1.msra.mxu0 %v470
        %2120 = vmatprep.subr.mxu0 0.0
        %2121 = vmatpush1.msra.mxu0 %v461
        %2122 = vmatprep.subr.mxu0 0.0
        %2123 = vmatpush1.msra.mxu0 %v452
        %2124 = vmatprep.subr.mxu0 0.0
        %2125 = vmatpush1.msra.mxu0 %v443
        %2126 = vmatprep.subr.mxu0 0.0
        %2127 = vmatpush1.msra.mxu0 %v434
        %2128 = vmatprep.subr.mxu0 0.0
        %2129 = vmatpush1.msra.mxu0 %v425
        %2130 = vmatprep.subr.mxu0 0.0
        %2131 = vmatpush1.msra.mxu0 %v416
        %2132 = vmatprep.subr.mxu0 0.0
        %2133 = vmatpush1.msra.mxu0 %v407
        %2134 = vmatprep.subr.mxu0 0.0
        %2135 = vmatpush1.msra.mxu0 %v398
        %2136 = vmatprep.subr.mxu0 0.0
        %2137 = vmatpush1.msra.mxu0 %v389
        %2138 = vmatprep.subr.mxu0 0.0
        %2139 = vmatpush1.msra.mxu0 %v380
        %2140 = vmatprep.subr.mxu0 0.0
        %2141 = vmatpush1.msra.mxu0 %v371
        %2142 = vmatprep.subr.mxu0 0.0
        %2143 = vmatpush1.msra.mxu0 %v362
        %2144 = vmatprep.subr.mxu0 0.0
        %2145 = vmatpush1.msra.mxu0 %v353
        %2146 = vmatprep.subr.mxu0 0.0
        %2147 = vmatpush2.msra.mxu0 %v632
        %2148 = vmatprep.subr.mxu0 0.0
        %2149 = vmatpush2.msra.mxu0 %v623
        %2150 = vmatprep.subr.mxu0 0.0
        %2151 = vmatpush2.msra.mxu0 %v614
        %2152 = vmatprep.subr.mxu0 0.0
        %2153 = vmatpush2.msra.mxu0 %v605
        %2154 = vmatprep.subr.mxu0 0.0
        %2155 = vmatpush2.msra.mxu0 %v596
        %2156 = vmatprep.subr.mxu0 0.0
        %2157 = vmatpush2.msra.mxu0 %v587
        %2158 = vmatprep.subr.mxu0 0.0
        %2159 = vmatpush2.msra.mxu0 %v578
        %2160 = vmatprep.subr.mxu0 0.0
        %2161 = vmatpush2.msra.mxu0 %v569
        %2162 = vmatprep.subr.mxu0 0.0
        %2163 = vmatpush2.msra.mxu0 %v560
        %2164 = vmatprep.subr.mxu0 0.0
        %2165 = vmatpush2.msra.mxu0 %v551
        %2166 = vmatprep.subr.mxu0 0.0
        %2167 = vmatpush2.msra.mxu0 %v542
        %2168 = vmatprep.subr.mxu0 0.0
        %2169 = vmatpush2.msra.mxu0 %v533
        %2170 = vmatprep.subr.mxu0 0.0
        %2171 = vmatpush2.msra.mxu0 %v524
        %2172 = vmatprep.subr.mxu0 0.0
        %2173 = vmatpush2.msra.mxu0 %v515
        %2174 = vmatprep.subr.mxu0 0.0
        %2175 = vmatpush2.msra.mxu0 %v506
        %2176 = vmatprep.subr.mxu0 0.0
        %2177 = vmatpush2.msra.mxu0 %v497
        %2178 = vmatprep.mubr.f32.mxu0 %v298
        %2179 = vmatmul.mubr.f32.gmra.mxu0 %v297
        %v2180 = vpop.f32.mrf.mxu0
        %v2181 = vadd.f32 %v816, %v2180
        %v2182 = vpop.f32.mrf.mxu0
        %2183 = vmatprep.mubr.f32.mxu0 %v301
        %2184 = vmatmul.mubr.f32.gmra.mxu0 %v300
        %v2185 = vpop.f32.mrf.mxu0
        %v2186 = vadd.f32 %v816, %v2185
        %v2187 = vpop.f32.mrf.mxu0
        %2188 = vmatprep.mubr.f32.mxu0 %v304
        %2189 = vmatmul.mubr.f32.gmra.mxu0 %v303
        %v2190 = vpop.f32.mrf.mxu0
        %v2191 = vadd.f32 %v816, %v2190
        %v2192 = vpop.f32.mrf.mxu0
        %2193 = vmatprep.mubr.f32.mxu0 %v307
        %2194 = vmatmul.mubr.f32.gmra.mxu0 %v306
        %v2195 = vpop.f32.mrf.mxu0
        %v2196 = vadd.f32 %v816, %v2195
        %v2197 = vpop.f32.mrf.mxu0
        %2198 = vmatprep.mubr.f32.mxu0 %v310
        %2199 = vmatmul.mubr.f32.gmra.mxu0 %v309
        %v2200 = vpop.f32.mrf.mxu0
        %v2201 = vadd.f32 %v816, %v2200
        %v2202 = vpop.f32.mrf.mxu0
        %2203 = vmatprep.mubr.f32.mxu0 %v313
        %2204 = vmatmul.mubr.f32.gmra.mxu0 %v312
        %v2205 = vpop.f32.mrf.mxu0
        %v2206 = vadd.f32 %v816, %v2205
        %v2207 = vpop.f32.mrf.mxu0
        %2208 = vmatprep.mubr.f32.mxu0 %v316
        %2209 = vmatmul.mubr.f32.gmra.mxu0 %v315
        %v2210 = vpop.f32.mrf.mxu0
        %v2211 = vadd.f32 %v816, %v2210
        %v2212 = vpop.f32.mrf.mxu0
        %2213 = vmatprep.mubr.f32.mxu0 %v319
        %2214 = vmatmul.mubr.f32.gmra.mxu0 %v318
        %v2215 = vpop.f32.mrf.mxu0
        %v2216 = vadd.f32 %v816, %v2215
        %v2217 = vpop.f32.mrf.mxu0
        %2218 = vmatprep.mubr.f32.mxu0 %v322
        %2219 = vmatmul.mubr.f32.gmra.mxu0 %v321
        %v2220 = vpop.f32.mrf.mxu0
        %v2221 = vadd.f32 %v816, %v2220
        %v2222 = vpop.f32.mrf.mxu0
        %2223 = vmatprep.mubr.f32.mxu0 %v325
        %2224 = vmatmul.mubr.f32.gmra.mxu0 %v324
        %v2225 = vpop.f32.mrf.mxu0
        %v2226 = vadd.f32 %v816, %v2225
        %v2227 = vpop.f32.mrf.mxu0
        %2228 = vmatprep.mubr.f32.mxu0 %v328
        %2229 = vmatmul.mubr.f32.gmra.mxu0 %v327
        %v2230 = vpop.f32.mrf.mxu0
        %v2231 = vadd.f32 %v816, %v2230
        %v2232 = vpop.f32.mrf.mxu0
        %2233 = vmatprep.mubr.f32.mxu0 %v331
        %2234 = vmatmul.mubr.f32.gmra.mxu0 %v330
        %v2235 = vpop.f32.mrf.mxu0
        %v2236 = vadd.f32 %v816, %v2235
        %v2237 = vpop.f32.mrf.mxu0
        %2238 = vmatprep.mubr.f32.mxu0 %v334
        %2239 = vmatmul.mubr.f32.gmra.mxu0 %v333
        %v2240 = vpop.f32.mrf.mxu0
        %v2241 = vadd.f32 %v816, %v2240
        %v2242 = vpop.f32.mrf.mxu0
        %2243 = vmatprep.mubr.f32.mxu0 %v337
        %2244 = vmatmul.mubr.f32.gmra.mxu0 %v336
        %v2245 = vpop.f32.mrf.mxu0
        %v2246 = vadd.f32 %v816, %v2245
        %v2247 = vpop.f32.mrf.mxu0
        %2248 = vmatprep.mubr.f32.mxu0 %v340
        %2249 = vmatmul.mubr.f32.gmra.mxu0 %v339
        %v2250 = vpop.f32.mrf.mxu0
        %v2251 = vadd.f32 %v816, %v2250
        %v2252 = vpop.f32.mrf.mxu0
        %2253 = vmatprep.mubr.f32.mxu0 %v343
        %2254 = vmatmul.mubr.f32.gmra.mxu0 %v342
        %v2255 = vpop.f32.mrf.mxu0
        %v2256 = vadd.f32 %v816, %v2255
        %v2257 = vpop.f32.mrf.mxu0
        %2258 = vdwg.mxu0
        %2259 = vmatprep.subr.mxu0 0.0
        %2260 = vmatpush1.msra.mxu0 %v776
        %2261 = vmatprep.subr.mxu0 0.0
        %2262 = vmatpush1.msra.mxu0 %v767
        %2263 = vmatprep.subr.mxu0 0.0
        %2264 = vmatpush1.msra.mxu0 %v758
        %2265 = vmatprep.subr.mxu0 0.0
        %2266 = vmatpush1.msra.mxu0 %v749
        %2267 = vmatprep.subr.mxu0 0.0
        %2268 = vmatpush1.msra.mxu0 %v740
        %2269 = vmatprep.subr.mxu0 0.0
        %2270 = vmatpush1.msra.mxu0 %v731
        %2271 = vmatprep.subr.mxu0 0.0
        %2272 = vmatpush1.msra.mxu0 %v722
        %2273 = vmatprep.subr.mxu0 0.0
        %2274 = vmatpush1.msra.mxu0 %v713
        %2275 = vmatprep.subr.mxu0 0.0
        %2276 = vmatpush1.msra.mxu0 %v704
        %2277 = vmatprep.subr.mxu0 0.0
        %2278 = vmatpush1.msra.mxu0 %v695
        %2279 = vmatprep.subr.mxu0 0.0
        %2280 = vmatpush1.msra.mxu0 %v686
        %2281 = vmatprep.subr.mxu0 0.0
        %2282 = vmatpush1.msra.mxu0 %v677
        %2283 = vmatprep.subr.mxu0 0.0
        %2284 = vmatpush1.msra.mxu0 %v668
        %2285 = vmatprep.subr.mxu0 0.0
        %2286 = vmatpush1.msra.mxu0 %v659
        %2287 = vmatprep.subr.mxu0 0.0
        %2288 = vmatpush1.msra.mxu0 %v650
        %2289 = vmatprep.subr.mxu0 0.0
        %2290 = vmatpush1.msra.mxu0 %v641
        %2291 = vmatprep.subr.mxu0 0.0
        %2292 = vmatpush2.msra.mxu0 0.0
        %2293 = vmatprep.subr.mxu0 0.0
        %2294 = vmatpush2.msra.mxu0 0.0
        %2295 = vmatprep.subr.mxu0 0.0
        %2296 = vmatpush2.msra.mxu0 0.0
        %2297 = vmatprep.subr.mxu0 0.0
        %2298 = vmatpush2.msra.mxu0 0.0
        %2299 = vmatprep.subr.mxu0 0.0
        %2300 = vmatpush2.msra.mxu0 0.0
        %2301 = vmatprep.subr.mxu0 0.0
        %2302 = vmatpush2.msra.mxu0 0.0
        %2303 = vmatprep.subr.mxu0 0.0
        %2304 = vmatpush2.msra.mxu0 0.0
        %2305 = vmatprep.subr.mxu0 0.0
        %2306 = vmatpush2.msra.mxu0 0.0
        %2307 = vmatprep.subr.mxu0 0.0
        %2308 = vmatpush2.msra.mxu0 0.0
        %2309 = vmatprep.subr.mxu0 0.0
        %2310 = vmatpush2.msra.mxu0 0.0
        %2311 = vmatprep.subr.mxu0 0.0
        %2312 = vmatpush2.msra.mxu0 0.0
        %2313 = vmatprep.subr.mxu0 0.0
        %2314 = vmatpush2.msra.mxu0 0.0
        %2315 = vmatprep.subr.mxu0 0.0
        %2316 = vmatpush2.msra.mxu0 0.0
        %2317 = vmatprep.subr.mxu0 0.0
        %2318 = vmatpush2.msra.mxu0 0.0
        %2319 = vmatprep.subr.mxu0 0.0
        %2320 = vmatpush2.msra.mxu0 0.0
        %2321 = vmatprep.subr.mxu0 0.0
        %2322 = vmatpush2.msra.mxu0 0.0
        %2323 = vmatprep.mubr.f32.mxu0 0.0
        %2324 = vmatmul.mubr.f32.gmra.mxu0 %v299
        %v2325 = vpop.f32.mrf.mxu0
        %v2326 = vadd.f32 %v2181, %v2325
        %v2327 = vpop.f32.mrf.mxu0
        %2328 = vmatprep.mubr.f32.mxu0 0.0
        %2329 = vmatmul.mubr.f32.gmra.mxu0 %v302
        %v2330 = vpop.f32.mrf.mxu0
        %v2331 = vadd.f32 %v2186, %v2330
        %v2332 = vpop.f32.mrf.mxu0
        %2333 = vmatprep.mubr.f32.mxu0 0.0
        %2334 = vmatmul.mubr.f32.gmra.mxu0 %v305
        %v2335 = vpop.f32.mrf.mxu0
        %v2336 = vadd.f32 %v2191, %v2335
        %v2337 = vpop.f32.mrf.mxu0
        %2338 = vmatprep.mubr.f32.mxu0 0.0
        %2339 = vmatmul.mubr.f32.gmra.mxu0 %v308
        %v2340 = vpop.f32.mrf.mxu0
        %v2341 = vadd.f32 %v2196, %v2340
        %v2342 = vpop.f32.mrf.mxu0
        %2343 = vmatprep.mubr.f32.mxu0 0.0
        %2344 = vmatmul.mubr.f32.gmra.mxu0 %v311
        %v2345 = vpop.f32.mrf.mxu0
        %v2346 = vadd.f32 %v2201, %v2345
        %v2347 = vpop.f32.mrf.mxu0
        %2348 = vmatprep.mubr.f32.mxu0 0.0
        %2349 = vmatmul.mubr.f32.gmra.mxu0 %v314
        %v2350 = vpop.f32.mrf.mxu0
        %v2351 = vadd.f32 %v2206, %v2350
        %v2352 = vpop.f32.mrf.mxu0
        %2353 = vmatprep.mubr.f32.mxu0 0.0
        %2354 = vmatmul.mubr.f32.gmra.mxu0 %v317
        %v2355 = vpop.f32.mrf.mxu0
        %v2356 = vadd.f32 %v2211, %v2355
        %v2357 = vpop.f32.mrf.mxu0
        %2358 = vmatprep.mubr.f32.mxu0 0.0
        %2359 = vmatmul.mubr.f32.gmra.mxu0 %v320
        %v2360 = vpop.f32.mrf.mxu0
        %v2361 = vadd.f32 %v2216, %v2360
        %v2362 = vpop.f32.mrf.mxu0
        %2363 = vmatprep.mubr.f32.mxu0 0.0
        %2364 = vmatmul.mubr.f32.gmra.mxu0 %v323
        %v2365 = vpop.f32.mrf.mxu0
        %v2366 = vadd.f32 %v2221, %v2365
        %v2367 = vpop.f32.mrf.mxu0
        %2368 = vmatprep.mubr.f32.mxu0 0.0
        %2369 = vmatmul.mubr.f32.gmra.mxu0 %v326
        %v2370 = vpop.f32.mrf.mxu0
        %v2371 = vadd.f32 %v2226, %v2370
        %v2372 = vpop.f32.mrf.mxu0
        %2373 = vmatprep.mubr.f32.mxu0 0.0
        %2374 = vmatmul.mubr.f32.gmra.mxu0 %v329
        %v2375 = vpop.f32.mrf.mxu0
        %v2376 = vadd.f32 %v2231, %v2375
        %v2377 = vpop.f32.mrf.mxu0
        %2378 = vmatprep.mubr.f32.mxu0 0.0
        %2379 = vmatmul.mubr.f32.gmra.mxu0 %v332
        %v2380 = vpop.f32.mrf.mxu0
        %v2381 = vadd.f32 %v2236, %v2380
        %v2382 = vpop.f32.mrf.mxu0
        %2383 = vmatprep.mubr.f32.mxu0 0.0
        %2384 = vmatmul.mubr.f32.gmra.mxu0 %v335
        %v2385 = vpop.f32.mrf.mxu0
        %v2386 = vadd.f32 %v2241, %v2385
        %v2387 = vpop.f32.mrf.mxu0
        %2388 = vmatprep.mubr.f32.mxu0 0.0
        %2389 = vmatmul.mubr.f32.gmra.mxu0 %v338
        %v2390 = vpop.f32.mrf.mxu0
        %v2391 = vadd.f32 %v2246, %v2390
        %v2392 = vpop.f32.mrf.mxu0
        %2393 = vmatprep.mubr.f32.mxu0 0.0
        %2394 = vmatmul.mubr.f32.gmra.mxu0 %v341
        %v2395 = vpop.f32.mrf.mxu0
        %v2396 = vadd.f32 %v2251, %v2395
        %v2397 = vpop.f32.mrf.mxu0
        %2398 = vmatprep.mubr.f32.mxu0 0.0
        %2399 = vmatmul.mubr.f32.gmra.mxu0 %v344
        %v2400 = vpop.f32.mrf.mxu0
        %v2401 = vadd.f32 %v2256, %v2400
        %v2402 = vpop.f32.mrf.mxu0
        %2403 = vdwg.mxu0
        %v2404 = vmul.f32 %v1054, 0.17677669
        %v2405 = vmul.f32 %v1056, 0.17677669
        %v2406 = vmul.f32 %v1376, 0.17677669
        %v2407 = vmul.f32 %v1060, 0.17677669
        %v2408 = vmul.f32 %v1062, 0.17677669
        %v2409 = vmul.f32 %v1382, 0.17677669
        %v2410 = vmul.f32 %v1066, 0.17677669
        %v2411 = vmul.f32 %v1068, 0.17677669
        %v2412 = vmul.f32 %v1388, 0.17677669
        %v2413 = vmul.f32 %v1072, 0.17677669
        %v2414 = vmul.f32 %v1074, 0.17677669
        %v2415 = vmul.f32 %v1394, 0.17677669
        %v2416 = vmul.f32 %v1078, 0.17677669
        %v2417 = vmul.f32 %v1080, 0.17677669
        %v2418 = vmul.f32 %v1400, 0.17677669
        %v2419 = vmul.f32 %v1084, 0.17677669
        %v2420 = vmul.f32 %v1086, 0.17677669
        %v2421 = vmul.f32 %v1406, 0.17677669
        %v2422 = vmul.f32 %v1090, 0.17677669
        %v2423 = vmul.f32 %v1092, 0.17677669
        %v2424 = vmul.f32 %v1412, 0.17677669
        %v2425 = vmul.f32 %v1096, 0.17677669
        %v2426 = vmul.f32 %v1098, 0.17677669
        %v2427 = vmul.f32 %v1418, 0.17677669
        %v2428 = vmul.f32 %v1102, 0.17677669
        %v2429 = vmul.f32 %v1104, 0.17677669
        %v2430 = vmul.f32 %v1424, 0.17677669
        %v2431 = vmul.f32 %v1108, 0.17677669
        %v2432 = vmul.f32 %v1110, 0.17677669
        %v2433 = vmul.f32 %v1430, 0.17677669
        %v2434 = vmul.f32 %v1114, 0.17677669
        %v2435 = vmul.f32 %v1116, 0.17677669
        %v2436 = vmul.f32 %v1436, 0.17677669
        %v2437 = vmul.f32 %v1120, 0.17677669
        %v2438 = vmul.f32 %v1122, 0.17677669
        %v2439 = vmul.f32 %v1442, 0.17677669
        %v2440 = vmul.f32 %v1126, 0.17677669
        %v2441 = vmul.f32 %v1128, 0.17677669
        %v2442 = vmul.f32 %v1448, 0.17677669
        %v2443 = vmul.f32 %v1132, 0.17677669
        %v2444 = vmul.f32 %v1134, 0.17677669
        %v2445 = vmul.f32 %v1454, 0.17677669
        %v2446 = vmul.f32 %v1138, 0.17677669
        %v2447 = vmul.f32 %v1140, 0.17677669
        %v2448 = vmul.f32 %v1460, 0.17677669
        %v2449 = vmul.f32 %v1144, 0.17677669
        %v2450 = vmul.f32 %v1146, 0.17677669
        %v2451 = vmul.f32 %v1466, 0.17677669
        %vm2452 = vcmask 261120
        %v2454 = vsel %vm2452, %v2404, 0
        %v2457 = vsel %vm2452, %v2407, 0
        %v2460 = vsel %vm2452, %v2410, 0
        %v2463 = vsel %vm2452, %v2413, 0
        %v2466 = vsel %vm2452, %v2416, 0
        %v2469 = vsel %vm2452, %v2419, 0
        %v2472 = vsel %vm2452, %v2422, 0
        %v2475 = vsel %vm2452, %v2425, 0
        %v2478 = vsel %vm2452, %v2428, 0
        %v2481 = vsel %vm2452, %v2431, 0
        %v2484 = vsel %vm2452, %v2434, 0
        %v2487 = vsel %vm2452, %v2437, 0
        %v2490 = vsel %vm2452, %v2440, 0
        %v2493 = vsel %vm2452, %v2443, 0
        %v2496 = vsel %vm2452, %v2446, 0
        %v2499 = vsel %vm2452, %v2449, 0
        %v2502 = vsel %vm2452, %v1378, 0
        %v2505 = vsel %vm2452, %v1384, 0
        %v2508 = vsel %vm2452, %v1390, 0
        %v2511 = vsel %vm2452, %v1396, 0
        %v2514 = vsel %vm2452, %v1402, 0
        %v2517 = vsel %vm2452, %v1408, 0
        %v2520 = vsel %vm2452, %v1414, 0
        %v2523 = vsel %vm2452, %v1420, 0
        %v2526 = vsel %vm2452, %v1426, 0
        %v2529 = vsel %vm2452, %v1432, 0
        %v2532 = vsel %vm2452, %v1438, 0
        %v2535 = vsel %vm2452, %v1444, 0
        %v2538 = vsel %vm2452, %v1450, 0
        %v2541 = vsel %vm2452, %v1456, 0
        %v2544 = vsel %vm2452, %v1462, 0
        %v2547 = vsel %vm2452, %v1468, 0
        %2549 = vmatprep.subr.mxu0 0.0
        %2550 = vmatpush1.xpose.msra.mxu0 %v2547
        %2551 = vmatprep.subr.mxu0 0.0
        %2552 = vmatpush1.xpose.msra.mxu0 %v2544
        %2553 = vmatprep.subr.mxu0 0.0
        %2554 = vmatpush1.xpose.msra.mxu0 %v2541
        %2555 = vmatprep.subr.mxu0 0.0
        %2556 = vmatpush1.xpose.msra.mxu0 %v2538
        %2557 = vmatprep.subr.mxu0 0.0
        %2558 = vmatpush1.xpose.msra.mxu0 %v2535
        %2559 = vmatprep.subr.mxu0 0.0
        %2560 = vmatpush1.xpose.msra.mxu0 %v2532
        %2561 = vmatprep.subr.mxu0 0.0
        %2562 = vmatpush1.xpose.msra.mxu0 %v2529
        %2563 = vmatprep.subr.mxu0 0.0
        %2564 = vmatpush1.xpose.msra.mxu0 %v2526
        %2565 = vmatprep.subr.mxu0 0.0
        %2566 = vmatpush1.xpose.msra.mxu0 %v2523
        %2567 = vmatprep.subr.mxu0 0.0
        %2568 = vmatpush1.xpose.msra.mxu0 %v2520
        %2569 = vmatprep.subr.mxu0 0.0
        %2570 = vmatpush1.xpose.msra.mxu0 %v2517
        %2571 = vmatprep.subr.mxu0 0.0
        %2572 = vmatpush1.xpose.msra.mxu0 %v2514
        %2573 = vmatprep.subr.mxu0 0.0
        %2574 = vmatpush1.xpose.msra.mxu0 %v2511
        %2575 = vmatprep.subr.mxu0 0.0
        %2576 = vmatpush1.xpose.msra.mxu0 %v2508
        %2577 = vmatprep.subr.mxu0 0.0
        %2578 = vmatpush1.xpose.msra.mxu0 %v2505
        %2579 = vmatprep.subr.mxu0 0.0
        %2580 = vmatpush1.xpose.msra.mxu0 %v2502
        %2581 = vmatprep.subr.mxu0 0.0
        %2582 = vmatpush2.xpose.msra.mxu0 0.0
        %2583 = vmatprep.subr.mxu0 0.0
        %2584 = vmatpush2.xpose.msra.mxu0 0.0
        %2585 = vmatprep.subr.mxu0 0.0
        %2586 = vmatpush2.xpose.msra.mxu0 0.0
        %2587 = vmatprep.subr.mxu0 0.0
        %2588 = vmatpush2.xpose.msra.mxu0 0.0
        %2589 = vmatprep.subr.mxu0 0.0
        %2590 = vmatpush2.xpose.msra.mxu0 0.0
        %2591 = vmatprep.subr.mxu0 0.0
        %2592 = vmatpush2.xpose.msra.mxu0 0.0
        %2593 = vmatprep.subr.mxu0 0.0
        %2594 = vmatpush2.xpose.msra.mxu0 0.0
        %2595 = vmatprep.subr.mxu0 0.0
        %2596 = vmatpush2.xpose.msra.mxu0 0.0
        %2597 = vmatprep.subr.mxu0 0.0
        %2598 = vmatpush2.xpose.msra.mxu0 0.0
        %2599 = vmatprep.subr.mxu0 0.0
        %2600 = vmatpush2.xpose.msra.mxu0 0.0
        %2601 = vmatprep.subr.mxu0 0.0
        %2602 = vmatpush2.xpose.msra.mxu0 0.0
        %2603 = vmatprep.subr.mxu0 0.0
        %2604 = vmatpush2.xpose.msra.mxu0 0.0
        %2605 = vmatprep.subr.mxu0 0.0
        %2606 = vmatpush2.xpose.msra.mxu0 0.0
        %2607 = vmatprep.subr.mxu0 0.0
        %2608 = vmatpush2.xpose.msra.mxu0 0.0
        %2609 = vmatprep.subr.mxu0 0.0
        %2610 = vmatpush2.xpose.msra.mxu0 0.0
        %2611 = vmatprep.subr.mxu0 0.0
        %2612 = vmatpush2.xpose.msra.mxu0 0.0
        %2613 = vmatprep.mubr.f32.mxu0 0.0
        %2614 = vmatmul.mubr.f32.gmra.mxu0 %v2454
        %v2615 = vpop.f32.mrf.mxu0
        %v2616 = vadd.f32 0.0, %v2615
        %v2617 = vpop.f32.mrf.mxu0
        %2618 = vmatprep.mubr.f32.mxu0 0.0
        %2619 = vmatmul.mubr.f32.gmra.mxu0 %v2457
        %v2620 = vpop.f32.mrf.mxu0
        %v2621 = vadd.f32 0.0, %v2620
        %v2622 = vpop.f32.mrf.mxu0
        %2623 = vmatprep.mubr.f32.mxu0 0.0
        %2624 = vmatmul.mubr.f32.gmra.mxu0 %v2460
        %v2625 = vpop.f32.mrf.mxu0
        %v2626 = vadd.f32 0.0, %v2625
        %v2627 = vpop.f32.mrf.mxu0
        %2628 = vmatprep.mubr.f32.mxu0 0.0
        %2629 = vmatmul.mubr.f32.gmra.mxu0 %v2463
        %v2630 = vpop.f32.mrf.mxu0
        %v2631 = vadd.f32 0.0, %v2630
        %v2632 = vpop.f32.mrf.mxu0
        %2633 = vmatprep.mubr.f32.mxu0 0.0
        %2634 = vmatmul.mubr.f32.gmra.mxu0 %v2466
        %v2635 = vpop.f32.mrf.mxu0
        %v2636 = vadd.f32 0.0, %v2635
        %v2637 = vpop.f32.mrf.mxu0
        %2638 = vmatprep.mubr.f32.mxu0 0.0
        %2639 = vmatmul.mubr.f32.gmra.mxu0 %v2469
        %v2640 = vpop.f32.mrf.mxu0
        %v2641 = vadd.f32 0.0, %v2640
        %v2642 = vpop.f32.mrf.mxu0
        %2643 = vmatprep.mubr.f32.mxu0 0.0
        %2644 = vmatmul.mubr.f32.gmra.mxu0 %v2472
        %v2645 = vpop.f32.mrf.mxu0
        %v2646 = vadd.f32 0.0, %v2645
        %v2647 = vpop.f32.mrf.mxu0
        %2648 = vmatprep.mubr.f32.mxu0 0.0
        %2649 = vmatmul.mubr.f32.gmra.mxu0 %v2475
        %v2650 = vpop.f32.mrf.mxu0
        %v2651 = vadd.f32 0.0, %v2650
        %v2652 = vpop.f32.mrf.mxu0
        %2653 = vmatprep.mubr.f32.mxu0 0.0
        %2654 = vmatmul.mubr.f32.gmra.mxu0 %v2478
        %v2655 = vpop.f32.mrf.mxu0
        %v2656 = vadd.f32 0.0, %v2655
        %v2657 = vpop.f32.mrf.mxu0
        %2658 = vmatprep.mubr.f32.mxu0 0.0
        %2659 = vmatmul.mubr.f32.gmra.mxu0 %v2481
        %v2660 = vpop.f32.mrf.mxu0
        %v2661 = vadd.f32 0.0, %v2660
        %v2662 = vpop.f32.mrf.mxu0
        %2663 = vmatprep.mubr.f32.mxu0 0.0
        %2664 = vmatmul.mubr.f32.gmra.mxu0 %v2484
        %v2665 = vpop.f32.mrf.mxu0
        %v2666 = vadd.f32 0.0, %v2665
        %v2667 = vpop.f32.mrf.mxu0
        %2668 = vmatprep.mubr.f32.mxu0 0.0
        %2669 = vmatmul.mubr.f32.gmra.mxu0 %v2487
        %v2670 = vpop.f32.mrf.mxu0
        %v2671 = vadd.f32 0.0, %v2670
        %v2672 = vpop.f32.mrf.mxu0
        %2673 = vmatprep.mubr.f32.mxu0 0.0
        %2674 = vmatmul.mubr.f32.gmra.mxu0 %v2490
        %v2675 = vpop.f32.mrf.mxu0
        %v2676 = vadd.f32 0.0, %v2675
        %v2677 = vpop.f32.mrf.mxu0
        %2678 = vmatprep.mubr.f32.mxu0 0.0
        %2679 = vmatmul.mubr.f32.gmra.mxu0 %v2493
        %v2680 = vpop.f32.mrf.mxu0
        %v2681 = vadd.f32 0.0, %v2680
        %v2682 = vpop.f32.mrf.mxu0
        %2683 = vmatprep.mubr.f32.mxu0 0.0
        %2684 = vmatmul.mubr.f32.gmra.mxu0 %v2496
        %v2685 = vpop.f32.mrf.mxu0
        %v2686 = vadd.f32 0.0, %v2685
        %v2687 = vpop.f32.mrf.mxu0
        %2688 = vmatprep.mubr.f32.mxu0 0.0
        %2689 = vmatmul.mubr.f32.gmra.mxu0 %v2499
        %v2690 = vpop.f32.mrf.mxu0
        %v2691 = vadd.f32 0.0, %v2690
        %v2692 = vpop.f32.mrf.mxu0
        %2693 = vdwg.mxu0
        %2694 = vmax.xlane.f32.xlu0 %v2616
        %v2695 = vpop.xlane.xlu0 %2694
        %2696 = vmax.xlane.f32.xlu0 %v2621
        %v2697 = vpop.xlane.xlu0 %2696
        %2698 = vmax.xlane.f32.xlu0 %v2626
        %v2699 = vpop.xlane.xlu0 %2698
        %2700 = vmax.xlane.f32.xlu0 %v2631
        %v2701 = vpop.xlane.xlu0 %2700
        %2702 = vmax.xlane.f32.xlu0 %v2636
        %v2703 = vpop.xlane.xlu0 %2702
        %2704 = vmax.xlane.f32.xlu0 %v2641
        %v2705 = vpop.xlane.xlu0 %2704
        %2706 = vmax.xlane.f32.xlu0 %v2646
        %v2707 = vpop.xlane.xlu0 %2706
        %2708 = vmax.xlane.f32.xlu0 %v2651
        %v2709 = vpop.xlane.xlu0 %2708
        %2710 = vmax.xlane.f32.xlu0 %v2656
        %v2711 = vpop.xlane.xlu0 %2710
        %2712 = vmax.xlane.f32.xlu0 %v2661
        %v2713 = vpop.xlane.xlu0 %2712
        %2714 = vmax.xlane.f32.xlu0 %v2666
        %v2715 = vpop.xlane.xlu0 %2714
        %2716 = vmax.xlane.f32.xlu0 %v2671
        %v2717 = vpop.xlane.xlu0 %2716
        %2718 = vmax.xlane.f32.xlu0 %v2676
        %v2719 = vpop.xlane.xlu0 %2718
        %2720 = vmax.xlane.f32.xlu0 %v2681
        %v2721 = vpop.xlane.xlu0 %2720
        %2722 = vmax.xlane.f32.xlu0 %v2686
        %v2723 = vpop.xlane.xlu0 %2722
        %2724 = vmax.xlane.f32.xlu0 %v2691
        %v2725 = vpop.xlane.xlu0 %2724
        %v2726 = vsub.f32 %v2616, %v2695
        %v2727 = vsub.f32 %v2621, %v2697
        %v2728 = vsub.f32 %v2626, %v2699
        %v2729 = vsub.f32 %v2631, %v2701
        %v2730 = vsub.f32 %v2636, %v2703
        %v2731 = vsub.f32 %v2641, %v2705
        %v2732 = vsub.f32 %v2646, %v2707
        %v2733 = vsub.f32 %v2651, %v2709
        %v2734 = vsub.f32 %v2656, %v2711
        %v2735 = vsub.f32 %v2661, %v2713
        %v2736 = vsub.f32 %v2666, %v2715
        %v2737 = vsub.f32 %v2671, %v2717
        %v2738 = vsub.f32 %v2676, %v2719
        %v2739 = vsub.f32 %v2681, %v2721
        %v2740 = vsub.f32 %v2686, %v2723
        %v2741 = vsub.f32 %v2691, %v2725
        %v2742 = vmul.f32 %v2726, 1.442695
        %v2743 = vpow.pop %v2742
        %v2744 = vmul.f32 %v2727, 1.442695
        %v2745 = vpow.pop %v2744
        %v2746 = vmul.f32 %v2728, 1.442695
        %v2747 = vpow.pop %v2746
        %v2748 = vmul.f32 %v2729, 1.442695
        %v2749 = vpow.pop %v2748
        %v2750 = vmul.f32 %v2730, 1.442695
        %v2751 = vpow.pop %v2750
        %v2752 = vmul.f32 %v2731, 1.442695
        %v2753 = vpow.pop %v2752
        %v2754 = vmul.f32 %v2732, 1.442695
        %v2755 = vpow.pop %v2754
        %v2756 = vmul.f32 %v2733, 1.442695
        %v2757 = vpow.pop %v2756
        %v2758 = vmul.f32 %v2734, 1.442695
        %v2759 = vpow.pop %v2758
        %v2760 = vmul.f32 %v2735, 1.442695
        %v2761 = vpow.pop %v2760
        %v2762 = vmul.f32 %v2736, 1.442695
        %v2763 = vpow.pop %v2762
        %v2764 = vmul.f32 %v2737, 1.442695
        %v2765 = vpow.pop %v2764
        %v2766 = vmul.f32 %v2738, 1.442695
        %v2767 = vpow.pop %v2766
        %v2768 = vmul.f32 %v2739, 1.442695
        %v2769 = vpow.pop %v2768
        %v2770 = vmul.f32 %v2740, 1.442695
        %v2771 = vpow.pop %v2770
        %v2772 = vmul.f32 %v2741, 1.442695
        %v2773 = vpow.pop %v2772
        %2774 = vadd.xlane.f32.xlu0 %v2743
        %v2775 = vpop.xlane.xlu0 %2774
        %2776 = vadd.xlane.f32.xlu0 %v2745
        %v2777 = vpop.xlane.xlu0 %2776
        %2778 = vadd.xlane.f32.xlu0 %v2747
        %v2779 = vpop.xlane.xlu0 %2778
        %2780 = vadd.xlane.f32.xlu0 %v2749
        %v2781 = vpop.xlane.xlu0 %2780
        %2782 = vadd.xlane.f32.xlu0 %v2751
        %v2783 = vpop.xlane.xlu0 %2782
        %2784 = vadd.xlane.f32.xlu0 %v2753
        %v2785 = vpop.xlane.xlu0 %2784
        %2786 = vadd.xlane.f32.xlu0 %v2755
        %v2787 = vpop.xlane.xlu0 %2786
        %2788 = vadd.xlane.f32.xlu0 %v2757
        %v2789 = vpop.xlane.xlu0 %2788
        %2790 = vadd.xlane.f32.xlu0 %v2759
        %v2791 = vpop.xlane.xlu0 %2790
        %2792 = vadd.xlane.f32.xlu0 %v2761
        %v2793 = vpop.xlane.xlu0 %2792
        %2794 = vadd.xlane.f32.xlu0 %v2763
        %v2795 = vpop.xlane.xlu0 %2794
        %2796 = vadd.xlane.f32.xlu0 %v2765
        %v2797 = vpop.xlane.xlu0 %2796
        %2798 = vadd.xlane.f32.xlu0 %v2767
        %v2799 = vpop.xlane.xlu0 %2798
        %2800 = vadd.xlane.f32.xlu0 %v2769
        %v2801 = vpop.xlane.xlu0 %2800
        %2802 = vadd.xlane.f32.xlu0 %v2771
        %v2803 = vpop.xlane.xlu0 %2802
        %2804 = vadd.xlane.f32.xlu0 %v2773
        %v2805 = vpop.xlane.xlu0 %2804
        %v2806 = vrcp.pop %v2775
        %v2807 = vrcp.pop %v2777
        %v2808 = vrcp.pop %v2779
        %v2809 = vrcp.pop %v2781
        %v2810 = vrcp.pop %v2783
        %v2811 = vrcp.pop %v2785
        %v2812 = vrcp.pop %v2787
        %v2813 = vrcp.pop %v2789
        %v2814 = vrcp.pop %v2791
        %v2815 = vrcp.pop %v2793
        %v2816 = vrcp.pop %v2795
        %v2817 = vrcp.pop %v2797
        %v2818 = vrcp.pop %v2799
        %v2819 = vrcp.pop %v2801
        %v2820 = vrcp.pop %v2803
        %v2821 = vrcp.pop %v2805
        %v2822 = vmul.f32 %v2743, %v2806
        %v2823 = vmul.f32 %v2745, %v2807
        %v2824 = vmul.f32 %v2747, %v2808
        %v2825 = vmul.f32 %v2749, %v2809
        %v2826 = vmul.f32 %v2751, %v2810
        %v2827 = vmul.f32 %v2753, %v2811
        %v2828 = vmul.f32 %v2755, %v2812
        %v2829 = vmul.f32 %v2757, %v2813
        %v2830 = vmul.f32 %v2759, %v2814
        %v2831 = vmul.f32 %v2761, %v2815
        %v2832 = vmul.f32 %v2763, %v2816
        %v2833 = vmul.f32 %v2765, %v2817
        %v2834 = vmul.f32 %v2767, %v2818
        %v2835 = vmul.f32 %v2769, %v2819
        %v2836 = vmul.f32 %v2771, %v2820
        %v2837 = vmul.f32 %v2773, %v2821
        %2838 = vmatprep.subr.mxu0 0.0
        %2839 = vmatpush1.msra.mxu0 %v2110
        %2840 = vmatprep.subr.mxu0 0.0
        %2841 = vmatpush1.msra.mxu0 %v2104
        %2842 = vmatprep.subr.mxu0 0.0
        %2843 = vmatpush1.msra.mxu0 %v2098
        %2844 = vmatprep.subr.mxu0 0.0
        %2845 = vmatpush1.msra.mxu0 %v2092
        %2846 = vmatprep.subr.mxu0 0.0
        %2847 = vmatpush1.msra.mxu0 %v2086
        %2848 = vmatprep.subr.mxu0 0.0
        %2849 = vmatpush1.msra.mxu0 %v2080
        %2850 = vmatprep.subr.mxu0 0.0
        %2851 = vmatpush1.msra.mxu0 %v2074
        %2852 = vmatprep.subr.mxu0 0.0
        %2853 = vmatpush1.msra.mxu0 %v2068
        %2854 = vmatprep.subr.mxu0 0.0
        %2855 = vmatpush1.msra.mxu0 %v2062
        %2856 = vmatprep.subr.mxu0 0.0
        %2857 = vmatpush1.msra.mxu0 %v2056
        %2858 = vmatprep.subr.mxu0 0.0
        %2859 = vmatpush1.msra.mxu0 %v2050
        %2860 = vmatprep.subr.mxu0 0.0
        %2861 = vmatpush1.msra.mxu0 %v2044
        %2862 = vmatprep.subr.mxu0 0.0
        %2863 = vmatpush1.msra.mxu0 %v2038
        %2864 = vmatprep.subr.mxu0 0.0
        %2865 = vmatpush1.msra.mxu0 %v2032
        %2866 = vmatprep.subr.mxu0 0.0
        %2867 = vmatpush1.msra.mxu0 %v2026
        %2868 = vmatprep.subr.mxu0 0.0
        %2869 = vmatpush1.msra.mxu0 %v2020
        %2870 = vmatprep.subr.mxu0 0.0
        %2871 = vmatpush2.msra.mxu0 0.0
        %2872 = vmatprep.subr.mxu0 0.0
        %2873 = vmatpush2.msra.mxu0 0.0
        %2874 = vmatprep.subr.mxu0 0.0
        %2875 = vmatpush2.msra.mxu0 0.0
        %2876 = vmatprep.subr.mxu0 0.0
        %2877 = vmatpush2.msra.mxu0 0.0
        %2878 = vmatprep.subr.mxu0 0.0
        %2879 = vmatpush2.msra.mxu0 0.0
        %2880 = vmatprep.subr.mxu0 0.0
        %2881 = vmatpush2.msra.mxu0 0.0
        %2882 = vmatprep.subr.mxu0 0.0
        %2883 = vmatpush2.msra.mxu0 0.0
        %2884 = vmatprep.subr.mxu0 0.0
        %2885 = vmatpush2.msra.mxu0 0.0
        %2886 = vmatprep.subr.mxu0 0.0
        %2887 = vmatpush2.msra.mxu0 0.0
        %2888 = vmatprep.subr.mxu0 0.0
        %2889 = vmatpush2.msra.mxu0 0.0
        %2890 = vmatprep.subr.mxu0 0.0
        %2891 = vmatpush2.msra.mxu0 0.0
        %2892 = vmatprep.subr.mxu0 0.0
        %2893 = vmatpush2.msra.mxu0 0.0
        %2894 = vmatprep.subr.mxu0 0.0
        %2895 = vmatpush2.msra.mxu0 0.0
        %2896 = vmatprep.subr.mxu0 0.0
        %2897 = vmatpush2.msra.mxu0 0.0
        %2898 = vmatprep.subr.mxu0 0.0
        %2899 = vmatpush2.msra.mxu0 0.0
        %2900 = vmatprep.subr.mxu0 0.0
        %2901 = vmatpush2.msra.mxu0 0.0
        %2902 = vmatprep.mubr.f32.mxu0 0.0
        %2903 = vmatmul.mubr.f32.gmra.mxu0 %v2822
        %v2904 = vpop.f32.mrf.mxu0
        %v2905 = vadd.f32 0.0, %v2904
        %v2906 = vpop.f32.mrf.mxu0
        %2907 = vmatprep.mubr.f32.mxu0 0.0
        %2908 = vmatmul.mubr.f32.gmra.mxu0 %v2823
        %v2909 = vpop.f32.mrf.mxu0
        %v2910 = vadd.f32 0.0, %v2909
        %v2911 = vpop.f32.mrf.mxu0
        %2912 = vmatprep.mubr.f32.mxu0 0.0
        %2913 = vmatmul.mubr.f32.gmra.mxu0 %v2824
        %v2914 = vpop.f32.mrf.mxu0
        %v2915 = vadd.f32 0.0, %v2914
        %v2916 = vpop.f32.mrf.mxu0
        %2917 = vmatprep.mubr.f32.mxu0 0.0
        %2918 = vmatmul.mubr.f32.gmra.mxu0 %v2825
        %v2919 = vpop.f32.mrf.mxu0
        %v2920 = vadd.f32 0.0, %v2919
        %v2921 = vpop.f32.mrf.mxu0
        %2922 = vmatprep.mubr.f32.mxu0 0.0
        %2923 = vmatmul.mubr.f32.gmra.mxu0 %v2826
        %v2924 = vpop.f32.mrf.mxu0
        %v2925 = vadd.f32 0.0, %v2924
        %v2926 = vpop.f32.mrf.mxu0
        %2927 = vmatprep.mubr.f32.mxu0 0.0
        %2928 = vmatmul.mubr.f32.gmra.mxu0 %v2827
        %v2929 = vpop.f32.mrf.mxu0
        %v2930 = vadd.f32 0.0, %v2929
        %v2931 = vpop.f32.mrf.mxu0
        %2932 = vmatprep.mubr.f32.mxu0 0.0
        %2933 = vmatmul.mubr.f32.gmra.mxu0 %v2828
        %v2934 = vpop.f32.mrf.mxu0
        %v2935 = vadd.f32 0.0, %v2934
        %v2936 = vpop.f32.mrf.mxu0
        %2937 = vmatprep.mubr.f32.mxu0 0.0
        %2938 = vmatmul.mubr.f32.gmra.mxu0 %v2829
        %v2939 = vpop.f32.mrf.mxu0
        %v2940 = vadd.f32 0.0, %v2939
        %v2941 = vpop.f32.mrf.mxu0
        %2942 = vmatprep.mubr.f32.mxu0 0.0
        %2943 = vmatmul.mubr.f32.gmra.mxu0 %v2830
        %v2944 = vpop.f32.mrf.mxu0
        %v2945 = vadd.f32 0.0, %v2944
        %v2946 = vpop.f32.mrf.mxu0
        %2947 = vmatprep.mubr.f32.mxu0 0.0
        %2948 = vmatmul.mubr.f32.gmra.mxu0 %v2831
        %v2949 = vpop.f32.mrf.mxu0
        %v2950 = vadd.f32 0.0, %v2949
        %v2951 = vpop.f32.mrf.mxu0
        %2952 = vmatprep.mubr.f32.mxu0 0.0
        %2953 = vmatmul.mubr.f32.gmra.mxu0 %v2832
        %v2954 = vpop.f32.mrf.mxu0
        %v2955 = vadd.f32 0.0, %v2954
        %v2956 = vpop.f32.mrf.mxu0
        %2957 = vmatprep.mubr.f32.mxu0 0.0
        %2958 = vmatmul.mubr.f32.gmra.mxu0 %v2833
        %v2959 = vpop.f32.mrf.mxu0
        %v2960 = vadd.f32 0.0, %v2959
        %v2961 = vpop.f32.mrf.mxu0
        %2962 = vmatprep.mubr.f32.mxu0 0.0
        %2963 = vmatmul.mubr.f32.gmra.mxu0 %v2834
        %v2964 = vpop.f32.mrf.mxu0
        %v2965 = vadd.f32 0.0, %v2964
        %v2966 = vpop.f32.mrf.mxu0
        %2967 = vmatprep.mubr.f32.mxu0 0.0
        %2968 = vmatmul.mubr.f32.gmra.mxu0 %v2835
        %v2969 = vpop.f32.mrf.mxu0
        %v2970 = vadd.f32 0.0, %v2969
        %v2971 = vpop.f32.mrf.mxu0
        %2972 = vmatprep.mubr.f32.mxu0 0.0
        %2973 = vmatmul.mubr.f32.gmra.mxu0 %v2836
        %v2974 = vpop.f32.mrf.mxu0
        %v2975 = vadd.f32 0.0, %v2974
        %v2976 = vpop.f32.mrf.mxu0
        %2977 = vmatprep.mubr.f32.mxu0 0.0
        %2978 = vmatmul.mubr.f32.gmra.mxu0 %v2837
        %v2979 = vpop.f32.mrf.mxu0
        %v2980 = vadd.f32 0.0, %v2979
        %v2981 = vpop.f32.mrf.mxu0
        %2982 = vdwg.mxu0
        %2983 = vrot.lane.b32.xlu0 %v2404, 96
        %v2984 = vpop.permute.xlu0 %2983
        %2985 = vrot.lane.b32.xlu0 %v2407, 96
        %v2986 = vpop.permute.xlu0 %2985
        %2987 = vrot.lane.b32.xlu0 %v2410, 96
        %v2988 = vpop.permute.xlu0 %2987
        %2989 = vrot.lane.b32.xlu0 %v2413, 96
        %v2990 = vpop.permute.xlu0 %2989
        %2991 = vrot.lane.b32.xlu0 %v2416, 96
        %v2992 = vpop.permute.xlu0 %2991
        %2993 = vrot.lane.b32.xlu0 %v2419, 96
        %v2994 = vpop.permute.xlu0 %2993
        %2995 = vrot.lane.b32.xlu0 %v2422, 96
        %v2996 = vpop.permute.xlu0 %2995
        %2997 = vrot.lane.b32.xlu0 %v2425, 96
        %v2998 = vpop.permute.xlu0 %2997
        %2999 = vrot.lane.b32.xlu0 %v2428, 96
        %v3000 = vpop.permute.xlu0 %2999
        %3001 = vrot.lane.b32.xlu0 %v2431, 96
        %v3002 = vpop.permute.xlu0 %3001
        %3003 = vrot.lane.b32.xlu0 %v2434, 96
        %v3004 = vpop.permute.xlu0 %3003
        %3005 = vrot.lane.b32.xlu0 %v2437, 96
        %v3006 = vpop.permute.xlu0 %3005
        %3007 = vrot.lane.b32.xlu0 %v2440, 96
        %v3008 = vpop.permute.xlu0 %3007
        %3009 = vrot.lane.b32.xlu0 %v2443, 96
        %v3010 = vpop.permute.xlu0 %3009
        %3011 = vrot.lane.b32.xlu0 %v2446, 96
        %v3012 = vpop.permute.xlu0 %3011
        %3013 = vrot.lane.b32.xlu0 %v2449, 96
        %v3014 = vpop.permute.xlu0 %3013
        %3015 = vrot.lane.b32.xlu0 %v1378, 96
        %v3016 = vpop.permute.xlu0 %3015
        %3017 = vrot.lane.b32.xlu0 %v1384, 96
        %v3018 = vpop.permute.xlu0 %3017
        %3019 = vrot.lane.b32.xlu0 %v1390, 96
        %v3020 = vpop.permute.xlu0 %3019
        %3021 = vrot.lane.b32.xlu0 %v1396, 96
        %v3022 = vpop.permute.xlu0 %3021
        %3023 = vrot.lane.b32.xlu0 %v1402, 96
        %v3024 = vpop.permute.xlu0 %3023
        %3025 = vrot.lane.b32.xlu0 %v1408, 96
        %v3026 = vpop.permute.xlu0 %3025
        %3027 = vrot.lane.b32.xlu0 %v1414, 96
        %v3028 = vpop.permute.xlu0 %3027
        %3029 = vrot.lane.b32.xlu0 %v1420, 96
        %v3030 = vpop.permute.xlu0 %3029
        %3031 = vrot.lane.b32.xlu0 %v1426, 96
        %v3032 = vpop.permute.xlu0 %3031
        %3033 = vrot.lane.b32.xlu0 %v1432, 96
        %v3034 = vpop.permute.xlu0 %3033
        %3035 = vrot.lane.b32.xlu0 %v1438, 96
        %v3036 = vpop.permute.xlu0 %3035
        %3037 = vrot.lane.b32.xlu0 %v1444, 96
        %v3038 = vpop.permute.xlu0 %3037
        %3039 = vrot.lane.b32.xlu0 %v1450, 96
        %v3040 = vpop.permute.xlu0 %3039
        %3041 = vrot.lane.b32.xlu0 %v1456, 96
        %v3042 = vpop.permute.xlu0 %3041
        %3043 = vrot.lane.b32.xlu0 %v1462, 96
        %v3044 = vpop.permute.xlu0 %3043
        %3045 = vrot.lane.b32.xlu0 %v1468, 96
        %v3046 = vpop.permute.xlu0 %3045
        %v3047 = vsel %vm2452, %v2984, 0
        %v3049 = vsel %vm2452, %v2986, 0
        %v3051 = vsel %vm2452, %v2988, 0
        %v3053 = vsel %vm2452, %v2990, 0
        %v3055 = vsel %vm2452, %v2992, 0
        %v3057 = vsel %vm2452, %v2994, 0
        %v3059 = vsel %vm2452, %v2996, 0
        %v3061 = vsel %vm2452, %v2998, 0
        %v3063 = vsel %vm2452, %v3000, 0
        %v3065 = vsel %vm2452, %v3002, 0
        %v3067 = vsel %vm2452, %v3004, 0
        %v3069 = vsel %vm2452, %v3006, 0
        %v3071 = vsel %vm2452, %v3008, 0
        %v3073 = vsel %vm2452, %v3010, 0
        %v3075 = vsel %vm2452, %v3012, 0
        %v3077 = vsel %vm2452, %v3014, 0
        %v3079 = vsel %vm2452, %v3016, 0
        %v3081 = vsel %vm2452, %v3018, 0
        %v3083 = vsel %vm2452, %v3020, 0
        %v3085 = vsel %vm2452, %v3022, 0
        %v3087 = vsel %vm2452, %v3024, 0
        %v3089 = vsel %vm2452, %v3026, 0
        %v3091 = vsel %vm2452, %v3028, 0
        %v3093 = vsel %vm2452, %v3030, 0
        %v3095 = vsel %vm2452, %v3032, 0
        %v3097 = vsel %vm2452, %v3034, 0
        %v3099 = vsel %vm2452, %v3036, 0
        %v3101 = vsel %vm2452, %v3038, 0
        %v3103 = vsel %vm2452, %v3040, 0
        %v3105 = vsel %vm2452, %v3042, 0
        %v3107 = vsel %vm2452, %v3044, 0
        %v3109 = vsel %vm2452, %v3046, 0
        %3111 = vmatprep.subr.mxu0 0.0
        %3112 = vmatpush1.xpose.msra.mxu0 %v3109
        %3113 = vmatprep.subr.mxu0 0.0
        %3114 = vmatpush1.xpose.msra.mxu0 %v3107
        %3115 = vmatprep.subr.mxu0 0.0
        %3116 = vmatpush1.xpose.msra.mxu0 %v3105
        %3117 = vmatprep.subr.mxu0 0.0
        %3118 = vmatpush1.xpose.msra.mxu0 %v3103
        %3119 = vmatprep.subr.mxu0 0.0
        %3120 = vmatpush1.xpose.msra.mxu0 %v3101
        %3121 = vmatprep.subr.mxu0 0.0
        %3122 = vmatpush1.xpose.msra.mxu0 %v3099
        %3123 = vmatprep.subr.mxu0 0.0
        %3124 = vmatpush1.xpose.msra.mxu0 %v3097
        %3125 = vmatprep.subr.mxu0 0.0
        %3126 = vmatpush1.xpose.msra.mxu0 %v3095
        %3127 = vmatprep.subr.mxu0 0.0
        %3128 = vmatpush1.xpose.msra.mxu0 %v3093
        %3129 = vmatprep.subr.mxu0 0.0
        %3130 = vmatpush1.xpose.msra.mxu0 %v3091
        %3131 = vmatprep.subr.mxu0 0.0
        %3132 = vmatpush1.xpose.msra.mxu0 %v3089
        %3133 = vmatprep.subr.mxu0 0.0
        %3134 = vmatpush1.xpose.msra.mxu0 %v3087
        %3135 = vmatprep.subr.mxu0 0.0
        %3136 = vmatpush1.xpose.msra.mxu0 %v3085
        %3137 = vmatprep.subr.mxu0 0.0
        %3138 = vmatpush1.xpose.msra.mxu0 %v3083
        %3139 = vmatprep.subr.mxu0 0.0
        %3140 = vmatpush1.xpose.msra.mxu0 %v3081
        %3141 = vmatprep.subr.mxu0 0.0
        %3142 = vmatpush1.xpose.msra.mxu0 %v3079
        %3143 = vmatprep.subr.mxu0 0.0
        %3144 = vmatpush2.xpose.msra.mxu0 0.0
        %3145 = vmatprep.subr.mxu0 0.0
        %3146 = vmatpush2.xpose.msra.mxu0 0.0
        %3147 = vmatprep.subr.mxu0 0.0
        %3148 = vmatpush2.xpose.msra.mxu0 0.0
        %3149 = vmatprep.subr.mxu0 0.0
        %3150 = vmatpush2.xpose.msra.mxu0 0.0
        %3151 = vmatprep.subr.mxu0 0.0
        %3152 = vmatpush2.xpose.msra.mxu0 0.0
        %3153 = vmatprep.subr.mxu0 0.0
        %3154 = vmatpush2.xpose.msra.mxu0 0.0
        %3155 = vmatprep.subr.mxu0 0.0
        %3156 = vmatpush2.xpose.msra.mxu0 0.0
        %3157 = vmatprep.subr.mxu0 0.0
        %3158 = vmatpush2.xpose.msra.mxu0 0.0
        %3159 = vmatprep.subr.mxu0 0.0
        %3160 = vmatpush2.xpose.msra.mxu0 0.0
        %3161 = vmatprep.subr.mxu0 0.0
        %3162 = vmatpush2.xpose.msra.mxu0 0.0
        %3163 = vmatprep.subr.mxu0 0.0
        %3164 = vmatpush2.xpose.msra.mxu0 0.0
        %3165 = vmatprep.subr.mxu0 0.0
        %3166 = vmatpush2.xpose.msra.mxu0 0.0
        %3167 = vmatprep.subr.mxu0 0.0
        %3168 = vmatpush2.xpose.msra.mxu0 0.0
        %3169 = vmatprep.subr.mxu0 0.0
        %3170 = vmatpush2.xpose.msra.mxu0 0.0
        %3171 = vmatprep.subr.mxu0 0.0
        %3172 = vmatpush2.xpose.msra.mxu0 0.0
        %3173 = vmatprep.subr.mxu0 0.0
        %3174 = vmatpush2.xpose.msra.mxu0 0.0
        %3175 = vmatprep.mubr.f32.mxu0 0.0
        %3176 = vmatmul.mubr.f32.gmra.mxu0 %v3047
        %v3177 = vpop.f32.mrf.mxu0
        %v3178 = vadd.f32 0.0, %v3177
        %v3179 = vpop.f32.mrf.mxu0
        %3180 = vmatprep.mubr.f32.mxu0 0.0
        %3181 = vmatmul.mubr.f32.gmra.mxu0 %v3049
        %v3182 = vpop.f32.mrf.mxu0
        %v3183 = vadd.f32 0.0, %v3182
        %v3184 = vpop.f32.mrf.mxu0
        %3185 = vmatprep.mubr.f32.mxu0 0.0
        %3186 = vmatmul.mubr.f32.gmra.mxu0 %v3051
        %v3187 = vpop.f32.mrf.mxu0
        %v3188 = vadd.f32 0.0, %v3187
        %v3189 = vpop.f32.mrf.mxu0
        %3190 = vmatprep.mubr.f32.mxu0 0.0
        %3191 = vmatmul.mubr.f32.gmra.mxu0 %v3053
        %v3192 = vpop.f32.mrf.mxu0
        %v3193 = vadd.f32 0.0, %v3192
        %v3194 = vpop.f32.mrf.mxu0
        %3195 = vmatprep.mubr.f32.mxu0 0.0
        %3196 = vmatmul.mubr.f32.gmra.mxu0 %v3055
        %v3197 = vpop.f32.mrf.mxu0
        %v3198 = vadd.f32 0.0, %v3197
        %v3199 = vpop.f32.mrf.mxu0
        %3200 = vmatprep.mubr.f32.mxu0 0.0
        %3201 = vmatmul.mubr.f32.gmra.mxu0 %v3057
        %v3202 = vpop.f32.mrf.mxu0
        %v3203 = vadd.f32 0.0, %v3202
        %v3204 = vpop.f32.mrf.mxu0
        %3205 = vmatprep.mubr.f32.mxu0 0.0
        %3206 = vmatmul.mubr.f32.gmra.mxu0 %v3059
        %v3207 = vpop.f32.mrf.mxu0
        %v3208 = vadd.f32 0.0, %v3207
        %v3209 = vpop.f32.mrf.mxu0
        %3210 = vmatprep.mubr.f32.mxu0 0.0
        %3211 = vmatmul.mubr.f32.gmra.mxu0 %v3061
        %v3212 = vpop.f32.mrf.mxu0
        %v3213 = vadd.f32 0.0, %v3212
        %v3214 = vpop.f32.mrf.mxu0
        %3215 = vmatprep.mubr.f32.mxu0 0.0
        %3216 = vmatmul.mubr.f32.gmra.mxu0 %v3063
        %v3217 = vpop.f32.mrf.mxu0
        %v3218 = vadd.f32 0.0, %v3217
        %v3219 = vpop.f32.mrf.mxu0
        %3220 = vmatprep.mubr.f32.mxu0 0.0
        %3221 = vmatmul.mubr.f32.gmra.mxu0 %v3065
        %v3222 = vpop.f32.mrf.mxu0
        %v3223 = vadd.f32 0.0, %v3222
        %v3224 = vpop.f32.mrf.mxu0
        %3225 = vmatprep.mubr.f32.mxu0 0.0
        %3226 = vmatmul.mubr.f32.gmra.mxu0 %v3067
        %v3227 = vpop.f32.mrf.mxu0
        %v3228 = vadd.f32 0.0, %v3227
        %v3229 = vpop.f32.mrf.mxu0
        %3230 = vmatprep.mubr.f32.mxu0 0.0
        %3231 = vmatmul.mubr.f32.gmra.mxu0 %v3069
        %v3232 = vpop.f32.mrf.mxu0
        %v3233 = vadd.f32 0.0, %v3232
        %v3234 = vpop.f32.mrf.mxu0
        %3235 = vmatprep.mubr.f32.mxu0 0.0
        %3236 = vmatmul.mubr.f32.gmra.mxu0 %v3071
        %v3237 = vpop.f32.mrf.mxu0
        %v3238 = vadd.f32 0.0, %v3237
        %v3239 = vpop.f32.mrf.mxu0
        %3240 = vmatprep.mubr.f32.mxu0 0.0
        %3241 = vmatmul.mubr.f32.gmra.mxu0 %v3073
        %v3242 = vpop.f32.mrf.mxu0
        %v3243 = vadd.f32 0.0, %v3242
        %v3244 = vpop.f32.mrf.mxu0
        %3245 = vmatprep.mubr.f32.mxu0 0.0
        %3246 = vmatmul.mubr.f32.gmra.mxu0 %v3075
        %v3247 = vpop.f32.mrf.mxu0
        %v3248 = vadd.f32 0.0, %v3247
        %v3249 = vpop.f32.mrf.mxu0
        %3250 = vmatprep.mubr.f32.mxu0 0.0
        %3251 = vmatmul.mubr.f32.gmra.mxu0 %v3077
        %v3252 = vpop.f32.mrf.mxu0
        %v3253 = vadd.f32 0.0, %v3252
        %v3254 = vpop.f32.mrf.mxu0
        %3255 = vdwg.mxu0
        %3256 = vmax.xlane.f32.xlu0 %v3178
        %v3257 = vpop.xlane.xlu0 %3256
        %3258 = vmax.xlane.f32.xlu0 %v3183
        %v3259 = vpop.xlane.xlu0 %3258
        %3260 = vmax.xlane.f32.xlu0 %v3188
        %v3261 = vpop.xlane.xlu0 %3260
        %3262 = vmax.xlane.f32.xlu0 %v3193
        %v3263 = vpop.xlane.xlu0 %3262
        %3264 = vmax.xlane.f32.xlu0 %v3198
        %v3265 = vpop.xlane.xlu0 %3264
        %3266 = vmax.xlane.f32.xlu0 %v3203
        %v3267 = vpop.xlane.xlu0 %3266
        %3268 = vmax.xlane.f32.xlu0 %v3208
        %v3269 = vpop.xlane.xlu0 %3268
        %3270 = vmax.xlane.f32.xlu0 %v3213
        %v3271 = vpop.xlane.xlu0 %3270
        %3272 = vmax.xlane.f32.xlu0 %v3218
        %v3273 = vpop.xlane.xlu0 %3272
        %3274 = vmax.xlane.f32.xlu0 %v3223
        %v3275 = vpop.xlane.xlu0 %3274
        %3276 = vmax.xlane.f32.xlu0 %v3228
        %v3277 = vpop.xlane.xlu0 %3276
        %3278 = vmax.xlane.f32.xlu0 %v3233
        %v3279 = vpop.xlane.xlu0 %3278
        %3280 = vmax.xlane.f32.xlu0 %v3238
        %v3281 = vpop.xlane.xlu0 %3280
        %3282 = vmax.xlane.f32.xlu0 %v3243
        %v3283 = vpop.xlane.xlu0 %3282
        %3284 = vmax.xlane.f32.xlu0 %v3248
        %v3285 = vpop.xlane.xlu0 %3284
        %3286 = vmax.xlane.f32.xlu0 %v3253
        %v3287 = vpop.xlane.xlu0 %3286
        %v3288 = vsub.f32 %v3178, %v3257
        %v3289 = vsub.f32 %v3183, %v3259
        %v3290 = vsub.f32 %v3188, %v3261
        %v3291 = vsub.f32 %v3193, %v3263
        %v3292 = vsub.f32 %v3198, %v3265
        %v3293 = vsub.f32 %v3203, %v3267
        %v3294 = vsub.f32 %v3208, %v3269
        %v3295 = vsub.f32 %v3213, %v3271
        %v3296 = vsub.f32 %v3218, %v3273
        %v3297 = vsub.f32 %v3223, %v3275
        %v3298 = vsub.f32 %v3228, %v3277
        %v3299 = vsub.f32 %v3233, %v3279
        %v3300 = vsub.f32 %v3238, %v3281
        %v3301 = vsub.f32 %v3243, %v3283
        %v3302 = vsub.f32 %v3248, %v3285
        %v3303 = vsub.f32 %v3253, %v3287
        %v3304 = vmul.f32 %v3288, 1.442695
        %v3305 = vpow.pop %v3304
        %v3306 = vmul.f32 %v3289, 1.442695
        %v3307 = vpow.pop %v3306
        %v3308 = vmul.f32 %v3290, 1.442695
        %v3309 = vpow.pop %v3308
        %v3310 = vmul.f32 %v3291, 1.442695
        %v3311 = vpow.pop %v3310
        %v3312 = vmul.f32 %v3292, 1.442695
        %v3313 = vpow.pop %v3312
        %v3314 = vmul.f32 %v3293, 1.442695
        %v3315 = vpow.pop %v3314
        %v3316 = vmul.f32 %v3294, 1.442695
        %v3317 = vpow.pop %v3316
        %v3318 = vmul.f32 %v3295, 1.442695
        %v3319 = vpow.pop %v3318
        %v3320 = vmul.f32 %v3296, 1.442695
        %v3321 = vpow.pop %v3320
        %v3322 = vmul.f32 %v3297, 1.442695
        %v3323 = vpow.pop %v3322
        %v3324 = vmul.f32 %v3298, 1.442695
        %v3325 = vpow.pop %v3324
        %v3326 = vmul.f32 %v3299, 1.442695
        %v3327 = vpow.pop %v3326
        %v3328 = vmul.f32 %v3300, 1.442695
        %v3329 = vpow.pop %v3328
        %v3330 = vmul.f32 %v3301, 1.442695
        %v3331 = vpow.pop %v3330
        %v3332 = vmul.f32 %v3302, 1.442695
        %v3333 = vpow.pop %v3332
        %v3334 = vmul.f32 %v3303, 1.442695
        %v3335 = vpow.pop %v3334
        %3336 = vadd.xlane.f32.xlu0 %v3305
        %v3337 = vpop.xlane.xlu0 %3336
        %3338 = vadd.xlane.f32.xlu0 %v3307
        %v3339 = vpop.xlane.xlu0 %3338
        %3340 = vadd.xlane.f32.xlu0 %v3309
        %v3341 = vpop.xlane.xlu0 %3340
        %3342 = vadd.xlane.f32.xlu0 %v3311
        %v3343 = vpop.xlane.xlu0 %3342
        %3344 = vadd.xlane.f32.xlu0 %v3313
        %v3345 = vpop.xlane.xlu0 %3344
        %3346 = vadd.xlane.f32.xlu0 %v3315
        %v3347 = vpop.xlane.xlu0 %3346
        %3348 = vadd.xlane.f32.xlu0 %v3317
        %v3349 = vpop.xlane.xlu0 %3348
        %3350 = vadd.xlane.f32.xlu0 %v3319
        %v3351 = vpop.xlane.xlu0 %3350
        %3352 = vadd.xlane.f32.xlu0 %v3321
        %v3353 = vpop.xlane.xlu0 %3352
        %3354 = vadd.xlane.f32.xlu0 %v3323
        %v3355 = vpop.xlane.xlu0 %3354
        %3356 = vadd.xlane.f32.xlu0 %v3325
        %v3357 = vpop.xlane.xlu0 %3356
        %3358 = vadd.xlane.f32.xlu0 %v3327
        %v3359 = vpop.xlane.xlu0 %3358
        %3360 = vadd.xlane.f32.xlu0 %v3329
        %v3361 = vpop.xlane.xlu0 %3360
        %3362 = vadd.xlane.f32.xlu0 %v3331
        %v3363 = vpop.xlane.xlu0 %3362
        %3364 = vadd.xlane.f32.xlu0 %v3333
        %v3365 = vpop.xlane.xlu0 %3364
        %3366 = vadd.xlane.f32.xlu0 %v3335
        %v3367 = vpop.xlane.xlu0 %3366
        %v3368 = vrcp.pop %v3337
        %v3369 = vrcp.pop %v3339
        %v3370 = vrcp.pop %v3341
        %v3371 = vrcp.pop %v3343
        %v3372 = vrcp.pop %v3345
        %v3373 = vrcp.pop %v3347
        %v3374 = vrcp.pop %v3349
        %v3375 = vrcp.pop %v3351
        %v3376 = vrcp.pop %v3353
        %v3377 = vrcp.pop %v3355
        %v3378 = vrcp.pop %v3357
        %v3379 = vrcp.pop %v3359
        %v3380 = vrcp.pop %v3361
        %v3381 = vrcp.pop %v3363
        %v3382 = vrcp.pop %v3365
        %v3383 = vrcp.pop %v3367
        %v3384 = vmul.f32 %v3305, %v3368
        %v3385 = vmul.f32 %v3307, %v3369
        %v3386 = vmul.f32 %v3309, %v3370
        %v3387 = vmul.f32 %v3311, %v3371
        %v3388 = vmul.f32 %v3313, %v3372
        %v3389 = vmul.f32 %v3315, %v3373
        %v3390 = vmul.f32 %v3317, %v3374
        %v3391 = vmul.f32 %v3319, %v3375
        %v3392 = vmul.f32 %v3321, %v3376
        %v3393 = vmul.f32 %v3323, %v3377
        %v3394 = vmul.f32 %v3325, %v3378
        %v3395 = vmul.f32 %v3327, %v3379
        %v3396 = vmul.f32 %v3329, %v3380
        %v3397 = vmul.f32 %v3331, %v3381
        %v3398 = vmul.f32 %v3333, %v3382
        %v3399 = vmul.f32 %v3335, %v3383
        %3416 = vrot.lane.b32.xlu0 %v2020, 96
        %v3417 = vpop.permute.xlu0 %3416
        %3418 = vrot.lane.b32.xlu0 %v2026, 96
        %v3419 = vpop.permute.xlu0 %3418
        %3420 = vrot.lane.b32.xlu0 %v2032, 96
        %v3421 = vpop.permute.xlu0 %3420
        %3422 = vrot.lane.b32.xlu0 %v2038, 96
        %v3423 = vpop.permute.xlu0 %3422
        %3424 = vrot.lane.b32.xlu0 %v2044, 96
        %v3425 = vpop.permute.xlu0 %3424
        %3426 = vrot.lane.b32.xlu0 %v2050, 96
        %v3427 = vpop.permute.xlu0 %3426
        %3428 = vrot.lane.b32.xlu0 %v2056, 96
        %v3429 = vpop.permute.xlu0 %3428
        %3430 = vrot.lane.b32.xlu0 %v2062, 96
        %v3431 = vpop.permute.xlu0 %3430
        %3432 = vrot.lane.b32.xlu0 %v2068, 96
        %v3433 = vpop.permute.xlu0 %3432
        %3434 = vrot.lane.b32.xlu0 %v2074, 96
        %v3435 = vpop.permute.xlu0 %3434
        %3436 = vrot.lane.b32.xlu0 %v2080, 96
        %v3437 = vpop.permute.xlu0 %3436
        %3438 = vrot.lane.b32.xlu0 %v2086, 96
        %v3439 = vpop.permute.xlu0 %3438
        %3440 = vrot.lane.b32.xlu0 %v2092, 96
        %v3441 = vpop.permute.xlu0 %3440
        %3442 = vrot.lane.b32.xlu0 %v2098, 96
        %v3443 = vpop.permute.xlu0 %3442
        %3444 = vrot.lane.b32.xlu0 %v2104, 96
        %v3445 = vpop.permute.xlu0 %3444
        %3446 = vrot.lane.b32.xlu0 %v2110, 96
        %v3447 = vpop.permute.xlu0 %3446
        %3464 = vmatprep.subr.mxu0 0.0
        %3465 = vmatpush1.msra.mxu0 %v3447
        %3466 = vmatprep.subr.mxu0 0.0
        %3467 = vmatpush1.msra.mxu0 %v3445
        %3468 = vmatprep.subr.mxu0 0.0
        %3469 = vmatpush1.msra.mxu0 %v3443
        %3470 = vmatprep.subr.mxu0 0.0
        %3471 = vmatpush1.msra.mxu0 %v3441
        %3472 = vmatprep.subr.mxu0 0.0
        %3473 = vmatpush1.msra.mxu0 %v3439
        %3474 = vmatprep.subr.mxu0 0.0
        %3475 = vmatpush1.msra.mxu0 %v3437
        %3476 = vmatprep.subr.mxu0 0.0
        %3477 = vmatpush1.msra.mxu0 %v3435
        %3478 = vmatprep.subr.mxu0 0.0
        %3479 = vmatpush1.msra.mxu0 %v3433
        %3480 = vmatprep.subr.mxu0 0.0
        %3481 = vmatpush1.msra.mxu0 %v3431
        %3482 = vmatprep.subr.mxu0 0.0
        %3483 = vmatpush1.msra.mxu0 %v3429
        %3484 = vmatprep.subr.mxu0 0.0
        %3485 = vmatpush1.msra.mxu0 %v3427
        %3486 = vmatprep.subr.mxu0 0.0
        %3487 = vmatpush1.msra.mxu0 %v3425
        %3488 = vmatprep.subr.mxu0 0.0
        %3489 = vmatpush1.msra.mxu0 %v3423
        %3490 = vmatprep.subr.mxu0 0.0
        %3491 = vmatpush1.msra.mxu0 %v3421
        %3492 = vmatprep.subr.mxu0 0.0
        %3493 = vmatpush1.msra.mxu0 %v3419
        %3494 = vmatprep.subr.mxu0 0.0
        %3495 = vmatpush1.msra.mxu0 %v3417
        %3496 = vmatprep.subr.mxu0 0.0
        %3497 = vmatpush2.msra.mxu0 0.0
        %3498 = vmatprep.subr.mxu0 0.0
        %3499 = vmatpush2.msra.mxu0 0.0
        %3500 = vmatprep.subr.mxu0 0.0
        %3501 = vmatpush2.msra.mxu0 0.0
        %3502 = vmatprep.subr.mxu0 0.0
        %3503 = vmatpush2.msra.mxu0 0.0
        %3504 = vmatprep.subr.mxu0 0.0
        %3505 = vmatpush2.msra.mxu0 0.0
        %3506 = vmatprep.subr.mxu0 0.0
        %3507 = vmatpush2.msra.mxu0 0.0
        %3508 = vmatprep.subr.mxu0 0.0
        %3509 = vmatpush2.msra.mxu0 0.0
        %3510 = vmatprep.subr.mxu0 0.0
        %3511 = vmatpush2.msra.mxu0 0.0
        %3512 = vmatprep.subr.mxu0 0.0
        %3513 = vmatpush2.msra.mxu0 0.0
        %3514 = vmatprep.subr.mxu0 0.0
        %3515 = vmatpush2.msra.mxu0 0.0
        %3516 = vmatprep.subr.mxu0 0.0
        %3517 = vmatpush2.msra.mxu0 0.0
        %3518 = vmatprep.subr.mxu0 0.0
        %3519 = vmatpush2.msra.mxu0 0.0
        %3520 = vmatprep.subr.mxu0 0.0
        %3521 = vmatpush2.msra.mxu0 0.0
        %3522 = vmatprep.subr.mxu0 0.0
        %3523 = vmatpush2.msra.mxu0 0.0
        %3524 = vmatprep.subr.mxu0 0.0
        %3525 = vmatpush2.msra.mxu0 0.0
        %3526 = vmatprep.subr.mxu0 0.0
        %3527 = vmatpush2.msra.mxu0 0.0
        %3528 = vmatprep.mubr.f32.mxu0 0.0
        %3529 = vmatmul.mubr.f32.gmra.mxu0 %v3384
        %v3530 = vpop.f32.mrf.mxu0
        %v3531 = vadd.f32 0.0, %v3530
        %v3532 = vpop.f32.mrf.mxu0
        %3533 = vmatprep.mubr.f32.mxu0 0.0
        %3534 = vmatmul.mubr.f32.gmra.mxu0 %v3385
        %v3535 = vpop.f32.mrf.mxu0
        %v3536 = vadd.f32 0.0, %v3535
        %v3537 = vpop.f32.mrf.mxu0
        %3538 = vmatprep.mubr.f32.mxu0 0.0
        %3539 = vmatmul.mubr.f32.gmra.mxu0 %v3386
        %v3540 = vpop.f32.mrf.mxu0
        %v3541 = vadd.f32 0.0, %v3540
        %v3542 = vpop.f32.mrf.mxu0
        %3543 = vmatprep.mubr.f32.mxu0 0.0
        %3544 = vmatmul.mubr.f32.gmra.mxu0 %v3387
        %v3545 = vpop.f32.mrf.mxu0
        %v3546 = vadd.f32 0.0, %v3545
        %v3547 = vpop.f32.mrf.mxu0
        %3548 = vmatprep.mubr.f32.mxu0 0.0
        %3549 = vmatmul.mubr.f32.gmra.mxu0 %v3388
        %v3550 = vpop.f32.mrf.mxu0
        %v3551 = vadd.f32 0.0, %v3550
        %v3552 = vpop.f32.mrf.mxu0
        %3553 = vmatprep.mubr.f32.mxu0 0.0
        %3554 = vmatmul.mubr.f32.gmra.mxu0 %v3389
        %v3555 = vpop.f32.mrf.mxu0
        %v3556 = vadd.f32 0.0, %v3555
        %v3557 = vpop.f32.mrf.mxu0
        %3558 = vmatprep.mubr.f32.mxu0 0.0
        %3559 = vmatmul.mubr.f32.gmra.mxu0 %v3390
        %v3560 = vpop.f32.mrf.mxu0
        %v3561 = vadd.f32 0.0, %v3560
        %v3562 = vpop.f32.mrf.mxu0
        %3563 = vmatprep.mubr.f32.mxu0 0.0
        %3564 = vmatmul.mubr.f32.gmra.mxu0 %v3391
        %v3565 = vpop.f32.mrf.mxu0
        %v3566 = vadd.f32 0.0, %v3565
        %v3567 = vpop.f32.mrf.mxu0
        %3568 = vmatprep.mubr.f32.mxu0 0.0
        %3569 = vmatmul.mubr.f32.gmra.mxu0 %v3392
        %v3570 = vpop.f32.mrf.mxu0
        %v3571 = vadd.f32 0.0, %v3570
        %v3572 = vpop.f32.mrf.mxu0
        %3573 = vmatprep.mubr.f32.mxu0 0.0
        %3574 = vmatmul.mubr.f32.gmra.mxu0 %v3393
        %v3575 = vpop.f32.mrf.mxu0
        %v3576 = vadd.f32 0.0, %v3575
        %v3577 = vpop.f32.mrf.mxu0
        %3578 = vmatprep.mubr.f32.mxu0 0.0
        %3579 = vmatmul.mubr.f32.gmra.mxu0 %v3394
        %v3580 = vpop.f32.mrf.mxu0
        %v3581 = vadd.f32 0.0, %v3580
        %v3582 = vpop.f32.mrf.mxu0
        %3583 = vmatprep.mubr.f32.mxu0 0.0
        %3584 = vmatmul.mubr.f32.gmra.mxu0 %v3395
        %v3585 = vpop.f32.mrf.mxu0
        %v3586 = vadd.f32 0.0, %v3585
        %v3587 = vpop.f32.mrf.mxu0
        %3588 = vmatprep.mubr.f32.mxu0 0.0
        %3589 = vmatmul.mubr.f32.gmra.mxu0 %v3396
        %v3590 = vpop.f32.mrf.mxu0
        %v3591 = vadd.f32 0.0, %v3590
        %v3592 = vpop.f32.mrf.mxu0
        %3593 = vmatprep.mubr.f32.mxu0 0.0
        %3594 = vmatmul.mubr.f32.gmra.mxu0 %v3397
        %v3595 = vpop.f32.mrf.mxu0
        %v3596 = vadd.f32 0.0, %v3595
        %v3597 = vpop.f32.mrf.mxu0
        %3598 = vmatprep.mubr.f32.mxu0 0.0
        %3599 = vmatmul.mubr.f32.gmra.mxu0 %v3398
        %v3600 = vpop.f32.mrf.mxu0
        %v3601 = vadd.f32 0.0, %v3600
        %v3602 = vpop.f32.mrf.mxu0
        %3603 = vmatprep.mubr.f32.mxu0 0.0
        %3604 = vmatmul.mubr.f32.gmra.mxu0 %v3399
        %v3605 = vpop.f32.mrf.mxu0
        %v3606 = vadd.f32 0.0, %v3605
        %v3607 = vpop.f32.mrf.mxu0
        %3608 = vdwg.mxu0
        %3609 = vrot.lane.b32.xlu0 %v2404, 64
        %v3610 = vpop.permute.xlu0 %3609
        %3611 = vrot.lane.b32.xlu0 %v2407, 64
        %v3612 = vpop.permute.xlu0 %3611
        %3613 = vrot.lane.b32.xlu0 %v2410, 64
        %v3614 = vpop.permute.xlu0 %3613
        %3615 = vrot.lane.b32.xlu0 %v2413, 64
        %v3616 = vpop.permute.xlu0 %3615
        %3617 = vrot.lane.b32.xlu0 %v2416, 64
        %v3618 = vpop.permute.xlu0 %3617
        %3619 = vrot.lane.b32.xlu0 %v2419, 64
        %v3620 = vpop.permute.xlu0 %3619
        %3621 = vrot.lane.b32.xlu0 %v2422, 64
        %v3622 = vpop.permute.xlu0 %3621
        %3623 = vrot.lane.b32.xlu0 %v2425, 64
        %v3624 = vpop.permute.xlu0 %3623
        %3625 = vrot.lane.b32.xlu0 %v2428, 64
        %v3626 = vpop.permute.xlu0 %3625
        %3627 = vrot.lane.b32.xlu0 %v2431, 64
        %v3628 = vpop.permute.xlu0 %3627
        %3629 = vrot.lane.b32.xlu0 %v2434, 64
        %v3630 = vpop.permute.xlu0 %3629
        %3631 = vrot.lane.b32.xlu0 %v2437, 64
        %v3632 = vpop.permute.xlu0 %3631
        %3633 = vrot.lane.b32.xlu0 %v2440, 64
        %v3634 = vpop.permute.xlu0 %3633
        %3635 = vrot.lane.b32.xlu0 %v2443, 64
        %v3636 = vpop.permute.xlu0 %3635
        %3637 = vrot.lane.b32.xlu0 %v2446, 64
        %v3638 = vpop.permute.xlu0 %3637
        %3639 = vrot.lane.b32.xlu0 %v2449, 64
        %v3640 = vpop.permute.xlu0 %3639
        %3641 = vrot.lane.b32.xlu0 %v1378, 64
        %v3642 = vpop.permute.xlu0 %3641
        %3643 = vrot.lane.b32.xlu0 %v1384, 64
        %v3644 = vpop.permute.xlu0 %3643
        %3645 = vrot.lane.b32.xlu0 %v1390, 64
        %v3646 = vpop.permute.xlu0 %3645
        %3647 = vrot.lane.b32.xlu0 %v1396, 64
        %v3648 = vpop.permute.xlu0 %3647
        %3649 = vrot.lane.b32.xlu0 %v1402, 64
        %v3650 = vpop.permute.xlu0 %3649
        %3651 = vrot.lane.b32.xlu0 %v1408, 64
        %v3652 = vpop.permute.xlu0 %3651
        %3653 = vrot.lane.b32.xlu0 %v1414, 64
        %v3654 = vpop.permute.xlu0 %3653
        %3655 = vrot.lane.b32.xlu0 %v1420, 64
        %v3656 = vpop.permute.xlu0 %3655
        %3657 = vrot.lane.b32.xlu0 %v1426, 64
        %v3658 = vpop.permute.xlu0 %3657
        %3659 = vrot.lane.b32.xlu0 %v1432, 64
        %v3660 = vpop.permute.xlu0 %3659
        %3661 = vrot.lane.b32.xlu0 %v1438, 64
        %v3662 = vpop.permute.xlu0 %3661
        %3663 = vrot.lane.b32.xlu0 %v1444, 64
        %v3664 = vpop.permute.xlu0 %3663
        %3665 = vrot.lane.b32.xlu0 %v1450, 64
        %v3666 = vpop.permute.xlu0 %3665
        %3667 = vrot.lane.b32.xlu0 %v1456, 64
        %v3668 = vpop.permute.xlu0 %3667
        %3669 = vrot.lane.b32.xlu0 %v1462, 64
        %v3670 = vpop.permute.xlu0 %3669
        %3671 = vrot.lane.b32.xlu0 %v1468, 64
        %v3672 = vpop.permute.xlu0 %3671
        %v3673 = vsel %vm2452, %v3610, 0
        %v3675 = vsel %vm2452, %v3612, 0
        %v3677 = vsel %vm2452, %v3614, 0
        %v3679 = vsel %vm2452, %v3616, 0
        %v3681 = vsel %vm2452, %v3618, 0
        %v3683 = vsel %vm2452, %v3620, 0
        %v3685 = vsel %vm2452, %v3622, 0
        %v3687 = vsel %vm2452, %v3624, 0
        %v3689 = vsel %vm2452, %v3626, 0
        %v3691 = vsel %vm2452, %v3628, 0
        %v3693 = vsel %vm2452, %v3630, 0
        %v3695 = vsel %vm2452, %v3632, 0
        %v3697 = vsel %vm2452, %v3634, 0
        %v3699 = vsel %vm2452, %v3636, 0
        %v3701 = vsel %vm2452, %v3638, 0
        %v3703 = vsel %vm2452, %v3640, 0
        %v3705 = vsel %vm2452, %v3642, 0
        %v3707 = vsel %vm2452, %v3644, 0
        %v3709 = vsel %vm2452, %v3646, 0
        %v3711 = vsel %vm2452, %v3648, 0
        %v3713 = vsel %vm2452, %v3650, 0
        %v3715 = vsel %vm2452, %v3652, 0
        %v3717 = vsel %vm2452, %v3654, 0
        %v3719 = vsel %vm2452, %v3656, 0
        %v3721 = vsel %vm2452, %v3658, 0
        %v3723 = vsel %vm2452, %v3660, 0
        %v3725 = vsel %vm2452, %v3662, 0
        %v3727 = vsel %vm2452, %v3664, 0
        %v3729 = vsel %vm2452, %v3666, 0
        %v3731 = vsel %vm2452, %v3668, 0
        %v3733 = vsel %vm2452, %v3670, 0
        %v3735 = vsel %vm2452, %v3672, 0
        %3737 = vmatprep.subr.mxu0 0.0
        %3738 = vmatpush1.xpose.msra.mxu0 %v3735
        %3739 = vmatprep.subr.mxu0 0.0
        %3740 = vmatpush1.xpose.msra.mxu0 %v3733
        %3741 = vmatprep.subr.mxu0 0.0
        %3742 = vmatpush1.xpose.msra.mxu0 %v3731
        %3743 = vmatprep.subr.mxu0 0.0
        %3744 = vmatpush1.xpose.msra.mxu0 %v3729
        %3745 = vmatprep.subr.mxu0 0.0
        %3746 = vmatpush1.xpose.msra.mxu0 %v3727
        %3747 = vmatprep.subr.mxu0 0.0
        %3748 = vmatpush1.xpose.msra.mxu0 %v3725
        %3749 = vmatprep.subr.mxu0 0.0
        %3750 = vmatpush1.xpose.msra.mxu0 %v3723
        %3751 = vmatprep.subr.mxu0 0.0
        %3752 = vmatpush1.xpose.msra.mxu0 %v3721
        %3753 = vmatprep.subr.mxu0 0.0
        %3754 = vmatpush1.xpose.msra.mxu0 %v3719
        %3755 = vmatprep.subr.mxu0 0.0
        %3756 = vmatpush1.xpose.msra.mxu0 %v3717
        %3757 = vmatprep.subr.mxu0 0.0
        %3758 = vmatpush1.xpose.msra.mxu0 %v3715
        %3759 = vmatprep.subr.mxu0 0.0
        %3760 = vmatpush1.xpose.msra.mxu0 %v3713
        %3761 = vmatprep.subr.mxu0 0.0
        %3762 = vmatpush1.xpose.msra.mxu0 %v3711
        %3763 = vmatprep.subr.mxu0 0.0
        %3764 = vmatpush1.xpose.msra.mxu0 %v3709
        %3765 = vmatprep.subr.mxu0 0.0
        %3766 = vmatpush1.xpose.msra.mxu0 %v3707
        %3767 = vmatprep.subr.mxu0 0.0
        %3768 = vmatpush1.xpose.msra.mxu0 %v3705
        %3769 = vmatprep.subr.mxu0 0.0
        %3770 = vmatpush2.xpose.msra.mxu0 0.0
        %3771 = vmatprep.subr.mxu0 0.0
        %3772 = vmatpush2.xpose.msra.mxu0 0.0
        %3773 = vmatprep.subr.mxu0 0.0
        %3774 = vmatpush2.xpose.msra.mxu0 0.0
        %3775 = vmatprep.subr.mxu0 0.0
        %3776 = vmatpush2.xpose.msra.mxu0 0.0
        %3777 = vmatprep.subr.mxu0 0.0
        %3778 = vmatpush2.xpose.msra.mxu0 0.0
        %3779 = vmatprep.subr.mxu0 0.0
        %3780 = vmatpush2.xpose.msra.mxu0 0.0
        %3781 = vmatprep.subr.mxu0 0.0
        %3782 = vmatpush2.xpose.msra.mxu0 0.0
        %3783 = vmatprep.subr.mxu0 0.0
        %3784 = vmatpush2.xpose.msra.mxu0 0.0
        %3785 = vmatprep.subr.mxu0 0.0
        %3786 = vmatpush2.xpose.msra.mxu0 0.0
        %3787 = vmatprep.subr.mxu0 0.0
        %3788 = vmatpush2.xpose.msra.mxu0 0.0
        %3789 = vmatprep.subr.mxu0 0.0
        %3790 = vmatpush2.xpose.msra.mxu0 0.0
        %3791 = vmatprep.subr.mxu0 0.0
        %3792 = vmatpush2.xpose.msra.mxu0 0.0
        %3793 = vmatprep.subr.mxu0 0.0
        %3794 = vmatpush2.xpose.msra.mxu0 0.0
        %3795 = vmatprep.subr.mxu0 0.0
        %3796 = vmatpush2.xpose.msra.mxu0 0.0
        %3797 = vmatprep.subr.mxu0 0.0
        %3798 = vmatpush2.xpose.msra.mxu0 0.0
        %3799 = vmatprep.subr.mxu0 0.0
        %3800 = vmatpush2.xpose.msra.mxu0 0.0
        %3801 = vmatprep.mubr.f32.mxu0 0.0
        %3802 = vmatmul.mubr.f32.gmra.mxu0 %v3673
        %v3803 = vpop.f32.mrf.mxu0
        %v3804 = vadd.f32 0.0, %v3803
        %v3805 = vpop.f32.mrf.mxu0
        %3806 = vmatprep.mubr.f32.mxu0 0.0
        %3807 = vmatmul.mubr.f32.gmra.mxu0 %v3675
        %v3808 = vpop.f32.mrf.mxu0
        %v3809 = vadd.f32 0.0, %v3808
        %v3810 = vpop.f32.mrf.mxu0
        %3811 = vmatprep.mubr.f32.mxu0 0.0
        %3812 = vmatmul.mubr.f32.gmra.mxu0 %v3677
        %v3813 = vpop.f32.mrf.mxu0
        %v3814 = vadd.f32 0.0, %v3813
        %v3815 = vpop.f32.mrf.mxu0
        %3816 = vmatprep.mubr.f32.mxu0 0.0
        %3817 = vmatmul.mubr.f32.gmra.mxu0 %v3679
        %v3818 = vpop.f32.mrf.mxu0
        %v3819 = vadd.f32 0.0, %v3818
        %v3820 = vpop.f32.mrf.mxu0
        %3821 = vmatprep.mubr.f32.mxu0 0.0
        %3822 = vmatmul.mubr.f32.gmra.mxu0 %v3681
        %v3823 = vpop.f32.mrf.mxu0
        %v3824 = vadd.f32 0.0, %v3823
        %v3825 = vpop.f32.mrf.mxu0
        %3826 = vmatprep.mubr.f32.mxu0 0.0
        %3827 = vmatmul.mubr.f32.gmra.mxu0 %v3683
        %v3828 = vpop.f32.mrf.mxu0
        %v3829 = vadd.f32 0.0, %v3828
        %v3830 = vpop.f32.mrf.mxu0
        %3831 = vmatprep.mubr.f32.mxu0 0.0
        %3832 = vmatmul.mubr.f32.gmra.mxu0 %v3685
        %v3833 = vpop.f32.mrf.mxu0
        %v3834 = vadd.f32 0.0, %v3833
        %v3835 = vpop.f32.mrf.mxu0
        %3836 = vmatprep.mubr.f32.mxu0 0.0
        %3837 = vmatmul.mubr.f32.gmra.mxu0 %v3687
        %v3838 = vpop.f32.mrf.mxu0
        %v3839 = vadd.f32 0.0, %v3838
        %v3840 = vpop.f32.mrf.mxu0
        %3841 = vmatprep.mubr.f32.mxu0 0.0
        %3842 = vmatmul.mubr.f32.gmra.mxu0 %v3689
        %v3843 = vpop.f32.mrf.mxu0
        %v3844 = vadd.f32 0.0, %v3843
        %v3845 = vpop.f32.mrf.mxu0
        %3846 = vmatprep.mubr.f32.mxu0 0.0
        %3847 = vmatmul.mubr.f32.gmra.mxu0 %v3691
        %v3848 = vpop.f32.mrf.mxu0
        %v3849 = vadd.f32 0.0, %v3848
        %v3850 = vpop.f32.mrf.mxu0
        %3851 = vmatprep.mubr.f32.mxu0 0.0
        %3852 = vmatmul.mubr.f32.gmra.mxu0 %v3693
        %v3853 = vpop.f32.mrf.mxu0
        %v3854 = vadd.f32 0.0, %v3853
        %v3855 = vpop.f32.mrf.mxu0
        %3856 = vmatprep.mubr.f32.mxu0 0.0
        %3857 = vmatmul.mubr.f32.gmra.mxu0 %v3695
        %v3858 = vpop.f32.mrf.mxu0
        %v3859 = vadd.f32 0.0, %v3858
        %v3860 = vpop.f32.mrf.mxu0
        %3861 = vmatprep.mubr.f32.mxu0 0.0
        %3862 = vmatmul.mubr.f32.gmra.mxu0 %v3697
        %v3863 = vpop.f32.mrf.mxu0
        %v3864 = vadd.f32 0.0, %v3863
        %v3865 = vpop.f32.mrf.mxu0
        %3866 = vmatprep.mubr.f32.mxu0 0.0
        %3867 = vmatmul.mubr.f32.gmra.mxu0 %v3699
        %v3868 = vpop.f32.mrf.mxu0
        %v3869 = vadd.f32 0.0, %v3868
        %v3870 = vpop.f32.mrf.mxu0
        %3871 = vmatprep.mubr.f32.mxu0 0.0
        %3872 = vmatmul.mubr.f32.gmra.mxu0 %v3701
        %v3873 = vpop.f32.mrf.mxu0
        %v3874 = vadd.f32 0.0, %v3873
        %v3875 = vpop.f32.mrf.mxu0
        %3876 = vmatprep.mubr.f32.mxu0 0.0
        %3877 = vmatmul.mubr.f32.gmra.mxu0 %v3703
        %v3878 = vpop.f32.mrf.mxu0
        %v3879 = vadd.f32 0.0, %v3878
        %v3880 = vpop.f32.mrf.mxu0
        %3881 = vdwg.mxu0
        %3882 = vmax.xlane.f32.xlu0 %v3804
        %v3883 = vpop.xlane.xlu0 %3882
        %3884 = vmax.xlane.f32.xlu0 %v3809
        %v3885 = vpop.xlane.xlu0 %3884
        %3886 = vmax.xlane.f32.xlu0 %v3814
        %v3887 = vpop.xlane.xlu0 %3886
        %3888 = vmax.xlane.f32.xlu0 %v3819
        %v3889 = vpop.xlane.xlu0 %3888
        %3890 = vmax.xlane.f32.xlu0 %v3824
        %v3891 = vpop.xlane.xlu0 %3890
        %3892 = vmax.xlane.f32.xlu0 %v3829
        %v3893 = vpop.xlane.xlu0 %3892
        %3894 = vmax.xlane.f32.xlu0 %v3834
        %v3895 = vpop.xlane.xlu0 %3894
        %3896 = vmax.xlane.f32.xlu0 %v3839
        %v3897 = vpop.xlane.xlu0 %3896
        %3898 = vmax.xlane.f32.xlu0 %v3844
        %v3899 = vpop.xlane.xlu0 %3898
        %3900 = vmax.xlane.f32.xlu0 %v3849
        %v3901 = vpop.xlane.xlu0 %3900
        %3902 = vmax.xlane.f32.xlu0 %v3854
        %v3903 = vpop.xlane.xlu0 %3902
        %3904 = vmax.xlane.f32.xlu0 %v3859
        %v3905 = vpop.xlane.xlu0 %3904
        %3906 = vmax.xlane.f32.xlu0 %v3864
        %v3907 = vpop.xlane.xlu0 %3906
        %3908 = vmax.xlane.f32.xlu0 %v3869
        %v3909 = vpop.xlane.xlu0 %3908
        %3910 = vmax.xlane.f32.xlu0 %v3874
        %v3911 = vpop.xlane.xlu0 %3910
        %3912 = vmax.xlane.f32.xlu0 %v3879
        %v3913 = vpop.xlane.xlu0 %3912
        %v3914 = vsub.f32 %v3804, %v3883
        %v3915 = vsub.f32 %v3809, %v3885
        %v3916 = vsub.f32 %v3814, %v3887
        %v3917 = vsub.f32 %v3819, %v3889
        %v3918 = vsub.f32 %v3824, %v3891
        %v3919 = vsub.f32 %v3829, %v3893
        %v3920 = vsub.f32 %v3834, %v3895
        %v3921 = vsub.f32 %v3839, %v3897
        %v3922 = vsub.f32 %v3844, %v3899
        %v3923 = vsub.f32 %v3849, %v3901
        %v3924 = vsub.f32 %v3854, %v3903
        %v3925 = vsub.f32 %v3859, %v3905
        %v3926 = vsub.f32 %v3864, %v3907
        %v3927 = vsub.f32 %v3869, %v3909
        %v3928 = vsub.f32 %v3874, %v3911
        %v3929 = vsub.f32 %v3879, %v3913
        %v3930 = vmul.f32 %v3914, 1.442695
        %v3931 = vpow.pop %v3930
        %v3932 = vmul.f32 %v3915, 1.442695
        %v3933 = vpow.pop %v3932
        %v3934 = vmul.f32 %v3916, 1.442695
        %v3935 = vpow.pop %v3934
        %v3936 = vmul.f32 %v3917, 1.442695
        %v3937 = vpow.pop %v3936
        %v3938 = vmul.f32 %v3918, 1.442695
        %v3939 = vpow.pop %v3938
        %v3940 = vmul.f32 %v3919, 1.442695
        %v3941 = vpow.pop %v3940
        %v3942 = vmul.f32 %v3920, 1.442695
        %v3943 = vpow.pop %v3942
        %v3944 = vmul.f32 %v3921, 1.442695
        %v3945 = vpow.pop %v3944
        %v3946 = vmul.f32 %v3922, 1.442695
        %v3947 = vpow.pop %v3946
        %v3948 = vmul.f32 %v3923, 1.442695
        %v3949 = vpow.pop %v3948
        %v3950 = vmul.f32 %v3924, 1.442695
        %v3951 = vpow.pop %v3950
        %v3952 = vmul.f32 %v3925, 1.442695
        %v3953 = vpow.pop %v3952
        %v3954 = vmul.f32 %v3926, 1.442695
        %v3955 = vpow.pop %v3954
        %v3956 = vmul.f32 %v3927, 1.442695
        %v3957 = vpow.pop %v3956
        %v3958 = vmul.f32 %v3928, 1.442695
        %v3959 = vpow.pop %v3958
        %v3960 = vmul.f32 %v3929, 1.442695
        %v3961 = vpow.pop %v3960
        %3962 = vadd.xlane.f32.xlu0 %v3931
        %v3963 = vpop.xlane.xlu0 %3962
        %3964 = vadd.xlane.f32.xlu0 %v3933
        %v3965 = vpop.xlane.xlu0 %3964
        %3966 = vadd.xlane.f32.xlu0 %v3935
        %v3967 = vpop.xlane.xlu0 %3966
        %3968 = vadd.xlane.f32.xlu0 %v3937
        %v3969 = vpop.xlane.xlu0 %3968
        %3970 = vadd.xlane.f32.xlu0 %v3939
        %v3971 = vpop.xlane.xlu0 %3970
        %3972 = vadd.xlane.f32.xlu0 %v3941
        %v3973 = vpop.xlane.xlu0 %3972
        %3974 = vadd.xlane.f32.xlu0 %v3943
        %v3975 = vpop.xlane.xlu0 %3974
        %3976 = vadd.xlane.f32.xlu0 %v3945
        %v3977 = vpop.xlane.xlu0 %3976
        %3978 = vadd.xlane.f32.xlu0 %v3947
        %v3979 = vpop.xlane.xlu0 %3978
        %3980 = vadd.xlane.f32.xlu0 %v3949
        %v3981 = vpop.xlane.xlu0 %3980
        %3982 = vadd.xlane.f32.xlu0 %v3951
        %v3983 = vpop.xlane.xlu0 %3982
        %3984 = vadd.xlane.f32.xlu0 %v3953
        %v3985 = vpop.xlane.xlu0 %3984
        %3986 = vadd.xlane.f32.xlu0 %v3955
        %v3987 = vpop.xlane.xlu0 %3986
        %3988 = vadd.xlane.f32.xlu0 %v3957
        %v3989 = vpop.xlane.xlu0 %3988
        %3990 = vadd.xlane.f32.xlu0 %v3959
        %v3991 = vpop.xlane.xlu0 %3990
        %3992 = vadd.xlane.f32.xlu0 %v3961
        %v3993 = vpop.xlane.xlu0 %3992
        %v3994 = vrcp.pop %v3963
        %v3995 = vrcp.pop %v3965
        %v3996 = vrcp.pop %v3967
        %v3997 = vrcp.pop %v3969
        %v3998 = vrcp.pop %v3971
        %v3999 = vrcp.pop %v3973
        %v4000 = vrcp.pop %v3975
        %v4001 = vrcp.pop %v3977
        %v4002 = vrcp.pop %v3979
        %v4003 = vrcp.pop %v3981
        %v4004 = vrcp.pop %v3983
        %v4005 = vrcp.pop %v3985
        %v4006 = vrcp.pop %v3987
        %v4007 = vrcp.pop %v3989
        %v4008 = vrcp.pop %v3991
        %v4009 = vrcp.pop %v3993
        %v4010 = vmul.f32 %v3931, %v3994
        %v4011 = vmul.f32 %v3933, %v3995
        %v4012 = vmul.f32 %v3935, %v3996
        %v4013 = vmul.f32 %v3937, %v3997
        %v4014 = vmul.f32 %v3939, %v3998
        %v4015 = vmul.f32 %v3941, %v3999
        %v4016 = vmul.f32 %v3943, %v4000
        %v4017 = vmul.f32 %v3945, %v4001
        %v4018 = vmul.f32 %v3947, %v4002
        %v4019 = vmul.f32 %v3949, %v4003
        %v4020 = vmul.f32 %v3951, %v4004
        %v4021 = vmul.f32 %v3953, %v4005
        %v4022 = vmul.f32 %v3955, %v4006
        %v4023 = vmul.f32 %v3957, %v4007
        %v4024 = vmul.f32 %v3959, %v4008
        %v4025 = vmul.f32 %v3961, %v4009
        %4026 = vrot.lane.b32.xlu0 %v2020, 64
        %v4027 = vpop.permute.xlu0 %4026
        %4028 = vrot.lane.b32.xlu0 %v2026, 64
        %v4029 = vpop.permute.xlu0 %4028
        %4030 = vrot.lane.b32.xlu0 %v2032, 64
        %v4031 = vpop.permute.xlu0 %4030
        %4032 = vrot.lane.b32.xlu0 %v2038, 64
        %v4033 = vpop.permute.xlu0 %4032
        %4034 = vrot.lane.b32.xlu0 %v2044, 64
        %v4035 = vpop.permute.xlu0 %4034
        %4036 = vrot.lane.b32.xlu0 %v2050, 64
        %v4037 = vpop.permute.xlu0 %4036
        %4038 = vrot.lane.b32.xlu0 %v2056, 64
        %v4039 = vpop.permute.xlu0 %4038
        %4040 = vrot.lane.b32.xlu0 %v2062, 64
        %v4041 = vpop.permute.xlu0 %4040
        %4042 = vrot.lane.b32.xlu0 %v2068, 64
        %v4043 = vpop.permute.xlu0 %4042
        %4044 = vrot.lane.b32.xlu0 %v2074, 64
        %v4045 = vpop.permute.xlu0 %4044
        %4046 = vrot.lane.b32.xlu0 %v2080, 64
        %v4047 = vpop.permute.xlu0 %4046
        %4048 = vrot.lane.b32.xlu0 %v2086, 64
        %v4049 = vpop.permute.xlu0 %4048
        %4050 = vrot.lane.b32.xlu0 %v2092, 64
        %v4051 = vpop.permute.xlu0 %4050
        %4052 = vrot.lane.b32.xlu0 %v2098, 64
        %v4053 = vpop.permute.xlu0 %4052
        %4054 = vrot.lane.b32.xlu0 %v2104, 64
        %v4055 = vpop.permute.xlu0 %4054
        %4056 = vrot.lane.b32.xlu0 %v2110, 64
        %v4057 = vpop.permute.xlu0 %4056
        %4074 = vmatprep.subr.mxu0 0.0
        %4075 = vmatpush1.msra.mxu0 %v4057
        %4076 = vmatprep.subr.mxu0 0.0
        %4077 = vmatpush1.msra.mxu0 %v4055
        %4078 = vmatprep.subr.mxu0 0.0
        %4079 = vmatpush1.msra.mxu0 %v4053
        %4080 = vmatprep.subr.mxu0 0.0
        %4081 = vmatpush1.msra.mxu0 %v4051
        %4082 = vmatprep.subr.mxu0 0.0
        %4083 = vmatpush1.msra.mxu0 %v4049
        %4084 = vmatprep.subr.mxu0 0.0
        %4085 = vmatpush1.msra.mxu0 %v4047
        %4086 = vmatprep.subr.mxu0 0.0
        %4087 = vmatpush1.msra.mxu0 %v4045
        %4088 = vmatprep.subr.mxu0 0.0
        %4089 = vmatpush1.msra.mxu0 %v4043
        %4090 = vmatprep.subr.mxu0 0.0
        %4091 = vmatpush1.msra.mxu0 %v4041
        %4092 = vmatprep.subr.mxu0 0.0
        %4093 = vmatpush1.msra.mxu0 %v4039
        %4094 = vmatprep.subr.mxu0 0.0
        %4095 = vmatpush1.msra.mxu0 %v4037
        %4096 = vmatprep.subr.mxu0 0.0
        %4097 = vmatpush1.msra.mxu0 %v4035
        %4098 = vmatprep.subr.mxu0 0.0
        %4099 = vmatpush1.msra.mxu0 %v4033
        %4100 = vmatprep.subr.mxu0 0.0
        %4101 = vmatpush1.msra.mxu0 %v4031
        %4102 = vmatprep.subr.mxu0 0.0
        %4103 = vmatpush1.msra.mxu0 %v4029
        %4104 = vmatprep.subr.mxu0 0.0
        %4105 = vmatpush1.msra.mxu0 %v4027
        %4106 = vmatprep.subr.mxu0 0.0
        %4107 = vmatpush2.msra.mxu0 0.0
        %4108 = vmatprep.subr.mxu0 0.0
        %4109 = vmatpush2.msra.mxu0 0.0
        %4110 = vmatprep.subr.mxu0 0.0
        %4111 = vmatpush2.msra.mxu0 0.0
        %4112 = vmatprep.subr.mxu0 0.0
        %4113 = vmatpush2.msra.mxu0 0.0
        %4114 = vmatprep.subr.mxu0 0.0
        %4115 = vmatpush2.msra.mxu0 0.0
        %4116 = vmatprep.subr.mxu0 0.0
        %4117 = vmatpush2.msra.mxu0 0.0
        %4118 = vmatprep.subr.mxu0 0.0
        %4119 = vmatpush2.msra.mxu0 0.0
        %4120 = vmatprep.subr.mxu0 0.0
        %4121 = vmatpush2.msra.mxu0 0.0
        %4122 = vmatprep.subr.mxu0 0.0
        %4123 = vmatpush2.msra.mxu0 0.0
        %4124 = vmatprep.subr.mxu0 0.0
        %4125 = vmatpush2.msra.mxu0 0.0
        %4126 = vmatprep.subr.mxu0 0.0
        %4127 = vmatpush2.msra.mxu0 0.0
        %4128 = vmatprep.subr.mxu0 0.0
        %4129 = vmatpush2.msra.mxu0 0.0
        %4130 = vmatprep.subr.mxu0 0.0
        %4131 = vmatpush2.msra.mxu0 0.0
        %4132 = vmatprep.subr.mxu0 0.0
        %4133 = vmatpush2.msra.mxu0 0.0
        %4134 = vmatprep.subr.mxu0 0.0
        %4135 = vmatpush2.msra.mxu0 0.0
        %4136 = vmatprep.subr.mxu0 0.0
        %4137 = vmatpush2.msra.mxu0 0.0
        %4138 = vmatprep.mubr.f32.mxu0 0.0
        %4139 = vmatmul.mubr.f32.gmra.mxu0 %v4010
        %v4140 = vpop.f32.mrf.mxu0
        %v4141 = vadd.f32 0.0, %v4140
        %v4142 = vpop.f32.mrf.mxu0
        %4143 = vmatprep.mubr.f32.mxu0 0.0
        %4144 = vmatmul.mubr.f32.gmra.mxu0 %v4011
        %v4145 = vpop.f32.mrf.mxu0
        %v4146 = vadd.f32 0.0, %v4145
        %v4147 = vpop.f32.mrf.mxu0
        %4148 = vmatprep.mubr.f32.mxu0 0.0
        %4149 = vmatmul.mubr.f32.gmra.mxu0 %v4012
        %v4150 = vpop.f32.mrf.mxu0
        %v4151 = vadd.f32 0.0, %v4150
        %v4152 = vpop.f32.mrf.mxu0
        %4153 = vmatprep.mubr.f32.mxu0 0.0
        %4154 = vmatmul.mubr.f32.gmra.mxu0 %v4013
        %v4155 = vpop.f32.mrf.mxu0
        %v4156 = vadd.f32 0.0, %v4155
        %v4157 = vpop.f32.mrf.mxu0
        %4158 = vmatprep.mubr.f32.mxu0 0.0
        %4159 = vmatmul.mubr.f32.gmra.mxu0 %v4014
        %v4160 = vpop.f32.mrf.mxu0
        %v4161 = vadd.f32 0.0, %v4160
        %v4162 = vpop.f32.mrf.mxu0
        %4163 = vmatprep.mubr.f32.mxu0 0.0
        %4164 = vmatmul.mubr.f32.gmra.mxu0 %v4015
        %v4165 = vpop.f32.mrf.mxu0
        %v4166 = vadd.f32 0.0, %v4165
        %v4167 = vpop.f32.mrf.mxu0
        %4168 = vmatprep.mubr.f32.mxu0 0.0
        %4169 = vmatmul.mubr.f32.gmra.mxu0 %v4016
        %v4170 = vpop.f32.mrf.mxu0
        %v4171 = vadd.f32 0.0, %v4170
        %v4172 = vpop.f32.mrf.mxu0
        %4173 = vmatprep.mubr.f32.mxu0 0.0
        %4174 = vmatmul.mubr.f32.gmra.mxu0 %v4017
        %v4175 = vpop.f32.mrf.mxu0
        %v4176 = vadd.f32 0.0, %v4175
        %v4177 = vpop.f32.mrf.mxu0
        %4178 = vmatprep.mubr.f32.mxu0 0.0
        %4179 = vmatmul.mubr.f32.gmra.mxu0 %v4018
        %v4180 = vpop.f32.mrf.mxu0
        %v4181 = vadd.f32 0.0, %v4180
        %v4182 = vpop.f32.mrf.mxu0
        %4183 = vmatprep.mubr.f32.mxu0 0.0
        %4184 = vmatmul.mubr.f32.gmra.mxu0 %v4019
        %v4185 = vpop.f32.mrf.mxu0
        %v4186 = vadd.f32 0.0, %v4185
        %v4187 = vpop.f32.mrf.mxu0
        %4188 = vmatprep.mubr.f32.mxu0 0.0
        %4189 = vmatmul.mubr.f32.gmra.mxu0 %v4020
        %v4190 = vpop.f32.mrf.mxu0
        %v4191 = vadd.f32 0.0, %v4190
        %v4192 = vpop.f32.mrf.mxu0
        %4193 = vmatprep.mubr.f32.mxu0 0.0
        %4194 = vmatmul.mubr.f32.gmra.mxu0 %v4021
        %v4195 = vpop.f32.mrf.mxu0
        %v4196 = vadd.f32 0.0, %v4195
        %v4197 = vpop.f32.mrf.mxu0
        %4198 = vmatprep.mubr.f32.mxu0 0.0
        %4199 = vmatmul.mubr.f32.gmra.mxu0 %v4022
        %v4200 = vpop.f32.mrf.mxu0
        %v4201 = vadd.f32 0.0, %v4200
        %v4202 = vpop.f32.mrf.mxu0
        %4203 = vmatprep.mubr.f32.mxu0 0.0
        %4204 = vmatmul.mubr.f32.gmra.mxu0 %v4023
        %v4205 = vpop.f32.mrf.mxu0
        %v4206 = vadd.f32 0.0, %v4205
        %v4207 = vpop.f32.mrf.mxu0
        %4208 = vmatprep.mubr.f32.mxu0 0.0
        %4209 = vmatmul.mubr.f32.gmra.mxu0 %v4024
        %v4210 = vpop.f32.mrf.mxu0
        %v4211 = vadd.f32 0.0, %v4210
        %v4212 = vpop.f32.mrf.mxu0
        %4213 = vmatprep.mubr.f32.mxu0 0.0
        %4214 = vmatmul.mubr.f32.gmra.mxu0 %v4025
        %v4215 = vpop.f32.mrf.mxu0
        %v4216 = vadd.f32 0.0, %v4215
        %v4217 = vpop.f32.mrf.mxu0
        %4218 = vdwg.mxu0
        %4219 = vrot.lane.b32.xlu0 %v2404, 32
        %v4220 = vpop.permute.xlu0 %4219
        %4221 = vrot.lane.b32.xlu0 %v2407, 32
        %v4222 = vpop.permute.xlu0 %4221
        %4223 = vrot.lane.b32.xlu0 %v2410, 32
        %v4224 = vpop.permute.xlu0 %4223
        %4225 = vrot.lane.b32.xlu0 %v2413, 32
        %v4226 = vpop.permute.xlu0 %4225
        %4227 = vrot.lane.b32.xlu0 %v2416, 32
        %v4228 = vpop.permute.xlu0 %4227
        %4229 = vrot.lane.b32.xlu0 %v2419, 32
        %v4230 = vpop.permute.xlu0 %4229
        %4231 = vrot.lane.b32.xlu0 %v2422, 32
        %v4232 = vpop.permute.xlu0 %4231
        %4233 = vrot.lane.b32.xlu0 %v2425, 32
        %v4234 = vpop.permute.xlu0 %4233
        %4235 = vrot.lane.b32.xlu0 %v2428, 32
        %v4236 = vpop.permute.xlu0 %4235
        %4237 = vrot.lane.b32.xlu0 %v2431, 32
        %v4238 = vpop.permute.xlu0 %4237
        %4239 = vrot.lane.b32.xlu0 %v2434, 32
        %v4240 = vpop.permute.xlu0 %4239
        %4241 = vrot.lane.b32.xlu0 %v2437, 32
        %v4242 = vpop.permute.xlu0 %4241
        %4243 = vrot.lane.b32.xlu0 %v2440, 32
        %v4244 = vpop.permute.xlu0 %4243
        %4245 = vrot.lane.b32.xlu0 %v2443, 32
        %v4246 = vpop.permute.xlu0 %4245
        %4247 = vrot.lane.b32.xlu0 %v2446, 32
        %v4248 = vpop.permute.xlu0 %4247
        %4249 = vrot.lane.b32.xlu0 %v2449, 32
        %v4250 = vpop.permute.xlu0 %4249
        %4251 = vrot.lane.b32.xlu0 %v1378, 32
        %v4252 = vpop.permute.xlu0 %4251
        %4253 = vrot.lane.b32.xlu0 %v1384, 32
        %v4254 = vpop.permute.xlu0 %4253
        %4255 = vrot.lane.b32.xlu0 %v1390, 32
        %v4256 = vpop.permute.xlu0 %4255
        %4257 = vrot.lane.b32.xlu0 %v1396, 32
        %v4258 = vpop.permute.xlu0 %4257
        %4259 = vrot.lane.b32.xlu0 %v1402, 32
        %v4260 = vpop.permute.xlu0 %4259
        %4261 = vrot.lane.b32.xlu0 %v1408, 32
        %v4262 = vpop.permute.xlu0 %4261
        %4263 = vrot.lane.b32.xlu0 %v1414, 32
        %v4264 = vpop.permute.xlu0 %4263
        %4265 = vrot.lane.b32.xlu0 %v1420, 32
        %v4266 = vpop.permute.xlu0 %4265
        %4267 = vrot.lane.b32.xlu0 %v1426, 32
        %v4268 = vpop.permute.xlu0 %4267
        %4269 = vrot.lane.b32.xlu0 %v1432, 32
        %v4270 = vpop.permute.xlu0 %4269
        %4271 = vrot.lane.b32.xlu0 %v1438, 32
        %v4272 = vpop.permute.xlu0 %4271
        %4273 = vrot.lane.b32.xlu0 %v1444, 32
        %v4274 = vpop.permute.xlu0 %4273
        %4275 = vrot.lane.b32.xlu0 %v1450, 32
        %v4276 = vpop.permute.xlu0 %4275
        %4277 = vrot.lane.b32.xlu0 %v1456, 32
        %v4278 = vpop.permute.xlu0 %4277
        %4279 = vrot.lane.b32.xlu0 %v1462, 32
        %v4280 = vpop.permute.xlu0 %4279
        %4281 = vrot.lane.b32.xlu0 %v1468, 32
        %v4282 = vpop.permute.xlu0 %4281
        %v4283 = vsel %vm2452, %v4220, 0
        %v4285 = vsel %vm2452, %v4222, 0
        %v4287 = vsel %vm2452, %v4224, 0
        %v4289 = vsel %vm2452, %v4226, 0
        %v4291 = vsel %vm2452, %v4228, 0
        %v4293 = vsel %vm2452, %v4230, 0
        %v4295 = vsel %vm2452, %v4232, 0
        %v4297 = vsel %vm2452, %v4234, 0
        %v4299 = vsel %vm2452, %v4236, 0
        %v4301 = vsel %vm2452, %v4238, 0
        %v4303 = vsel %vm2452, %v4240, 0
        %v4305 = vsel %vm2452, %v4242, 0
        %v4307 = vsel %vm2452, %v4244, 0
        %v4309 = vsel %vm2452, %v4246, 0
        %v4311 = vsel %vm2452, %v4248, 0
        %v4313 = vsel %vm2452, %v4250, 0
        %v4315 = vsel %vm2452, %v4252, 0
        %v4317 = vsel %vm2452, %v4254, 0
        %v4319 = vsel %vm2452, %v4256, 0
        %v4321 = vsel %vm2452, %v4258, 0
        %v4323 = vsel %vm2452, %v4260, 0
        %v4325 = vsel %vm2452, %v4262, 0
        %v4327 = vsel %vm2452, %v4264, 0
        %v4329 = vsel %vm2452, %v4266, 0
        %v4331 = vsel %vm2452, %v4268, 0
        %v4333 = vsel %vm2452, %v4270, 0
        %v4335 = vsel %vm2452, %v4272, 0
        %v4337 = vsel %vm2452, %v4274, 0
        %v4339 = vsel %vm2452, %v4276, 0
        %v4341 = vsel %vm2452, %v4278, 0
        %v4343 = vsel %vm2452, %v4280, 0
        %v4345 = vsel %vm2452, %v4282, 0
        %4347 = vmatprep.subr.mxu0 0.0
        %4348 = vmatpush1.xpose.msra.mxu0 %v4345
        %4349 = vmatprep.subr.mxu0 0.0
        %4350 = vmatpush1.xpose.msra.mxu0 %v4343
        %4351 = vmatprep.subr.mxu0 0.0
        %4352 = vmatpush1.xpose.msra.mxu0 %v4341
        %4353 = vmatprep.subr.mxu0 0.0
        %4354 = vmatpush1.xpose.msra.mxu0 %v4339
        %4355 = vmatprep.subr.mxu0 0.0
        %4356 = vmatpush1.xpose.msra.mxu0 %v4337
        %4357 = vmatprep.subr.mxu0 0.0
        %4358 = vmatpush1.xpose.msra.mxu0 %v4335
        %4359 = vmatprep.subr.mxu0 0.0
        %4360 = vmatpush1.xpose.msra.mxu0 %v4333
        %4361 = vmatprep.subr.mxu0 0.0
        %4362 = vmatpush1.xpose.msra.mxu0 %v4331
        %4363 = vmatprep.subr.mxu0 0.0
        %4364 = vmatpush1.xpose.msra.mxu0 %v4329
        %4365 = vmatprep.subr.mxu0 0.0
        %4366 = vmatpush1.xpose.msra.mxu0 %v4327
        %4367 = vmatprep.subr.mxu0 0.0
        %4368 = vmatpush1.xpose.msra.mxu0 %v4325
        %4369 = vmatprep.subr.mxu0 0.0
        %4370 = vmatpush1.xpose.msra.mxu0 %v4323
        %4371 = vmatprep.subr.mxu0 0.0
        %4372 = vmatpush1.xpose.msra.mxu0 %v4321
        %4373 = vmatprep.subr.mxu0 0.0
        %4374 = vmatpush1.xpose.msra.mxu0 %v4319
        %4375 = vmatprep.subr.mxu0 0.0
        %4376 = vmatpush1.xpose.msra.mxu0 %v4317
        %4377 = vmatprep.subr.mxu0 0.0
        %4378 = vmatpush1.xpose.msra.mxu0 %v4315
        %4379 = vmatprep.subr.mxu0 0.0
        %4380 = vmatpush2.xpose.msra.mxu0 0.0
        %4381 = vmatprep.subr.mxu0 0.0
        %4382 = vmatpush2.xpose.msra.mxu0 0.0
        %4383 = vmatprep.subr.mxu0 0.0
        %4384 = vmatpush2.xpose.msra.mxu0 0.0
        %4385 = vmatprep.subr.mxu0 0.0
        %4386 = vmatpush2.xpose.msra.mxu0 0.0
        %4387 = vmatprep.subr.mxu0 0.0
        %4388 = vmatpush2.xpose.msra.mxu0 0.0
        %4389 = vmatprep.subr.mxu0 0.0
        %4390 = vmatpush2.xpose.msra.mxu0 0.0
        %4391 = vmatprep.subr.mxu0 0.0
        %4392 = vmatpush2.xpose.msra.mxu0 0.0
        %4393 = vmatprep.subr.mxu0 0.0
        %4394 = vmatpush2.xpose.msra.mxu0 0.0
        %4395 = vmatprep.subr.mxu0 0.0
        %4396 = vmatpush2.xpose.msra.mxu0 0.0
        %4397 = vmatprep.subr.mxu0 0.0
        %4398 = vmatpush2.xpose.msra.mxu0 0.0
        %4399 = vmatprep.subr.mxu0 0.0
        %4400 = vmatpush2.xpose.msra.mxu0 0.0
        %4401 = vmatprep.subr.mxu0 0.0
        %4402 = vmatpush2.xpose.msra.mxu0 0.0
        %4403 = vmatprep.subr.mxu0 0.0
        %4404 = vmatpush2.xpose.msra.mxu0 0.0
        %4405 = vmatprep.subr.mxu0 0.0
        %4406 = vmatpush2.xpose.msra.mxu0 0.0
        %4407 = vmatprep.subr.mxu0 0.0
        %4408 = vmatpush2.xpose.msra.mxu0 0.0
        %4409 = vmatprep.subr.mxu0 0.0
        %4410 = vmatpush2.xpose.msra.mxu0 0.0
        %4411 = vmatprep.mubr.f32.mxu0 0.0
        %4412 = vmatmul.mubr.f32.gmra.mxu0 %v4283
        %v4413 = vpop.f32.mrf.mxu0
        %v4414 = vadd.f32 0.0, %v4413
        %v4415 = vpop.f32.mrf.mxu0
        %4416 = vmatprep.mubr.f32.mxu0 0.0
        %4417 = vmatmul.mubr.f32.gmra.mxu0 %v4285
        %v4418 = vpop.f32.mrf.mxu0
        %v4419 = vadd.f32 0.0, %v4418
        %v4420 = vpop.f32.mrf.mxu0
        %4421 = vmatprep.mubr.f32.mxu0 0.0
        %4422 = vmatmul.mubr.f32.gmra.mxu0 %v4287
        %v4423 = vpop.f32.mrf.mxu0
        %v4424 = vadd.f32 0.0, %v4423
        %v4425 = vpop.f32.mrf.mxu0
        %4426 = vmatprep.mubr.f32.mxu0 0.0
        %4427 = vmatmul.mubr.f32.gmra.mxu0 %v4289
        %v4428 = vpop.f32.mrf.mxu0
        %v4429 = vadd.f32 0.0, %v4428
        %v4430 = vpop.f32.mrf.mxu0
        %4431 = vmatprep.mubr.f32.mxu0 0.0
        %4432 = vmatmul.mubr.f32.gmra.mxu0 %v4291
        %v4433 = vpop.f32.mrf.mxu0
        %v4434 = vadd.f32 0.0, %v4433
        %v4435 = vpop.f32.mrf.mxu0
        %4436 = vmatprep.mubr.f32.mxu0 0.0
        %4437 = vmatmul.mubr.f32.gmra.mxu0 %v4293
        %v4438 = vpop.f32.mrf.mxu0
        %v4439 = vadd.f32 0.0, %v4438
        %v4440 = vpop.f32.mrf.mxu0
        %4441 = vmatprep.mubr.f32.mxu0 0.0
        %4442 = vmatmul.mubr.f32.gmra.mxu0 %v4295
        %v4443 = vpop.f32.mrf.mxu0
        %v4444 = vadd.f32 0.0, %v4443
        %v4445 = vpop.f32.mrf.mxu0
        %4446 = vmatprep.mubr.f32.mxu0 0.0
        %4447 = vmatmul.mubr.f32.gmra.mxu0 %v4297
        %v4448 = vpop.f32.mrf.mxu0
        %v4449 = vadd.f32 0.0, %v4448
        %v4450 = vpop.f32.mrf.mxu0
        %4451 = vmatprep.mubr.f32.mxu0 0.0
        %4452 = vmatmul.mubr.f32.gmra.mxu0 %v4299
        %v4453 = vpop.f32.mrf.mxu0
        %v4454 = vadd.f32 0.0, %v4453
        %v4455 = vpop.f32.mrf.mxu0
        %4456 = vmatprep.mubr.f32.mxu0 0.0
        %4457 = vmatmul.mubr.f32.gmra.mxu0 %v4301
        %v4458 = vpop.f32.mrf.mxu0
        %v4459 = vadd.f32 0.0, %v4458
        %v4460 = vpop.f32.mrf.mxu0
        %4461 = vmatprep.mubr.f32.mxu0 0.0
        %4462 = vmatmul.mubr.f32.gmra.mxu0 %v4303
        %v4463 = vpop.f32.mrf.mxu0
        %v4464 = vadd.f32 0.0, %v4463
        %v4465 = vpop.f32.mrf.mxu0
        %4466 = vmatprep.mubr.f32.mxu0 0.0
        %4467 = vmatmul.mubr.f32.gmra.mxu0 %v4305
        %v4468 = vpop.f32.mrf.mxu0
        %v4469 = vadd.f32 0.0, %v4468
        %v4470 = vpop.f32.mrf.mxu0
        %4471 = vmatprep.mubr.f32.mxu0 0.0
        %4472 = vmatmul.mubr.f32.gmra.mxu0 %v4307
        %v4473 = vpop.f32.mrf.mxu0
        %v4474 = vadd.f32 0.0, %v4473
        %v4475 = vpop.f32.mrf.mxu0
        %4476 = vmatprep.mubr.f32.mxu0 0.0
        %4477 = vmatmul.mubr.f32.gmra.mxu0 %v4309
        %v4478 = vpop.f32.mrf.mxu0
        %v4479 = vadd.f32 0.0, %v4478
        %v4480 = vpop.f32.mrf.mxu0
        %4481 = vmatprep.mubr.f32.mxu0 0.0
        %4482 = vmatmul.mubr.f32.gmra.mxu0 %v4311
        %v4483 = vpop.f32.mrf.mxu0
        %v4484 = vadd.f32 0.0, %v4483
        %v4485 = vpop.f32.mrf.mxu0
        %4486 = vmatprep.mubr.f32.mxu0 0.0
        %4487 = vmatmul.mubr.f32.gmra.mxu0 %v4313
        %v4488 = vpop.f32.mrf.mxu0
        %v4489 = vadd.f32 0.0, %v4488
        %v4490 = vpop.f32.mrf.mxu0
        %4491 = vdwg.mxu0
        %4492 = vmax.xlane.f32.xlu0 %v4414
        %v4493 = vpop.xlane.xlu0 %4492
        %4494 = vmax.xlane.f32.xlu0 %v4419
        %v4495 = vpop.xlane.xlu0 %4494
        %4496 = vmax.xlane.f32.xlu0 %v4424
        %v4497 = vpop.xlane.xlu0 %4496
        %4498 = vmax.xlane.f32.xlu0 %v4429
        %v4499 = vpop.xlane.xlu0 %4498
        %4500 = vmax.xlane.f32.xlu0 %v4434
        %v4501 = vpop.xlane.xlu0 %4500
        %4502 = vmax.xlane.f32.xlu0 %v4439
        %v4503 = vpop.xlane.xlu0 %4502
        %4504 = vmax.xlane.f32.xlu0 %v4444
        %v4505 = vpop.xlane.xlu0 %4504
        %4506 = vmax.xlane.f32.xlu0 %v4449
        %v4507 = vpop.xlane.xlu0 %4506
        %4508 = vmax.xlane.f32.xlu0 %v4454
        %v4509 = vpop.xlane.xlu0 %4508
        %4510 = vmax.xlane.f32.xlu0 %v4459
        %v4511 = vpop.xlane.xlu0 %4510
        %4512 = vmax.xlane.f32.xlu0 %v4464
        %v4513 = vpop.xlane.xlu0 %4512
        %4514 = vmax.xlane.f32.xlu0 %v4469
        %v4515 = vpop.xlane.xlu0 %4514
        %4516 = vmax.xlane.f32.xlu0 %v4474
        %v4517 = vpop.xlane.xlu0 %4516
        %4518 = vmax.xlane.f32.xlu0 %v4479
        %v4519 = vpop.xlane.xlu0 %4518
        %4520 = vmax.xlane.f32.xlu0 %v4484
        %v4521 = vpop.xlane.xlu0 %4520
        %4522 = vmax.xlane.f32.xlu0 %v4489
        %v4523 = vpop.xlane.xlu0 %4522
        %v4524 = vsub.f32 %v4414, %v4493
        %v4525 = vsub.f32 %v4419, %v4495
        %v4526 = vsub.f32 %v4424, %v4497
        %v4527 = vsub.f32 %v4429, %v4499
        %v4528 = vsub.f32 %v4434, %v4501
        %v4529 = vsub.f32 %v4439, %v4503
        %v4530 = vsub.f32 %v4444, %v4505
        %v4531 = vsub.f32 %v4449, %v4507
        %v4532 = vsub.f32 %v4454, %v4509
        %v4533 = vsub.f32 %v4459, %v4511
        %v4534 = vsub.f32 %v4464, %v4513
        %v4535 = vsub.f32 %v4469, %v4515
        %v4536 = vsub.f32 %v4474, %v4517
        %v4537 = vsub.f32 %v4479, %v4519
        %v4538 = vsub.f32 %v4484, %v4521
        %v4539 = vsub.f32 %v4489, %v4523
        %v4540 = vmul.f32 %v4524, 1.442695
        %v4541 = vpow.pop %v4540
        %v4542 = vmul.f32 %v4525, 1.442695
        %v4543 = vpow.pop %v4542
        %v4544 = vmul.f32 %v4526, 1.442695
        %v4545 = vpow.pop %v4544
        %v4546 = vmul.f32 %v4527, 1.442695
        %v4547 = vpow.pop %v4546
        %v4548 = vmul.f32 %v4528, 1.442695
        %v4549 = vpow.pop %v4548
        %v4550 = vmul.f32 %v4529, 1.442695
        %v4551 = vpow.pop %v4550
        %v4552 = vmul.f32 %v4530, 1.442695
        %v4553 = vpow.pop %v4552
        %v4554 = vmul.f32 %v4531, 1.442695
        %v4555 = vpow.pop %v4554
        %v4556 = vmul.f32 %v4532, 1.442695
        %v4557 = vpow.pop %v4556
        %v4558 = vmul.f32 %v4533, 1.442695
        %v4559 = vpow.pop %v4558
        %v4560 = vmul.f32 %v4534, 1.442695
        %v4561 = vpow.pop %v4560
        %v4562 = vmul.f32 %v4535, 1.442695
        %v4563 = vpow.pop %v4562
        %v4564 = vmul.f32 %v4536, 1.442695
        %v4565 = vpow.pop %v4564
        %v4566 = vmul.f32 %v4537, 1.442695
        %v4567 = vpow.pop %v4566
        %v4568 = vmul.f32 %v4538, 1.442695
        %v4569 = vpow.pop %v4568
        %v4570 = vmul.f32 %v4539, 1.442695
        %v4571 = vpow.pop %v4570
        %4572 = vadd.xlane.f32.xlu0 %v4541
        %v4573 = vpop.xlane.xlu0 %4572
        %4574 = vadd.xlane.f32.xlu0 %v4543
        %v4575 = vpop.xlane.xlu0 %4574
        %4576 = vadd.xlane.f32.xlu0 %v4545
        %v4577 = vpop.xlane.xlu0 %4576
        %4578 = vadd.xlane.f32.xlu0 %v4547
        %v4579 = vpop.xlane.xlu0 %4578
        %4580 = vadd.xlane.f32.xlu0 %v4549
        %v4581 = vpop.xlane.xlu0 %4580
        %4582 = vadd.xlane.f32.xlu0 %v4551
        %v4583 = vpop.xlane.xlu0 %4582
        %4584 = vadd.xlane.f32.xlu0 %v4553
        %v4585 = vpop.xlane.xlu0 %4584
        %4586 = vadd.xlane.f32.xlu0 %v4555
        %v4587 = vpop.xlane.xlu0 %4586
        %4588 = vadd.xlane.f32.xlu0 %v4557
        %v4589 = vpop.xlane.xlu0 %4588
        %4590 = vadd.xlane.f32.xlu0 %v4559
        %v4591 = vpop.xlane.xlu0 %4590
        %4592 = vadd.xlane.f32.xlu0 %v4561
        %v4593 = vpop.xlane.xlu0 %4592
        %4594 = vadd.xlane.f32.xlu0 %v4563
        %v4595 = vpop.xlane.xlu0 %4594
        %4596 = vadd.xlane.f32.xlu0 %v4565
        %v4597 = vpop.xlane.xlu0 %4596
        %4598 = vadd.xlane.f32.xlu0 %v4567
        %v4599 = vpop.xlane.xlu0 %4598
        %4600 = vadd.xlane.f32.xlu0 %v4569
        %v4601 = vpop.xlane.xlu0 %4600
        %4602 = vadd.xlane.f32.xlu0 %v4571
        %v4603 = vpop.xlane.xlu0 %4602
        %v4604 = vrcp.pop %v4573
        %v4605 = vrcp.pop %v4575
        %v4606 = vrcp.pop %v4577
        %v4607 = vrcp.pop %v4579
        %v4608 = vrcp.pop %v4581
        %v4609 = vrcp.pop %v4583
        %v4610 = vrcp.pop %v4585
        %v4611 = vrcp.pop %v4587
        %v4612 = vrcp.pop %v4589
        %v4613 = vrcp.pop %v4591
        %v4614 = vrcp.pop %v4593
        %v4615 = vrcp.pop %v4595
        %v4616 = vrcp.pop %v4597
        %v4617 = vrcp.pop %v4599
        %v4618 = vrcp.pop %v4601
        %v4619 = vrcp.pop %v4603
        %v4620 = vmul.f32 %v4541, %v4604
        %v4621 = vmul.f32 %v4543, %v4605
        %v4622 = vmul.f32 %v4545, %v4606
        %v4623 = vmul.f32 %v4547, %v4607
        %v4624 = vmul.f32 %v4549, %v4608
        %v4625 = vmul.f32 %v4551, %v4609
        %v4626 = vmul.f32 %v4553, %v4610
        %v4627 = vmul.f32 %v4555, %v4611
        %v4628 = vmul.f32 %v4557, %v4612
        %v4629 = vmul.f32 %v4559, %v4613
        %v4630 = vmul.f32 %v4561, %v4614
        %v4631 = vmul.f32 %v4563, %v4615
        %v4632 = vmul.f32 %v4565, %v4616
        %v4633 = vmul.f32 %v4567, %v4617
        %v4634 = vmul.f32 %v4569, %v4618
        %v4635 = vmul.f32 %v4571, %v4619
        %4636 = vrot.lane.b32.xlu0 %v2020, 32
        %v4637 = vpop.permute.xlu0 %4636
        %4638 = vrot.lane.b32.xlu0 %v2026, 32
        %v4639 = vpop.permute.xlu0 %4638
        %4640 = vrot.lane.b32.xlu0 %v2032, 32
        %v4641 = vpop.permute.xlu0 %4640
        %4642 = vrot.lane.b32.xlu0 %v2038, 32
        %v4643 = vpop.permute.xlu0 %4642
        %4644 = vrot.lane.b32.xlu0 %v2044, 32
        %v4645 = vpop.permute.xlu0 %4644
        %4646 = vrot.lane.b32.xlu0 %v2050, 32
        %v4647 = vpop.permute.xlu0 %4646
        %4648 = vrot.lane.b32.xlu0 %v2056, 32
        %v4649 = vpop.permute.xlu0 %4648
        %4650 = vrot.lane.b32.xlu0 %v2062, 32
        %v4651 = vpop.permute.xlu0 %4650
        %4652 = vrot.lane.b32.xlu0 %v2068, 32
        %v4653 = vpop.permute.xlu0 %4652
        %4654 = vrot.lane.b32.xlu0 %v2074, 32
        %v4655 = vpop.permute.xlu0 %4654
        %4656 = vrot.lane.b32.xlu0 %v2080, 32
        %v4657 = vpop.permute.xlu0 %4656
        %4658 = vrot.lane.b32.xlu0 %v2086, 32
        %v4659 = vpop.permute.xlu0 %4658
        %4660 = vrot.lane.b32.xlu0 %v2092, 32
        %v4661 = vpop.permute.xlu0 %4660
        %4662 = vrot.lane.b32.xlu0 %v2098, 32
        %v4663 = vpop.permute.xlu0 %4662
        %4664 = vrot.lane.b32.xlu0 %v2104, 32
        %v4665 = vpop.permute.xlu0 %4664
        %4666 = vrot.lane.b32.xlu0 %v2110, 32
        %v4667 = vpop.permute.xlu0 %4666
        %4684 = vmatprep.subr.mxu0 0.0
        %4685 = vmatpush1.msra.mxu0 %v4667
        %4686 = vmatprep.subr.mxu0 0.0
        %4687 = vmatpush1.msra.mxu0 %v4665
        %4688 = vmatprep.subr.mxu0 0.0
        %4689 = vmatpush1.msra.mxu0 %v4663
        %4690 = vmatprep.subr.mxu0 0.0
        %4691 = vmatpush1.msra.mxu0 %v4661
        %4692 = vmatprep.subr.mxu0 0.0
        %4693 = vmatpush1.msra.mxu0 %v4659
        %4694 = vmatprep.subr.mxu0 0.0
        %4695 = vmatpush1.msra.mxu0 %v4657
        %4696 = vmatprep.subr.mxu0 0.0
        %4697 = vmatpush1.msra.mxu0 %v4655
        %4698 = vmatprep.subr.mxu0 0.0
        %4699 = vmatpush1.msra.mxu0 %v4653
        %4700 = vmatprep.subr.mxu0 0.0
        %4701 = vmatpush1.msra.mxu0 %v4651
        %4702 = vmatprep.subr.mxu0 0.0
        %4703 = vmatpush1.msra.mxu0 %v4649
        %4704 = vmatprep.subr.mxu0 0.0
        %4705 = vmatpush1.msra.mxu0 %v4647
        %4706 = vmatprep.subr.mxu0 0.0
        %4707 = vmatpush1.msra.mxu0 %v4645
        %4708 = vmatprep.subr.mxu0 0.0
        %4709 = vmatpush1.msra.mxu0 %v4643
        %4710 = vmatprep.subr.mxu0 0.0
        %4711 = vmatpush1.msra.mxu0 %v4641
        %4712 = vmatprep.subr.mxu0 0.0
        %4713 = vmatpush1.msra.mxu0 %v4639
        %4714 = vmatprep.subr.mxu0 0.0
        %4715 = vmatpush1.msra.mxu0 %v4637
        %4716 = vmatprep.subr.mxu0 0.0
        %4717 = vmatpush2.msra.mxu0 0.0
        %4718 = vmatprep.subr.mxu0 0.0
        %4719 = vmatpush2.msra.mxu0 0.0
        %4720 = vmatprep.subr.mxu0 0.0
        %4721 = vmatpush2.msra.mxu0 0.0
        %4722 = vmatprep.subr.mxu0 0.0
        %4723 = vmatpush2.msra.mxu0 0.0
        %4724 = vmatprep.subr.mxu0 0.0
        %4725 = vmatpush2.msra.mxu0 0.0
        %4726 = vmatprep.subr.mxu0 0.0
        %4727 = vmatpush2.msra.mxu0 0.0
        %4728 = vmatprep.subr.mxu0 0.0
        %4729 = vmatpush2.msra.mxu0 0.0
        %4730 = vmatprep.subr.mxu0 0.0
        %4731 = vmatpush2.msra.mxu0 0.0
        %4732 = vmatprep.subr.mxu0 0.0
        %4733 = vmatpush2.msra.mxu0 0.0
        %4734 = vmatprep.subr.mxu0 0.0
        %4735 = vmatpush2.msra.mxu0 0.0
        %4736 = vmatprep.subr.mxu0 0.0
        %4737 = vmatpush2.msra.mxu0 0.0
        %4738 = vmatprep.subr.mxu0 0.0
        %4739 = vmatpush2.msra.mxu0 0.0
        %4740 = vmatprep.subr.mxu0 0.0
        %4741 = vmatpush2.msra.mxu0 0.0
        %4742 = vmatprep.subr.mxu0 0.0
        %4743 = vmatpush2.msra.mxu0 0.0
        %4744 = vmatprep.subr.mxu0 0.0
        %4745 = vmatpush2.msra.mxu0 0.0
        %4746 = vmatprep.subr.mxu0 0.0
        %4747 = vmatpush2.msra.mxu0 0.0
        %4748 = vmatprep.mubr.f32.mxu0 0.0
        %4749 = vmatmul.mubr.f32.gmra.mxu0 %v4620
        %v4750 = vpop.f32.mrf.mxu0
        %v4751 = vadd.f32 0.0, %v4750
        %v4752 = vpop.f32.mrf.mxu0
        %4753 = vmatprep.mubr.f32.mxu0 0.0
        %4754 = vmatmul.mubr.f32.gmra.mxu0 %v4621
        %v4755 = vpop.f32.mrf.mxu0
        %v4756 = vadd.f32 0.0, %v4755
        %v4757 = vpop.f32.mrf.mxu0
        %4758 = vmatprep.mubr.f32.mxu0 0.0
        %4759 = vmatmul.mubr.f32.gmra.mxu0 %v4622
        %v4760 = vpop.f32.mrf.mxu0
        %v4761 = vadd.f32 0.0, %v4760
        %v4762 = vpop.f32.mrf.mxu0
        %4763 = vmatprep.mubr.f32.mxu0 0.0
        %4764 = vmatmul.mubr.f32.gmra.mxu0 %v4623
        %v4765 = vpop.f32.mrf.mxu0
        %v4766 = vadd.f32 0.0, %v4765
        %v4767 = vpop.f32.mrf.mxu0
        %4768 = vmatprep.mubr.f32.mxu0 0.0
        %4769 = vmatmul.mubr.f32.gmra.mxu0 %v4624
        %v4770 = vpop.f32.mrf.mxu0
        %v4771 = vadd.f32 0.0, %v4770
        %v4772 = vpop.f32.mrf.mxu0
        %4773 = vmatprep.mubr.f32.mxu0 0.0
        %4774 = vmatmul.mubr.f32.gmra.mxu0 %v4625
        %v4775 = vpop.f32.mrf.mxu0
        %v4776 = vadd.f32 0.0, %v4775
        %v4777 = vpop.f32.mrf.mxu0
        %4778 = vmatprep.mubr.f32.mxu0 0.0
        %4779 = vmatmul.mubr.f32.gmra.mxu0 %v4626
        %v4780 = vpop.f32.mrf.mxu0
        %v4781 = vadd.f32 0.0, %v4780
        %v4782 = vpop.f32.mrf.mxu0
        %4783 = vmatprep.mubr.f32.mxu0 0.0
        %4784 = vmatmul.mubr.f32.gmra.mxu0 %v4627
        %v4785 = vpop.f32.mrf.mxu0
        %v4786 = vadd.f32 0.0, %v4785
        %v4787 = vpop.f32.mrf.mxu0
        %4788 = vmatprep.mubr.f32.mxu0 0.0
        %4789 = vmatmul.mubr.f32.gmra.mxu0 %v4628
        %v4790 = vpop.f32.mrf.mxu0
        %v4791 = vadd.f32 0.0, %v4790
        %v4792 = vpop.f32.mrf.mxu0
        %4793 = vmatprep.mubr.f32.mxu0 0.0
        %4794 = vmatmul.mubr.f32.gmra.mxu0 %v4629
        %v4795 = vpop.f32.mrf.mxu0
        %v4796 = vadd.f32 0.0, %v4795
        %v4797 = vpop.f32.mrf.mxu0
        %4798 = vmatprep.mubr.f32.mxu0 0.0
        %4799 = vmatmul.mubr.f32.gmra.mxu0 %v4630
        %v4800 = vpop.f32.mrf.mxu0
        %v4801 = vadd.f32 0.0, %v4800
        %v4802 = vpop.f32.mrf.mxu0
        %4803 = vmatprep.mubr.f32.mxu0 0.0
        %4804 = vmatmul.mubr.f32.gmra.mxu0 %v4631
        %v4805 = vpop.f32.mrf.mxu0
        %v4806 = vadd.f32 0.0, %v4805
        %v4807 = vpop.f32.mrf.mxu0
        %4808 = vmatprep.mubr.f32.mxu0 0.0
        %4809 = vmatmul.mubr.f32.gmra.mxu0 %v4632
        %v4810 = vpop.f32.mrf.mxu0
        %v4811 = vadd.f32 0.0, %v4810
        %v4812 = vpop.f32.mrf.mxu0
        %4813 = vmatprep.mubr.f32.mxu0 0.0
        %4814 = vmatmul.mubr.f32.gmra.mxu0 %v4633
        %v4815 = vpop.f32.mrf.mxu0
        %v4816 = vadd.f32 0.0, %v4815
        %v4817 = vpop.f32.mrf.mxu0
        %4818 = vmatprep.mubr.f32.mxu0 0.0
        %4819 = vmatmul.mubr.f32.gmra.mxu0 %v4634
        %v4820 = vpop.f32.mrf.mxu0
        %v4821 = vadd.f32 0.0, %v4820
        %v4822 = vpop.f32.mrf.mxu0
        %4823 = vmatprep.mubr.f32.mxu0 0.0
        %4824 = vmatmul.mubr.f32.gmra.mxu0 %v4635
        %v4825 = vpop.f32.mrf.mxu0
        %v4826 = vadd.f32 0.0, %v4825
        %v4827 = vpop.f32.mrf.mxu0
        %4828 = vdwg.mxu0
        %v4830 = vsel %vm2452, %v2405, 0
        %v4833 = vsel %vm2452, %v2408, 0
        %v4836 = vsel %vm2452, %v2411, 0
        %v4839 = vsel %vm2452, %v2414, 0
        %v4842 = vsel %vm2452, %v2417, 0
        %v4845 = vsel %vm2452, %v2420, 0
        %v4848 = vsel %vm2452, %v2423, 0
        %v4851 = vsel %vm2452, %v2426, 0
        %v4854 = vsel %vm2452, %v2429, 0
        %v4857 = vsel %vm2452, %v2432, 0
        %v4860 = vsel %vm2452, %v2435, 0
        %v4863 = vsel %vm2452, %v2438, 0
        %v4866 = vsel %vm2452, %v2441, 0
        %v4869 = vsel %vm2452, %v2444, 0
        %v4872 = vsel %vm2452, %v2447, 0
        %v4875 = vsel %vm2452, %v2450, 0
        %v4878 = vsel %vm2452, %v1698, 0
        %v4881 = vsel %vm2452, %v1704, 0
        %v4884 = vsel %vm2452, %v1710, 0
        %v4887 = vsel %vm2452, %v1716, 0
        %v4890 = vsel %vm2452, %v1722, 0
        %v4893 = vsel %vm2452, %v1728, 0
        %v4896 = vsel %vm2452, %v1734, 0
        %v4899 = vsel %vm2452, %v1740, 0
        %v4902 = vsel %vm2452, %v1746, 0
        %v4905 = vsel %vm2452, %v1752, 0
        %v4908 = vsel %vm2452, %v1758, 0
        %v4911 = vsel %vm2452, %v1764, 0
        %v4914 = vsel %vm2452, %v1770, 0
        %v4917 = vsel %vm2452, %v1776, 0
        %v4920 = vsel %vm2452, %v1782, 0
        %v4923 = vsel %vm2452, %v1788, 0
        %4925 = vmatprep.subr.mxu0 0.0
        %4926 = vmatpush1.xpose.msra.mxu0 %v4923
        %4927 = vmatprep.subr.mxu0 0.0
        %4928 = vmatpush1.xpose.msra.mxu0 %v4920
        %4929 = vmatprep.subr.mxu0 0.0
        %4930 = vmatpush1.xpose.msra.mxu0 %v4917
        %4931 = vmatprep.subr.mxu0 0.0
        %4932 = vmatpush1.xpose.msra.mxu0 %v4914
        %4933 = vmatprep.subr.mxu0 0.0
        %4934 = vmatpush1.xpose.msra.mxu0 %v4911
        %4935 = vmatprep.subr.mxu0 0.0
        %4936 = vmatpush1.xpose.msra.mxu0 %v4908
        %4937 = vmatprep.subr.mxu0 0.0
        %4938 = vmatpush1.xpose.msra.mxu0 %v4905
        %4939 = vmatprep.subr.mxu0 0.0
        %4940 = vmatpush1.xpose.msra.mxu0 %v4902
        %4941 = vmatprep.subr.mxu0 0.0
        %4942 = vmatpush1.xpose.msra.mxu0 %v4899
        %4943 = vmatprep.subr.mxu0 0.0
        %4944 = vmatpush1.xpose.msra.mxu0 %v4896
        %4945 = vmatprep.subr.mxu0 0.0
        %4946 = vmatpush1.xpose.msra.mxu0 %v4893
        %4947 = vmatprep.subr.mxu0 0.0
        %4948 = vmatpush1.xpose.msra.mxu0 %v4890
        %4949 = vmatprep.subr.mxu0 0.0
        %4950 = vmatpush1.xpose.msra.mxu0 %v4887
        %4951 = vmatprep.subr.mxu0 0.0
        %4952 = vmatpush1.xpose.msra.mxu0 %v4884
        %4953 = vmatprep.subr.mxu0 0.0
        %4954 = vmatpush1.xpose.msra.mxu0 %v4881
        %4955 = vmatprep.subr.mxu0 0.0
        %4956 = vmatpush1.xpose.msra.mxu0 %v4878
        %4957 = vmatprep.subr.mxu0 0.0
        %4958 = vmatpush2.xpose.msra.mxu0 0.0
        %4959 = vmatprep.subr.mxu0 0.0
        %4960 = vmatpush2.xpose.msra.mxu0 0.0
        %4961 = vmatprep.subr.mxu0 0.0
        %4962 = vmatpush2.xpose.msra.mxu0 0.0
        %4963 = vmatprep.subr.mxu0 0.0
        %4964 = vmatpush2.xpose.msra.mxu0 0.0
        %4965 = vmatprep.subr.mxu0 0.0
        %4966 = vmatpush2.xpose.msra.mxu0 0.0
        %4967 = vmatprep.subr.mxu0 0.0
        %4968 = vmatpush2.xpose.msra.mxu0 0.0
        %4969 = vmatprep.subr.mxu0 0.0
        %4970 = vmatpush2.xpose.msra.mxu0 0.0
        %4971 = vmatprep.subr.mxu0 0.0
        %4972 = vmatpush2.xpose.msra.mxu0 0.0
        %4973 = vmatprep.subr.mxu0 0.0
        %4974 = vmatpush2.xpose.msra.mxu0 0.0
        %4975 = vmatprep.subr.mxu0 0.0
        %4976 = vmatpush2.xpose.msra.mxu0 0.0
        %4977 = vmatprep.subr.mxu0 0.0
        %4978 = vmatpush2.xpose.msra.mxu0 0.0
        %4979 = vmatprep.subr.mxu0 0.0
        %4980 = vmatpush2.xpose.msra.mxu0 0.0
        %4981 = vmatprep.subr.mxu0 0.0
        %4982 = vmatpush2.xpose.msra.mxu0 0.0
        %4983 = vmatprep.subr.mxu0 0.0
        %4984 = vmatpush2.xpose.msra.mxu0 0.0
        %4985 = vmatprep.subr.mxu0 0.0
        %4986 = vmatpush2.xpose.msra.mxu0 0.0
        %4987 = vmatprep.subr.mxu0 0.0
        %4988 = vmatpush2.xpose.msra.mxu0 0.0
        %4989 = vmatprep.mubr.f32.mxu0 0.0
        %4990 = vmatmul.mubr.f32.gmra.mxu0 %v4830
        %v4991 = vpop.f32.mrf.mxu0
        %v4992 = vadd.f32 0.0, %v4991
        %v4993 = vpop.f32.mrf.mxu0
        %4994 = vmatprep.mubr.f32.mxu0 0.0
        %4995 = vmatmul.mubr.f32.gmra.mxu0 %v4833
        %v4996 = vpop.f32.mrf.mxu0
        %v4997 = vadd.f32 0.0, %v4996
        %v4998 = vpop.f32.mrf.mxu0
        %4999 = vmatprep.mubr.f32.mxu0 0.0
        %5000 = vmatmul.mubr.f32.gmra.mxu0 %v4836
        %v5001 = vpop.f32.mrf.mxu0
        %v5002 = vadd.f32 0.0, %v5001
        %v5003 = vpop.f32.mrf.mxu0
        %5004 = vmatprep.mubr.f32.mxu0 0.0
        %5005 = vmatmul.mubr.f32.gmra.mxu0 %v4839
        %v5006 = vpop.f32.mrf.mxu0
        %v5007 = vadd.f32 0.0, %v5006
        %v5008 = vpop.f32.mrf.mxu0
        %5009 = vmatprep.mubr.f32.mxu0 0.0
        %5010 = vmatmul.mubr.f32.gmra.mxu0 %v4842
        %v5011 = vpop.f32.mrf.mxu0
        %v5012 = vadd.f32 0.0, %v5011
        %v5013 = vpop.f32.mrf.mxu0
        %5014 = vmatprep.mubr.f32.mxu0 0.0
        %5015 = vmatmul.mubr.f32.gmra.mxu0 %v4845
        %v5016 = vpop.f32.mrf.mxu0
        %v5017 = vadd.f32 0.0, %v5016
        %v5018 = vpop.f32.mrf.mxu0
        %5019 = vmatprep.mubr.f32.mxu0 0.0
        %5020 = vmatmul.mubr.f32.gmra.mxu0 %v4848
        %v5021 = vpop.f32.mrf.mxu0
        %v5022 = vadd.f32 0.0, %v5021
        %v5023 = vpop.f32.mrf.mxu0
        %5024 = vmatprep.mubr.f32.mxu0 0.0
        %5025 = vmatmul.mubr.f32.gmra.mxu0 %v4851
        %v5026 = vpop.f32.mrf.mxu0
        %v5027 = vadd.f32 0.0, %v5026
        %v5028 = vpop.f32.mrf.mxu0
        %5029 = vmatprep.mubr.f32.mxu0 0.0
        %5030 = vmatmul.mubr.f32.gmra.mxu0 %v4854
        %v5031 = vpop.f32.mrf.mxu0
        %v5032 = vadd.f32 0.0, %v5031
        %v5033 = vpop.f32.mrf.mxu0
        %5034 = vmatprep.mubr.f32.mxu0 0.0
        %5035 = vmatmul.mubr.f32.gmra.mxu0 %v4857
        %v5036 = vpop.f32.mrf.mxu0
        %v5037 = vadd.f32 0.0, %v5036
        %v5038 = vpop.f32.mrf.mxu0
        %5039 = vmatprep.mubr.f32.mxu0 0.0
        %5040 = vmatmul.mubr.f32.gmra.mxu0 %v4860
        %v5041 = vpop.f32.mrf.mxu0
        %v5042 = vadd.f32 0.0, %v5041
        %v5043 = vpop.f32.mrf.mxu0
        %5044 = vmatprep.mubr.f32.mxu0 0.0
        %5045 = vmatmul.mubr.f32.gmra.mxu0 %v4863
        %v5046 = vpop.f32.mrf.mxu0
        %v5047 = vadd.f32 0.0, %v5046
        %v5048 = vpop.f32.mrf.mxu0
        %5049 = vmatprep.mubr.f32.mxu0 0.0
        %5050 = vmatmul.mubr.f32.gmra.mxu0 %v4866
        %v5051 = vpop.f32.mrf.mxu0
        %v5052 = vadd.f32 0.0, %v5051
        %v5053 = vpop.f32.mrf.mxu0
        %5054 = vmatprep.mubr.f32.mxu0 0.0
        %5055 = vmatmul.mubr.f32.gmra.mxu0 %v4869
        %v5056 = vpop.f32.mrf.mxu0
        %v5057 = vadd.f32 0.0, %v5056
        %v5058 = vpop.f32.mrf.mxu0
        %5059 = vmatprep.mubr.f32.mxu0 0.0
        %5060 = vmatmul.mubr.f32.gmra.mxu0 %v4872
        %v5061 = vpop.f32.mrf.mxu0
        %v5062 = vadd.f32 0.0, %v5061
        %v5063 = vpop.f32.mrf.mxu0
        %5064 = vmatprep.mubr.f32.mxu0 0.0
        %5065 = vmatmul.mubr.f32.gmra.mxu0 %v4875
        %v5066 = vpop.f32.mrf.mxu0
        %v5067 = vadd.f32 0.0, %v5066
        %v5068 = vpop.f32.mrf.mxu0
        %5069 = vdwg.mxu0
        %5070 = vmax.xlane.f32.xlu0 %v4992
        %v5071 = vpop.xlane.xlu0 %5070
        %5072 = vmax.xlane.f32.xlu0 %v4997
        %v5073 = vpop.xlane.xlu0 %5072
        %5074 = vmax.xlane.f32.xlu0 %v5002
        %v5075 = vpop.xlane.xlu0 %5074
        %5076 = vmax.xlane.f32.xlu0 %v5007
        %v5077 = vpop.xlane.xlu0 %5076
        %5078 = vmax.xlane.f32.xlu0 %v5012
        %v5079 = vpop.xlane.xlu0 %5078
        %5080 = vmax.xlane.f32.xlu0 %v5017
        %v5081 = vpop.xlane.xlu0 %5080
        %5082 = vmax.xlane.f32.xlu0 %v5022
        %v5083 = vpop.xlane.xlu0 %5082
        %5084 = vmax.xlane.f32.xlu0 %v5027
        %v5085 = vpop.xlane.xlu0 %5084
        %5086 = vmax.xlane.f32.xlu0 %v5032
        %v5087 = vpop.xlane.xlu0 %5086
        %5088 = vmax.xlane.f32.xlu0 %v5037
        %v5089 = vpop.xlane.xlu0 %5088
        %5090 = vmax.xlane.f32.xlu0 %v5042
        %v5091 = vpop.xlane.xlu0 %5090
        %5092 = vmax.xlane.f32.xlu0 %v5047
        %v5093 = vpop.xlane.xlu0 %5092
        %5094 = vmax.xlane.f32.xlu0 %v5052
        %v5095 = vpop.xlane.xlu0 %5094
        %5096 = vmax.xlane.f32.xlu0 %v5057
        %v5097 = vpop.xlane.xlu0 %5096
        %5098 = vmax.xlane.f32.xlu0 %v5062
        %v5099 = vpop.xlane.xlu0 %5098
        %5100 = vmax.xlane.f32.xlu0 %v5067
        %v5101 = vpop.xlane.xlu0 %5100
        %v5102 = vsub.f32 %v4992, %v5071
        %v5103 = vsub.f32 %v4997, %v5073
        %v5104 = vsub.f32 %v5002, %v5075
        %v5105 = vsub.f32 %v5007, %v5077
        %v5106 = vsub.f32 %v5012, %v5079
        %v5107 = vsub.f32 %v5017, %v5081
        %v5108 = vsub.f32 %v5022, %v5083
        %v5109 = vsub.f32 %v5027, %v5085
        %v5110 = vsub.f32 %v5032, %v5087
        %v5111 = vsub.f32 %v5037, %v5089
        %v5112 = vsub.f32 %v5042, %v5091
        %v5113 = vsub.f32 %v5047, %v5093
        %v5114 = vsub.f32 %v5052, %v5095
        %v5115 = vsub.f32 %v5057, %v5097
        %v5116 = vsub.f32 %v5062, %v5099
        %v5117 = vsub.f32 %v5067, %v5101
        %v5118 = vmul.f32 %v5102, 1.442695
        %v5119 = vpow.pop %v5118
        %v5120 = vmul.f32 %v5103, 1.442695
        %v5121 = vpow.pop %v5120
        %v5122 = vmul.f32 %v5104, 1.442695
        %v5123 = vpow.pop %v5122
        %v5124 = vmul.f32 %v5105, 1.442695
        %v5125 = vpow.pop %v5124
        %v5126 = vmul.f32 %v5106, 1.442695
        %v5127 = vpow.pop %v5126
        %v5128 = vmul.f32 %v5107, 1.442695
        %v5129 = vpow.pop %v5128
        %v5130 = vmul.f32 %v5108, 1.442695
        %v5131 = vpow.pop %v5130
        %v5132 = vmul.f32 %v5109, 1.442695
        %v5133 = vpow.pop %v5132
        %v5134 = vmul.f32 %v5110, 1.442695
        %v5135 = vpow.pop %v5134
        %v5136 = vmul.f32 %v5111, 1.442695
        %v5137 = vpow.pop %v5136
        %v5138 = vmul.f32 %v5112, 1.442695
        %v5139 = vpow.pop %v5138
        %v5140 = vmul.f32 %v5113, 1.442695
        %v5141 = vpow.pop %v5140
        %v5142 = vmul.f32 %v5114, 1.442695
        %v5143 = vpow.pop %v5142
        %v5144 = vmul.f32 %v5115, 1.442695
        %v5145 = vpow.pop %v5144
        %v5146 = vmul.f32 %v5116, 1.442695
        %v5147 = vpow.pop %v5146
        %v5148 = vmul.f32 %v5117, 1.442695
        %v5149 = vpow.pop %v5148
        %5150 = vadd.xlane.f32.xlu0 %v5119
        %v5151 = vpop.xlane.xlu0 %5150
        %5152 = vadd.xlane.f32.xlu0 %v5121
        %v5153 = vpop.xlane.xlu0 %5152
        %5154 = vadd.xlane.f32.xlu0 %v5123
        %v5155 = vpop.xlane.xlu0 %5154
        %5156 = vadd.xlane.f32.xlu0 %v5125
        %v5157 = vpop.xlane.xlu0 %5156
        %5158 = vadd.xlane.f32.xlu0 %v5127
        %v5159 = vpop.xlane.xlu0 %5158
        %5160 = vadd.xlane.f32.xlu0 %v5129
        %v5161 = vpop.xlane.xlu0 %5160
        %5162 = vadd.xlane.f32.xlu0 %v5131
        %v5163 = vpop.xlane.xlu0 %5162
        %5164 = vadd.xlane.f32.xlu0 %v5133
        %v5165 = vpop.xlane.xlu0 %5164
        %5166 = vadd.xlane.f32.xlu0 %v5135
        %v5167 = vpop.xlane.xlu0 %5166
        %5168 = vadd.xlane.f32.xlu0 %v5137
        %v5169 = vpop.xlane.xlu0 %5168
        %5170 = vadd.xlane.f32.xlu0 %v5139
        %v5171 = vpop.xlane.xlu0 %5170
        %5172 = vadd.xlane.f32.xlu0 %v5141
        %v5173 = vpop.xlane.xlu0 %5172
        %5174 = vadd.xlane.f32.xlu0 %v5143
        %v5175 = vpop.xlane.xlu0 %5174
        %5176 = vadd.xlane.f32.xlu0 %v5145
        %v5177 = vpop.xlane.xlu0 %5176
        %5178 = vadd.xlane.f32.xlu0 %v5147
        %v5179 = vpop.xlane.xlu0 %5178
        %5180 = vadd.xlane.f32.xlu0 %v5149
        %v5181 = vpop.xlane.xlu0 %5180
        %v5182 = vrcp.pop %v5151
        %v5183 = vrcp.pop %v5153
        %v5184 = vrcp.pop %v5155
        %v5185 = vrcp.pop %v5157
        %v5186 = vrcp.pop %v5159
        %v5187 = vrcp.pop %v5161
        %v5188 = vrcp.pop %v5163
        %v5189 = vrcp.pop %v5165
        %v5190 = vrcp.pop %v5167
        %v5191 = vrcp.pop %v5169
        %v5192 = vrcp.pop %v5171
        %v5193 = vrcp.pop %v5173
        %v5194 = vrcp.pop %v5175
        %v5195 = vrcp.pop %v5177
        %v5196 = vrcp.pop %v5179
        %v5197 = vrcp.pop %v5181
        %v5198 = vmul.f32 %v5119, %v5182
        %v5199 = vmul.f32 %v5121, %v5183
        %v5200 = vmul.f32 %v5123, %v5184
        %v5201 = vmul.f32 %v5125, %v5185
        %v5202 = vmul.f32 %v5127, %v5186
        %v5203 = vmul.f32 %v5129, %v5187
        %v5204 = vmul.f32 %v5131, %v5188
        %v5205 = vmul.f32 %v5133, %v5189
        %v5206 = vmul.f32 %v5135, %v5190
        %v5207 = vmul.f32 %v5137, %v5191
        %v5208 = vmul.f32 %v5139, %v5192
        %v5209 = vmul.f32 %v5141, %v5193
        %v5210 = vmul.f32 %v5143, %v5194
        %v5211 = vmul.f32 %v5145, %v5195
        %v5212 = vmul.f32 %v5147, %v5196
        %v5213 = vmul.f32 %v5149, %v5197
        %5214 = vmatprep.subr.mxu0 0.0
        %5215 = vmatpush1.msra.mxu0 %v2112
        %5216 = vmatprep.subr.mxu0 0.0
        %5217 = vmatpush1.msra.mxu0 %v2106
        %5218 = vmatprep.subr.mxu0 0.0
        %5219 = vmatpush1.msra.mxu0 %v2100
        %5220 = vmatprep.subr.mxu0 0.0
        %5221 = vmatpush1.msra.mxu0 %v2094
        %5222 = vmatprep.subr.mxu0 0.0
        %5223 = vmatpush1.msra.mxu0 %v2088
        %5224 = vmatprep.subr.mxu0 0.0
        %5225 = vmatpush1.msra.mxu0 %v2082
        %5226 = vmatprep.subr.mxu0 0.0
        %5227 = vmatpush1.msra.mxu0 %v2076
        %5228 = vmatprep.subr.mxu0 0.0
        %5229 = vmatpush1.msra.mxu0 %v2070
        %5230 = vmatprep.subr.mxu0 0.0
        %5231 = vmatpush1.msra.mxu0 %v2064
        %5232 = vmatprep.subr.mxu0 0.0
        %5233 = vmatpush1.msra.mxu0 %v2058
        %5234 = vmatprep.subr.mxu0 0.0
        %5235 = vmatpush1.msra.mxu0 %v2052
        %5236 = vmatprep.subr.mxu0 0.0
        %5237 = vmatpush1.msra.mxu0 %v2046
        %5238 = vmatprep.subr.mxu0 0.0
        %5239 = vmatpush1.msra.mxu0 %v2040
        %5240 = vmatprep.subr.mxu0 0.0
        %5241 = vmatpush1.msra.mxu0 %v2034
        %5242 = vmatprep.subr.mxu0 0.0
        %5243 = vmatpush1.msra.mxu0 %v2028
        %5244 = vmatprep.subr.mxu0 0.0
        %5245 = vmatpush1.msra.mxu0 %v2022
        %5246 = vmatprep.subr.mxu0 0.0
        %5247 = vmatpush2.msra.mxu0 0.0
        %5248 = vmatprep.subr.mxu0 0.0
        %5249 = vmatpush2.msra.mxu0 0.0
        %5250 = vmatprep.subr.mxu0 0.0
        %5251 = vmatpush2.msra.mxu0 0.0
        %5252 = vmatprep.subr.mxu0 0.0
        %5253 = vmatpush2.msra.mxu0 0.0
        %5254 = vmatprep.subr.mxu0 0.0
        %5255 = vmatpush2.msra.mxu0 0.0
        %5256 = vmatprep.subr.mxu0 0.0
        %5257 = vmatpush2.msra.mxu0 0.0
        %5258 = vmatprep.subr.mxu0 0.0
        %5259 = vmatpush2.msra.mxu0 0.0
        %5260 = vmatprep.subr.mxu0 0.0
        %5261 = vmatpush2.msra.mxu0 0.0
        %5262 = vmatprep.subr.mxu0 0.0
        %5263 = vmatpush2.msra.mxu0 0.0
        %5264 = vmatprep.subr.mxu0 0.0
        %5265 = vmatpush2.msra.mxu0 0.0
        %5266 = vmatprep.subr.mxu0 0.0
        %5267 = vmatpush2.msra.mxu0 0.0
        %5268 = vmatprep.subr.mxu0 0.0
        %5269 = vmatpush2.msra.mxu0 0.0
        %5270 = vmatprep.subr.mxu0 0.0
        %5271 = vmatpush2.msra.mxu0 0.0
        %5272 = vmatprep.subr.mxu0 0.0
        %5273 = vmatpush2.msra.mxu0 0.0
        %5274 = vmatprep.subr.mxu0 0.0
        %5275 = vmatpush2.msra.mxu0 0.0
        %5276 = vmatprep.subr.mxu0 0.0
        %5277 = vmatpush2.msra.mxu0 0.0
        %5278 = vmatprep.mubr.f32.mxu0 0.0
        %5279 = vmatmul.mubr.f32.gmra.mxu0 %v5198
        %v5280 = vpop.f32.mrf.mxu0
        %v5281 = vadd.f32 0.0, %v5280
        %v5282 = vpop.f32.mrf.mxu0
        %5283 = vmatprep.mubr.f32.mxu0 0.0
        %5284 = vmatmul.mubr.f32.gmra.mxu0 %v5199
        %v5285 = vpop.f32.mrf.mxu0
        %v5286 = vadd.f32 0.0, %v5285
        %v5287 = vpop.f32.mrf.mxu0
        %5288 = vmatprep.mubr.f32.mxu0 0.0
        %5289 = vmatmul.mubr.f32.gmra.mxu0 %v5200
        %v5290 = vpop.f32.mrf.mxu0
        %v5291 = vadd.f32 0.0, %v5290
        %v5292 = vpop.f32.mrf.mxu0
        %5293 = vmatprep.mubr.f32.mxu0 0.0
        %5294 = vmatmul.mubr.f32.gmra.mxu0 %v5201
        %v5295 = vpop.f32.mrf.mxu0
        %v5296 = vadd.f32 0.0, %v5295
        %v5297 = vpop.f32.mrf.mxu0
        %5298 = vmatprep.mubr.f32.mxu0 0.0
        %5299 = vmatmul.mubr.f32.gmra.mxu0 %v5202
        %v5300 = vpop.f32.mrf.mxu0
        %v5301 = vadd.f32 0.0, %v5300
        %v5302 = vpop.f32.mrf.mxu0
        %5303 = vmatprep.mubr.f32.mxu0 0.0
        %5304 = vmatmul.mubr.f32.gmra.mxu0 %v5203
        %v5305 = vpop.f32.mrf.mxu0
        %v5306 = vadd.f32 0.0, %v5305
        %v5307 = vpop.f32.mrf.mxu0
        %5308 = vmatprep.mubr.f32.mxu0 0.0
        %5309 = vmatmul.mubr.f32.gmra.mxu0 %v5204
        %v5310 = vpop.f32.mrf.mxu0
        %v5311 = vadd.f32 0.0, %v5310
        %v5312 = vpop.f32.mrf.mxu0
        %5313 = vmatprep.mubr.f32.mxu0 0.0
        %5314 = vmatmul.mubr.f32.gmra.mxu0 %v5205
        %v5315 = vpop.f32.mrf.mxu0
        %v5316 = vadd.f32 0.0, %v5315
        %v5317 = vpop.f32.mrf.mxu0
        %5318 = vmatprep.mubr.f32.mxu0 0.0
        %5319 = vmatmul.mubr.f32.gmra.mxu0 %v5206
        %v5320 = vpop.f32.mrf.mxu0
        %v5321 = vadd.f32 0.0, %v5320
        %v5322 = vpop.f32.mrf.mxu0
        %5323 = vmatprep.mubr.f32.mxu0 0.0
        %5324 = vmatmul.mubr.f32.gmra.mxu0 %v5207
        %v5325 = vpop.f32.mrf.mxu0
        %v5326 = vadd.f32 0.0, %v5325
        %v5327 = vpop.f32.mrf.mxu0
        %5328 = vmatprep.mubr.f32.mxu0 0.0
        %5329 = vmatmul.mubr.f32.gmra.mxu0 %v5208
        %v5330 = vpop.f32.mrf.mxu0
        %v5331 = vadd.f32 0.0, %v5330
        %v5332 = vpop.f32.mrf.mxu0
        %5333 = vmatprep.mubr.f32.mxu0 0.0
        %5334 = vmatmul.mubr.f32.gmra.mxu0 %v5209
        %v5335 = vpop.f32.mrf.mxu0
        %v5336 = vadd.f32 0.0, %v5335
        %v5337 = vpop.f32.mrf.mxu0
        %5338 = vmatprep.mubr.f32.mxu0 0.0
        %5339 = vmatmul.mubr.f32.gmra.mxu0 %v5210
        %v5340 = vpop.f32.mrf.mxu0
        %v5341 = vadd.f32 0.0, %v5340
        %v5342 = vpop.f32.mrf.mxu0
        %5343 = vmatprep.mubr.f32.mxu0 0.0
        %5344 = vmatmul.mubr.f32.gmra.mxu0 %v5211
        %v5345 = vpop.f32.mrf.mxu0
        %v5346 = vadd.f32 0.0, %v5345
        %v5347 = vpop.f32.mrf.mxu0
        %5348 = vmatprep.mubr.f32.mxu0 0.0
        %5349 = vmatmul.mubr.f32.gmra.mxu0 %v5212
        %v5350 = vpop.f32.mrf.mxu0
        %v5351 = vadd.f32 0.0, %v5350
        %v5352 = vpop.f32.mrf.mxu0
        %5353 = vmatprep.mubr.f32.mxu0 0.0
        %5354 = vmatmul.mubr.f32.gmra.mxu0 %v5213
        %v5355 = vpop.f32.mrf.mxu0
        %v5356 = vadd.f32 0.0, %v5355
        %v5357 = vpop.f32.mrf.mxu0
        %5358 = vdwg.mxu0
        %5359 = vrot.lane.b32.xlu0 %v2405, 96
        %v5360 = vpop.permute.xlu0 %5359
        %5361 = vrot.lane.b32.xlu0 %v2408, 96
        %v5362 = vpop.permute.xlu0 %5361
        %5363 = vrot.lane.b32.xlu0 %v2411, 96
        %v5364 = vpop.permute.xlu0 %5363
        %5365 = vrot.lane.b32.xlu0 %v2414, 96
        %v5366 = vpop.permute.xlu0 %5365
        %5367 = vrot.lane.b32.xlu0 %v2417, 96
        %v5368 = vpop.permute.xlu0 %5367
        %5369 = vrot.lane.b32.xlu0 %v2420, 96
        %v5370 = vpop.permute.xlu0 %5369
        %5371 = vrot.lane.b32.xlu0 %v2423, 96
        %v5372 = vpop.permute.xlu0 %5371
        %5373 = vrot.lane.b32.xlu0 %v2426, 96
        %v5374 = vpop.permute.xlu0 %5373
        %5375 = vrot.lane.b32.xlu0 %v2429, 96
        %v5376 = vpop.permute.xlu0 %5375
        %5377 = vrot.lane.b32.xlu0 %v2432, 96
        %v5378 = vpop.permute.xlu0 %5377
        %5379 = vrot.lane.b32.xlu0 %v2435, 96
        %v5380 = vpop.permute.xlu0 %5379
        %5381 = vrot.lane.b32.xlu0 %v2438, 96
        %v5382 = vpop.permute.xlu0 %5381
        %5383 = vrot.lane.b32.xlu0 %v2441, 96
        %v5384 = vpop.permute.xlu0 %5383
        %5385 = vrot.lane.b32.xlu0 %v2444, 96
        %v5386 = vpop.permute.xlu0 %5385
        %5387 = vrot.lane.b32.xlu0 %v2447, 96
        %v5388 = vpop.permute.xlu0 %5387
        %5389 = vrot.lane.b32.xlu0 %v2450, 96
        %v5390 = vpop.permute.xlu0 %5389
        %5391 = vrot.lane.b32.xlu0 %v1698, 96
        %v5392 = vpop.permute.xlu0 %5391
        %5393 = vrot.lane.b32.xlu0 %v1704, 96
        %v5394 = vpop.permute.xlu0 %5393
        %5395 = vrot.lane.b32.xlu0 %v1710, 96
        %v5396 = vpop.permute.xlu0 %5395
        %5397 = vrot.lane.b32.xlu0 %v1716, 96
        %v5398 = vpop.permute.xlu0 %5397
        %5399 = vrot.lane.b32.xlu0 %v1722, 96
        %v5400 = vpop.permute.xlu0 %5399
        %5401 = vrot.lane.b32.xlu0 %v1728, 96
        %v5402 = vpop.permute.xlu0 %5401
        %5403 = vrot.lane.b32.xlu0 %v1734, 96
        %v5404 = vpop.permute.xlu0 %5403
        %5405 = vrot.lane.b32.xlu0 %v1740, 96
        %v5406 = vpop.permute.xlu0 %5405
        %5407 = vrot.lane.b32.xlu0 %v1746, 96
        %v5408 = vpop.permute.xlu0 %5407
        %5409 = vrot.lane.b32.xlu0 %v1752, 96
        %v5410 = vpop.permute.xlu0 %5409
        %5411 = vrot.lane.b32.xlu0 %v1758, 96
        %v5412 = vpop.permute.xlu0 %5411
        %5413 = vrot.lane.b32.xlu0 %v1764, 96
        %v5414 = vpop.permute.xlu0 %5413
        %5415 = vrot.lane.b32.xlu0 %v1770, 96
        %v5416 = vpop.permute.xlu0 %5415
        %5417 = vrot.lane.b32.xlu0 %v1776, 96
        %v5418 = vpop.permute.xlu0 %5417
        %5419 = vrot.lane.b32.xlu0 %v1782, 96
        %v5420 = vpop.permute.xlu0 %5419
        %5421 = vrot.lane.b32.xlu0 %v1788, 96
        %v5422 = vpop.permute.xlu0 %5421
        %v5423 = vsel %vm2452, %v5360, 0
        %v5425 = vsel %vm2452, %v5362, 0
        %v5427 = vsel %vm2452, %v5364, 0
        %v5429 = vsel %vm2452, %v5366, 0
        %v5431 = vsel %vm2452, %v5368, 0
        %v5433 = vsel %vm2452, %v5370, 0
        %v5435 = vsel %vm2452, %v5372, 0
        %v5437 = vsel %vm2452, %v5374, 0
        %v5439 = vsel %vm2452, %v5376, 0
        %v5441 = vsel %vm2452, %v5378, 0
        %v5443 = vsel %vm2452, %v5380, 0
        %v5445 = vsel %vm2452, %v5382, 0
        %v5447 = vsel %vm2452, %v5384, 0
        %v5449 = vsel %vm2452, %v5386, 0
        %v5451 = vsel %vm2452, %v5388, 0
        %v5453 = vsel %vm2452, %v5390, 0
        %v5455 = vsel %vm2452, %v5392, 0
        %v5457 = vsel %vm2452, %v5394, 0
        %v5459 = vsel %vm2452, %v5396, 0
        %v5461 = vsel %vm2452, %v5398, 0
        %v5463 = vsel %vm2452, %v5400, 0
        %v5465 = vsel %vm2452, %v5402, 0
        %v5467 = vsel %vm2452, %v5404, 0
        %v5469 = vsel %vm2452, %v5406, 0
        %v5471 = vsel %vm2452, %v5408, 0
        %v5473 = vsel %vm2452, %v5410, 0
        %v5475 = vsel %vm2452, %v5412, 0
        %v5477 = vsel %vm2452, %v5414, 0
        %v5479 = vsel %vm2452, %v5416, 0
        %v5481 = vsel %vm2452, %v5418, 0
        %v5483 = vsel %vm2452, %v5420, 0
        %v5485 = vsel %vm2452, %v5422, 0
        %5487 = vmatprep.subr.mxu0 0.0
        %5488 = vmatpush1.xpose.msra.mxu0 %v5485
        %5489 = vmatprep.subr.mxu0 0.0
        %5490 = vmatpush1.xpose.msra.mxu0 %v5483
        %5491 = vmatprep.subr.mxu0 0.0
        %5492 = vmatpush1.xpose.msra.mxu0 %v5481
        %5493 = vmatprep.subr.mxu0 0.0
        %5494 = vmatpush1.xpose.msra.mxu0 %v5479
        %5495 = vmatprep.subr.mxu0 0.0
        %5496 = vmatpush1.xpose.msra.mxu0 %v5477
        %5497 = vmatprep.subr.mxu0 0.0
        %5498 = vmatpush1.xpose.msra.mxu0 %v5475
        %5499 = vmatprep.subr.mxu0 0.0
        %5500 = vmatpush1.xpose.msra.mxu0 %v5473
        %5501 = vmatprep.subr.mxu0 0.0
        %5502 = vmatpush1.xpose.msra.mxu0 %v5471
        %5503 = vmatprep.subr.mxu0 0.0
        %5504 = vmatpush1.xpose.msra.mxu0 %v5469
        %5505 = vmatprep.subr.mxu0 0.0
        %5506 = vmatpush1.xpose.msra.mxu0 %v5467
        %5507 = vmatprep.subr.mxu0 0.0
        %5508 = vmatpush1.xpose.msra.mxu0 %v5465
        %5509 = vmatprep.subr.mxu0 0.0
        %5510 = vmatpush1.xpose.msra.mxu0 %v5463
        %5511 = vmatprep.subr.mxu0 0.0
        %5512 = vmatpush1.xpose.msra.mxu0 %v5461
        %5513 = vmatprep.subr.mxu0 0.0
        %5514 = vmatpush1.xpose.msra.mxu0 %v5459
        %5515 = vmatprep.subr.mxu0 0.0
        %5516 = vmatpush1.xpose.msra.mxu0 %v5457
        %5517 = vmatprep.subr.mxu0 0.0
        %5518 = vmatpush1.xpose.msra.mxu0 %v5455
        %5519 = vmatprep.subr.mxu0 0.0
        %5520 = vmatpush2.xpose.msra.mxu0 0.0
        %5521 = vmatprep.subr.mxu0 0.0
        %5522 = vmatpush2.xpose.msra.mxu0 0.0
        %5523 = vmatprep.subr.mxu0 0.0
        %5524 = vmatpush2.xpose.msra.mxu0 0.0
        %5525 = vmatprep.subr.mxu0 0.0
        %5526 = vmatpush2.xpose.msra.mxu0 0.0
        %5527 = vmatprep.subr.mxu0 0.0
        %5528 = vmatpush2.xpose.msra.mxu0 0.0
        %5529 = vmatprep.subr.mxu0 0.0
        %5530 = vmatpush2.xpose.msra.mxu0 0.0
        %5531 = vmatprep.subr.mxu0 0.0
        %5532 = vmatpush2.xpose.msra.mxu0 0.0
        %5533 = vmatprep.subr.mxu0 0.0
        %5534 = vmatpush2.xpose.msra.mxu0 0.0
        %5535 = vmatprep.subr.mxu0 0.0
        %5536 = vmatpush2.xpose.msra.mxu0 0.0
        %5537 = vmatprep.subr.mxu0 0.0
        %5538 = vmatpush2.xpose.msra.mxu0 0.0
        %5539 = vmatprep.subr.mxu0 0.0
        %5540 = vmatpush2.xpose.msra.mxu0 0.0
        %5541 = vmatprep.subr.mxu0 0.0
        %5542 = vmatpush2.xpose.msra.mxu0 0.0
        %5543 = vmatprep.subr.mxu0 0.0
        %5544 = vmatpush2.xpose.msra.mxu0 0.0
        %5545 = vmatprep.subr.mxu0 0.0
        %5546 = vmatpush2.xpose.msra.mxu0 0.0
        %5547 = vmatprep.subr.mxu0 0.0
        %5548 = vmatpush2.xpose.msra.mxu0 0.0
        %5549 = vmatprep.subr.mxu0 0.0
        %5550 = vmatpush2.xpose.msra.mxu0 0.0
        %5551 = vmatprep.mubr.f32.mxu0 0.0
        %5552 = vmatmul.mubr.f32.gmra.mxu0 %v5423
        %v5553 = vpop.f32.mrf.mxu0
        %v5554 = vadd.f32 0.0, %v5553
        %v5555 = vpop.f32.mrf.mxu0
        %5556 = vmatprep.mubr.f32.mxu0 0.0
        %5557 = vmatmul.mubr.f32.gmra.mxu0 %v5425
        %v5558 = vpop.f32.mrf.mxu0
        %v5559 = vadd.f32 0.0, %v5558
        %v5560 = vpop.f32.mrf.mxu0
        %5561 = vmatprep.mubr.f32.mxu0 0.0
        %5562 = vmatmul.mubr.f32.gmra.mxu0 %v5427
        %v5563 = vpop.f32.mrf.mxu0
        %v5564 = vadd.f32 0.0, %v5563
        %v5565 = vpop.f32.mrf.mxu0
        %5566 = vmatprep.mubr.f32.mxu0 0.0
        %5567 = vmatmul.mubr.f32.gmra.mxu0 %v5429
        %v5568 = vpop.f32.mrf.mxu0
        %v5569 = vadd.f32 0.0, %v5568
        %v5570 = vpop.f32.mrf.mxu0
        %5571 = vmatprep.mubr.f32.mxu0 0.0
        %5572 = vmatmul.mubr.f32.gmra.mxu0 %v5431
        %v5573 = vpop.f32.mrf.mxu0
        %v5574 = vadd.f32 0.0, %v5573
        %v5575 = vpop.f32.mrf.mxu0
        %5576 = vmatprep.mubr.f32.mxu0 0.0
        %5577 = vmatmul.mubr.f32.gmra.mxu0 %v5433
        %v5578 = vpop.f32.mrf.mxu0
        %v5579 = vadd.f32 0.0, %v5578
        %v5580 = vpop.f32.mrf.mxu0
        %5581 = vmatprep.mubr.f32.mxu0 0.0
        %5582 = vmatmul.mubr.f32.gmra.mxu0 %v5435
        %v5583 = vpop.f32.mrf.mxu0
        %v5584 = vadd.f32 0.0, %v5583
        %v5585 = vpop.f32.mrf.mxu0
        %5586 = vmatprep.mubr.f32.mxu0 0.0
        %5587 = vmatmul.mubr.f32.gmra.mxu0 %v5437
        %v5588 = vpop.f32.mrf.mxu0
        %v5589 = vadd.f32 0.0, %v5588
        %v5590 = vpop.f32.mrf.mxu0
        %5591 = vmatprep.mubr.f32.mxu0 0.0
        %5592 = vmatmul.mubr.f32.gmra.mxu0 %v5439
        %v5593 = vpop.f32.mrf.mxu0
        %v5594 = vadd.f32 0.0, %v5593
        %v5595 = vpop.f32.mrf.mxu0
        %5596 = vmatprep.mubr.f32.mxu0 0.0
        %5597 = vmatmul.mubr.f32.gmra.mxu0 %v5441
        %v5598 = vpop.f32.mrf.mxu0
        %v5599 = vadd.f32 0.0, %v5598
        %v5600 = vpop.f32.mrf.mxu0
        %5601 = vmatprep.mubr.f32.mxu0 0.0
        %5602 = vmatmul.mubr.f32.gmra.mxu0 %v5443
        %v5603 = vpop.f32.mrf.mxu0
        %v5604 = vadd.f32 0.0, %v5603
        %v5605 = vpop.f32.mrf.mxu0
        %5606 = vmatprep.mubr.f32.mxu0 0.0
        %5607 = vmatmul.mubr.f32.gmra.mxu0 %v5445
        %v5608 = vpop.f32.mrf.mxu0
        %v5609 = vadd.f32 0.0, %v5608
        %v5610 = vpop.f32.mrf.mxu0
        %5611 = vmatprep.mubr.f32.mxu0 0.0
        %5612 = vmatmul.mubr.f32.gmra.mxu0 %v5447
        %v5613 = vpop.f32.mrf.mxu0
        %v5614 = vadd.f32 0.0, %v5613
        %v5615 = vpop.f32.mrf.mxu0
        %5616 = vmatprep.mubr.f32.mxu0 0.0
        %5617 = vmatmul.mubr.f32.gmra.mxu0 %v5449
        %v5618 = vpop.f32.mrf.mxu0
        %v5619 = vadd.f32 0.0, %v5618
        %v5620 = vpop.f32.mrf.mxu0
        %5621 = vmatprep.mubr.f32.mxu0 0.0
        %5622 = vmatmul.mubr.f32.gmra.mxu0 %v5451
        %v5623 = vpop.f32.mrf.mxu0
        %v5624 = vadd.f32 0.0, %v5623
        %v5625 = vpop.f32.mrf.mxu0
        %5626 = vmatprep.mubr.f32.mxu0 0.0
        %5627 = vmatmul.mubr.f32.gmra.mxu0 %v5453
        %v5628 = vpop.f32.mrf.mxu0
        %v5629 = vadd.f32 0.0, %v5628
        %v5630 = vpop.f32.mrf.mxu0
        %5631 = vdwg.mxu0
        %5632 = vmax.xlane.f32.xlu0 %v5554
        %v5633 = vpop.xlane.xlu0 %5632
        %5634 = vmax.xlane.f32.xlu0 %v5559
        %v5635 = vpop.xlane.xlu0 %5634
        %5636 = vmax.xlane.f32.xlu0 %v5564
        %v5637 = vpop.xlane.xlu0 %5636
        %5638 = vmax.xlane.f32.xlu0 %v5569
        %v5639 = vpop.xlane.xlu0 %5638
        %5640 = vmax.xlane.f32.xlu0 %v5574
        %v5641 = vpop.xlane.xlu0 %5640
        %5642 = vmax.xlane.f32.xlu0 %v5579
        %v5643 = vpop.xlane.xlu0 %5642
        %5644 = vmax.xlane.f32.xlu0 %v5584
        %v5645 = vpop.xlane.xlu0 %5644
        %5646 = vmax.xlane.f32.xlu0 %v5589
        %v5647 = vpop.xlane.xlu0 %5646
        %5648 = vmax.xlane.f32.xlu0 %v5594
        %v5649 = vpop.xlane.xlu0 %5648
        %5650 = vmax.xlane.f32.xlu0 %v5599
        %v5651 = vpop.xlane.xlu0 %5650
        %5652 = vmax.xlane.f32.xlu0 %v5604
        %v5653 = vpop.xlane.xlu0 %5652
        %5654 = vmax.xlane.f32.xlu0 %v5609
        %v5655 = vpop.xlane.xlu0 %5654
        %5656 = vmax.xlane.f32.xlu0 %v5614
        %v5657 = vpop.xlane.xlu0 %5656
        %5658 = vmax.xlane.f32.xlu0 %v5619
        %v5659 = vpop.xlane.xlu0 %5658
        %5660 = vmax.xlane.f32.xlu0 %v5624
        %v5661 = vpop.xlane.xlu0 %5660
        %5662 = vmax.xlane.f32.xlu0 %v5629
        %v5663 = vpop.xlane.xlu0 %5662
        %v5664 = vsub.f32 %v5554, %v5633
        %v5665 = vsub.f32 %v5559, %v5635
        %v5666 = vsub.f32 %v5564, %v5637
        %v5667 = vsub.f32 %v5569, %v5639
        %v5668 = vsub.f32 %v5574, %v5641
        %v5669 = vsub.f32 %v5579, %v5643
        %v5670 = vsub.f32 %v5584, %v5645
        %v5671 = vsub.f32 %v5589, %v5647
        %v5672 = vsub.f32 %v5594, %v5649
        %v5673 = vsub.f32 %v5599, %v5651
        %v5674 = vsub.f32 %v5604, %v5653
        %v5675 = vsub.f32 %v5609, %v5655
        %v5676 = vsub.f32 %v5614, %v5657
        %v5677 = vsub.f32 %v5619, %v5659
        %v5678 = vsub.f32 %v5624, %v5661
        %v5679 = vsub.f32 %v5629, %v5663
        %v5680 = vmul.f32 %v5664, 1.442695
        %v5681 = vpow.pop %v5680
        %v5682 = vmul.f32 %v5665, 1.442695
        %v5683 = vpow.pop %v5682
        %v5684 = vmul.f32 %v5666, 1.442695
        %v5685 = vpow.pop %v5684
        %v5686 = vmul.f32 %v5667, 1.442695
        %v5687 = vpow.pop %v5686
        %v5688 = vmul.f32 %v5668, 1.442695
        %v5689 = vpow.pop %v5688
        %v5690 = vmul.f32 %v5669, 1.442695
        %v5691 = vpow.pop %v5690
        %v5692 = vmul.f32 %v5670, 1.442695
        %v5693 = vpow.pop %v5692
        %v5694 = vmul.f32 %v5671, 1.442695
        %v5695 = vpow.pop %v5694
        %v5696 = vmul.f32 %v5672, 1.442695
        %v5697 = vpow.pop %v5696
        %v5698 = vmul.f32 %v5673, 1.442695
        %v5699 = vpow.pop %v5698
        %v5700 = vmul.f32 %v5674, 1.442695
        %v5701 = vpow.pop %v5700
        %v5702 = vmul.f32 %v5675, 1.442695
        %v5703 = vpow.pop %v5702
        %v5704 = vmul.f32 %v5676, 1.442695
        %v5705 = vpow.pop %v5704
        %v5706 = vmul.f32 %v5677, 1.442695
        %v5707 = vpow.pop %v5706
        %v5708 = vmul.f32 %v5678, 1.442695
        %v5709 = vpow.pop %v5708
        %v5710 = vmul.f32 %v5679, 1.442695
        %v5711 = vpow.pop %v5710
        %5712 = vadd.xlane.f32.xlu0 %v5681
        %v5713 = vpop.xlane.xlu0 %5712
        %5714 = vadd.xlane.f32.xlu0 %v5683
        %v5715 = vpop.xlane.xlu0 %5714
        %5716 = vadd.xlane.f32.xlu0 %v5685
        %v5717 = vpop.xlane.xlu0 %5716
        %5718 = vadd.xlane.f32.xlu0 %v5687
        %v5719 = vpop.xlane.xlu0 %5718
        %5720 = vadd.xlane.f32.xlu0 %v5689
        %v5721 = vpop.xlane.xlu0 %5720
        %5722 = vadd.xlane.f32.xlu0 %v5691
        %v5723 = vpop.xlane.xlu0 %5722
        %5724 = vadd.xlane.f32.xlu0 %v5693
        %v5725 = vpop.xlane.xlu0 %5724
        %5726 = vadd.xlane.f32.xlu0 %v5695
        %v5727 = vpop.xlane.xlu0 %5726
        %5728 = vadd.xlane.f32.xlu0 %v5697
        %v5729 = vpop.xlane.xlu0 %5728
        %5730 = vadd.xlane.f32.xlu0 %v5699
        %v5731 = vpop.xlane.xlu0 %5730
        %5732 = vadd.xlane.f32.xlu0 %v5701
        %v5733 = vpop.xlane.xlu0 %5732
        %5734 = vadd.xlane.f32.xlu0 %v5703
        %v5735 = vpop.xlane.xlu0 %5734
        %5736 = vadd.xlane.f32.xlu0 %v5705
        %v5737 = vpop.xlane.xlu0 %5736
        %5738 = vadd.xlane.f32.xlu0 %v5707
        %v5739 = vpop.xlane.xlu0 %5738
        %5740 = vadd.xlane.f32.xlu0 %v5709
        %v5741 = vpop.xlane.xlu0 %5740
        %5742 = vadd.xlane.f32.xlu0 %v5711
        %v5743 = vpop.xlane.xlu0 %5742
        %v5744 = vrcp.pop %v5713
        %v5745 = vrcp.pop %v5715
        %v5746 = vrcp.pop %v5717
        %v5747 = vrcp.pop %v5719
        %v5748 = vrcp.pop %v5721
        %v5749 = vrcp.pop %v5723
        %v5750 = vrcp.pop %v5725
        %v5751 = vrcp.pop %v5727
        %v5752 = vrcp.pop %v5729
        %v5753 = vrcp.pop %v5731
        %v5754 = vrcp.pop %v5733
        %v5755 = vrcp.pop %v5735
        %v5756 = vrcp.pop %v5737
        %v5757 = vrcp.pop %v5739
        %v5758 = vrcp.pop %v5741
        %v5759 = vrcp.pop %v5743
        %v5760 = vmul.f32 %v5681, %v5744
        %v5761 = vmul.f32 %v5683, %v5745
        %v5762 = vmul.f32 %v5685, %v5746
        %v5763 = vmul.f32 %v5687, %v5747
        %v5764 = vmul.f32 %v5689, %v5748
        %v5765 = vmul.f32 %v5691, %v5749
        %v5766 = vmul.f32 %v5693, %v5750
        %v5767 = vmul.f32 %v5695, %v5751
        %v5768 = vmul.f32 %v5697, %v5752
        %v5769 = vmul.f32 %v5699, %v5753
        %v5770 = vmul.f32 %v5701, %v5754
        %v5771 = vmul.f32 %v5703, %v5755
        %v5772 = vmul.f32 %v5705, %v5756
        %v5773 = vmul.f32 %v5707, %v5757
        %v5774 = vmul.f32 %v5709, %v5758
        %v5775 = vmul.f32 %v5711, %v5759
        %5792 = vrot.lane.b32.xlu0 %v2022, 96
        %v5793 = vpop.permute.xlu0 %5792
        %5794 = vrot.lane.b32.xlu0 %v2028, 96
        %v5795 = vpop.permute.xlu0 %5794
        %5796 = vrot.lane.b32.xlu0 %v2034, 96
        %v5797 = vpop.permute.xlu0 %5796
        %5798 = vrot.lane.b32.xlu0 %v2040, 96
        %v5799 = vpop.permute.xlu0 %5798
        %5800 = vrot.lane.b32.xlu0 %v2046, 96
        %v5801 = vpop.permute.xlu0 %5800
        %5802 = vrot.lane.b32.xlu0 %v2052, 96
        %v5803 = vpop.permute.xlu0 %5802
        %5804 = vrot.lane.b32.xlu0 %v2058, 96
        %v5805 = vpop.permute.xlu0 %5804
        %5806 = vrot.lane.b32.xlu0 %v2064, 96
        %v5807 = vpop.permute.xlu0 %5806
        %5808 = vrot.lane.b32.xlu0 %v2070, 96
        %v5809 = vpop.permute.xlu0 %5808
        %5810 = vrot.lane.b32.xlu0 %v2076, 96
        %v5811 = vpop.permute.xlu0 %5810
        %5812 = vrot.lane.b32.xlu0 %v2082, 96
        %v5813 = vpop.permute.xlu0 %5812
        %5814 = vrot.lane.b32.xlu0 %v2088, 96
        %v5815 = vpop.permute.xlu0 %5814
        %5816 = vrot.lane.b32.xlu0 %v2094, 96
        %v5817 = vpop.permute.xlu0 %5816
        %5818 = vrot.lane.b32.xlu0 %v2100, 96
        %v5819 = vpop.permute.xlu0 %5818
        %5820 = vrot.lane.b32.xlu0 %v2106, 96
        %v5821 = vpop.permute.xlu0 %5820
        %5822 = vrot.lane.b32.xlu0 %v2112, 96
        %v5823 = vpop.permute.xlu0 %5822
        %5840 = vmatprep.subr.mxu0 0.0
        %5841 = vmatpush1.msra.mxu0 %v5823
        %5842 = vmatprep.subr.mxu0 0.0
        %5843 = vmatpush1.msra.mxu0 %v5821
        %5844 = vmatprep.subr.mxu0 0.0
        %5845 = vmatpush1.msra.mxu0 %v5819
        %5846 = vmatprep.subr.mxu0 0.0
        %5847 = vmatpush1.msra.mxu0 %v5817
        %5848 = vmatprep.subr.mxu0 0.0
        %5849 = vmatpush1.msra.mxu0 %v5815
        %5850 = vmatprep.subr.mxu0 0.0
        %5851 = vmatpush1.msra.mxu0 %v5813
        %5852 = vmatprep.subr.mxu0 0.0
        %5853 = vmatpush1.msra.mxu0 %v5811
        %5854 = vmatprep.subr.mxu0 0.0
        %5855 = vmatpush1.msra.mxu0 %v5809
        %5856 = vmatprep.subr.mxu0 0.0
        %5857 = vmatpush1.msra.mxu0 %v5807
        %5858 = vmatprep.subr.mxu0 0.0
        %5859 = vmatpush1.msra.mxu0 %v5805
        %5860 = vmatprep.subr.mxu0 0.0
        %5861 = vmatpush1.msra.mxu0 %v5803
        %5862 = vmatprep.subr.mxu0 0.0
        %5863 = vmatpush1.msra.mxu0 %v5801
        %5864 = vmatprep.subr.mxu0 0.0
        %5865 = vmatpush1.msra.mxu0 %v5799
        %5866 = vmatprep.subr.mxu0 0.0
        %5867 = vmatpush1.msra.mxu0 %v5797
        %5868 = vmatprep.subr.mxu0 0.0
        %5869 = vmatpush1.msra.mxu0 %v5795
        %5870 = vmatprep.subr.mxu0 0.0
        %5871 = vmatpush1.msra.mxu0 %v5793
        %5872 = vmatprep.subr.mxu0 0.0
        %5873 = vmatpush2.msra.mxu0 0.0
        %5874 = vmatprep.subr.mxu0 0.0
        %5875 = vmatpush2.msra.mxu0 0.0
        %5876 = vmatprep.subr.mxu0 0.0
        %5877 = vmatpush2.msra.mxu0 0.0
        %5878 = vmatprep.subr.mxu0 0.0
        %5879 = vmatpush2.msra.mxu0 0.0
        %5880 = vmatprep.subr.mxu0 0.0
        %5881 = vmatpush2.msra.mxu0 0.0
        %5882 = vmatprep.subr.mxu0 0.0
        %5883 = vmatpush2.msra.mxu0 0.0
        %5884 = vmatprep.subr.mxu0 0.0
        %5885 = vmatpush2.msra.mxu0 0.0
        %5886 = vmatprep.subr.mxu0 0.0
        %5887 = vmatpush2.msra.mxu0 0.0
        %5888 = vmatprep.subr.mxu0 0.0
        %5889 = vmatpush2.msra.mxu0 0.0
        %5890 = vmatprep.subr.mxu0 0.0
        %5891 = vmatpush2.msra.mxu0 0.0
        %5892 = vmatprep.subr.mxu0 0.0
        %5893 = vmatpush2.msra.mxu0 0.0
        %5894 = vmatprep.subr.mxu0 0.0
        %5895 = vmatpush2.msra.mxu0 0.0
        %5896 = vmatprep.subr.mxu0 0.0
        %5897 = vmatpush2.msra.mxu0 0.0
        %5898 = vmatprep.subr.mxu0 0.0
        %5899 = vmatpush2.msra.mxu0 0.0
        %5900 = vmatprep.subr.mxu0 0.0
        %5901 = vmatpush2.msra.mxu0 0.0
        %5902 = vmatprep.subr.mxu0 0.0
        %5903 = vmatpush2.msra.mxu0 0.0
        %5904 = vmatprep.mubr.f32.mxu0 0.0
        %5905 = vmatmul.mubr.f32.gmra.mxu0 %v5760
        %v5906 = vpop.f32.mrf.mxu0
        %v5907 = vadd.f32 0.0, %v5906
        %v5908 = vpop.f32.mrf.mxu0
        %5909 = vmatprep.mubr.f32.mxu0 0.0
        %5910 = vmatmul.mubr.f32.gmra.mxu0 %v5761
        %v5911 = vpop.f32.mrf.mxu0
        %v5912 = vadd.f32 0.0, %v5911
        %v5913 = vpop.f32.mrf.mxu0
        %5914 = vmatprep.mubr.f32.mxu0 0.0
        %5915 = vmatmul.mubr.f32.gmra.mxu0 %v5762
        %v5916 = vpop.f32.mrf.mxu0
        %v5917 = vadd.f32 0.0, %v5916
        %v5918 = vpop.f32.mrf.mxu0
        %5919 = vmatprep.mubr.f32.mxu0 0.0
        %5920 = vmatmul.mubr.f32.gmra.mxu0 %v5763
        %v5921 = vpop.f32.mrf.mxu0
        %v5922 = vadd.f32 0.0, %v5921
        %v5923 = vpop.f32.mrf.mxu0
        %5924 = vmatprep.mubr.f32.mxu0 0.0
        %5925 = vmatmul.mubr.f32.gmra.mxu0 %v5764
        %v5926 = vpop.f32.mrf.mxu0
        %v5927 = vadd.f32 0.0, %v5926
        %v5928 = vpop.f32.mrf.mxu0
        %5929 = vmatprep.mubr.f32.mxu0 0.0
        %5930 = vmatmul.mubr.f32.gmra.mxu0 %v5765
        %v5931 = vpop.f32.mrf.mxu0
        %v5932 = vadd.f32 0.0, %v5931
        %v5933 = vpop.f32.mrf.mxu0
        %5934 = vmatprep.mubr.f32.mxu0 0.0
        %5935 = vmatmul.mubr.f32.gmra.mxu0 %v5766
        %v5936 = vpop.f32.mrf.mxu0
        %v5937 = vadd.f32 0.0, %v5936
        %v5938 = vpop.f32.mrf.mxu0
        %5939 = vmatprep.mubr.f32.mxu0 0.0
        %5940 = vmatmul.mubr.f32.gmra.mxu0 %v5767
        %v5941 = vpop.f32.mrf.mxu0
        %v5942 = vadd.f32 0.0, %v5941
        %v5943 = vpop.f32.mrf.mxu0
        %5944 = vmatprep.mubr.f32.mxu0 0.0
        %5945 = vmatmul.mubr.f32.gmra.mxu0 %v5768
        %v5946 = vpop.f32.mrf.mxu0
        %v5947 = vadd.f32 0.0, %v5946
        %v5948 = vpop.f32.mrf.mxu0
        %5949 = vmatprep.mubr.f32.mxu0 0.0
        %5950 = vmatmul.mubr.f32.gmra.mxu0 %v5769
        %v5951 = vpop.f32.mrf.mxu0
        %v5952 = vadd.f32 0.0, %v5951
        %v5953 = vpop.f32.mrf.mxu0
        %5954 = vmatprep.mubr.f32.mxu0 0.0
        %5955 = vmatmul.mubr.f32.gmra.mxu0 %v5770
        %v5956 = vpop.f32.mrf.mxu0
        %v5957 = vadd.f32 0.0, %v5956
        %v5958 = vpop.f32.mrf.mxu0
        %5959 = vmatprep.mubr.f32.mxu0 0.0
        %5960 = vmatmul.mubr.f32.gmra.mxu0 %v5771
        %v5961 = vpop.f32.mrf.mxu0
        %v5962 = vadd.f32 0.0, %v5961
        %v5963 = vpop.f32.mrf.mxu0
        %5964 = vmatprep.mubr.f32.mxu0 0.0
        %5965 = vmatmul.mubr.f32.gmra.mxu0 %v5772
        %v5966 = vpop.f32.mrf.mxu0
        %v5967 = vadd.f32 0.0, %v5966
        %v5968 = vpop.f32.mrf.mxu0
        %5969 = vmatprep.mubr.f32.mxu0 0.0
        %5970 = vmatmul.mubr.f32.gmra.mxu0 %v5773
        %v5971 = vpop.f32.mrf.mxu0
        %v5972 = vadd.f32 0.0, %v5971
        %v5973 = vpop.f32.mrf.mxu0
        %5974 = vmatprep.mubr.f32.mxu0 0.0
        %5975 = vmatmul.mubr.f32.gmra.mxu0 %v5774
        %v5976 = vpop.f32.mrf.mxu0
        %v5977 = vadd.f32 0.0, %v5976
        %v5978 = vpop.f32.mrf.mxu0
        %5979 = vmatprep.mubr.f32.mxu0 0.0
        %5980 = vmatmul.mubr.f32.gmra.mxu0 %v5775
        %v5981 = vpop.f32.mrf.mxu0
        %v5982 = vadd.f32 0.0, %v5981
        %v5983 = vpop.f32.mrf.mxu0
        %5984 = vdwg.mxu0
        %5985 = vrot.lane.b32.xlu0 %v2405, 64
        %v5986 = vpop.permute.xlu0 %5985
        %5987 = vrot.lane.b32.xlu0 %v2408, 64
        %v5988 = vpop.permute.xlu0 %5987
        %5989 = vrot.lane.b32.xlu0 %v2411, 64
        %v5990 = vpop.permute.xlu0 %5989
        %5991 = vrot.lane.b32.xlu0 %v2414, 64
        %v5992 = vpop.permute.xlu0 %5991
        %5993 = vrot.lane.b32.xlu0 %v2417, 64
        %v5994 = vpop.permute.xlu0 %5993
        %5995 = vrot.lane.b32.xlu0 %v2420, 64
        %v5996 = vpop.permute.xlu0 %5995
        %5997 = vrot.lane.b32.xlu0 %v2423, 64
        %v5998 = vpop.permute.xlu0 %5997
        %5999 = vrot.lane.b32.xlu0 %v2426, 64
        %v6000 = vpop.permute.xlu0 %5999
        %6001 = vrot.lane.b32.xlu0 %v2429, 64
        %v6002 = vpop.permute.xlu0 %6001
        %6003 = vrot.lane.b32.xlu0 %v2432, 64
        %v6004 = vpop.permute.xlu0 %6003
        %6005 = vrot.lane.b32.xlu0 %v2435, 64
        %v6006 = vpop.permute.xlu0 %6005
        %6007 = vrot.lane.b32.xlu0 %v2438, 64
        %v6008 = vpop.permute.xlu0 %6007
        %6009 = vrot.lane.b32.xlu0 %v2441, 64
        %v6010 = vpop.permute.xlu0 %6009
        %6011 = vrot.lane.b32.xlu0 %v2444, 64
        %v6012 = vpop.permute.xlu0 %6011
        %6013 = vrot.lane.b32.xlu0 %v2447, 64
        %v6014 = vpop.permute.xlu0 %6013
        %6015 = vrot.lane.b32.xlu0 %v2450, 64
        %v6016 = vpop.permute.xlu0 %6015
        %6017 = vrot.lane.b32.xlu0 %v1698, 64
        %v6018 = vpop.permute.xlu0 %6017
        %6019 = vrot.lane.b32.xlu0 %v1704, 64
        %v6020 = vpop.permute.xlu0 %6019
        %6021 = vrot.lane.b32.xlu0 %v1710, 64
        %v6022 = vpop.permute.xlu0 %6021
        %6023 = vrot.lane.b32.xlu0 %v1716, 64
        %v6024 = vpop.permute.xlu0 %6023
        %6025 = vrot.lane.b32.xlu0 %v1722, 64
        %v6026 = vpop.permute.xlu0 %6025
        %6027 = vrot.lane.b32.xlu0 %v1728, 64
        %v6028 = vpop.permute.xlu0 %6027
        %6029 = vrot.lane.b32.xlu0 %v1734, 64
        %v6030 = vpop.permute.xlu0 %6029
        %6031 = vrot.lane.b32.xlu0 %v1740, 64
        %v6032 = vpop.permute.xlu0 %6031
        %6033 = vrot.lane.b32.xlu0 %v1746, 64
        %v6034 = vpop.permute.xlu0 %6033
        %6035 = vrot.lane.b32.xlu0 %v1752, 64
        %v6036 = vpop.permute.xlu0 %6035
        %6037 = vrot.lane.b32.xlu0 %v1758, 64
        %v6038 = vpop.permute.xlu0 %6037
        %6039 = vrot.lane.b32.xlu0 %v1764, 64
        %v6040 = vpop.permute.xlu0 %6039
        %6041 = vrot.lane.b32.xlu0 %v1770, 64
        %v6042 = vpop.permute.xlu0 %6041
        %6043 = vrot.lane.b32.xlu0 %v1776, 64
        %v6044 = vpop.permute.xlu0 %6043
        %6045 = vrot.lane.b32.xlu0 %v1782, 64
        %v6046 = vpop.permute.xlu0 %6045
        %6047 = vrot.lane.b32.xlu0 %v1788, 64
        %v6048 = vpop.permute.xlu0 %6047
        %v6049 = vsel %vm2452, %v5986, 0
        %v6051 = vsel %vm2452, %v5988, 0
        %v6053 = vsel %vm2452, %v5990, 0
        %v6055 = vsel %vm2452, %v5992, 0
        %v6057 = vsel %vm2452, %v5994, 0
        %v6059 = vsel %vm2452, %v5996, 0
        %v6061 = vsel %vm2452, %v5998, 0
        %v6063 = vsel %vm2452, %v6000, 0
        %v6065 = vsel %vm2452, %v6002, 0
        %v6067 = vsel %vm2452, %v6004, 0
        %v6069 = vsel %vm2452, %v6006, 0
        %v6071 = vsel %vm2452, %v6008, 0
        %v6073 = vsel %vm2452, %v6010, 0
        %v6075 = vsel %vm2452, %v6012, 0
        %v6077 = vsel %vm2452, %v6014, 0
        %v6079 = vsel %vm2452, %v6016, 0
        %v6081 = vsel %vm2452, %v6018, 0
        %v6083 = vsel %vm2452, %v6020, 0
        %v6085 = vsel %vm2452, %v6022, 0
        %v6087 = vsel %vm2452, %v6024, 0
        %v6089 = vsel %vm2452, %v6026, 0
        %v6091 = vsel %vm2452, %v6028, 0
        %v6093 = vsel %vm2452, %v6030, 0
        %v6095 = vsel %vm2452, %v6032, 0
        %v6097 = vsel %vm2452, %v6034, 0
        %v6099 = vsel %vm2452, %v6036, 0
        %v6101 = vsel %vm2452, %v6038, 0
        %v6103 = vsel %vm2452, %v6040, 0
        %v6105 = vsel %vm2452, %v6042, 0
        %v6107 = vsel %vm2452, %v6044, 0
        %v6109 = vsel %vm2452, %v6046, 0
        %v6111 = vsel %vm2452, %v6048, 0
        %6113 = vmatprep.subr.mxu0 0.0
        %6114 = vmatpush1.xpose.msra.mxu0 %v6111
        %6115 = vmatprep.subr.mxu0 0.0
        %6116 = vmatpush1.xpose.msra.mxu0 %v6109
        %6117 = vmatprep.subr.mxu0 0.0
        %6118 = vmatpush1.xpose.msra.mxu0 %v6107
        %6119 = vmatprep.subr.mxu0 0.0
        %6120 = vmatpush1.xpose.msra.mxu0 %v6105
        %6121 = vmatprep.subr.mxu0 0.0
        %6122 = vmatpush1.xpose.msra.mxu0 %v6103
        %6123 = vmatprep.subr.mxu0 0.0
        %6124 = vmatpush1.xpose.msra.mxu0 %v6101
        %6125 = vmatprep.subr.mxu0 0.0
        %6126 = vmatpush1.xpose.msra.mxu0 %v6099
        %6127 = vmatprep.subr.mxu0 0.0
        %6128 = vmatpush1.xpose.msra.mxu0 %v6097
        %6129 = vmatprep.subr.mxu0 0.0
        %6130 = vmatpush1.xpose.msra.mxu0 %v6095
        %6131 = vmatprep.subr.mxu0 0.0
        %6132 = vmatpush1.xpose.msra.mxu0 %v6093
        %6133 = vmatprep.subr.mxu0 0.0
        %6134 = vmatpush1.xpose.msra.mxu0 %v6091
        %6135 = vmatprep.subr.mxu0 0.0
        %6136 = vmatpush1.xpose.msra.mxu0 %v6089
        %6137 = vmatprep.subr.mxu0 0.0
        %6138 = vmatpush1.xpose.msra.mxu0 %v6087
        %6139 = vmatprep.subr.mxu0 0.0
        %6140 = vmatpush1.xpose.msra.mxu0 %v6085
        %6141 = vmatprep.subr.mxu0 0.0
        %6142 = vmatpush1.xpose.msra.mxu0 %v6083
        %6143 = vmatprep.subr.mxu0 0.0
        %6144 = vmatpush1.xpose.msra.mxu0 %v6081
        %6145 = vmatprep.subr.mxu0 0.0
        %6146 = vmatpush2.xpose.msra.mxu0 0.0
        %6147 = vmatprep.subr.mxu0 0.0
        %6148 = vmatpush2.xpose.msra.mxu0 0.0
        %6149 = vmatprep.subr.mxu0 0.0
        %6150 = vmatpush2.xpose.msra.mxu0 0.0
        %6151 = vmatprep.subr.mxu0 0.0
        %6152 = vmatpush2.xpose.msra.mxu0 0.0
        %6153 = vmatprep.subr.mxu0 0.0
        %6154 = vmatpush2.xpose.msra.mxu0 0.0
        %6155 = vmatprep.subr.mxu0 0.0
        %6156 = vmatpush2.xpose.msra.mxu0 0.0
        %6157 = vmatprep.subr.mxu0 0.0
        %6158 = vmatpush2.xpose.msra.mxu0 0.0
        %6159 = vmatprep.subr.mxu0 0.0
        %6160 = vmatpush2.xpose.msra.mxu0 0.0
        %6161 = vmatprep.subr.mxu0 0.0
        %6162 = vmatpush2.xpose.msra.mxu0 0.0
        %6163 = vmatprep.subr.mxu0 0.0
        %6164 = vmatpush2.xpose.msra.mxu0 0.0
        %6165 = vmatprep.subr.mxu0 0.0
        %6166 = vmatpush2.xpose.msra.mxu0 0.0
        %6167 = vmatprep.subr.mxu0 0.0
        %6168 = vmatpush2.xpose.msra.mxu0 0.0
        %6169 = vmatprep.subr.mxu0 0.0
        %6170 = vmatpush2.xpose.msra.mxu0 0.0
        %6171 = vmatprep.subr.mxu0 0.0
        %6172 = vmatpush2.xpose.msra.mxu0 0.0
        %6173 = vmatprep.subr.mxu0 0.0
        %6174 = vmatpush2.xpose.msra.mxu0 0.0
        %6175 = vmatprep.subr.mxu0 0.0
        %6176 = vmatpush2.xpose.msra.mxu0 0.0
        %6177 = vmatprep.mubr.f32.mxu0 0.0
        %6178 = vmatmul.mubr.f32.gmra.mxu0 %v6049
        %v6179 = vpop.f32.mrf.mxu0
        %v6180 = vadd.f32 0.0, %v6179
        %v6181 = vpop.f32.mrf.mxu0
        %6182 = vmatprep.mubr.f32.mxu0 0.0
        %6183 = vmatmul.mubr.f32.gmra.mxu0 %v6051
        %v6184 = vpop.f32.mrf.mxu0
        %v6185 = vadd.f32 0.0, %v6184
        %v6186 = vpop.f32.mrf.mxu0
        %6187 = vmatprep.mubr.f32.mxu0 0.0
        %6188 = vmatmul.mubr.f32.gmra.mxu0 %v6053
        %v6189 = vpop.f32.mrf.mxu0
        %v6190 = vadd.f32 0.0, %v6189
        %v6191 = vpop.f32.mrf.mxu0
        %6192 = vmatprep.mubr.f32.mxu0 0.0
        %6193 = vmatmul.mubr.f32.gmra.mxu0 %v6055
        %v6194 = vpop.f32.mrf.mxu0
        %v6195 = vadd.f32 0.0, %v6194
        %v6196 = vpop.f32.mrf.mxu0
        %6197 = vmatprep.mubr.f32.mxu0 0.0
        %6198 = vmatmul.mubr.f32.gmra.mxu0 %v6057
        %v6199 = vpop.f32.mrf.mxu0
        %v6200 = vadd.f32 0.0, %v6199
        %v6201 = vpop.f32.mrf.mxu0
        %6202 = vmatprep.mubr.f32.mxu0 0.0
        %6203 = vmatmul.mubr.f32.gmra.mxu0 %v6059
        %v6204 = vpop.f32.mrf.mxu0
        %v6205 = vadd.f32 0.0, %v6204
        %v6206 = vpop.f32.mrf.mxu0
        %6207 = vmatprep.mubr.f32.mxu0 0.0
        %6208 = vmatmul.mubr.f32.gmra.mxu0 %v6061
        %v6209 = vpop.f32.mrf.mxu0
        %v6210 = vadd.f32 0.0, %v6209
        %v6211 = vpop.f32.mrf.mxu0
        %6212 = vmatprep.mubr.f32.mxu0 0.0
        %6213 = vmatmul.mubr.f32.gmra.mxu0 %v6063
        %v6214 = vpop.f32.mrf.mxu0
        %v6215 = vadd.f32 0.0, %v6214
        %v6216 = vpop.f32.mrf.mxu0
        %6217 = vmatprep.mubr.f32.mxu0 0.0
        %6218 = vmatmul.mubr.f32.gmra.mxu0 %v6065
        %v6219 = vpop.f32.mrf.mxu0
        %v6220 = vadd.f32 0.0, %v6219
        %v6221 = vpop.f32.mrf.mxu0
        %6222 = vmatprep.mubr.f32.mxu0 0.0
        %6223 = vmatmul.mubr.f32.gmra.mxu0 %v6067
        %v6224 = vpop.f32.mrf.mxu0
        %v6225 = vadd.f32 0.0, %v6224
        %v6226 = vpop.f32.mrf.mxu0
        %6227 = vmatprep.mubr.f32.mxu0 0.0
        %6228 = vmatmul.mubr.f32.gmra.mxu0 %v6069
        %v6229 = vpop.f32.mrf.mxu0
        %v6230 = vadd.f32 0.0, %v6229
        %v6231 = vpop.f32.mrf.mxu0
        %6232 = vmatprep.mubr.f32.mxu0 0.0
        %6233 = vmatmul.mubr.f32.gmra.mxu0 %v6071
        %v6234 = vpop.f32.mrf.mxu0
        %v6235 = vadd.f32 0.0, %v6234
        %v6236 = vpop.f32.mrf.mxu0
        %6237 = vmatprep.mubr.f32.mxu0 0.0
        %6238 = vmatmul.mubr.f32.gmra.mxu0 %v6073
        %v6239 = vpop.f32.mrf.mxu0
        %v6240 = vadd.f32 0.0, %v6239
        %v6241 = vpop.f32.mrf.mxu0
        %6242 = vmatprep.mubr.f32.mxu0 0.0
        %6243 = vmatmul.mubr.f32.gmra.mxu0 %v6075
        %v6244 = vpop.f32.mrf.mxu0
        %v6245 = vadd.f32 0.0, %v6244
        %v6246 = vpop.f32.mrf.mxu0
        %6247 = vmatprep.mubr.f32.mxu0 0.0
        %6248 = vmatmul.mubr.f32.gmra.mxu0 %v6077
        %v6249 = vpop.f32.mrf.mxu0
        %v6250 = vadd.f32 0.0, %v6249
        %v6251 = vpop.f32.mrf.mxu0
        %6252 = vmatprep.mubr.f32.mxu0 0.0
        %6253 = vmatmul.mubr.f32.gmra.mxu0 %v6079
        %v6254 = vpop.f32.mrf.mxu0
        %v6255 = vadd.f32 0.0, %v6254
        %v6256 = vpop.f32.mrf.mxu0
        %6257 = vdwg.mxu0
        %6258 = vmax.xlane.f32.xlu0 %v6180
        %v6259 = vpop.xlane.xlu0 %6258
        %6260 = vmax.xlane.f32.xlu0 %v6185
        %v6261 = vpop.xlane.xlu0 %6260
        %6262 = vmax.xlane.f32.xlu0 %v6190
        %v6263 = vpop.xlane.xlu0 %6262
        %6264 = vmax.xlane.f32.xlu0 %v6195
        %v6265 = vpop.xlane.xlu0 %6264
        %6266 = vmax.xlane.f32.xlu0 %v6200
        %v6267 = vpop.xlane.xlu0 %6266
        %6268 = vmax.xlane.f32.xlu0 %v6205
        %v6269 = vpop.xlane.xlu0 %6268
        %6270 = vmax.xlane.f32.xlu0 %v6210
        %v6271 = vpop.xlane.xlu0 %6270
        %6272 = vmax.xlane.f32.xlu0 %v6215
        %v6273 = vpop.xlane.xlu0 %6272
        %6274 = vmax.xlane.f32.xlu0 %v6220
        %v6275 = vpop.xlane.xlu0 %6274
        %6276 = vmax.xlane.f32.xlu0 %v6225
        %v6277 = vpop.xlane.xlu0 %6276
        %6278 = vmax.xlane.f32.xlu0 %v6230
        %v6279 = vpop.xlane.xlu0 %6278
        %6280 = vmax.xlane.f32.xlu0 %v6235
        %v6281 = vpop.xlane.xlu0 %6280
        %6282 = vmax.xlane.f32.xlu0 %v6240
        %v6283 = vpop.xlane.xlu0 %6282
        %6284 = vmax.xlane.f32.xlu0 %v6245
        %v6285 = vpop.xlane.xlu0 %6284
        %6286 = vmax.xlane.f32.xlu0 %v6250
        %v6287 = vpop.xlane.xlu0 %6286
        %6288 = vmax.xlane.f32.xlu0 %v6255
        %v6289 = vpop.xlane.xlu0 %6288
        %v6290 = vsub.f32 %v6180, %v6259
        %v6291 = vsub.f32 %v6185, %v6261
        %v6292 = vsub.f32 %v6190, %v6263
        %v6293 = vsub.f32 %v6195, %v6265
        %v6294 = vsub.f32 %v6200, %v6267
        %v6295 = vsub.f32 %v6205, %v6269
        %v6296 = vsub.f32 %v6210, %v6271
        %v6297 = vsub.f32 %v6215, %v6273
        %v6298 = vsub.f32 %v6220, %v6275
        %v6299 = vsub.f32 %v6225, %v6277
        %v6300 = vsub.f32 %v6230, %v6279
        %v6301 = vsub.f32 %v6235, %v6281
        %v6302 = vsub.f32 %v6240, %v6283
        %v6303 = vsub.f32 %v6245, %v6285
        %v6304 = vsub.f32 %v6250, %v6287
        %v6305 = vsub.f32 %v6255, %v6289
        %v6306 = vmul.f32 %v6290, 1.442695
        %v6307 = vpow.pop %v6306
        %v6308 = vmul.f32 %v6291, 1.442695
        %v6309 = vpow.pop %v6308
        %v6310 = vmul.f32 %v6292, 1.442695
        %v6311 = vpow.pop %v6310
        %v6312 = vmul.f32 %v6293, 1.442695
        %v6313 = vpow.pop %v6312
        %v6314 = vmul.f32 %v6294, 1.442695
        %v6315 = vpow.pop %v6314
        %v6316 = vmul.f32 %v6295, 1.442695
        %v6317 = vpow.pop %v6316
        %v6318 = vmul.f32 %v6296, 1.442695
        %v6319 = vpow.pop %v6318
        %v6320 = vmul.f32 %v6297, 1.442695
        %v6321 = vpow.pop %v6320
        %v6322 = vmul.f32 %v6298, 1.442695
        %v6323 = vpow.pop %v6322
        %v6324 = vmul.f32 %v6299, 1.442695
        %v6325 = vpow.pop %v6324
        %v6326 = vmul.f32 %v6300, 1.442695
        %v6327 = vpow.pop %v6326
        %v6328 = vmul.f32 %v6301, 1.442695
        %v6329 = vpow.pop %v6328
        %v6330 = vmul.f32 %v6302, 1.442695
        %v6331 = vpow.pop %v6330
        %v6332 = vmul.f32 %v6303, 1.442695
        %v6333 = vpow.pop %v6332
        %v6334 = vmul.f32 %v6304, 1.442695
        %v6335 = vpow.pop %v6334
        %v6336 = vmul.f32 %v6305, 1.442695
        %v6337 = vpow.pop %v6336
        %6338 = vadd.xlane.f32.xlu0 %v6307
        %v6339 = vpop.xlane.xlu0 %6338
        %6340 = vadd.xlane.f32.xlu0 %v6309
        %v6341 = vpop.xlane.xlu0 %6340
        %6342 = vadd.xlane.f32.xlu0 %v6311
        %v6343 = vpop.xlane.xlu0 %6342
        %6344 = vadd.xlane.f32.xlu0 %v6313
        %v6345 = vpop.xlane.xlu0 %6344
        %6346 = vadd.xlane.f32.xlu0 %v6315
        %v6347 = vpop.xlane.xlu0 %6346
        %6348 = vadd.xlane.f32.xlu0 %v6317
        %v6349 = vpop.xlane.xlu0 %6348
        %6350 = vadd.xlane.f32.xlu0 %v6319
        %v6351 = vpop.xlane.xlu0 %6350
        %6352 = vadd.xlane.f32.xlu0 %v6321
        %v6353 = vpop.xlane.xlu0 %6352
        %6354 = vadd.xlane.f32.xlu0 %v6323
        %v6355 = vpop.xlane.xlu0 %6354
        %6356 = vadd.xlane.f32.xlu0 %v6325
        %v6357 = vpop.xlane.xlu0 %6356
        %6358 = vadd.xlane.f32.xlu0 %v6327
        %v6359 = vpop.xlane.xlu0 %6358
        %6360 = vadd.xlane.f32.xlu0 %v6329
        %v6361 = vpop.xlane.xlu0 %6360
        %6362 = vadd.xlane.f32.xlu0 %v6331
        %v6363 = vpop.xlane.xlu0 %6362
        %6364 = vadd.xlane.f32.xlu0 %v6333
        %v6365 = vpop.xlane.xlu0 %6364
        %6366 = vadd.xlane.f32.xlu0 %v6335
        %v6367 = vpop.xlane.xlu0 %6366
        %6368 = vadd.xlane.f32.xlu0 %v6337
        %v6369 = vpop.xlane.xlu0 %6368
        %v6370 = vrcp.pop %v6339
        %v6371 = vrcp.pop %v6341
        %v6372 = vrcp.pop %v6343
        %v6373 = vrcp.pop %v6345
        %v6374 = vrcp.pop %v6347
        %v6375 = vrcp.pop %v6349
        %v6376 = vrcp.pop %v6351
        %v6377 = vrcp.pop %v6353
        %v6378 = vrcp.pop %v6355
        %v6379 = vrcp.pop %v6357
        %v6380 = vrcp.pop %v6359
        %v6381 = vrcp.pop %v6361
        %v6382 = vrcp.pop %v6363
        %v6383 = vrcp.pop %v6365
        %v6384 = vrcp.pop %v6367
        %v6385 = vrcp.pop %v6369
        %v6386 = vmul.f32 %v6307, %v6370
        %v6387 = vmul.f32 %v6309, %v6371
        %v6388 = vmul.f32 %v6311, %v6372
        %v6389 = vmul.f32 %v6313, %v6373
        %v6390 = vmul.f32 %v6315, %v6374
        %v6391 = vmul.f32 %v6317, %v6375
        %v6392 = vmul.f32 %v6319, %v6376
        %v6393 = vmul.f32 %v6321, %v6377
        %v6394 = vmul.f32 %v6323, %v6378
        %v6395 = vmul.f32 %v6325, %v6379
        %v6396 = vmul.f32 %v6327, %v6380
        %v6397 = vmul.f32 %v6329, %v6381
        %v6398 = vmul.f32 %v6331, %v6382
        %v6399 = vmul.f32 %v6333, %v6383
        %v6400 = vmul.f32 %v6335, %v6384
        %v6401 = vmul.f32 %v6337, %v6385
        %6402 = vrot.lane.b32.xlu0 %v2022, 64
        %v6403 = vpop.permute.xlu0 %6402
        %6404 = vrot.lane.b32.xlu0 %v2028, 64
        %v6405 = vpop.permute.xlu0 %6404
        %6406 = vrot.lane.b32.xlu0 %v2034, 64
        %v6407 = vpop.permute.xlu0 %6406
        %6408 = vrot.lane.b32.xlu0 %v2040, 64
        %v6409 = vpop.permute.xlu0 %6408
        %6410 = vrot.lane.b32.xlu0 %v2046, 64
        %v6411 = vpop.permute.xlu0 %6410
        %6412 = vrot.lane.b32.xlu0 %v2052, 64
        %v6413 = vpop.permute.xlu0 %6412
        %6414 = vrot.lane.b32.xlu0 %v2058, 64
        %v6415 = vpop.permute.xlu0 %6414
        %6416 = vrot.lane.b32.xlu0 %v2064, 64
        %v6417 = vpop.permute.xlu0 %6416
        %6418 = vrot.lane.b32.xlu0 %v2070, 64
        %v6419 = vpop.permute.xlu0 %6418
        %6420 = vrot.lane.b32.xlu0 %v2076, 64
        %v6421 = vpop.permute.xlu0 %6420
        %6422 = vrot.lane.b32.xlu0 %v2082, 64
        %v6423 = vpop.permute.xlu0 %6422
        %6424 = vrot.lane.b32.xlu0 %v2088, 64
        %v6425 = vpop.permute.xlu0 %6424
        %6426 = vrot.lane.b32.xlu0 %v2094, 64
        %v6427 = vpop.permute.xlu0 %6426
        %6428 = vrot.lane.b32.xlu0 %v2100, 64
        %v6429 = vpop.permute.xlu0 %6428
        %6430 = vrot.lane.b32.xlu0 %v2106, 64
        %v6431 = vpop.permute.xlu0 %6430
        %6432 = vrot.lane.b32.xlu0 %v2112, 64
        %v6433 = vpop.permute.xlu0 %6432
        %6450 = vmatprep.subr.mxu0 0.0
        %6451 = vmatpush1.msra.mxu0 %v6433
        %6452 = vmatprep.subr.mxu0 0.0
        %6453 = vmatpush1.msra.mxu0 %v6431
        %6454 = vmatprep.subr.mxu0 0.0
        %6455 = vmatpush1.msra.mxu0 %v6429
        %6456 = vmatprep.subr.mxu0 0.0
        %6457 = vmatpush1.msra.mxu0 %v6427
        %6458 = vmatprep.subr.mxu0 0.0
        %6459 = vmatpush1.msra.mxu0 %v6425
        %6460 = vmatprep.subr.mxu0 0.0
        %6461 = vmatpush1.msra.mxu0 %v6423
        %6462 = vmatprep.subr.mxu0 0.0
        %6463 = vmatpush1.msra.mxu0 %v6421
        %6464 = vmatprep.subr.mxu0 0.0
        %6465 = vmatpush1.msra.mxu0 %v6419
        %6466 = vmatprep.subr.mxu0 0.0
        %6467 = vmatpush1.msra.mxu0 %v6417
        %6468 = vmatprep.subr.mxu0 0.0
        %6469 = vmatpush1.msra.mxu0 %v6415
        %6470 = vmatprep.subr.mxu0 0.0
        %6471 = vmatpush1.msra.mxu0 %v6413
        %6472 = vmatprep.subr.mxu0 0.0
        %6473 = vmatpush1.msra.mxu0 %v6411
        %6474 = vmatprep.subr.mxu0 0.0
        %6475 = vmatpush1.msra.mxu0 %v6409
        %6476 = vmatprep.subr.mxu0 0.0
        %6477 = vmatpush1.msra.mxu0 %v6407
        %6478 = vmatprep.subr.mxu0 0.0
        %6479 = vmatpush1.msra.mxu0 %v6405
        %6480 = vmatprep.subr.mxu0 0.0
        %6481 = vmatpush1.msra.mxu0 %v6403
        %6482 = vmatprep.subr.mxu0 0.0
        %6483 = vmatpush2.msra.mxu0 0.0
        %6484 = vmatprep.subr.mxu0 0.0
        %6485 = vmatpush2.msra.mxu0 0.0
        %6486 = vmatprep.subr.mxu0 0.0
        %6487 = vmatpush2.msra.mxu0 0.0
        %6488 = vmatprep.subr.mxu0 0.0
        %6489 = vmatpush2.msra.mxu0 0.0
        %6490 = vmatprep.subr.mxu0 0.0
        %6491 = vmatpush2.msra.mxu0 0.0
        %6492 = vmatprep.subr.mxu0 0.0
        %6493 = vmatpush2.msra.mxu0 0.0
        %6494 = vmatprep.subr.mxu0 0.0
        %6495 = vmatpush2.msra.mxu0 0.0
        %6496 = vmatprep.subr.mxu0 0.0
        %6497 = vmatpush2.msra.mxu0 0.0
        %6498 = vmatprep.subr.mxu0 0.0
        %6499 = vmatpush2.msra.mxu0 0.0
        %6500 = vmatprep.subr.mxu0 0.0
        %6501 = vmatpush2.msra.mxu0 0.0
        %6502 = vmatprep.subr.mxu0 0.0
        %6503 = vmatpush2.msra.mxu0 0.0
        %6504 = vmatprep.subr.mxu0 0.0
        %6505 = vmatpush2.msra.mxu0 0.0
        %6506 = vmatprep.subr.mxu0 0.0
        %6507 = vmatpush2.msra.mxu0 0.0
        %6508 = vmatprep.subr.mxu0 0.0
        %6509 = vmatpush2.msra.mxu0 0.0
        %6510 = vmatprep.subr.mxu0 0.0
        %6511 = vmatpush2.msra.mxu0 0.0
        %6512 = vmatprep.subr.mxu0 0.0
        %6513 = vmatpush2.msra.mxu0 0.0
        %6514 = vmatprep.mubr.f32.mxu0 0.0
        %6515 = vmatmul.mubr.f32.gmra.mxu0 %v6386
        %v6516 = vpop.f32.mrf.mxu0
        %v6517 = vadd.f32 0.0, %v6516
        %v6518 = vpop.f32.mrf.mxu0
        %6519 = vmatprep.mubr.f32.mxu0 0.0
        %6520 = vmatmul.mubr.f32.gmra.mxu0 %v6387
        %v6521 = vpop.f32.mrf.mxu0
        %v6522 = vadd.f32 0.0, %v6521
        %v6523 = vpop.f32.mrf.mxu0
        %6524 = vmatprep.mubr.f32.mxu0 0.0
        %6525 = vmatmul.mubr.f32.gmra.mxu0 %v6388
        %v6526 = vpop.f32.mrf.mxu0
        %v6527 = vadd.f32 0.0, %v6526
        %v6528 = vpop.f32.mrf.mxu0
        %6529 = vmatprep.mubr.f32.mxu0 0.0
        %6530 = vmatmul.mubr.f32.gmra.mxu0 %v6389
        %v6531 = vpop.f32.mrf.mxu0
        %v6532 = vadd.f32 0.0, %v6531
        %v6533 = vpop.f32.mrf.mxu0
        %6534 = vmatprep.mubr.f32.mxu0 0.0
        %6535 = vmatmul.mubr.f32.gmra.mxu0 %v6390
        %v6536 = vpop.f32.mrf.mxu0
        %v6537 = vadd.f32 0.0, %v6536
        %v6538 = vpop.f32.mrf.mxu0
        %6539 = vmatprep.mubr.f32.mxu0 0.0
        %6540 = vmatmul.mubr.f32.gmra.mxu0 %v6391
        %v6541 = vpop.f32.mrf.mxu0
        %v6542 = vadd.f32 0.0, %v6541
        %v6543 = vpop.f32.mrf.mxu0
        %6544 = vmatprep.mubr.f32.mxu0 0.0
        %6545 = vmatmul.mubr.f32.gmra.mxu0 %v6392
        %v6546 = vpop.f32.mrf.mxu0
        %v6547 = vadd.f32 0.0, %v6546
        %v6548 = vpop.f32.mrf.mxu0
        %6549 = vmatprep.mubr.f32.mxu0 0.0
        %6550 = vmatmul.mubr.f32.gmra.mxu0 %v6393
        %v6551 = vpop.f32.mrf.mxu0
        %v6552 = vadd.f32 0.0, %v6551
        %v6553 = vpop.f32.mrf.mxu0
        %6554 = vmatprep.mubr.f32.mxu0 0.0
        %6555 = vmatmul.mubr.f32.gmra.mxu0 %v6394
        %v6556 = vpop.f32.mrf.mxu0
        %v6557 = vadd.f32 0.0, %v6556
        %v6558 = vpop.f32.mrf.mxu0
        %6559 = vmatprep.mubr.f32.mxu0 0.0
        %6560 = vmatmul.mubr.f32.gmra.mxu0 %v6395
        %v6561 = vpop.f32.mrf.mxu0
        %v6562 = vadd.f32 0.0, %v6561
        %v6563 = vpop.f32.mrf.mxu0
        %6564 = vmatprep.mubr.f32.mxu0 0.0
        %6565 = vmatmul.mubr.f32.gmra.mxu0 %v6396
        %v6566 = vpop.f32.mrf.mxu0
        %v6567 = vadd.f32 0.0, %v6566
        %v6568 = vpop.f32.mrf.mxu0
        %6569 = vmatprep.mubr.f32.mxu0 0.0
        %6570 = vmatmul.mubr.f32.gmra.mxu0 %v6397
        %v6571 = vpop.f32.mrf.mxu0
        %v6572 = vadd.f32 0.0, %v6571
        %v6573 = vpop.f32.mrf.mxu0
        %6574 = vmatprep.mubr.f32.mxu0 0.0
        %6575 = vmatmul.mubr.f32.gmra.mxu0 %v6398
        %v6576 = vpop.f32.mrf.mxu0
        %v6577 = vadd.f32 0.0, %v6576
        %v6578 = vpop.f32.mrf.mxu0
        %6579 = vmatprep.mubr.f32.mxu0 0.0
        %6580 = vmatmul.mubr.f32.gmra.mxu0 %v6399
        %v6581 = vpop.f32.mrf.mxu0
        %v6582 = vadd.f32 0.0, %v6581
        %v6583 = vpop.f32.mrf.mxu0
        %6584 = vmatprep.mubr.f32.mxu0 0.0
        %6585 = vmatmul.mubr.f32.gmra.mxu0 %v6400
        %v6586 = vpop.f32.mrf.mxu0
        %v6587 = vadd.f32 0.0, %v6586
        %v6588 = vpop.f32.mrf.mxu0
        %6589 = vmatprep.mubr.f32.mxu0 0.0
        %6590 = vmatmul.mubr.f32.gmra.mxu0 %v6401
        %v6591 = vpop.f32.mrf.mxu0
        %v6592 = vadd.f32 0.0, %v6591
        %v6593 = vpop.f32.mrf.mxu0
        %6594 = vdwg.mxu0
        %6595 = vrot.lane.b32.xlu0 %v2405, 32
        %v6596 = vpop.permute.xlu0 %6595
        %6597 = vrot.lane.b32.xlu0 %v2408, 32
        %v6598 = vpop.permute.xlu0 %6597
        %6599 = vrot.lane.b32.xlu0 %v2411, 32
        %v6600 = vpop.permute.xlu0 %6599
        %6601 = vrot.lane.b32.xlu0 %v2414, 32
        %v6602 = vpop.permute.xlu0 %6601
        %6603 = vrot.lane.b32.xlu0 %v2417, 32
        %v6604 = vpop.permute.xlu0 %6603
        %6605 = vrot.lane.b32.xlu0 %v2420, 32
        %v6606 = vpop.permute.xlu0 %6605
        %6607 = vrot.lane.b32.xlu0 %v2423, 32
        %v6608 = vpop.permute.xlu0 %6607
        %6609 = vrot.lane.b32.xlu0 %v2426, 32
        %v6610 = vpop.permute.xlu0 %6609
        %6611 = vrot.lane.b32.xlu0 %v2429, 32
        %v6612 = vpop.permute.xlu0 %6611
        %6613 = vrot.lane.b32.xlu0 %v2432, 32
        %v6614 = vpop.permute.xlu0 %6613
        %6615 = vrot.lane.b32.xlu0 %v2435, 32
        %v6616 = vpop.permute.xlu0 %6615
        %6617 = vrot.lane.b32.xlu0 %v2438, 32
        %v6618 = vpop.permute.xlu0 %6617
        %6619 = vrot.lane.b32.xlu0 %v2441, 32
        %v6620 = vpop.permute.xlu0 %6619
        %6621 = vrot.lane.b32.xlu0 %v2444, 32
        %v6622 = vpop.permute.xlu0 %6621
        %6623 = vrot.lane.b32.xlu0 %v2447, 32
        %v6624 = vpop.permute.xlu0 %6623
        %6625 = vrot.lane.b32.xlu0 %v2450, 32
        %v6626 = vpop.permute.xlu0 %6625
        %6627 = vrot.lane.b32.xlu0 %v1698, 32
        %v6628 = vpop.permute.xlu0 %6627
        %6629 = vrot.lane.b32.xlu0 %v1704, 32
        %v6630 = vpop.permute.xlu0 %6629
        %6631 = vrot.lane.b32.xlu0 %v1710, 32
        %v6632 = vpop.permute.xlu0 %6631
        %6633 = vrot.lane.b32.xlu0 %v1716, 32
        %v6634 = vpop.permute.xlu0 %6633
        %6635 = vrot.lane.b32.xlu0 %v1722, 32
        %v6636 = vpop.permute.xlu0 %6635
        %6637 = vrot.lane.b32.xlu0 %v1728, 32
        %v6638 = vpop.permute.xlu0 %6637
        %6639 = vrot.lane.b32.xlu0 %v1734, 32
        %v6640 = vpop.permute.xlu0 %6639
        %6641 = vrot.lane.b32.xlu0 %v1740, 32
        %v6642 = vpop.permute.xlu0 %6641
        %6643 = vrot.lane.b32.xlu0 %v1746, 32
        %v6644 = vpop.permute.xlu0 %6643
        %6645 = vrot.lane.b32.xlu0 %v1752, 32
        %v6646 = vpop.permute.xlu0 %6645
        %6647 = vrot.lane.b32.xlu0 %v1758, 32
        %v6648 = vpop.permute.xlu0 %6647
        %6649 = vrot.lane.b32.xlu0 %v1764, 32
        %v6650 = vpop.permute.xlu0 %6649
        %6651 = vrot.lane.b32.xlu0 %v1770, 32
        %v6652 = vpop.permute.xlu0 %6651
        %6653 = vrot.lane.b32.xlu0 %v1776, 32
        %v6654 = vpop.permute.xlu0 %6653
        %6655 = vrot.lane.b32.xlu0 %v1782, 32
        %v6656 = vpop.permute.xlu0 %6655
        %6657 = vrot.lane.b32.xlu0 %v1788, 32
        %v6658 = vpop.permute.xlu0 %6657
        %v6659 = vsel %vm2452, %v6596, 0
        %v6661 = vsel %vm2452, %v6598, 0
        %v6663 = vsel %vm2452, %v6600, 0
        %v6665 = vsel %vm2452, %v6602, 0
        %v6667 = vsel %vm2452, %v6604, 0
        %v6669 = vsel %vm2452, %v6606, 0
        %v6671 = vsel %vm2452, %v6608, 0
        %v6673 = vsel %vm2452, %v6610, 0
        %v6675 = vsel %vm2452, %v6612, 0
        %v6677 = vsel %vm2452, %v6614, 0
        %v6679 = vsel %vm2452, %v6616, 0
        %v6681 = vsel %vm2452, %v6618, 0
        %v6683 = vsel %vm2452, %v6620, 0
        %v6685 = vsel %vm2452, %v6622, 0
        %v6687 = vsel %vm2452, %v6624, 0
        %v6689 = vsel %vm2452, %v6626, 0
        %v6691 = vsel %vm2452, %v6628, 0
        %v6693 = vsel %vm2452, %v6630, 0
        %v6695 = vsel %vm2452, %v6632, 0
        %v6697 = vsel %vm2452, %v6634, 0
        %v6699 = vsel %vm2452, %v6636, 0
        %v6701 = vsel %vm2452, %v6638, 0
        %v6703 = vsel %vm2452, %v6640, 0
        %v6705 = vsel %vm2452, %v6642, 0
        %v6707 = vsel %vm2452, %v6644, 0
        %v6709 = vsel %vm2452, %v6646, 0
        %v6711 = vsel %vm2452, %v6648, 0
        %v6713 = vsel %vm2452, %v6650, 0
        %v6715 = vsel %vm2452, %v6652, 0
        %v6717 = vsel %vm2452, %v6654, 0
        %v6719 = vsel %vm2452, %v6656, 0
        %v6721 = vsel %vm2452, %v6658, 0
        %6723 = vmatprep.subr.mxu0 0.0
        %6724 = vmatpush1.xpose.msra.mxu0 %v6721
        %6725 = vmatprep.subr.mxu0 0.0
        %6726 = vmatpush1.xpose.msra.mxu0 %v6719
        %6727 = vmatprep.subr.mxu0 0.0
        %6728 = vmatpush1.xpose.msra.mxu0 %v6717
        %6729 = vmatprep.subr.mxu0 0.0
        %6730 = vmatpush1.xpose.msra.mxu0 %v6715
        %6731 = vmatprep.subr.mxu0 0.0
        %6732 = vmatpush1.xpose.msra.mxu0 %v6713
        %6733 = vmatprep.subr.mxu0 0.0
        %6734 = vmatpush1.xpose.msra.mxu0 %v6711
        %6735 = vmatprep.subr.mxu0 0.0
        %6736 = vmatpush1.xpose.msra.mxu0 %v6709
        %6737 = vmatprep.subr.mxu0 0.0
        %6738 = vmatpush1.xpose.msra.mxu0 %v6707
        %6739 = vmatprep.subr.mxu0 0.0
        %6740 = vmatpush1.xpose.msra.mxu0 %v6705
        %6741 = vmatprep.subr.mxu0 0.0
        %6742 = vmatpush1.xpose.msra.mxu0 %v6703
        %6743 = vmatprep.subr.mxu0 0.0
        %6744 = vmatpush1.xpose.msra.mxu0 %v6701
        %6745 = vmatprep.subr.mxu0 0.0
        %6746 = vmatpush1.xpose.msra.mxu0 %v6699
        %6747 = vmatprep.subr.mxu0 0.0
        %6748 = vmatpush1.xpose.msra.mxu0 %v6697
        %6749 = vmatprep.subr.mxu0 0.0
        %6750 = vmatpush1.xpose.msra.mxu0 %v6695
        %6751 = vmatprep.subr.mxu0 0.0
        %6752 = vmatpush1.xpose.msra.mxu0 %v6693
        %6753 = vmatprep.subr.mxu0 0.0
        %6754 = vmatpush1.xpose.msra.mxu0 %v6691
        %6755 = vmatprep.subr.mxu0 0.0
        %6756 = vmatpush2.xpose.msra.mxu0 0.0
        %6757 = vmatprep.subr.mxu0 0.0
        %6758 = vmatpush2.xpose.msra.mxu0 0.0
        %6759 = vmatprep.subr.mxu0 0.0
        %6760 = vmatpush2.xpose.msra.mxu0 0.0
        %6761 = vmatprep.subr.mxu0 0.0
        %6762 = vmatpush2.xpose.msra.mxu0 0.0
        %6763 = vmatprep.subr.mxu0 0.0
        %6764 = vmatpush2.xpose.msra.mxu0 0.0
        %6765 = vmatprep.subr.mxu0 0.0
        %6766 = vmatpush2.xpose.msra.mxu0 0.0
        %6767 = vmatprep.subr.mxu0 0.0
        %6768 = vmatpush2.xpose.msra.mxu0 0.0
        %6769 = vmatprep.subr.mxu0 0.0
        %6770 = vmatpush2.xpose.msra.mxu0 0.0
        %6771 = vmatprep.subr.mxu0 0.0
        %6772 = vmatpush2.xpose.msra.mxu0 0.0
        %6773 = vmatprep.subr.mxu0 0.0
        %6774 = vmatpush2.xpose.msra.mxu0 0.0
        %6775 = vmatprep.subr.mxu0 0.0
        %6776 = vmatpush2.xpose.msra.mxu0 0.0
        %6777 = vmatprep.subr.mxu0 0.0
        %6778 = vmatpush2.xpose.msra.mxu0 0.0
        %6779 = vmatprep.subr.mxu0 0.0
        %6780 = vmatpush2.xpose.msra.mxu0 0.0
        %6781 = vmatprep.subr.mxu0 0.0
        %6782 = vmatpush2.xpose.msra.mxu0 0.0
        %6783 = vmatprep.subr.mxu0 0.0
        %6784 = vmatpush2.xpose.msra.mxu0 0.0
        %6785 = vmatprep.subr.mxu0 0.0
        %6786 = vmatpush2.xpose.msra.mxu0 0.0
        %6787 = vmatprep.mubr.f32.mxu0 0.0
        %6788 = vmatmul.mubr.f32.gmra.mxu0 %v6659
        %v6789 = vpop.f32.mrf.mxu0
        %v6790 = vadd.f32 0.0, %v6789
        %v6791 = vpop.f32.mrf.mxu0
        %6792 = vmatprep.mubr.f32.mxu0 0.0
        %6793 = vmatmul.mubr.f32.gmra.mxu0 %v6661
        %v6794 = vpop.f32.mrf.mxu0
        %v6795 = vadd.f32 0.0, %v6794
        %v6796 = vpop.f32.mrf.mxu0
        %6797 = vmatprep.mubr.f32.mxu0 0.0
        %6798 = vmatmul.mubr.f32.gmra.mxu0 %v6663
        %v6799 = vpop.f32.mrf.mxu0
        %v6800 = vadd.f32 0.0, %v6799
        %v6801 = vpop.f32.mrf.mxu0
        %6802 = vmatprep.mubr.f32.mxu0 0.0
        %6803 = vmatmul.mubr.f32.gmra.mxu0 %v6665
        %v6804 = vpop.f32.mrf.mxu0
        %v6805 = vadd.f32 0.0, %v6804
        %v6806 = vpop.f32.mrf.mxu0
        %6807 = vmatprep.mubr.f32.mxu0 0.0
        %6808 = vmatmul.mubr.f32.gmra.mxu0 %v6667
        %v6809 = vpop.f32.mrf.mxu0
        %v6810 = vadd.f32 0.0, %v6809
        %v6811 = vpop.f32.mrf.mxu0
        %6812 = vmatprep.mubr.f32.mxu0 0.0
        %6813 = vmatmul.mubr.f32.gmra.mxu0 %v6669
        %v6814 = vpop.f32.mrf.mxu0
        %v6815 = vadd.f32 0.0, %v6814
        %v6816 = vpop.f32.mrf.mxu0
        %6817 = vmatprep.mubr.f32.mxu0 0.0
        %6818 = vmatmul.mubr.f32.gmra.mxu0 %v6671
        %v6819 = vpop.f32.mrf.mxu0
        %v6820 = vadd.f32 0.0, %v6819
        %v6821 = vpop.f32.mrf.mxu0
        %6822 = vmatprep.mubr.f32.mxu0 0.0
        %6823 = vmatmul.mubr.f32.gmra.mxu0 %v6673
        %v6824 = vpop.f32.mrf.mxu0
        %v6825 = vadd.f32 0.0, %v6824
        %v6826 = vpop.f32.mrf.mxu0
        %6827 = vmatprep.mubr.f32.mxu0 0.0
        %6828 = vmatmul.mubr.f32.gmra.mxu0 %v6675
        %v6829 = vpop.f32.mrf.mxu0
        %v6830 = vadd.f32 0.0, %v6829
        %v6831 = vpop.f32.mrf.mxu0
        %6832 = vmatprep.mubr.f32.mxu0 0.0
        %6833 = vmatmul.mubr.f32.gmra.mxu0 %v6677
        %v6834 = vpop.f32.mrf.mxu0
        %v6835 = vadd.f32 0.0, %v6834
        %v6836 = vpop.f32.mrf.mxu0
        %6837 = vmatprep.mubr.f32.mxu0 0.0
        %6838 = vmatmul.mubr.f32.gmra.mxu0 %v6679
        %v6839 = vpop.f32.mrf.mxu0
        %v6840 = vadd.f32 0.0, %v6839
        %v6841 = vpop.f32.mrf.mxu0
        %6842 = vmatprep.mubr.f32.mxu0 0.0
        %6843 = vmatmul.mubr.f32.gmra.mxu0 %v6681
        %v6844 = vpop.f32.mrf.mxu0
        %v6845 = vadd.f32 0.0, %v6844
        %v6846 = vpop.f32.mrf.mxu0
        %6847 = vmatprep.mubr.f32.mxu0 0.0
        %6848 = vmatmul.mubr.f32.gmra.mxu0 %v6683
        %v6849 = vpop.f32.mrf.mxu0
        %v6850 = vadd.f32 0.0, %v6849
        %v6851 = vpop.f32.mrf.mxu0
        %6852 = vmatprep.mubr.f32.mxu0 0.0
        %6853 = vmatmul.mubr.f32.gmra.mxu0 %v6685
        %v6854 = vpop.f32.mrf.mxu0
        %v6855 = vadd.f32 0.0, %v6854
        %v6856 = vpop.f32.mrf.mxu0
        %6857 = vmatprep.mubr.f32.mxu0 0.0
        %6858 = vmatmul.mubr.f32.gmra.mxu0 %v6687
        %v6859 = vpop.f32.mrf.mxu0
        %v6860 = vadd.f32 0.0, %v6859
        %v6861 = vpop.f32.mrf.mxu0
        %6862 = vmatprep.mubr.f32.mxu0 0.0
        %6863 = vmatmul.mubr.f32.gmra.mxu0 %v6689
        %v6864 = vpop.f32.mrf.mxu0
        %v6865 = vadd.f32 0.0, %v6864
        %v6866 = vpop.f32.mrf.mxu0
        %6867 = vdwg.mxu0
        %6868 = vmax.xlane.f32.xlu0 %v6790
        %v6869 = vpop.xlane.xlu0 %6868
        %6870 = vmax.xlane.f32.xlu0 %v6795
        %v6871 = vpop.xlane.xlu0 %6870
        %6872 = vmax.xlane.f32.xlu0 %v6800
        %v6873 = vpop.xlane.xlu0 %6872
        %6874 = vmax.xlane.f32.xlu0 %v6805
        %v6875 = vpop.xlane.xlu0 %6874
        %6876 = vmax.xlane.f32.xlu0 %v6810
        %v6877 = vpop.xlane.xlu0 %6876
        %6878 = vmax.xlane.f32.xlu0 %v6815
        %v6879 = vpop.xlane.xlu0 %6878
        %6880 = vmax.xlane.f32.xlu0 %v6820
        %v6881 = vpop.xlane.xlu0 %6880
        %6882 = vmax.xlane.f32.xlu0 %v6825
        %v6883 = vpop.xlane.xlu0 %6882
        %6884 = vmax.xlane.f32.xlu0 %v6830
        %v6885 = vpop.xlane.xlu0 %6884
        %6886 = vmax.xlane.f32.xlu0 %v6835
        %v6887 = vpop.xlane.xlu0 %6886
        %6888 = vmax.xlane.f32.xlu0 %v6840
        %v6889 = vpop.xlane.xlu0 %6888
        %6890 = vmax.xlane.f32.xlu0 %v6845
        %v6891 = vpop.xlane.xlu0 %6890
        %6892 = vmax.xlane.f32.xlu0 %v6850
        %v6893 = vpop.xlane.xlu0 %6892
        %6894 = vmax.xlane.f32.xlu0 %v6855
        %v6895 = vpop.xlane.xlu0 %6894
        %6896 = vmax.xlane.f32.xlu0 %v6860
        %v6897 = vpop.xlane.xlu0 %6896
        %6898 = vmax.xlane.f32.xlu0 %v6865
        %v6899 = vpop.xlane.xlu0 %6898
        %v6900 = vsub.f32 %v6790, %v6869
        %v6901 = vsub.f32 %v6795, %v6871
        %v6902 = vsub.f32 %v6800, %v6873
        %v6903 = vsub.f32 %v6805, %v6875
        %v6904 = vsub.f32 %v6810, %v6877
        %v6905 = vsub.f32 %v6815, %v6879
        %v6906 = vsub.f32 %v6820, %v6881
        %v6907 = vsub.f32 %v6825, %v6883
        %v6908 = vsub.f32 %v6830, %v6885
        %v6909 = vsub.f32 %v6835, %v6887
        %v6910 = vsub.f32 %v6840, %v6889
        %v6911 = vsub.f32 %v6845, %v6891
        %v6912 = vsub.f32 %v6850, %v6893
        %v6913 = vsub.f32 %v6855, %v6895
        %v6914 = vsub.f32 %v6860, %v6897
        %v6915 = vsub.f32 %v6865, %v6899
        %v6916 = vmul.f32 %v6900, 1.442695
        %v6917 = vpow.pop %v6916
        %v6918 = vmul.f32 %v6901, 1.442695
        %v6919 = vpow.pop %v6918
        %v6920 = vmul.f32 %v6902, 1.442695
        %v6921 = vpow.pop %v6920
        %v6922 = vmul.f32 %v6903, 1.442695
        %v6923 = vpow.pop %v6922
        %v6924 = vmul.f32 %v6904, 1.442695
        %v6925 = vpow.pop %v6924
        %v6926 = vmul.f32 %v6905, 1.442695
        %v6927 = vpow.pop %v6926
        %v6928 = vmul.f32 %v6906, 1.442695
        %v6929 = vpow.pop %v6928
        %v6930 = vmul.f32 %v6907, 1.442695
        %v6931 = vpow.pop %v6930
        %v6932 = vmul.f32 %v6908, 1.442695
        %v6933 = vpow.pop %v6932
        %v6934 = vmul.f32 %v6909, 1.442695
        %v6935 = vpow.pop %v6934
        %v6936 = vmul.f32 %v6910, 1.442695
        %v6937 = vpow.pop %v6936
        %v6938 = vmul.f32 %v6911, 1.442695
        %v6939 = vpow.pop %v6938
        %v6940 = vmul.f32 %v6912, 1.442695
        %v6941 = vpow.pop %v6940
        %v6942 = vmul.f32 %v6913, 1.442695
        %v6943 = vpow.pop %v6942
        %v6944 = vmul.f32 %v6914, 1.442695
        %v6945 = vpow.pop %v6944
        %v6946 = vmul.f32 %v6915, 1.442695
        %v6947 = vpow.pop %v6946
        %6948 = vadd.xlane.f32.xlu0 %v6917
        %v6949 = vpop.xlane.xlu0 %6948
        %6950 = vadd.xlane.f32.xlu0 %v6919
        %v6951 = vpop.xlane.xlu0 %6950
        %6952 = vadd.xlane.f32.xlu0 %v6921
        %v6953 = vpop.xlane.xlu0 %6952
        %6954 = vadd.xlane.f32.xlu0 %v6923
        %v6955 = vpop.xlane.xlu0 %6954
        %6956 = vadd.xlane.f32.xlu0 %v6925
        %v6957 = vpop.xlane.xlu0 %6956
        %6958 = vadd.xlane.f32.xlu0 %v6927
        %v6959 = vpop.xlane.xlu0 %6958
        %6960 = vadd.xlane.f32.xlu0 %v6929
        %v6961 = vpop.xlane.xlu0 %6960
        %6962 = vadd.xlane.f32.xlu0 %v6931
        %v6963 = vpop.xlane.xlu0 %6962
        %6964 = vadd.xlane.f32.xlu0 %v6933
        %v6965 = vpop.xlane.xlu0 %6964
        %6966 = vadd.xlane.f32.xlu0 %v6935
        %v6967 = vpop.xlane.xlu0 %6966
        %6968 = vadd.xlane.f32.xlu0 %v6937
        %v6969 = vpop.xlane.xlu0 %6968
        %6970 = vadd.xlane.f32.xlu0 %v6939
        %v6971 = vpop.xlane.xlu0 %6970
        %6972 = vadd.xlane.f32.xlu0 %v6941
        %v6973 = vpop.xlane.xlu0 %6972
        %6974 = vadd.xlane.f32.xlu0 %v6943
        %v6975 = vpop.xlane.xlu0 %6974
        %6976 = vadd.xlane.f32.xlu0 %v6945
        %v6977 = vpop.xlane.xlu0 %6976
        %6978 = vadd.xlane.f32.xlu0 %v6947
        %v6979 = vpop.xlane.xlu0 %6978
        %v6980 = vrcp.pop %v6949
        %v6981 = vrcp.pop %v6951
        %v6982 = vrcp.pop %v6953
        %v6983 = vrcp.pop %v6955
        %v6984 = vrcp.pop %v6957
        %v6985 = vrcp.pop %v6959
        %v6986 = vrcp.pop %v6961
        %v6987 = vrcp.pop %v6963
        %v6988 = vrcp.pop %v6965
        %v6989 = vrcp.pop %v6967
        %v6990 = vrcp.pop %v6969
        %v6991 = vrcp.pop %v6971
        %v6992 = vrcp.pop %v6973
        %v6993 = vrcp.pop %v6975
        %v6994 = vrcp.pop %v6977
        %v6995 = vrcp.pop %v6979
        %v6996 = vmul.f32 %v6917, %v6980
        %v6997 = vmul.f32 %v6919, %v6981
        %v6998 = vmul.f32 %v6921, %v6982
        %v6999 = vmul.f32 %v6923, %v6983
        %v7000 = vmul.f32 %v6925, %v6984
        %v7001 = vmul.f32 %v6927, %v6985
        %v7002 = vmul.f32 %v6929, %v6986
        %v7003 = vmul.f32 %v6931, %v6987
        %v7004 = vmul.f32 %v6933, %v6988
        %v7005 = vmul.f32 %v6935, %v6989
        %v7006 = vmul.f32 %v6937, %v6990
        %v7007 = vmul.f32 %v6939, %v6991
        %v7008 = vmul.f32 %v6941, %v6992
        %v7009 = vmul.f32 %v6943, %v6993
        %v7010 = vmul.f32 %v6945, %v6994
        %v7011 = vmul.f32 %v6947, %v6995
        %7012 = vrot.lane.b32.xlu0 %v2022, 32
        %v7013 = vpop.permute.xlu0 %7012
        %7014 = vrot.lane.b32.xlu0 %v2028, 32
        %v7015 = vpop.permute.xlu0 %7014
        %7016 = vrot.lane.b32.xlu0 %v2034, 32
        %v7017 = vpop.permute.xlu0 %7016
        %7018 = vrot.lane.b32.xlu0 %v2040, 32
        %v7019 = vpop.permute.xlu0 %7018
        %7020 = vrot.lane.b32.xlu0 %v2046, 32
        %v7021 = vpop.permute.xlu0 %7020
        %7022 = vrot.lane.b32.xlu0 %v2052, 32
        %v7023 = vpop.permute.xlu0 %7022
        %7024 = vrot.lane.b32.xlu0 %v2058, 32
        %v7025 = vpop.permute.xlu0 %7024
        %7026 = vrot.lane.b32.xlu0 %v2064, 32
        %v7027 = vpop.permute.xlu0 %7026
        %7028 = vrot.lane.b32.xlu0 %v2070, 32
        %v7029 = vpop.permute.xlu0 %7028
        %7030 = vrot.lane.b32.xlu0 %v2076, 32
        %v7031 = vpop.permute.xlu0 %7030
        %7032 = vrot.lane.b32.xlu0 %v2082, 32
        %v7033 = vpop.permute.xlu0 %7032
        %7034 = vrot.lane.b32.xlu0 %v2088, 32
        %v7035 = vpop.permute.xlu0 %7034
        %7036 = vrot.lane.b32.xlu0 %v2094, 32
        %v7037 = vpop.permute.xlu0 %7036
        %7038 = vrot.lane.b32.xlu0 %v2100, 32
        %v7039 = vpop.permute.xlu0 %7038
        %7040 = vrot.lane.b32.xlu0 %v2106, 32
        %v7041 = vpop.permute.xlu0 %7040
        %7042 = vrot.lane.b32.xlu0 %v2112, 32
        %v7043 = vpop.permute.xlu0 %7042
        %7060 = vmatprep.subr.mxu0 0.0
        %7061 = vmatpush1.msra.mxu0 %v7043
        %7062 = vmatprep.subr.mxu0 0.0
        %7063 = vmatpush1.msra.mxu0 %v7041
        %7064 = vmatprep.subr.mxu0 0.0
        %7065 = vmatpush1.msra.mxu0 %v7039
        %7066 = vmatprep.subr.mxu0 0.0
        %7067 = vmatpush1.msra.mxu0 %v7037
        %7068 = vmatprep.subr.mxu0 0.0
        %7069 = vmatpush1.msra.mxu0 %v7035
        %7070 = vmatprep.subr.mxu0 0.0
        %7071 = vmatpush1.msra.mxu0 %v7033
        %7072 = vmatprep.subr.mxu0 0.0
        %7073 = vmatpush1.msra.mxu0 %v7031
        %7074 = vmatprep.subr.mxu0 0.0
        %7075 = vmatpush1.msra.mxu0 %v7029
        %7076 = vmatprep.subr.mxu0 0.0
        %7077 = vmatpush1.msra.mxu0 %v7027
        %7078 = vmatprep.subr.mxu0 0.0
        %7079 = vmatpush1.msra.mxu0 %v7025
        %7080 = vmatprep.subr.mxu0 0.0
        %7081 = vmatpush1.msra.mxu0 %v7023
        %7082 = vmatprep.subr.mxu0 0.0
        %7083 = vmatpush1.msra.mxu0 %v7021
        %7084 = vmatprep.subr.mxu0 0.0
        %7085 = vmatpush1.msra.mxu0 %v7019
        %7086 = vmatprep.subr.mxu0 0.0
        %7087 = vmatpush1.msra.mxu0 %v7017
        %7088 = vmatprep.subr.mxu0 0.0
        %7089 = vmatpush1.msra.mxu0 %v7015
        %7090 = vmatprep.subr.mxu0 0.0
        %7091 = vmatpush1.msra.mxu0 %v7013
        %7092 = vmatprep.subr.mxu0 0.0
        %7093 = vmatpush2.msra.mxu0 0.0
        %7094 = vmatprep.subr.mxu0 0.0
        %7095 = vmatpush2.msra.mxu0 0.0
        %7096 = vmatprep.subr.mxu0 0.0
        %7097 = vmatpush2.msra.mxu0 0.0
        %7098 = vmatprep.subr.mxu0 0.0
        %7099 = vmatpush2.msra.mxu0 0.0
        %7100 = vmatprep.subr.mxu0 0.0
        %7101 = vmatpush2.msra.mxu0 0.0
        %7102 = vmatprep.subr.mxu0 0.0
        %7103 = vmatpush2.msra.mxu0 0.0
        %7104 = vmatprep.subr.mxu0 0.0
        %7105 = vmatpush2.msra.mxu0 0.0
        %7106 = vmatprep.subr.mxu0 0.0
        %7107 = vmatpush2.msra.mxu0 0.0
        %7108 = vmatprep.subr.mxu0 0.0
        %7109 = vmatpush2.msra.mxu0 0.0
        %7110 = vmatprep.subr.mxu0 0.0
        %7111 = vmatpush2.msra.mxu0 0.0
        %7112 = vmatprep.subr.mxu0 0.0
        %7113 = vmatpush2.msra.mxu0 0.0
        %7114 = vmatprep.subr.mxu0 0.0
        %7115 = vmatpush2.msra.mxu0 0.0
        %7116 = vmatprep.subr.mxu0 0.0
        %7117 = vmatpush2.msra.mxu0 0.0
        %7118 = vmatprep.subr.mxu0 0.0
        %7119 = vmatpush2.msra.mxu0 0.0
        %7120 = vmatprep.subr.mxu0 0.0
        %7121 = vmatpush2.msra.mxu0 0.0
        %7122 = vmatprep.subr.mxu0 0.0
        %7123 = vmatpush2.msra.mxu0 0.0
        %7124 = vmatprep.mubr.f32.mxu0 0.0
        %7125 = vmatmul.mubr.f32.gmra.mxu0 %v6996
        %v7126 = vpop.f32.mrf.mxu0
        %v7127 = vadd.f32 0.0, %v7126
        %v7128 = vpop.f32.mrf.mxu0
        %7129 = vmatprep.mubr.f32.mxu0 0.0
        %7130 = vmatmul.mubr.f32.gmra.mxu0 %v6997
        %v7131 = vpop.f32.mrf.mxu0
        %v7132 = vadd.f32 0.0, %v7131
        %v7133 = vpop.f32.mrf.mxu0
        %7134 = vmatprep.mubr.f32.mxu0 0.0
        %7135 = vmatmul.mubr.f32.gmra.mxu0 %v6998
        %v7136 = vpop.f32.mrf.mxu0
        %v7137 = vadd.f32 0.0, %v7136
        %v7138 = vpop.f32.mrf.mxu0
        %7139 = vmatprep.mubr.f32.mxu0 0.0
        %7140 = vmatmul.mubr.f32.gmra.mxu0 %v6999
        %v7141 = vpop.f32.mrf.mxu0
        %v7142 = vadd.f32 0.0, %v7141
        %v7143 = vpop.f32.mrf.mxu0
        %7144 = vmatprep.mubr.f32.mxu0 0.0
        %7145 = vmatmul.mubr.f32.gmra.mxu0 %v7000
        %v7146 = vpop.f32.mrf.mxu0
        %v7147 = vadd.f32 0.0, %v7146
        %v7148 = vpop.f32.mrf.mxu0
        %7149 = vmatprep.mubr.f32.mxu0 0.0
        %7150 = vmatmul.mubr.f32.gmra.mxu0 %v7001
        %v7151 = vpop.f32.mrf.mxu0
        %v7152 = vadd.f32 0.0, %v7151
        %v7153 = vpop.f32.mrf.mxu0
        %7154 = vmatprep.mubr.f32.mxu0 0.0
        %7155 = vmatmul.mubr.f32.gmra.mxu0 %v7002
        %v7156 = vpop.f32.mrf.mxu0
        %v7157 = vadd.f32 0.0, %v7156
        %v7158 = vpop.f32.mrf.mxu0
        %7159 = vmatprep.mubr.f32.mxu0 0.0
        %7160 = vmatmul.mubr.f32.gmra.mxu0 %v7003
        %v7161 = vpop.f32.mrf.mxu0
        %v7162 = vadd.f32 0.0, %v7161
        %v7163 = vpop.f32.mrf.mxu0
        %7164 = vmatprep.mubr.f32.mxu0 0.0
        %7165 = vmatmul.mubr.f32.gmra.mxu0 %v7004
        %v7166 = vpop.f32.mrf.mxu0
        %v7167 = vadd.f32 0.0, %v7166
        %v7168 = vpop.f32.mrf.mxu0
        %7169 = vmatprep.mubr.f32.mxu0 0.0
        %7170 = vmatmul.mubr.f32.gmra.mxu0 %v7005
        %v7171 = vpop.f32.mrf.mxu0
        %v7172 = vadd.f32 0.0, %v7171
        %v7173 = vpop.f32.mrf.mxu0
        %7174 = vmatprep.mubr.f32.mxu0 0.0
        %7175 = vmatmul.mubr.f32.gmra.mxu0 %v7006
        %v7176 = vpop.f32.mrf.mxu0
        %v7177 = vadd.f32 0.0, %v7176
        %v7178 = vpop.f32.mrf.mxu0
        %7179 = vmatprep.mubr.f32.mxu0 0.0
        %7180 = vmatmul.mubr.f32.gmra.mxu0 %v7007
        %v7181 = vpop.f32.mrf.mxu0
        %v7182 = vadd.f32 0.0, %v7181
        %v7183 = vpop.f32.mrf.mxu0
        %7184 = vmatprep.mubr.f32.mxu0 0.0
        %7185 = vmatmul.mubr.f32.gmra.mxu0 %v7008
        %v7186 = vpop.f32.mrf.mxu0
        %v7187 = vadd.f32 0.0, %v7186
        %v7188 = vpop.f32.mrf.mxu0
        %7189 = vmatprep.mubr.f32.mxu0 0.0
        %7190 = vmatmul.mubr.f32.gmra.mxu0 %v7009
        %v7191 = vpop.f32.mrf.mxu0
        %v7192 = vadd.f32 0.0, %v7191
        %v7193 = vpop.f32.mrf.mxu0
        %7194 = vmatprep.mubr.f32.mxu0 0.0
        %7195 = vmatmul.mubr.f32.gmra.mxu0 %v7010
        %v7196 = vpop.f32.mrf.mxu0
        %v7197 = vadd.f32 0.0, %v7196
        %v7198 = vpop.f32.mrf.mxu0
        %7199 = vmatprep.mubr.f32.mxu0 0.0
        %7200 = vmatmul.mubr.f32.gmra.mxu0 %v7011
        %v7201 = vpop.f32.mrf.mxu0
        %v7202 = vadd.f32 0.0, %v7201
        %v7203 = vpop.f32.mrf.mxu0
        %7204 = vdwg.mxu0
        %v7206 = vsel %vm2452, %v2406, 0
        %v7209 = vsel %vm2452, %v2409, 0
        %v7212 = vsel %vm2452, %v2412, 0
        %v7215 = vsel %vm2452, %v2415, 0
        %v7218 = vsel %vm2452, %v2418, 0
        %v7221 = vsel %vm2452, %v2421, 0
        %v7224 = vsel %vm2452, %v2424, 0
        %v7227 = vsel %vm2452, %v2427, 0
        %v7230 = vsel %vm2452, %v2430, 0
        %v7233 = vsel %vm2452, %v2433, 0
        %v7236 = vsel %vm2452, %v2436, 0
        %v7239 = vsel %vm2452, %v2439, 0
        %v7242 = vsel %vm2452, %v2442, 0
        %v7245 = vsel %vm2452, %v2445, 0
        %v7248 = vsel %vm2452, %v2448, 0
        %v7251 = vsel %vm2452, %v2451, 0
        %v7254 = vsel %vm2452, %v1700, 0
        %v7257 = vsel %vm2452, %v1706, 0
        %v7260 = vsel %vm2452, %v1712, 0
        %v7263 = vsel %vm2452, %v1718, 0
        %v7266 = vsel %vm2452, %v1724, 0
        %v7269 = vsel %vm2452, %v1730, 0
        %v7272 = vsel %vm2452, %v1736, 0
        %v7275 = vsel %vm2452, %v1742, 0
        %v7278 = vsel %vm2452, %v1748, 0
        %v7281 = vsel %vm2452, %v1754, 0
        %v7284 = vsel %vm2452, %v1760, 0
        %v7287 = vsel %vm2452, %v1766, 0
        %v7290 = vsel %vm2452, %v1772, 0
        %v7293 = vsel %vm2452, %v1778, 0
        %v7296 = vsel %vm2452, %v1784, 0
        %v7299 = vsel %vm2452, %v1790, 0
        %7301 = vmatprep.subr.mxu0 0.0
        %7302 = vmatpush1.xpose.msra.mxu0 %v7299
        %7303 = vmatprep.subr.mxu0 0.0
        %7304 = vmatpush1.xpose.msra.mxu0 %v7296
        %7305 = vmatprep.subr.mxu0 0.0
        %7306 = vmatpush1.xpose.msra.mxu0 %v7293
        %7307 = vmatprep.subr.mxu0 0.0
        %7308 = vmatpush1.xpose.msra.mxu0 %v7290
        %7309 = vmatprep.subr.mxu0 0.0
        %7310 = vmatpush1.xpose.msra.mxu0 %v7287
        %7311 = vmatprep.subr.mxu0 0.0
        %7312 = vmatpush1.xpose.msra.mxu0 %v7284
        %7313 = vmatprep.subr.mxu0 0.0
        %7314 = vmatpush1.xpose.msra.mxu0 %v7281
        %7315 = vmatprep.subr.mxu0 0.0
        %7316 = vmatpush1.xpose.msra.mxu0 %v7278
        %7317 = vmatprep.subr.mxu0 0.0
        %7318 = vmatpush1.xpose.msra.mxu0 %v7275
        %7319 = vmatprep.subr.mxu0 0.0
        %7320 = vmatpush1.xpose.msra.mxu0 %v7272
        %7321 = vmatprep.subr.mxu0 0.0
        %7322 = vmatpush1.xpose.msra.mxu0 %v7269
        %7323 = vmatprep.subr.mxu0 0.0
        %7324 = vmatpush1.xpose.msra.mxu0 %v7266
        %7325 = vmatprep.subr.mxu0 0.0
        %7326 = vmatpush1.xpose.msra.mxu0 %v7263
        %7327 = vmatprep.subr.mxu0 0.0
        %7328 = vmatpush1.xpose.msra.mxu0 %v7260
        %7329 = vmatprep.subr.mxu0 0.0
        %7330 = vmatpush1.xpose.msra.mxu0 %v7257
        %7331 = vmatprep.subr.mxu0 0.0
        %7332 = vmatpush1.xpose.msra.mxu0 %v7254
        %7333 = vmatprep.subr.mxu0 0.0
        %7334 = vmatpush2.xpose.msra.mxu0 0.0
        %7335 = vmatprep.subr.mxu0 0.0
        %7336 = vmatpush2.xpose.msra.mxu0 0.0
        %7337 = vmatprep.subr.mxu0 0.0
        %7338 = vmatpush2.xpose.msra.mxu0 0.0
        %7339 = vmatprep.subr.mxu0 0.0
        %7340 = vmatpush2.xpose.msra.mxu0 0.0
        %7341 = vmatprep.subr.mxu0 0.0
        %7342 = vmatpush2.xpose.msra.mxu0 0.0
        %7343 = vmatprep.subr.mxu0 0.0
        %7344 = vmatpush2.xpose.msra.mxu0 0.0
        %7345 = vmatprep.subr.mxu0 0.0
        %7346 = vmatpush2.xpose.msra.mxu0 0.0
        %7347 = vmatprep.subr.mxu0 0.0
        %7348 = vmatpush2.xpose.msra.mxu0 0.0
        %7349 = vmatprep.subr.mxu0 0.0
        %7350 = vmatpush2.xpose.msra.mxu0 0.0
        %7351 = vmatprep.subr.mxu0 0.0
        %7352 = vmatpush2.xpose.msra.mxu0 0.0
        %7353 = vmatprep.subr.mxu0 0.0
        %7354 = vmatpush2.xpose.msra.mxu0 0.0
        %7355 = vmatprep.subr.mxu0 0.0
        %7356 = vmatpush2.xpose.msra.mxu0 0.0
        %7357 = vmatprep.subr.mxu0 0.0
        %7358 = vmatpush2.xpose.msra.mxu0 0.0
        %7359 = vmatprep.subr.mxu0 0.0
        %7360 = vmatpush2.xpose.msra.mxu0 0.0
        %7361 = vmatprep.subr.mxu0 0.0
        %7362 = vmatpush2.xpose.msra.mxu0 0.0
        %7363 = vmatprep.subr.mxu0 0.0
        %7364 = vmatpush2.xpose.msra.mxu0 0.0
        %7365 = vmatprep.mubr.f32.mxu0 0.0
        %7366 = vmatmul.mubr.f32.gmra.mxu0 %v7206
        %v7367 = vpop.f32.mrf.mxu0
        %v7368 = vadd.f32 0.0, %v7367
        %v7369 = vpop.f32.mrf.mxu0
        %7370 = vmatprep.mubr.f32.mxu0 0.0
        %7371 = vmatmul.mubr.f32.gmra.mxu0 %v7209
        %v7372 = vpop.f32.mrf.mxu0
        %v7373 = vadd.f32 0.0, %v7372
        %v7374 = vpop.f32.mrf.mxu0
        %7375 = vmatprep.mubr.f32.mxu0 0.0
        %7376 = vmatmul.mubr.f32.gmra.mxu0 %v7212
        %v7377 = vpop.f32.mrf.mxu0
        %v7378 = vadd.f32 0.0, %v7377
        %v7379 = vpop.f32.mrf.mxu0
        %7380 = vmatprep.mubr.f32.mxu0 0.0
        %7381 = vmatmul.mubr.f32.gmra.mxu0 %v7215
        %v7382 = vpop.f32.mrf.mxu0
        %v7383 = vadd.f32 0.0, %v7382
        %v7384 = vpop.f32.mrf.mxu0
        %7385 = vmatprep.mubr.f32.mxu0 0.0
        %7386 = vmatmul.mubr.f32.gmra.mxu0 %v7218
        %v7387 = vpop.f32.mrf.mxu0
        %v7388 = vadd.f32 0.0, %v7387
        %v7389 = vpop.f32.mrf.mxu0
        %7390 = vmatprep.mubr.f32.mxu0 0.0
        %7391 = vmatmul.mubr.f32.gmra.mxu0 %v7221
        %v7392 = vpop.f32.mrf.mxu0
        %v7393 = vadd.f32 0.0, %v7392
        %v7394 = vpop.f32.mrf.mxu0
        %7395 = vmatprep.mubr.f32.mxu0 0.0
        %7396 = vmatmul.mubr.f32.gmra.mxu0 %v7224
        %v7397 = vpop.f32.mrf.mxu0
        %v7398 = vadd.f32 0.0, %v7397
        %v7399 = vpop.f32.mrf.mxu0
        %7400 = vmatprep.mubr.f32.mxu0 0.0
        %7401 = vmatmul.mubr.f32.gmra.mxu0 %v7227
        %v7402 = vpop.f32.mrf.mxu0
        %v7403 = vadd.f32 0.0, %v7402
        %v7404 = vpop.f32.mrf.mxu0
        %7405 = vmatprep.mubr.f32.mxu0 0.0
        %7406 = vmatmul.mubr.f32.gmra.mxu0 %v7230
        %v7407 = vpop.f32.mrf.mxu0
        %v7408 = vadd.f32 0.0, %v7407
        %v7409 = vpop.f32.mrf.mxu0
        %7410 = vmatprep.mubr.f32.mxu0 0.0
        %7411 = vmatmul.mubr.f32.gmra.mxu0 %v7233
        %v7412 = vpop.f32.mrf.mxu0
        %v7413 = vadd.f32 0.0, %v7412
        %v7414 = vpop.f32.mrf.mxu0
        %7415 = vmatprep.mubr.f32.mxu0 0.0
        %7416 = vmatmul.mubr.f32.gmra.mxu0 %v7236
        %v7417 = vpop.f32.mrf.mxu0
        %v7418 = vadd.f32 0.0, %v7417
        %v7419 = vpop.f32.mrf.mxu0
        %7420 = vmatprep.mubr.f32.mxu0 0.0
        %7421 = vmatmul.mubr.f32.gmra.mxu0 %v7239
        %v7422 = vpop.f32.mrf.mxu0
        %v7423 = vadd.f32 0.0, %v7422
        %v7424 = vpop.f32.mrf.mxu0
        %7425 = vmatprep.mubr.f32.mxu0 0.0
        %7426 = vmatmul.mubr.f32.gmra.mxu0 %v7242
        %v7427 = vpop.f32.mrf.mxu0
        %v7428 = vadd.f32 0.0, %v7427
        %v7429 = vpop.f32.mrf.mxu0
        %7430 = vmatprep.mubr.f32.mxu0 0.0
        %7431 = vmatmul.mubr.f32.gmra.mxu0 %v7245
        %v7432 = vpop.f32.mrf.mxu0
        %v7433 = vadd.f32 0.0, %v7432
        %v7434 = vpop.f32.mrf.mxu0
        %7435 = vmatprep.mubr.f32.mxu0 0.0
        %7436 = vmatmul.mubr.f32.gmra.mxu0 %v7248
        %v7437 = vpop.f32.mrf.mxu0
        %v7438 = vadd.f32 0.0, %v7437
        %v7439 = vpop.f32.mrf.mxu0
        %7440 = vmatprep.mubr.f32.mxu0 0.0
        %7441 = vmatmul.mubr.f32.gmra.mxu0 %v7251
        %v7442 = vpop.f32.mrf.mxu0
        %v7443 = vadd.f32 0.0, %v7442
        %v7444 = vpop.f32.mrf.mxu0
        %7445 = vdwg.mxu0
        %7446 = vmax.xlane.f32.xlu0 %v7368
        %v7447 = vpop.xlane.xlu0 %7446
        %7448 = vmax.xlane.f32.xlu0 %v7373
        %v7449 = vpop.xlane.xlu0 %7448
        %7450 = vmax.xlane.f32.xlu0 %v7378
        %v7451 = vpop.xlane.xlu0 %7450
        %7452 = vmax.xlane.f32.xlu0 %v7383
        %v7453 = vpop.xlane.xlu0 %7452
        %7454 = vmax.xlane.f32.xlu0 %v7388
        %v7455 = vpop.xlane.xlu0 %7454
        %7456 = vmax.xlane.f32.xlu0 %v7393
        %v7457 = vpop.xlane.xlu0 %7456
        %7458 = vmax.xlane.f32.xlu0 %v7398
        %v7459 = vpop.xlane.xlu0 %7458
        %7460 = vmax.xlane.f32.xlu0 %v7403
        %v7461 = vpop.xlane.xlu0 %7460
        %7462 = vmax.xlane.f32.xlu0 %v7408
        %v7463 = vpop.xlane.xlu0 %7462
        %7464 = vmax.xlane.f32.xlu0 %v7413
        %v7465 = vpop.xlane.xlu0 %7464
        %7466 = vmax.xlane.f32.xlu0 %v7418
        %v7467 = vpop.xlane.xlu0 %7466
        %7468 = vmax.xlane.f32.xlu0 %v7423
        %v7469 = vpop.xlane.xlu0 %7468
        %7470 = vmax.xlane.f32.xlu0 %v7428
        %v7471 = vpop.xlane.xlu0 %7470
        %7472 = vmax.xlane.f32.xlu0 %v7433
        %v7473 = vpop.xlane.xlu0 %7472
        %7474 = vmax.xlane.f32.xlu0 %v7438
        %v7475 = vpop.xlane.xlu0 %7474
        %7476 = vmax.xlane.f32.xlu0 %v7443
        %v7477 = vpop.xlane.xlu0 %7476
        %v7478 = vsub.f32 %v7368, %v7447
        %v7479 = vsub.f32 %v7373, %v7449
        %v7480 = vsub.f32 %v7378, %v7451
        %v7481 = vsub.f32 %v7383, %v7453
        %v7482 = vsub.f32 %v7388, %v7455
        %v7483 = vsub.f32 %v7393, %v7457
        %v7484 = vsub.f32 %v7398, %v7459
        %v7485 = vsub.f32 %v7403, %v7461
        %v7486 = vsub.f32 %v7408, %v7463
        %v7487 = vsub.f32 %v7413, %v7465
        %v7488 = vsub.f32 %v7418, %v7467
        %v7489 = vsub.f32 %v7423, %v7469
        %v7490 = vsub.f32 %v7428, %v7471
        %v7491 = vsub.f32 %v7433, %v7473
        %v7492 = vsub.f32 %v7438, %v7475
        %v7493 = vsub.f32 %v7443, %v7477
        %v7494 = vmul.f32 %v7478, 1.442695
        %v7495 = vpow.pop %v7494
        %v7496 = vmul.f32 %v7479, 1.442695
        %v7497 = vpow.pop %v7496
        %v7498 = vmul.f32 %v7480, 1.442695
        %v7499 = vpow.pop %v7498
        %v7500 = vmul.f32 %v7481, 1.442695
        %v7501 = vpow.pop %v7500
        %v7502 = vmul.f32 %v7482, 1.442695
        %v7503 = vpow.pop %v7502
        %v7504 = vmul.f32 %v7483, 1.442695
        %v7505 = vpow.pop %v7504
        %v7506 = vmul.f32 %v7484, 1.442695
        %v7507 = vpow.pop %v7506
        %v7508 = vmul.f32 %v7485, 1.442695
        %v7509 = vpow.pop %v7508
        %v7510 = vmul.f32 %v7486, 1.442695
        %v7511 = vpow.pop %v7510
        %v7512 = vmul.f32 %v7487, 1.442695
        %v7513 = vpow.pop %v7512
        %v7514 = vmul.f32 %v7488, 1.442695
        %v7515 = vpow.pop %v7514
        %v7516 = vmul.f32 %v7489, 1.442695
        %v7517 = vpow.pop %v7516
        %v7518 = vmul.f32 %v7490, 1.442695
        %v7519 = vpow.pop %v7518
        %v7520 = vmul.f32 %v7491, 1.442695
        %v7521 = vpow.pop %v7520
        %v7522 = vmul.f32 %v7492, 1.442695
        %v7523 = vpow.pop %v7522
        %v7524 = vmul.f32 %v7493, 1.442695
        %v7525 = vpow.pop %v7524
        %7526 = vadd.xlane.f32.xlu0 %v7495
        %v7527 = vpop.xlane.xlu0 %7526
        %7528 = vadd.xlane.f32.xlu0 %v7497
        %v7529 = vpop.xlane.xlu0 %7528
        %7530 = vadd.xlane.f32.xlu0 %v7499
        %v7531 = vpop.xlane.xlu0 %7530
        %7532 = vadd.xlane.f32.xlu0 %v7501
        %v7533 = vpop.xlane.xlu0 %7532
        %7534 = vadd.xlane.f32.xlu0 %v7503
        %v7535 = vpop.xlane.xlu0 %7534
        %7536 = vadd.xlane.f32.xlu0 %v7505
        %v7537 = vpop.xlane.xlu0 %7536
        %7538 = vadd.xlane.f32.xlu0 %v7507
        %v7539 = vpop.xlane.xlu0 %7538
        %7540 = vadd.xlane.f32.xlu0 %v7509
        %v7541 = vpop.xlane.xlu0 %7540
        %7542 = vadd.xlane.f32.xlu0 %v7511
        %v7543 = vpop.xlane.xlu0 %7542
        %7544 = vadd.xlane.f32.xlu0 %v7513
        %v7545 = vpop.xlane.xlu0 %7544
        %7546 = vadd.xlane.f32.xlu0 %v7515
        %v7547 = vpop.xlane.xlu0 %7546
        %7548 = vadd.xlane.f32.xlu0 %v7517
        %v7549 = vpop.xlane.xlu0 %7548
        %7550 = vadd.xlane.f32.xlu0 %v7519
        %v7551 = vpop.xlane.xlu0 %7550
        %7552 = vadd.xlane.f32.xlu0 %v7521
        %v7553 = vpop.xlane.xlu0 %7552
        %7554 = vadd.xlane.f32.xlu0 %v7523
        %v7555 = vpop.xlane.xlu0 %7554
        %7556 = vadd.xlane.f32.xlu0 %v7525
        %v7557 = vpop.xlane.xlu0 %7556
        %v7558 = vrcp.pop %v7527
        %v7559 = vrcp.pop %v7529
        %v7560 = vrcp.pop %v7531
        %v7561 = vrcp.pop %v7533
        %v7562 = vrcp.pop %v7535
        %v7563 = vrcp.pop %v7537
        %v7564 = vrcp.pop %v7539
        %v7565 = vrcp.pop %v7541
        %v7566 = vrcp.pop %v7543
        %v7567 = vrcp.pop %v7545
        %v7568 = vrcp.pop %v7547
        %v7569 = vrcp.pop %v7549
        %v7570 = vrcp.pop %v7551
        %v7571 = vrcp.pop %v7553
        %v7572 = vrcp.pop %v7555
        %v7573 = vrcp.pop %v7557
        %v7574 = vmul.f32 %v7495, %v7558
        %v7575 = vmul.f32 %v7497, %v7559
        %v7576 = vmul.f32 %v7499, %v7560
        %v7577 = vmul.f32 %v7501, %v7561
        %v7578 = vmul.f32 %v7503, %v7562
        %v7579 = vmul.f32 %v7505, %v7563
        %v7580 = vmul.f32 %v7507, %v7564
        %v7581 = vmul.f32 %v7509, %v7565
        %v7582 = vmul.f32 %v7511, %v7566
        %v7583 = vmul.f32 %v7513, %v7567
        %v7584 = vmul.f32 %v7515, %v7568
        %v7585 = vmul.f32 %v7517, %v7569
        %v7586 = vmul.f32 %v7519, %v7570
        %v7587 = vmul.f32 %v7521, %v7571
        %v7588 = vmul.f32 %v7523, %v7572
        %v7589 = vmul.f32 %v7525, %v7573
        %7590 = vmatprep.subr.mxu0 0.0
        %7591 = vmatpush1.msra.mxu0 %v2401
        %7592 = vmatprep.subr.mxu0 0.0
        %7593 = vmatpush1.msra.mxu0 %v2396
        %7594 = vmatprep.subr.mxu0 0.0
        %7595 = vmatpush1.msra.mxu0 %v2391
        %7596 = vmatprep.subr.mxu0 0.0
        %7597 = vmatpush1.msra.mxu0 %v2386
        %7598 = vmatprep.subr.mxu0 0.0
        %7599 = vmatpush1.msra.mxu0 %v2381
        %7600 = vmatprep.subr.mxu0 0.0
        %7601 = vmatpush1.msra.mxu0 %v2376
        %7602 = vmatprep.subr.mxu0 0.0
        %7603 = vmatpush1.msra.mxu0 %v2371
        %7604 = vmatprep.subr.mxu0 0.0
        %7605 = vmatpush1.msra.mxu0 %v2366
        %7606 = vmatprep.subr.mxu0 0.0
        %7607 = vmatpush1.msra.mxu0 %v2361
        %7608 = vmatprep.subr.mxu0 0.0
        %7609 = vmatpush1.msra.mxu0 %v2356
        %7610 = vmatprep.subr.mxu0 0.0
        %7611 = vmatpush1.msra.mxu0 %v2351
        %7612 = vmatprep.subr.mxu0 0.0
        %7613 = vmatpush1.msra.mxu0 %v2346
        %7614 = vmatprep.subr.mxu0 0.0
        %7615 = vmatpush1.msra.mxu0 %v2341
        %7616 = vmatprep.subr.mxu0 0.0
        %7617 = vmatpush1.msra.mxu0 %v2336
        %7618 = vmatprep.subr.mxu0 0.0
        %7619 = vmatpush1.msra.mxu0 %v2331
        %7620 = vmatprep.subr.mxu0 0.0
        %7621 = vmatpush1.msra.mxu0 %v2326
        %7622 = vmatprep.subr.mxu0 0.0
        %7623 = vmatpush2.msra.mxu0 0.0
        %7624 = vmatprep.subr.mxu0 0.0
        %7625 = vmatpush2.msra.mxu0 0.0
        %7626 = vmatprep.subr.mxu0 0.0
        %7627 = vmatpush2.msra.mxu0 0.0
        %7628 = vmatprep.subr.mxu0 0.0
        %7629 = vmatpush2.msra.mxu0 0.0
        %7630 = vmatprep.subr.mxu0 0.0
        %7631 = vmatpush2.msra.mxu0 0.0
        %7632 = vmatprep.subr.mxu0 0.0
        %7633 = vmatpush2.msra.mxu0 0.0
        %7634 = vmatprep.subr.mxu0 0.0
        %7635 = vmatpush2.msra.mxu0 0.0
        %7636 = vmatprep.subr.mxu0 0.0
        %7637 = vmatpush2.msra.mxu0 0.0
        %7638 = vmatprep.subr.mxu0 0.0
        %7639 = vmatpush2.msra.mxu0 0.0
        %7640 = vmatprep.subr.mxu0 0.0
        %7641 = vmatpush2.msra.mxu0 0.0
        %7642 = vmatprep.subr.mxu0 0.0
        %7643 = vmatpush2.msra.mxu0 0.0
        %7644 = vmatprep.subr.mxu0 0.0
        %7645 = vmatpush2.msra.mxu0 0.0
        %7646 = vmatprep.subr.mxu0 0.0
        %7647 = vmatpush2.msra.mxu0 0.0
        %7648 = vmatprep.subr.mxu0 0.0
        %7649 = vmatpush2.msra.mxu0 0.0
        %7650 = vmatprep.subr.mxu0 0.0
        %7651 = vmatpush2.msra.mxu0 0.0
        %7652 = vmatprep.subr.mxu0 0.0
        %7653 = vmatpush2.msra.mxu0 0.0
        %7654 = vmatprep.mubr.f32.mxu0 0.0
        %7655 = vmatmul.mubr.f32.gmra.mxu0 %v7574
        %v7656 = vpop.f32.mrf.mxu0
        %v7657 = vadd.f32 0.0, %v7656
        %v7658 = vpop.f32.mrf.mxu0
        %7659 = vmatprep.mubr.f32.mxu0 0.0
        %7660 = vmatmul.mubr.f32.gmra.mxu0 %v7575
        %v7661 = vpop.f32.mrf.mxu0
        %v7662 = vadd.f32 0.0, %v7661
        %v7663 = vpop.f32.mrf.mxu0
        %7664 = vmatprep.mubr.f32.mxu0 0.0
        %7665 = vmatmul.mubr.f32.gmra.mxu0 %v7576
        %v7666 = vpop.f32.mrf.mxu0
        %v7667 = vadd.f32 0.0, %v7666
        %v7668 = vpop.f32.mrf.mxu0
        %7669 = vmatprep.mubr.f32.mxu0 0.0
        %7670 = vmatmul.mubr.f32.gmra.mxu0 %v7577
        %v7671 = vpop.f32.mrf.mxu0
        %v7672 = vadd.f32 0.0, %v7671
        %v7673 = vpop.f32.mrf.mxu0
        %7674 = vmatprep.mubr.f32.mxu0 0.0
        %7675 = vmatmul.mubr.f32.gmra.mxu0 %v7578
        %v7676 = vpop.f32.mrf.mxu0
        %v7677 = vadd.f32 0.0, %v7676
        %v7678 = vpop.f32.mrf.mxu0
        %7679 = vmatprep.mubr.f32.mxu0 0.0
        %7680 = vmatmul.mubr.f32.gmra.mxu0 %v7579
        %v7681 = vpop.f32.mrf.mxu0
        %v7682 = vadd.f32 0.0, %v7681
        %v7683 = vpop.f32.mrf.mxu0
        %7684 = vmatprep.mubr.f32.mxu0 0.0
        %7685 = vmatmul.mubr.f32.gmra.mxu0 %v7580
        %v7686 = vpop.f32.mrf.mxu0
        %v7687 = vadd.f32 0.0, %v7686
        %v7688 = vpop.f32.mrf.mxu0
        %7689 = vmatprep.mubr.f32.mxu0 0.0
        %7690 = vmatmul.mubr.f32.gmra.mxu0 %v7581
        %v7691 = vpop.f32.mrf.mxu0
        %v7692 = vadd.f32 0.0, %v7691
        %v7693 = vpop.f32.mrf.mxu0
        %7694 = vmatprep.mubr.f32.mxu0 0.0
        %7695 = vmatmul.mubr.f32.gmra.mxu0 %v7582
        %v7696 = vpop.f32.mrf.mxu0
        %v7697 = vadd.f32 0.0, %v7696
        %v7698 = vpop.f32.mrf.mxu0
        %7699 = vmatprep.mubr.f32.mxu0 0.0
        %7700 = vmatmul.mubr.f32.gmra.mxu0 %v7583
        %v7701 = vpop.f32.mrf.mxu0
        %v7702 = vadd.f32 0.0, %v7701
        %v7703 = vpop.f32.mrf.mxu0
        %7704 = vmatprep.mubr.f32.mxu0 0.0
        %7705 = vmatmul.mubr.f32.gmra.mxu0 %v7584
        %v7706 = vpop.f32.mrf.mxu0
        %v7707 = vadd.f32 0.0, %v7706
        %v7708 = vpop.f32.mrf.mxu0
        %7709 = vmatprep.mubr.f32.mxu0 0.0
        %7710 = vmatmul.mubr.f32.gmra.mxu0 %v7585
        %v7711 = vpop.f32.mrf.mxu0
        %v7712 = vadd.f32 0.0, %v7711
        %v7713 = vpop.f32.mrf.mxu0
        %7714 = vmatprep.mubr.f32.mxu0 0.0
        %7715 = vmatmul.mubr.f32.gmra.mxu0 %v7586
        %v7716 = vpop.f32.mrf.mxu0
        %v7717 = vadd.f32 0.0, %v7716
        %v7718 = vpop.f32.mrf.mxu0
        %7719 = vmatprep.mubr.f32.mxu0 0.0
        %7720 = vmatmul.mubr.f32.gmra.mxu0 %v7587
        %v7721 = vpop.f32.mrf.mxu0
        %v7722 = vadd.f32 0.0, %v7721
        %v7723 = vpop.f32.mrf.mxu0
        %7724 = vmatprep.mubr.f32.mxu0 0.0
        %7725 = vmatmul.mubr.f32.gmra.mxu0 %v7588
        %v7726 = vpop.f32.mrf.mxu0
        %v7727 = vadd.f32 0.0, %v7726
        %v7728 = vpop.f32.mrf.mxu0
        %7729 = vmatprep.mubr.f32.mxu0 0.0
        %7730 = vmatmul.mubr.f32.gmra.mxu0 %v7589
        %v7731 = vpop.f32.mrf.mxu0
        %v7732 = vadd.f32 0.0, %v7731
        %v7733 = vpop.f32.mrf.mxu0
        %7734 = vdwg.mxu0
        %7735 = vrot.lane.b32.xlu0 %v2406, 96
        %v7736 = vpop.permute.xlu0 %7735
        %7737 = vrot.lane.b32.xlu0 %v2409, 96
        %v7738 = vpop.permute.xlu0 %7737
        %7739 = vrot.lane.b32.xlu0 %v2412, 96
        %v7740 = vpop.permute.xlu0 %7739
        %7741 = vrot.lane.b32.xlu0 %v2415, 96
        %v7742 = vpop.permute.xlu0 %7741
        %7743 = vrot.lane.b32.xlu0 %v2418, 96
        %v7744 = vpop.permute.xlu0 %7743
        %7745 = vrot.lane.b32.xlu0 %v2421, 96
        %v7746 = vpop.permute.xlu0 %7745
        %7747 = vrot.lane.b32.xlu0 %v2424, 96
        %v7748 = vpop.permute.xlu0 %7747
        %7749 = vrot.lane.b32.xlu0 %v2427, 96
        %v7750 = vpop.permute.xlu0 %7749
        %7751 = vrot.lane.b32.xlu0 %v2430, 96
        %v7752 = vpop.permute.xlu0 %7751
        %7753 = vrot.lane.b32.xlu0 %v2433, 96
        %v7754 = vpop.permute.xlu0 %7753
        %7755 = vrot.lane.b32.xlu0 %v2436, 96
        %v7756 = vpop.permute.xlu0 %7755
        %7757 = vrot.lane.b32.xlu0 %v2439, 96
        %v7758 = vpop.permute.xlu0 %7757
        %7759 = vrot.lane.b32.xlu0 %v2442, 96
        %v7760 = vpop.permute.xlu0 %7759
        %7761 = vrot.lane.b32.xlu0 %v2445, 96
        %v7762 = vpop.permute.xlu0 %7761
        %7763 = vrot.lane.b32.xlu0 %v2448, 96
        %v7764 = vpop.permute.xlu0 %7763
        %7765 = vrot.lane.b32.xlu0 %v2451, 96
        %v7766 = vpop.permute.xlu0 %7765
        %7767 = vrot.lane.b32.xlu0 %v1700, 96
        %v7768 = vpop.permute.xlu0 %7767
        %7769 = vrot.lane.b32.xlu0 %v1706, 96
        %v7770 = vpop.permute.xlu0 %7769
        %7771 = vrot.lane.b32.xlu0 %v1712, 96
        %v7772 = vpop.permute.xlu0 %7771
        %7773 = vrot.lane.b32.xlu0 %v1718, 96
        %v7774 = vpop.permute.xlu0 %7773
        %7775 = vrot.lane.b32.xlu0 %v1724, 96
        %v7776 = vpop.permute.xlu0 %7775
        %7777 = vrot.lane.b32.xlu0 %v1730, 96
        %v7778 = vpop.permute.xlu0 %7777
        %7779 = vrot.lane.b32.xlu0 %v1736, 96
        %v7780 = vpop.permute.xlu0 %7779
        %7781 = vrot.lane.b32.xlu0 %v1742, 96
        %v7782 = vpop.permute.xlu0 %7781
        %7783 = vrot.lane.b32.xlu0 %v1748, 96
        %v7784 = vpop.permute.xlu0 %7783
        %7785 = vrot.lane.b32.xlu0 %v1754, 96
        %v7786 = vpop.permute.xlu0 %7785
        %7787 = vrot.lane.b32.xlu0 %v1760, 96
        %v7788 = vpop.permute.xlu0 %7787
        %7789 = vrot.lane.b32.xlu0 %v1766, 96
        %v7790 = vpop.permute.xlu0 %7789
        %7791 = vrot.lane.b32.xlu0 %v1772, 96
        %v7792 = vpop.permute.xlu0 %7791
        %7793 = vrot.lane.b32.xlu0 %v1778, 96
        %v7794 = vpop.permute.xlu0 %7793
        %7795 = vrot.lane.b32.xlu0 %v1784, 96
        %v7796 = vpop.permute.xlu0 %7795
        %7797 = vrot.lane.b32.xlu0 %v1790, 96
        %v7798 = vpop.permute.xlu0 %7797
        %v7799 = vsel %vm2452, %v7736, 0
        %v7801 = vsel %vm2452, %v7738, 0
        %v7803 = vsel %vm2452, %v7740, 0
        %v7805 = vsel %vm2452, %v7742, 0
        %v7807 = vsel %vm2452, %v7744, 0
        %v7809 = vsel %vm2452, %v7746, 0
        %v7811 = vsel %vm2452, %v7748, 0
        %v7813 = vsel %vm2452, %v7750, 0
        %v7815 = vsel %vm2452, %v7752, 0
        %v7817 = vsel %vm2452, %v7754, 0
        %v7819 = vsel %vm2452, %v7756, 0
        %v7821 = vsel %vm2452, %v7758, 0
        %v7823 = vsel %vm2452, %v7760, 0
        %v7825 = vsel %vm2452, %v7762, 0
        %v7827 = vsel %vm2452, %v7764, 0
        %v7829 = vsel %vm2452, %v7766, 0
        %v7831 = vsel %vm2452, %v7768, 0
        %v7833 = vsel %vm2452, %v7770, 0
        %v7835 = vsel %vm2452, %v7772, 0
        %v7837 = vsel %vm2452, %v7774, 0
        %v7839 = vsel %vm2452, %v7776, 0
        %v7841 = vsel %vm2452, %v7778, 0
        %v7843 = vsel %vm2452, %v7780, 0
        %v7845 = vsel %vm2452, %v7782, 0
        %v7847 = vsel %vm2452, %v7784, 0
        %v7849 = vsel %vm2452, %v7786, 0
        %v7851 = vsel %vm2452, %v7788, 0
        %v7853 = vsel %vm2452, %v7790, 0
        %v7855 = vsel %vm2452, %v7792, 0
        %v7857 = vsel %vm2452, %v7794, 0
        %v7859 = vsel %vm2452, %v7796, 0
        %v7861 = vsel %vm2452, %v7798, 0
        %7863 = vmatprep.subr.mxu0 0.0
        %7864 = vmatpush1.xpose.msra.mxu0 %v7861
        %7865 = vmatprep.subr.mxu0 0.0
        %7866 = vmatpush1.xpose.msra.mxu0 %v7859
        %7867 = vmatprep.subr.mxu0 0.0
        %7868 = vmatpush1.xpose.msra.mxu0 %v7857
        %7869 = vmatprep.subr.mxu0 0.0
        %7870 = vmatpush1.xpose.msra.mxu0 %v7855
        %7871 = vmatprep.subr.mxu0 0.0
        %7872 = vmatpush1.xpose.msra.mxu0 %v7853
        %7873 = vmatprep.subr.mxu0 0.0
        %7874 = vmatpush1.xpose.msra.mxu0 %v7851
        %7875 = vmatprep.subr.mxu0 0.0
        %7876 = vmatpush1.xpose.msra.mxu0 %v7849
        %7877 = vmatprep.subr.mxu0 0.0
        %7878 = vmatpush1.xpose.msra.mxu0 %v7847
        %7879 = vmatprep.subr.mxu0 0.0
        %7880 = vmatpush1.xpose.msra.mxu0 %v7845
        %7881 = vmatprep.subr.mxu0 0.0
        %7882 = vmatpush1.xpose.msra.mxu0 %v7843
        %7883 = vmatprep.subr.mxu0 0.0
        %7884 = vmatpush1.xpose.msra.mxu0 %v7841
        %7885 = vmatprep.subr.mxu0 0.0
        %7886 = vmatpush1.xpose.msra.mxu0 %v7839
        %7887 = vmatprep.subr.mxu0 0.0
        %7888 = vmatpush1.xpose.msra.mxu0 %v7837
        %7889 = vmatprep.subr.mxu0 0.0
        %7890 = vmatpush1.xpose.msra.mxu0 %v7835
        %7891 = vmatprep.subr.mxu0 0.0
        %7892 = vmatpush1.xpose.msra.mxu0 %v7833
        %7893 = vmatprep.subr.mxu0 0.0
        %7894 = vmatpush1.xpose.msra.mxu0 %v7831
        %7895 = vmatprep.subr.mxu0 0.0
        %7896 = vmatpush2.xpose.msra.mxu0 0.0
        %7897 = vmatprep.subr.mxu0 0.0
        %7898 = vmatpush2.xpose.msra.mxu0 0.0
        %7899 = vmatprep.subr.mxu0 0.0
        %7900 = vmatpush2.xpose.msra.mxu0 0.0
        %7901 = vmatprep.subr.mxu0 0.0
        %7902 = vmatpush2.xpose.msra.mxu0 0.0
        %7903 = vmatprep.subr.mxu0 0.0
        %7904 = vmatpush2.xpose.msra.mxu0 0.0
        %7905 = vmatprep.subr.mxu0 0.0
        %7906 = vmatpush2.xpose.msra.mxu0 0.0
        %7907 = vmatprep.subr.mxu0 0.0
        %7908 = vmatpush2.xpose.msra.mxu0 0.0
        %7909 = vmatprep.subr.mxu0 0.0
        %7910 = vmatpush2.xpose.msra.mxu0 0.0
        %7911 = vmatprep.subr.mxu0 0.0
        %7912 = vmatpush2.xpose.msra.mxu0 0.0
        %7913 = vmatprep.subr.mxu0 0.0
        %7914 = vmatpush2.xpose.msra.mxu0 0.0
        %7915 = vmatprep.subr.mxu0 0.0
        %7916 = vmatpush2.xpose.msra.mxu0 0.0
        %7917 = vmatprep.subr.mxu0 0.0
        %7918 = vmatpush2.xpose.msra.mxu0 0.0
        %7919 = vmatprep.subr.mxu0 0.0
        %7920 = vmatpush2.xpose.msra.mxu0 0.0
        %7921 = vmatprep.subr.mxu0 0.0
        %7922 = vmatpush2.xpose.msra.mxu0 0.0
        %7923 = vmatprep.subr.mxu0 0.0
        %7924 = vmatpush2.xpose.msra.mxu0 0.0
        %7925 = vmatprep.subr.mxu0 0.0
        %7926 = vmatpush2.xpose.msra.mxu0 0.0
        %7927 = vmatprep.mubr.f32.mxu0 0.0
        %7928 = vmatmul.mubr.f32.gmra.mxu0 %v7799
        %v7929 = vpop.f32.mrf.mxu0
        %v7930 = vadd.f32 0.0, %v7929
        %v7931 = vpop.f32.mrf.mxu0
        %7932 = vmatprep.mubr.f32.mxu0 0.0
        %7933 = vmatmul.mubr.f32.gmra.mxu0 %v7801
        %v7934 = vpop.f32.mrf.mxu0
        %v7935 = vadd.f32 0.0, %v7934
        %v7936 = vpop.f32.mrf.mxu0
        %7937 = vmatprep.mubr.f32.mxu0 0.0
        %7938 = vmatmul.mubr.f32.gmra.mxu0 %v7803
        %v7939 = vpop.f32.mrf.mxu0
        %v7940 = vadd.f32 0.0, %v7939
        %v7941 = vpop.f32.mrf.mxu0
        %7942 = vmatprep.mubr.f32.mxu0 0.0
        %7943 = vmatmul.mubr.f32.gmra.mxu0 %v7805
        %v7944 = vpop.f32.mrf.mxu0
        %v7945 = vadd.f32 0.0, %v7944
        %v7946 = vpop.f32.mrf.mxu0
        %7947 = vmatprep.mubr.f32.mxu0 0.0
        %7948 = vmatmul.mubr.f32.gmra.mxu0 %v7807
        %v7949 = vpop.f32.mrf.mxu0
        %v7950 = vadd.f32 0.0, %v7949
        %v7951 = vpop.f32.mrf.mxu0
        %7952 = vmatprep.mubr.f32.mxu0 0.0
        %7953 = vmatmul.mubr.f32.gmra.mxu0 %v7809
        %v7954 = vpop.f32.mrf.mxu0
        %v7955 = vadd.f32 0.0, %v7954
        %v7956 = vpop.f32.mrf.mxu0
        %7957 = vmatprep.mubr.f32.mxu0 0.0
        %7958 = vmatmul.mubr.f32.gmra.mxu0 %v7811
        %v7959 = vpop.f32.mrf.mxu0
        %v7960 = vadd.f32 0.0, %v7959
        %v7961 = vpop.f32.mrf.mxu0
        %7962 = vmatprep.mubr.f32.mxu0 0.0
        %7963 = vmatmul.mubr.f32.gmra.mxu0 %v7813
        %v7964 = vpop.f32.mrf.mxu0
        %v7965 = vadd.f32 0.0, %v7964
        %v7966 = vpop.f32.mrf.mxu0
        %7967 = vmatprep.mubr.f32.mxu0 0.0
        %7968 = vmatmul.mubr.f32.gmra.mxu0 %v7815
        %v7969 = vpop.f32.mrf.mxu0
        %v7970 = vadd.f32 0.0, %v7969
        %v7971 = vpop.f32.mrf.mxu0
        %7972 = vmatprep.mubr.f32.mxu0 0.0
        %7973 = vmatmul.mubr.f32.gmra.mxu0 %v7817
        %v7974 = vpop.f32.mrf.mxu0
        %v7975 = vadd.f32 0.0, %v7974
        %v7976 = vpop.f32.mrf.mxu0
        %7977 = vmatprep.mubr.f32.mxu0 0.0
        %7978 = vmatmul.mubr.f32.gmra.mxu0 %v7819
        %v7979 = vpop.f32.mrf.mxu0
        %v7980 = vadd.f32 0.0, %v7979
        %v7981 = vpop.f32.mrf.mxu0
        %7982 = vmatprep.mubr.f32.mxu0 0.0
        %7983 = vmatmul.mubr.f32.gmra.mxu0 %v7821
        %v7984 = vpop.f32.mrf.mxu0
        %v7985 = vadd.f32 0.0, %v7984
        %v7986 = vpop.f32.mrf.mxu0
        %7987 = vmatprep.mubr.f32.mxu0 0.0
        %7988 = vmatmul.mubr.f32.gmra.mxu0 %v7823
        %v7989 = vpop.f32.mrf.mxu0
        %v7990 = vadd.f32 0.0, %v7989
        %v7991 = vpop.f32.mrf.mxu0
        %7992 = vmatprep.mubr.f32.mxu0 0.0
        %7993 = vmatmul.mubr.f32.gmra.mxu0 %v7825
        %v7994 = vpop.f32.mrf.mxu0
        %v7995 = vadd.f32 0.0, %v7994
        %v7996 = vpop.f32.mrf.mxu0
        %7997 = vmatprep.mubr.f32.mxu0 0.0
        %7998 = vmatmul.mubr.f32.gmra.mxu0 %v7827
        %v7999 = vpop.f32.mrf.mxu0
        %v8000 = vadd.f32 0.0, %v7999
        %v8001 = vpop.f32.mrf.mxu0
        %8002 = vmatprep.mubr.f32.mxu0 0.0
        %8003 = vmatmul.mubr.f32.gmra.mxu0 %v7829
        %v8004 = vpop.f32.mrf.mxu0
        %v8005 = vadd.f32 0.0, %v8004
        %v8006 = vpop.f32.mrf.mxu0
        %8007 = vdwg.mxu0
        %8008 = vmax.xlane.f32.xlu0 %v7930
        %v8009 = vpop.xlane.xlu0 %8008
        %8010 = vmax.xlane.f32.xlu0 %v7935
        %v8011 = vpop.xlane.xlu0 %8010
        %8012 = vmax.xlane.f32.xlu0 %v7940
        %v8013 = vpop.xlane.xlu0 %8012
        %8014 = vmax.xlane.f32.xlu0 %v7945
        %v8015 = vpop.xlane.xlu0 %8014
        %8016 = vmax.xlane.f32.xlu0 %v7950
        %v8017 = vpop.xlane.xlu0 %8016
        %8018 = vmax.xlane.f32.xlu0 %v7955
        %v8019 = vpop.xlane.xlu0 %8018
        %8020 = vmax.xlane.f32.xlu0 %v7960
        %v8021 = vpop.xlane.xlu0 %8020
        %8022 = vmax.xlane.f32.xlu0 %v7965
        %v8023 = vpop.xlane.xlu0 %8022
        %8024 = vmax.xlane.f32.xlu0 %v7970
        %v8025 = vpop.xlane.xlu0 %8024
        %8026 = vmax.xlane.f32.xlu0 %v7975
        %v8027 = vpop.xlane.xlu0 %8026
        %8028 = vmax.xlane.f32.xlu0 %v7980
        %v8029 = vpop.xlane.xlu0 %8028
        %8030 = vmax.xlane.f32.xlu0 %v7985
        %v8031 = vpop.xlane.xlu0 %8030
        %8032 = vmax.xlane.f32.xlu0 %v7990
        %v8033 = vpop.xlane.xlu0 %8032
        %8034 = vmax.xlane.f32.xlu0 %v7995
        %v8035 = vpop.xlane.xlu0 %8034
        %8036 = vmax.xlane.f32.xlu0 %v8000
        %v8037 = vpop.xlane.xlu0 %8036
        %8038 = vmax.xlane.f32.xlu0 %v8005
        %v8039 = vpop.xlane.xlu0 %8038
        %v8040 = vsub.f32 %v7930, %v8009
        %v8041 = vsub.f32 %v7935, %v8011
        %v8042 = vsub.f32 %v7940, %v8013
        %v8043 = vsub.f32 %v7945, %v8015
        %v8044 = vsub.f32 %v7950, %v8017
        %v8045 = vsub.f32 %v7955, %v8019
        %v8046 = vsub.f32 %v7960, %v8021
        %v8047 = vsub.f32 %v7965, %v8023
        %v8048 = vsub.f32 %v7970, %v8025
        %v8049 = vsub.f32 %v7975, %v8027
        %v8050 = vsub.f32 %v7980, %v8029
        %v8051 = vsub.f32 %v7985, %v8031
        %v8052 = vsub.f32 %v7990, %v8033
        %v8053 = vsub.f32 %v7995, %v8035
        %v8054 = vsub.f32 %v8000, %v8037
        %v8055 = vsub.f32 %v8005, %v8039
        %v8056 = vmul.f32 %v8040, 1.442695
        %v8057 = vpow.pop %v8056
        %v8058 = vmul.f32 %v8041, 1.442695
        %v8059 = vpow.pop %v8058
        %v8060 = vmul.f32 %v8042, 1.442695
        %v8061 = vpow.pop %v8060
        %v8062 = vmul.f32 %v8043, 1.442695
        %v8063 = vpow.pop %v8062
        %v8064 = vmul.f32 %v8044, 1.442695
        %v8065 = vpow.pop %v8064
        %v8066 = vmul.f32 %v8045, 1.442695
        %v8067 = vpow.pop %v8066
        %v8068 = vmul.f32 %v8046, 1.442695
        %v8069 = vpow.pop %v8068
        %v8070 = vmul.f32 %v8047, 1.442695
        %v8071 = vpow.pop %v8070
        %v8072 = vmul.f32 %v8048, 1.442695
        %v8073 = vpow.pop %v8072
        %v8074 = vmul.f32 %v8049, 1.442695
        %v8075 = vpow.pop %v8074
        %v8076 = vmul.f32 %v8050, 1.442695
        %v8077 = vpow.pop %v8076
        %v8078 = vmul.f32 %v8051, 1.442695
        %v8079 = vpow.pop %v8078
        %v8080 = vmul.f32 %v8052, 1.442695
        %v8081 = vpow.pop %v8080
        %v8082 = vmul.f32 %v8053, 1.442695
        %v8083 = vpow.pop %v8082
        %v8084 = vmul.f32 %v8054, 1.442695
        %v8085 = vpow.pop %v8084
        %v8086 = vmul.f32 %v8055, 1.442695
        %v8087 = vpow.pop %v8086
        %8088 = vadd.xlane.f32.xlu0 %v8057
        %v8089 = vpop.xlane.xlu0 %8088
        %8090 = vadd.xlane.f32.xlu0 %v8059
        %v8091 = vpop.xlane.xlu0 %8090
        %8092 = vadd.xlane.f32.xlu0 %v8061
        %v8093 = vpop.xlane.xlu0 %8092
        %8094 = vadd.xlane.f32.xlu0 %v8063
        %v8095 = vpop.xlane.xlu0 %8094
        %8096 = vadd.xlane.f32.xlu0 %v8065
        %v8097 = vpop.xlane.xlu0 %8096
        %8098 = vadd.xlane.f32.xlu0 %v8067
        %v8099 = vpop.xlane.xlu0 %8098
        %8100 = vadd.xlane.f32.xlu0 %v8069
        %v8101 = vpop.xlane.xlu0 %8100
        %8102 = vadd.xlane.f32.xlu0 %v8071
        %v8103 = vpop.xlane.xlu0 %8102
        %8104 = vadd.xlane.f32.xlu0 %v8073
        %v8105 = vpop.xlane.xlu0 %8104
        %8106 = vadd.xlane.f32.xlu0 %v8075
        %v8107 = vpop.xlane.xlu0 %8106
        %8108 = vadd.xlane.f32.xlu0 %v8077
        %v8109 = vpop.xlane.xlu0 %8108
        %8110 = vadd.xlane.f32.xlu0 %v8079
        %v8111 = vpop.xlane.xlu0 %8110
        %8112 = vadd.xlane.f32.xlu0 %v8081
        %v8113 = vpop.xlane.xlu0 %8112
        %8114 = vadd.xlane.f32.xlu0 %v8083
        %v8115 = vpop.xlane.xlu0 %8114
        %8116 = vadd.xlane.f32.xlu0 %v8085
        %v8117 = vpop.xlane.xlu0 %8116
        %8118 = vadd.xlane.f32.xlu0 %v8087
        %v8119 = vpop.xlane.xlu0 %8118
        %v8120 = vrcp.pop %v8089
        %v8121 = vrcp.pop %v8091
        %v8122 = vrcp.pop %v8093
        %v8123 = vrcp.pop %v8095
        %v8124 = vrcp.pop %v8097
        %v8125 = vrcp.pop %v8099
        %v8126 = vrcp.pop %v8101
        %v8127 = vrcp.pop %v8103
        %v8128 = vrcp.pop %v8105
        %v8129 = vrcp.pop %v8107
        %v8130 = vrcp.pop %v8109
        %v8131 = vrcp.pop %v8111
        %v8132 = vrcp.pop %v8113
        %v8133 = vrcp.pop %v8115
        %v8134 = vrcp.pop %v8117
        %v8135 = vrcp.pop %v8119
        %v8136 = vmul.f32 %v8057, %v8120
        %v8137 = vmul.f32 %v8059, %v8121
        %v8138 = vmul.f32 %v8061, %v8122
        %v8139 = vmul.f32 %v8063, %v8123
        %v8140 = vmul.f32 %v8065, %v8124
        %v8141 = vmul.f32 %v8067, %v8125
        %v8142 = vmul.f32 %v8069, %v8126
        %v8143 = vmul.f32 %v8071, %v8127
        %v8144 = vmul.f32 %v8073, %v8128
        %v8145 = vmul.f32 %v8075, %v8129
        %v8146 = vmul.f32 %v8077, %v8130
        %v8147 = vmul.f32 %v8079, %v8131
        %v8148 = vmul.f32 %v8081, %v8132
        %v8149 = vmul.f32 %v8083, %v8133
        %v8150 = vmul.f32 %v8085, %v8134
        %v8151 = vmul.f32 %v8087, %v8135
        %8168 = vrot.lane.b32.xlu0 %v2326, 96
        %v8169 = vpop.permute.xlu0 %8168
        %8170 = vrot.lane.b32.xlu0 %v2331, 96
        %v8171 = vpop.permute.xlu0 %8170
        %8172 = vrot.lane.b32.xlu0 %v2336, 96
        %v8173 = vpop.permute.xlu0 %8172
        %8174 = vrot.lane.b32.xlu0 %v2341, 96
        %v8175 = vpop.permute.xlu0 %8174
        %8176 = vrot.lane.b32.xlu0 %v2346, 96
        %v8177 = vpop.permute.xlu0 %8176
        %8178 = vrot.lane.b32.xlu0 %v2351, 96
        %v8179 = vpop.permute.xlu0 %8178
        %8180 = vrot.lane.b32.xlu0 %v2356, 96
        %v8181 = vpop.permute.xlu0 %8180
        %8182 = vrot.lane.b32.xlu0 %v2361, 96
        %v8183 = vpop.permute.xlu0 %8182
        %8184 = vrot.lane.b32.xlu0 %v2366, 96
        %v8185 = vpop.permute.xlu0 %8184
        %8186 = vrot.lane.b32.xlu0 %v2371, 96
        %v8187 = vpop.permute.xlu0 %8186
        %8188 = vrot.lane.b32.xlu0 %v2376, 96
        %v8189 = vpop.permute.xlu0 %8188
        %8190 = vrot.lane.b32.xlu0 %v2381, 96
        %v8191 = vpop.permute.xlu0 %8190
        %8192 = vrot.lane.b32.xlu0 %v2386, 96
        %v8193 = vpop.permute.xlu0 %8192
        %8194 = vrot.lane.b32.xlu0 %v2391, 96
        %v8195 = vpop.permute.xlu0 %8194
        %8196 = vrot.lane.b32.xlu0 %v2396, 96
        %v8197 = vpop.permute.xlu0 %8196
        %8198 = vrot.lane.b32.xlu0 %v2401, 96
        %v8199 = vpop.permute.xlu0 %8198
        %8216 = vmatprep.subr.mxu0 0.0
        %8217 = vmatpush1.msra.mxu0 %v8199
        %8218 = vmatprep.subr.mxu0 0.0
        %8219 = vmatpush1.msra.mxu0 %v8197
        %8220 = vmatprep.subr.mxu0 0.0
        %8221 = vmatpush1.msra.mxu0 %v8195
        %8222 = vmatprep.subr.mxu0 0.0
        %8223 = vmatpush1.msra.mxu0 %v8193
        %8224 = vmatprep.subr.mxu0 0.0
        %8225 = vmatpush1.msra.mxu0 %v8191
        %8226 = vmatprep.subr.mxu0 0.0
        %8227 = vmatpush1.msra.mxu0 %v8189
        %8228 = vmatprep.subr.mxu0 0.0
        %8229 = vmatpush1.msra.mxu0 %v8187
        %8230 = vmatprep.subr.mxu0 0.0
        %8231 = vmatpush1.msra.mxu0 %v8185
        %8232 = vmatprep.subr.mxu0 0.0
        %8233 = vmatpush1.msra.mxu0 %v8183
        %8234 = vmatprep.subr.mxu0 0.0
        %8235 = vmatpush1.msra.mxu0 %v8181
        %8236 = vmatprep.subr.mxu0 0.0
        %8237 = vmatpush1.msra.mxu0 %v8179
        %8238 = vmatprep.subr.mxu0 0.0
        %8239 = vmatpush1.msra.mxu0 %v8177
        %8240 = vmatprep.subr.mxu0 0.0
        %8241 = vmatpush1.msra.mxu0 %v8175
        %8242 = vmatprep.subr.mxu0 0.0
        %8243 = vmatpush1.msra.mxu0 %v8173
        %8244 = vmatprep.subr.mxu0 0.0
        %8245 = vmatpush1.msra.mxu0 %v8171
        %8246 = vmatprep.subr.mxu0 0.0
        %8247 = vmatpush1.msra.mxu0 %v8169
        %8248 = vmatprep.subr.mxu0 0.0
        %8249 = vmatpush2.msra.mxu0 0.0
        %8250 = vmatprep.subr.mxu0 0.0
        %8251 = vmatpush2.msra.mxu0 0.0
        %8252 = vmatprep.subr.mxu0 0.0
        %8253 = vmatpush2.msra.mxu0 0.0
        %8254 = vmatprep.subr.mxu0 0.0
        %8255 = vmatpush2.msra.mxu0 0.0
        %8256 = vmatprep.subr.mxu0 0.0
        %8257 = vmatpush2.msra.mxu0 0.0
        %8258 = vmatprep.subr.mxu0 0.0
        %8259 = vmatpush2.msra.mxu0 0.0
        %8260 = vmatprep.subr.mxu0 0.0
        %8261 = vmatpush2.msra.mxu0 0.0
        %8262 = vmatprep.subr.mxu0 0.0
        %8263 = vmatpush2.msra.mxu0 0.0
        %8264 = vmatprep.subr.mxu0 0.0
        %8265 = vmatpush2.msra.mxu0 0.0
        %8266 = vmatprep.subr.mxu0 0.0
        %8267 = vmatpush2.msra.mxu0 0.0
        %8268 = vmatprep.subr.mxu0 0.0
        %8269 = vmatpush2.msra.mxu0 0.0
        %8270 = vmatprep.subr.mxu0 0.0
        %8271 = vmatpush2.msra.mxu0 0.0
        %8272 = vmatprep.subr.mxu0 0.0
        %8273 = vmatpush2.msra.mxu0 0.0
        %8274 = vmatprep.subr.mxu0 0.0
        %8275 = vmatpush2.msra.mxu0 0.0
        %8276 = vmatprep.subr.mxu0 0.0
        %8277 = vmatpush2.msra.mxu0 0.0
        %8278 = vmatprep.subr.mxu0 0.0
        %8279 = vmatpush2.msra.mxu0 0.0
        %8280 = vmatprep.mubr.f32.mxu0 0.0
        %8281 = vmatmul.mubr.f32.gmra.mxu0 %v8136
        %v8282 = vpop.f32.mrf.mxu0
        %v8283 = vadd.f32 0.0, %v8282
        %v8284 = vpop.f32.mrf.mxu0
        %8285 = vmatprep.mubr.f32.mxu0 0.0
        %8286 = vmatmul.mubr.f32.gmra.mxu0 %v8137
        %v8287 = vpop.f32.mrf.mxu0
        %v8288 = vadd.f32 0.0, %v8287
        %v8289 = vpop.f32.mrf.mxu0
        %8290 = vmatprep.mubr.f32.mxu0 0.0
        %8291 = vmatmul.mubr.f32.gmra.mxu0 %v8138
        %v8292 = vpop.f32.mrf.mxu0
        %v8293 = vadd.f32 0.0, %v8292
        %v8294 = vpop.f32.mrf.mxu0
        %8295 = vmatprep.mubr.f32.mxu0 0.0
        %8296 = vmatmul.mubr.f32.gmra.mxu0 %v8139
        %v8297 = vpop.f32.mrf.mxu0
        %v8298 = vadd.f32 0.0, %v8297
        %v8299 = vpop.f32.mrf.mxu0
        %8300 = vmatprep.mubr.f32.mxu0 0.0
        %8301 = vmatmul.mubr.f32.gmra.mxu0 %v8140
        %v8302 = vpop.f32.mrf.mxu0
        %v8303 = vadd.f32 0.0, %v8302
        %v8304 = vpop.f32.mrf.mxu0
        %8305 = vmatprep.mubr.f32.mxu0 0.0
        %8306 = vmatmul.mubr.f32.gmra.mxu0 %v8141
        %v8307 = vpop.f32.mrf.mxu0
        %v8308 = vadd.f32 0.0, %v8307
        %v8309 = vpop.f32.mrf.mxu0
        %8310 = vmatprep.mubr.f32.mxu0 0.0
        %8311 = vmatmul.mubr.f32.gmra.mxu0 %v8142
        %v8312 = vpop.f32.mrf.mxu0
        %v8313 = vadd.f32 0.0, %v8312
        %v8314 = vpop.f32.mrf.mxu0
        %8315 = vmatprep.mubr.f32.mxu0 0.0
        %8316 = vmatmul.mubr.f32.gmra.mxu0 %v8143
        %v8317 = vpop.f32.mrf.mxu0
        %v8318 = vadd.f32 0.0, %v8317
        %v8319 = vpop.f32.mrf.mxu0
        %8320 = vmatprep.mubr.f32.mxu0 0.0
        %8321 = vmatmul.mubr.f32.gmra.mxu0 %v8144
        %v8322 = vpop.f32.mrf.mxu0
        %v8323 = vadd.f32 0.0, %v8322
        %v8324 = vpop.f32.mrf.mxu0
        %8325 = vmatprep.mubr.f32.mxu0 0.0
        %8326 = vmatmul.mubr.f32.gmra.mxu0 %v8145
        %v8327 = vpop.f32.mrf.mxu0
        %v8328 = vadd.f32 0.0, %v8327
        %v8329 = vpop.f32.mrf.mxu0
        %8330 = vmatprep.mubr.f32.mxu0 0.0
        %8331 = vmatmul.mubr.f32.gmra.mxu0 %v8146
        %v8332 = vpop.f32.mrf.mxu0
        %v8333 = vadd.f32 0.0, %v8332
        %v8334 = vpop.f32.mrf.mxu0
        %8335 = vmatprep.mubr.f32.mxu0 0.0
        %8336 = vmatmul.mubr.f32.gmra.mxu0 %v8147
        %v8337 = vpop.f32.mrf.mxu0
        %v8338 = vadd.f32 0.0, %v8337
        %v8339 = vpop.f32.mrf.mxu0
        %8340 = vmatprep.mubr.f32.mxu0 0.0
        %8341 = vmatmul.mubr.f32.gmra.mxu0 %v8148
        %v8342 = vpop.f32.mrf.mxu0
        %v8343 = vadd.f32 0.0, %v8342
        %v8344 = vpop.f32.mrf.mxu0
        %8345 = vmatprep.mubr.f32.mxu0 0.0
        %8346 = vmatmul.mubr.f32.gmra.mxu0 %v8149
        %v8347 = vpop.f32.mrf.mxu0
        %v8348 = vadd.f32 0.0, %v8347
        %v8349 = vpop.f32.mrf.mxu0
        %8350 = vmatprep.mubr.f32.mxu0 0.0
        %8351 = vmatmul.mubr.f32.gmra.mxu0 %v8150
        %v8352 = vpop.f32.mrf.mxu0
        %v8353 = vadd.f32 0.0, %v8352
        %v8354 = vpop.f32.mrf.mxu0
        %8355 = vmatprep.mubr.f32.mxu0 0.0
        %8356 = vmatmul.mubr.f32.gmra.mxu0 %v8151
        %v8357 = vpop.f32.mrf.mxu0
        %v8358 = vadd.f32 0.0, %v8357
        %v8359 = vpop.f32.mrf.mxu0
        %8360 = vdwg.mxu0
        %8361 = vrot.lane.b32.xlu0 %v2406, 64
        %v8362 = vpop.permute.xlu0 %8361
        %8363 = vrot.lane.b32.xlu0 %v2409, 64
        %v8364 = vpop.permute.xlu0 %8363
        %8365 = vrot.lane.b32.xlu0 %v2412, 64
        %v8366 = vpop.permute.xlu0 %8365
        %8367 = vrot.lane.b32.xlu0 %v2415, 64
        %v8368 = vpop.permute.xlu0 %8367
        %8369 = vrot.lane.b32.xlu0 %v2418, 64
        %v8370 = vpop.permute.xlu0 %8369
        %8371 = vrot.lane.b32.xlu0 %v2421, 64
        %v8372 = vpop.permute.xlu0 %8371
        %8373 = vrot.lane.b32.xlu0 %v2424, 64
        %v8374 = vpop.permute.xlu0 %8373
        %8375 = vrot.lane.b32.xlu0 %v2427, 64
        %v8376 = vpop.permute.xlu0 %8375
        %8377 = vrot.lane.b32.xlu0 %v2430, 64
        %v8378 = vpop.permute.xlu0 %8377
        %8379 = vrot.lane.b32.xlu0 %v2433, 64
        %v8380 = vpop.permute.xlu0 %8379
        %8381 = vrot.lane.b32.xlu0 %v2436, 64
        %v8382 = vpop.permute.xlu0 %8381
        %8383 = vrot.lane.b32.xlu0 %v2439, 64
        %v8384 = vpop.permute.xlu0 %8383
        %8385 = vrot.lane.b32.xlu0 %v2442, 64
        %v8386 = vpop.permute.xlu0 %8385
        %8387 = vrot.lane.b32.xlu0 %v2445, 64
        %v8388 = vpop.permute.xlu0 %8387
        %8389 = vrot.lane.b32.xlu0 %v2448, 64
        %v8390 = vpop.permute.xlu0 %8389
        %8391 = vrot.lane.b32.xlu0 %v2451, 64
        %v8392 = vpop.permute.xlu0 %8391
        %8393 = vrot.lane.b32.xlu0 %v1700, 64
        %v8394 = vpop.permute.xlu0 %8393
        %8395 = vrot.lane.b32.xlu0 %v1706, 64
        %v8396 = vpop.permute.xlu0 %8395
        %8397 = vrot.lane.b32.xlu0 %v1712, 64
        %v8398 = vpop.permute.xlu0 %8397
        %8399 = vrot.lane.b32.xlu0 %v1718, 64
        %v8400 = vpop.permute.xlu0 %8399
        %8401 = vrot.lane.b32.xlu0 %v1724, 64
        %v8402 = vpop.permute.xlu0 %8401
        %8403 = vrot.lane.b32.xlu0 %v1730, 64
        %v8404 = vpop.permute.xlu0 %8403
        %8405 = vrot.lane.b32.xlu0 %v1736, 64
        %v8406 = vpop.permute.xlu0 %8405
        %8407 = vrot.lane.b32.xlu0 %v1742, 64
        %v8408 = vpop.permute.xlu0 %8407
        %8409 = vrot.lane.b32.xlu0 %v1748, 64
        %v8410 = vpop.permute.xlu0 %8409
        %8411 = vrot.lane.b32.xlu0 %v1754, 64
        %v8412 = vpop.permute.xlu0 %8411
        %8413 = vrot.lane.b32.xlu0 %v1760, 64
        %v8414 = vpop.permute.xlu0 %8413
        %8415 = vrot.lane.b32.xlu0 %v1766, 64
        %v8416 = vpop.permute.xlu0 %8415
        %8417 = vrot.lane.b32.xlu0 %v1772, 64
        %v8418 = vpop.permute.xlu0 %8417
        %8419 = vrot.lane.b32.xlu0 %v1778, 64
        %v8420 = vpop.permute.xlu0 %8419
        %8421 = vrot.lane.b32.xlu0 %v1784, 64
        %v8422 = vpop.permute.xlu0 %8421
        %8423 = vrot.lane.b32.xlu0 %v1790, 64
        %v8424 = vpop.permute.xlu0 %8423
        %v8425 = vsel %vm2452, %v8362, 0
        %v8427 = vsel %vm2452, %v8364, 0
        %v8429 = vsel %vm2452, %v8366, 0
        %v8431 = vsel %vm2452, %v8368, 0
        %v8433 = vsel %vm2452, %v8370, 0
        %v8435 = vsel %vm2452, %v8372, 0
        %v8437 = vsel %vm2452, %v8374, 0
        %v8439 = vsel %vm2452, %v8376, 0
        %v8441 = vsel %vm2452, %v8378, 0
        %v8443 = vsel %vm2452, %v8380, 0
        %v8445 = vsel %vm2452, %v8382, 0
        %v8447 = vsel %vm2452, %v8384, 0
        %v8449 = vsel %vm2452, %v8386, 0
        %v8451 = vsel %vm2452, %v8388, 0
        %v8453 = vsel %vm2452, %v8390, 0
        %v8455 = vsel %vm2452, %v8392, 0
        %v8457 = vsel %vm2452, %v8394, 0
        %v8459 = vsel %vm2452, %v8396, 0
        %v8461 = vsel %vm2452, %v8398, 0
        %v8463 = vsel %vm2452, %v8400, 0
        %v8465 = vsel %vm2452, %v8402, 0
        %v8467 = vsel %vm2452, %v8404, 0
        %v8469 = vsel %vm2452, %v8406, 0
        %v8471 = vsel %vm2452, %v8408, 0
        %v8473 = vsel %vm2452, %v8410, 0
        %v8475 = vsel %vm2452, %v8412, 0
        %v8477 = vsel %vm2452, %v8414, 0
        %v8479 = vsel %vm2452, %v8416, 0
        %v8481 = vsel %vm2452, %v8418, 0
        %v8483 = vsel %vm2452, %v8420, 0
        %v8485 = vsel %vm2452, %v8422, 0
        %v8487 = vsel %vm2452, %v8424, 0
        %8489 = vmatprep.subr.mxu0 0.0
        %8490 = vmatpush1.xpose.msra.mxu0 %v8487
        %8491 = vmatprep.subr.mxu0 0.0
        %8492 = vmatpush1.xpose.msra.mxu0 %v8485
        %8493 = vmatprep.subr.mxu0 0.0
        %8494 = vmatpush1.xpose.msra.mxu0 %v8483
        %8495 = vmatprep.subr.mxu0 0.0
        %8496 = vmatpush1.xpose.msra.mxu0 %v8481
        %8497 = vmatprep.subr.mxu0 0.0
        %8498 = vmatpush1.xpose.msra.mxu0 %v8479
        %8499 = vmatprep.subr.mxu0 0.0
        %8500 = vmatpush1.xpose.msra.mxu0 %v8477
        %8501 = vmatprep.subr.mxu0 0.0
        %8502 = vmatpush1.xpose.msra.mxu0 %v8475
        %8503 = vmatprep.subr.mxu0 0.0
        %8504 = vmatpush1.xpose.msra.mxu0 %v8473
        %8505 = vmatprep.subr.mxu0 0.0
        %8506 = vmatpush1.xpose.msra.mxu0 %v8471
        %8507 = vmatprep.subr.mxu0 0.0
        %8508 = vmatpush1.xpose.msra.mxu0 %v8469
        %8509 = vmatprep.subr.mxu0 0.0
        %8510 = vmatpush1.xpose.msra.mxu0 %v8467
        %8511 = vmatprep.subr.mxu0 0.0
        %8512 = vmatpush1.xpose.msra.mxu0 %v8465
        %8513 = vmatprep.subr.mxu0 0.0
        %8514 = vmatpush1.xpose.msra.mxu0 %v8463
        %8515 = vmatprep.subr.mxu0 0.0
        %8516 = vmatpush1.xpose.msra.mxu0 %v8461
        %8517 = vmatprep.subr.mxu0 0.0
        %8518 = vmatpush1.xpose.msra.mxu0 %v8459
        %8519 = vmatprep.subr.mxu0 0.0
        %8520 = vmatpush1.xpose.msra.mxu0 %v8457
        %8521 = vmatprep.subr.mxu0 0.0
        %8522 = vmatpush2.xpose.msra.mxu0 0.0
        %8523 = vmatprep.subr.mxu0 0.0
        %8524 = vmatpush2.xpose.msra.mxu0 0.0
        %8525 = vmatprep.subr.mxu0 0.0
        %8526 = vmatpush2.xpose.msra.mxu0 0.0
        %8527 = vmatprep.subr.mxu0 0.0
        %8528 = vmatpush2.xpose.msra.mxu0 0.0
        %8529 = vmatprep.subr.mxu0 0.0
        %8530 = vmatpush2.xpose.msra.mxu0 0.0
        %8531 = vmatprep.subr.mxu0 0.0
        %8532 = vmatpush2.xpose.msra.mxu0 0.0
        %8533 = vmatprep.subr.mxu0 0.0
        %8534 = vmatpush2.xpose.msra.mxu0 0.0
        %8535 = vmatprep.subr.mxu0 0.0
        %8536 = vmatpush2.xpose.msra.mxu0 0.0
        %8537 = vmatprep.subr.mxu0 0.0
        %8538 = vmatpush2.xpose.msra.mxu0 0.0
        %8539 = vmatprep.subr.mxu0 0.0
        %8540 = vmatpush2.xpose.msra.mxu0 0.0
        %8541 = vmatprep.subr.mxu0 0.0
        %8542 = vmatpush2.xpose.msra.mxu0 0.0
        %8543 = vmatprep.subr.mxu0 0.0
        %8544 = vmatpush2.xpose.msra.mxu0 0.0
        %8545 = vmatprep.subr.mxu0 0.0
        %8546 = vmatpush2.xpose.msra.mxu0 0.0
        %8547 = vmatprep.subr.mxu0 0.0
        %8548 = vmatpush2.xpose.msra.mxu0 0.0
        %8549 = vmatprep.subr.mxu0 0.0
        %8550 = vmatpush2.xpose.msra.mxu0 0.0
        %8551 = vmatprep.subr.mxu0 0.0
        %8552 = vmatpush2.xpose.msra.mxu0 0.0
        %8553 = vmatprep.mubr.f32.mxu0 0.0
        %8554 = vmatmul.mubr.f32.gmra.mxu0 %v8425
        %v8555 = vpop.f32.mrf.mxu0
        %v8556 = vadd.f32 0.0, %v8555
        %v8557 = vpop.f32.mrf.mxu0
        %8558 = vmatprep.mubr.f32.mxu0 0.0
        %8559 = vmatmul.mubr.f32.gmra.mxu0 %v8427
        %v8560 = vpop.f32.mrf.mxu0
        %v8561 = vadd.f32 0.0, %v8560
        %v8562 = vpop.f32.mrf.mxu0
        %8563 = vmatprep.mubr.f32.mxu0 0.0
        %8564 = vmatmul.mubr.f32.gmra.mxu0 %v8429
        %v8565 = vpop.f32.mrf.mxu0
        %v8566 = vadd.f32 0.0, %v8565
        %v8567 = vpop.f32.mrf.mxu0
        %8568 = vmatprep.mubr.f32.mxu0 0.0
        %8569 = vmatmul.mubr.f32.gmra.mxu0 %v8431
        %v8570 = vpop.f32.mrf.mxu0
        %v8571 = vadd.f32 0.0, %v8570
        %v8572 = vpop.f32.mrf.mxu0
        %8573 = vmatprep.mubr.f32.mxu0 0.0
        %8574 = vmatmul.mubr.f32.gmra.mxu0 %v8433
        %v8575 = vpop.f32.mrf.mxu0
        %v8576 = vadd.f32 0.0, %v8575
        %v8577 = vpop.f32.mrf.mxu0
        %8578 = vmatprep.mubr.f32.mxu0 0.0
        %8579 = vmatmul.mubr.f32.gmra.mxu0 %v8435
        %v8580 = vpop.f32.mrf.mxu0
        %v8581 = vadd.f32 0.0, %v8580
        %v8582 = vpop.f32.mrf.mxu0
        %8583 = vmatprep.mubr.f32.mxu0 0.0
        %8584 = vmatmul.mubr.f32.gmra.mxu0 %v8437
        %v8585 = vpop.f32.mrf.mxu0
        %v8586 = vadd.f32 0.0, %v8585
        %v8587 = vpop.f32.mrf.mxu0
        %8588 = vmatprep.mubr.f32.mxu0 0.0
        %8589 = vmatmul.mubr.f32.gmra.mxu0 %v8439
        %v8590 = vpop.f32.mrf.mxu0
        %v8591 = vadd.f32 0.0, %v8590
        %v8592 = vpop.f32.mrf.mxu0
        %8593 = vmatprep.mubr.f32.mxu0 0.0
        %8594 = vmatmul.mubr.f32.gmra.mxu0 %v8441
        %v8595 = vpop.f32.mrf.mxu0
        %v8596 = vadd.f32 0.0, %v8595
        %v8597 = vpop.f32.mrf.mxu0
        %8598 = vmatprep.mubr.f32.mxu0 0.0
        %8599 = vmatmul.mubr.f32.gmra.mxu0 %v8443
        %v8600 = vpop.f32.mrf.mxu0
        %v8601 = vadd.f32 0.0, %v8600
        %v8602 = vpop.f32.mrf.mxu0
        %8603 = vmatprep.mubr.f32.mxu0 0.0
        %8604 = vmatmul.mubr.f32.gmra.mxu0 %v8445
        %v8605 = vpop.f32.mrf.mxu0
        %v8606 = vadd.f32 0.0, %v8605
        %v8607 = vpop.f32.mrf.mxu0
        %8608 = vmatprep.mubr.f32.mxu0 0.0
        %8609 = vmatmul.mubr.f32.gmra.mxu0 %v8447
        %v8610 = vpop.f32.mrf.mxu0
        %v8611 = vadd.f32 0.0, %v8610
        %v8612 = vpop.f32.mrf.mxu0
        %8613 = vmatprep.mubr.f32.mxu0 0.0
        %8614 = vmatmul.mubr.f32.gmra.mxu0 %v8449
        %v8615 = vpop.f32.mrf.mxu0
        %v8616 = vadd.f32 0.0, %v8615
        %v8617 = vpop.f32.mrf.mxu0
        %8618 = vmatprep.mubr.f32.mxu0 0.0
        %8619 = vmatmul.mubr.f32.gmra.mxu0 %v8451
        %v8620 = vpop.f32.mrf.mxu0
        %v8621 = vadd.f32 0.0, %v8620
        %v8622 = vpop.f32.mrf.mxu0
        %8623 = vmatprep.mubr.f32.mxu0 0.0
        %8624 = vmatmul.mubr.f32.gmra.mxu0 %v8453
        %v8625 = vpop.f32.mrf.mxu0
        %v8626 = vadd.f32 0.0, %v8625
        %v8627 = vpop.f32.mrf.mxu0
        %8628 = vmatprep.mubr.f32.mxu0 0.0
        %8629 = vmatmul.mubr.f32.gmra.mxu0 %v8455
        %v8630 = vpop.f32.mrf.mxu0
        %v8631 = vadd.f32 0.0, %v8630
        %v8632 = vpop.f32.mrf.mxu0
        %8633 = vdwg.mxu0
        %8634 = vmax.xlane.f32.xlu0 %v8556
        %v8635 = vpop.xlane.xlu0 %8634
        %8636 = vmax.xlane.f32.xlu0 %v8561
        %v8637 = vpop.xlane.xlu0 %8636
        %8638 = vmax.xlane.f32.xlu0 %v8566
        %v8639 = vpop.xlane.xlu0 %8638
        %8640 = vmax.xlane.f32.xlu0 %v8571
        %v8641 = vpop.xlane.xlu0 %8640
        %8642 = vmax.xlane.f32.xlu0 %v8576
        %v8643 = vpop.xlane.xlu0 %8642
        %8644 = vmax.xlane.f32.xlu0 %v8581
        %v8645 = vpop.xlane.xlu0 %8644
        %8646 = vmax.xlane.f32.xlu0 %v8586
        %v8647 = vpop.xlane.xlu0 %8646
        %8648 = vmax.xlane.f32.xlu0 %v8591
        %v8649 = vpop.xlane.xlu0 %8648
        %8650 = vmax.xlane.f32.xlu0 %v8596
        %v8651 = vpop.xlane.xlu0 %8650
        %8652 = vmax.xlane.f32.xlu0 %v8601
        %v8653 = vpop.xlane.xlu0 %8652
        %8654 = vmax.xlane.f32.xlu0 %v8606
        %v8655 = vpop.xlane.xlu0 %8654
        %8656 = vmax.xlane.f32.xlu0 %v8611
        %v8657 = vpop.xlane.xlu0 %8656
        %8658 = vmax.xlane.f32.xlu0 %v8616
        %v8659 = vpop.xlane.xlu0 %8658
        %8660 = vmax.xlane.f32.xlu0 %v8621
        %v8661 = vpop.xlane.xlu0 %8660
        %8662 = vmax.xlane.f32.xlu0 %v8626
        %v8663 = vpop.xlane.xlu0 %8662
        %8664 = vmax.xlane.f32.xlu0 %v8631
        %v8665 = vpop.xlane.xlu0 %8664
        %v8666 = vsub.f32 %v8556, %v8635
        %v8667 = vsub.f32 %v8561, %v8637
        %v8668 = vsub.f32 %v8566, %v8639
        %v8669 = vsub.f32 %v8571, %v8641
        %v8670 = vsub.f32 %v8576, %v8643
        %v8671 = vsub.f32 %v8581, %v8645
        %v8672 = vsub.f32 %v8586, %v8647
        %v8673 = vsub.f32 %v8591, %v8649
        %v8674 = vsub.f32 %v8596, %v8651
        %v8675 = vsub.f32 %v8601, %v8653
        %v8676 = vsub.f32 %v8606, %v8655
        %v8677 = vsub.f32 %v8611, %v8657
        %v8678 = vsub.f32 %v8616, %v8659
        %v8679 = vsub.f32 %v8621, %v8661
        %v8680 = vsub.f32 %v8626, %v8663
        %v8681 = vsub.f32 %v8631, %v8665
        %v8682 = vmul.f32 %v8666, 1.442695
        %v8683 = vpow.pop %v8682
        %v8684 = vmul.f32 %v8667, 1.442695
        %v8685 = vpow.pop %v8684
        %v8686 = vmul.f32 %v8668, 1.442695
        %v8687 = vpow.pop %v8686
        %v8688 = vmul.f32 %v8669, 1.442695
        %v8689 = vpow.pop %v8688
        %v8690 = vmul.f32 %v8670, 1.442695
        %v8691 = vpow.pop %v8690
        %v8692 = vmul.f32 %v8671, 1.442695
        %v8693 = vpow.pop %v8692
        %v8694 = vmul.f32 %v8672, 1.442695
        %v8695 = vpow.pop %v8694
        %v8696 = vmul.f32 %v8673, 1.442695
        %v8697 = vpow.pop %v8696
        %v8698 = vmul.f32 %v8674, 1.442695
        %v8699 = vpow.pop %v8698
        %v8700 = vmul.f32 %v8675, 1.442695
        %v8701 = vpow.pop %v8700
        %v8702 = vmul.f32 %v8676, 1.442695
        %v8703 = vpow.pop %v8702
        %v8704 = vmul.f32 %v8677, 1.442695
        %v8705 = vpow.pop %v8704
        %v8706 = vmul.f32 %v8678, 1.442695
        %v8707 = vpow.pop %v8706
        %v8708 = vmul.f32 %v8679, 1.442695
        %v8709 = vpow.pop %v8708
        %v8710 = vmul.f32 %v8680, 1.442695
        %v8711 = vpow.pop %v8710
        %v8712 = vmul.f32 %v8681, 1.442695
        %v8713 = vpow.pop %v8712
        %8714 = vadd.xlane.f32.xlu0 %v8683
        %v8715 = vpop.xlane.xlu0 %8714
        %8716 = vadd.xlane.f32.xlu0 %v8685
        %v8717 = vpop.xlane.xlu0 %8716
        %8718 = vadd.xlane.f32.xlu0 %v8687
        %v8719 = vpop.xlane.xlu0 %8718
        %8720 = vadd.xlane.f32.xlu0 %v8689
        %v8721 = vpop.xlane.xlu0 %8720
        %8722 = vadd.xlane.f32.xlu0 %v8691
        %v8723 = vpop.xlane.xlu0 %8722
        %8724 = vadd.xlane.f32.xlu0 %v8693
        %v8725 = vpop.xlane.xlu0 %8724
        %8726 = vadd.xlane.f32.xlu0 %v8695
        %v8727 = vpop.xlane.xlu0 %8726
        %8728 = vadd.xlane.f32.xlu0 %v8697
        %v8729 = vpop.xlane.xlu0 %8728
        %8730 = vadd.xlane.f32.xlu0 %v8699
        %v8731 = vpop.xlane.xlu0 %8730
        %8732 = vadd.xlane.f32.xlu0 %v8701
        %v8733 = vpop.xlane.xlu0 %8732
        %8734 = vadd.xlane.f32.xlu0 %v8703
        %v8735 = vpop.xlane.xlu0 %8734
        %8736 = vadd.xlane.f32.xlu0 %v8705
        %v8737 = vpop.xlane.xlu0 %8736
        %8738 = vadd.xlane.f32.xlu0 %v8707
        %v8739 = vpop.xlane.xlu0 %8738
        %8740 = vadd.xlane.f32.xlu0 %v8709
        %v8741 = vpop.xlane.xlu0 %8740
        %8742 = vadd.xlane.f32.xlu0 %v8711
        %v8743 = vpop.xlane.xlu0 %8742
        %8744 = vadd.xlane.f32.xlu0 %v8713
        %v8745 = vpop.xlane.xlu0 %8744
        %v8746 = vrcp.pop %v8715
        %v8747 = vrcp.pop %v8717
        %v8748 = vrcp.pop %v8719
        %v8749 = vrcp.pop %v8721
        %v8750 = vrcp.pop %v8723
        %v8751 = vrcp.pop %v8725
        %v8752 = vrcp.pop %v8727
        %v8753 = vrcp.pop %v8729
        %v8754 = vrcp.pop %v8731
        %v8755 = vrcp.pop %v8733
        %v8756 = vrcp.pop %v8735
        %v8757 = vrcp.pop %v8737
        %v8758 = vrcp.pop %v8739
        %v8759 = vrcp.pop %v8741
        %v8760 = vrcp.pop %v8743
        %v8761 = vrcp.pop %v8745
        %v8762 = vmul.f32 %v8683, %v8746
        %v8763 = vmul.f32 %v8685, %v8747
        %v8764 = vmul.f32 %v8687, %v8748
        %v8765 = vmul.f32 %v8689, %v8749
        %v8766 = vmul.f32 %v8691, %v8750
        %v8767 = vmul.f32 %v8693, %v8751
        %v8768 = vmul.f32 %v8695, %v8752
        %v8769 = vmul.f32 %v8697, %v8753
        %v8770 = vmul.f32 %v8699, %v8754
        %v8771 = vmul.f32 %v8701, %v8755
        %v8772 = vmul.f32 %v8703, %v8756
        %v8773 = vmul.f32 %v8705, %v8757
        %v8774 = vmul.f32 %v8707, %v8758
        %v8775 = vmul.f32 %v8709, %v8759
        %v8776 = vmul.f32 %v8711, %v8760
        %v8777 = vmul.f32 %v8713, %v8761
        %8778 = vrot.lane.b32.xlu0 %v2326, 64
        %v8779 = vpop.permute.xlu0 %8778
        %8780 = vrot.lane.b32.xlu0 %v2331, 64
        %v8781 = vpop.permute.xlu0 %8780
        %8782 = vrot.lane.b32.xlu0 %v2336, 64
        %v8783 = vpop.permute.xlu0 %8782
        %8784 = vrot.lane.b32.xlu0 %v2341, 64
        %v8785 = vpop.permute.xlu0 %8784
        %8786 = vrot.lane.b32.xlu0 %v2346, 64
        %v8787 = vpop.permute.xlu0 %8786
        %8788 = vrot.lane.b32.xlu0 %v2351, 64
        %v8789 = vpop.permute.xlu0 %8788
        %8790 = vrot.lane.b32.xlu0 %v2356, 64
        %v8791 = vpop.permute.xlu0 %8790
        %8792 = vrot.lane.b32.xlu0 %v2361, 64
        %v8793 = vpop.permute.xlu0 %8792
        %8794 = vrot.lane.b32.xlu0 %v2366, 64
        %v8795 = vpop.permute.xlu0 %8794
        %8796 = vrot.lane.b32.xlu0 %v2371, 64
        %v8797 = vpop.permute.xlu0 %8796
        %8798 = vrot.lane.b32.xlu0 %v2376, 64
        %v8799 = vpop.permute.xlu0 %8798
        %8800 = vrot.lane.b32.xlu0 %v2381, 64
        %v8801 = vpop.permute.xlu0 %8800
        %8802 = vrot.lane.b32.xlu0 %v2386, 64
        %v8803 = vpop.permute.xlu0 %8802
        %8804 = vrot.lane.b32.xlu0 %v2391, 64
        %v8805 = vpop.permute.xlu0 %8804
        %8806 = vrot.lane.b32.xlu0 %v2396, 64
        %v8807 = vpop.permute.xlu0 %8806
        %8808 = vrot.lane.b32.xlu0 %v2401, 64
        %v8809 = vpop.permute.xlu0 %8808
        %8826 = vmatprep.subr.mxu0 0.0
        %8827 = vmatpush1.msra.mxu0 %v8809
        %8828 = vmatprep.subr.mxu0 0.0
        %8829 = vmatpush1.msra.mxu0 %v8807
        %8830 = vmatprep.subr.mxu0 0.0
        %8831 = vmatpush1.msra.mxu0 %v8805
        %8832 = vmatprep.subr.mxu0 0.0
        %8833 = vmatpush1.msra.mxu0 %v8803
        %8834 = vmatprep.subr.mxu0 0.0
        %8835 = vmatpush1.msra.mxu0 %v8801
        %8836 = vmatprep.subr.mxu0 0.0
        %8837 = vmatpush1.msra.mxu0 %v8799
        %8838 = vmatprep.subr.mxu0 0.0
        %8839 = vmatpush1.msra.mxu0 %v8797
        %8840 = vmatprep.subr.mxu0 0.0
        %8841 = vmatpush1.msra.mxu0 %v8795
        %8842 = vmatprep.subr.mxu0 0.0
        %8843 = vmatpush1.msra.mxu0 %v8793
        %8844 = vmatprep.subr.mxu0 0.0
        %8845 = vmatpush1.msra.mxu0 %v8791
        %8846 = vmatprep.subr.mxu0 0.0
        %8847 = vmatpush1.msra.mxu0 %v8789
        %8848 = vmatprep.subr.mxu0 0.0
        %8849 = vmatpush1.msra.mxu0 %v8787
        %8850 = vmatprep.subr.mxu0 0.0
        %8851 = vmatpush1.msra.mxu0 %v8785
        %8852 = vmatprep.subr.mxu0 0.0
        %8853 = vmatpush1.msra.mxu0 %v8783
        %8854 = vmatprep.subr.mxu0 0.0
        %8855 = vmatpush1.msra.mxu0 %v8781
        %8856 = vmatprep.subr.mxu0 0.0
        %8857 = vmatpush1.msra.mxu0 %v8779
        %8858 = vmatprep.subr.mxu0 0.0
        %8859 = vmatpush2.msra.mxu0 0.0
        %8860 = vmatprep.subr.mxu0 0.0
        %8861 = vmatpush2.msra.mxu0 0.0
        %8862 = vmatprep.subr.mxu0 0.0
        %8863 = vmatpush2.msra.mxu0 0.0
        %8864 = vmatprep.subr.mxu0 0.0
        %8865 = vmatpush2.msra.mxu0 0.0
        %8866 = vmatprep.subr.mxu0 0.0
        %8867 = vmatpush2.msra.mxu0 0.0
        %8868 = vmatprep.subr.mxu0 0.0
        %8869 = vmatpush2.msra.mxu0 0.0
        %8870 = vmatprep.subr.mxu0 0.0
        %8871 = vmatpush2.msra.mxu0 0.0
        %8872 = vmatprep.subr.mxu0 0.0
        %8873 = vmatpush2.msra.mxu0 0.0
        %8874 = vmatprep.subr.mxu0 0.0
        %8875 = vmatpush2.msra.mxu0 0.0
        %8876 = vmatprep.subr.mxu0 0.0
        %8877 = vmatpush2.msra.mxu0 0.0
        %8878 = vmatprep.subr.mxu0 0.0
        %8879 = vmatpush2.msra.mxu0 0.0
        %8880 = vmatprep.subr.mxu0 0.0
        %8881 = vmatpush2.msra.mxu0 0.0
        %8882 = vmatprep.subr.mxu0 0.0
        %8883 = vmatpush2.msra.mxu0 0.0
        %8884 = vmatprep.subr.mxu0 0.0
        %8885 = vmatpush2.msra.mxu0 0.0
        %8886 = vmatprep.subr.mxu0 0.0
        %8887 = vmatpush2.msra.mxu0 0.0
        %8888 = vmatprep.subr.mxu0 0.0
        %8889 = vmatpush2.msra.mxu0 0.0
        %8890 = vmatprep.mubr.f32.mxu0 0.0
        %8891 = vmatmul.mubr.f32.gmra.mxu0 %v8762
        %v8892 = vpop.f32.mrf.mxu0
        %v8893 = vadd.f32 0.0, %v8892
        %v8894 = vpop.f32.mrf.mxu0
        %8895 = vmatprep.mubr.f32.mxu0 0.0
        %8896 = vmatmul.mubr.f32.gmra.mxu0 %v8763
        %v8897 = vpop.f32.mrf.mxu0
        %v8898 = vadd.f32 0.0, %v8897
        %v8899 = vpop.f32.mrf.mxu0
        %8900 = vmatprep.mubr.f32.mxu0 0.0
        %8901 = vmatmul.mubr.f32.gmra.mxu0 %v8764
        %v8902 = vpop.f32.mrf.mxu0
        %v8903 = vadd.f32 0.0, %v8902
        %v8904 = vpop.f32.mrf.mxu0
        %8905 = vmatprep.mubr.f32.mxu0 0.0
        %8906 = vmatmul.mubr.f32.gmra.mxu0 %v8765
        %v8907 = vpop.f32.mrf.mxu0
        %v8908 = vadd.f32 0.0, %v8907
        %v8909 = vpop.f32.mrf.mxu0
        %8910 = vmatprep.mubr.f32.mxu0 0.0
        %8911 = vmatmul.mubr.f32.gmra.mxu0 %v8766
        %v8912 = vpop.f32.mrf.mxu0
        %v8913 = vadd.f32 0.0, %v8912
        %v8914 = vpop.f32.mrf.mxu0
        %8915 = vmatprep.mubr.f32.mxu0 0.0
        %8916 = vmatmul.mubr.f32.gmra.mxu0 %v8767
        %v8917 = vpop.f32.mrf.mxu0
        %v8918 = vadd.f32 0.0, %v8917
        %v8919 = vpop.f32.mrf.mxu0
        %8920 = vmatprep.mubr.f32.mxu0 0.0
        %8921 = vmatmul.mubr.f32.gmra.mxu0 %v8768
        %v8922 = vpop.f32.mrf.mxu0
        %v8923 = vadd.f32 0.0, %v8922
        %v8924 = vpop.f32.mrf.mxu0
        %8925 = vmatprep.mubr.f32.mxu0 0.0
        %8926 = vmatmul.mubr.f32.gmra.mxu0 %v8769
        %v8927 = vpop.f32.mrf.mxu0
        %v8928 = vadd.f32 0.0, %v8927
        %v8929 = vpop.f32.mrf.mxu0
        %8930 = vmatprep.mubr.f32.mxu0 0.0
        %8931 = vmatmul.mubr.f32.gmra.mxu0 %v8770
        %v8932 = vpop.f32.mrf.mxu0
        %v8933 = vadd.f32 0.0, %v8932
        %v8934 = vpop.f32.mrf.mxu0
        %8935 = vmatprep.mubr.f32.mxu0 0.0
        %8936 = vmatmul.mubr.f32.gmra.mxu0 %v8771
        %v8937 = vpop.f32.mrf.mxu0
        %v8938 = vadd.f32 0.0, %v8937
        %v8939 = vpop.f32.mrf.mxu0
        %8940 = vmatprep.mubr.f32.mxu0 0.0
        %8941 = vmatmul.mubr.f32.gmra.mxu0 %v8772
        %v8942 = vpop.f32.mrf.mxu0
        %v8943 = vadd.f32 0.0, %v8942
        %v8944 = vpop.f32.mrf.mxu0
        %8945 = vmatprep.mubr.f32.mxu0 0.0
        %8946 = vmatmul.mubr.f32.gmra.mxu0 %v8773
        %v8947 = vpop.f32.mrf.mxu0
        %v8948 = vadd.f32 0.0, %v8947
        %v8949 = vpop.f32.mrf.mxu0
        %8950 = vmatprep.mubr.f32.mxu0 0.0
        %8951 = vmatmul.mubr.f32.gmra.mxu0 %v8774
        %v8952 = vpop.f32.mrf.mxu0
        %v8953 = vadd.f32 0.0, %v8952
        %v8954 = vpop.f32.mrf.mxu0
        %8955 = vmatprep.mubr.f32.mxu0 0.0
        %8956 = vmatmul.mubr.f32.gmra.mxu0 %v8775
        %v8957 = vpop.f32.mrf.mxu0
        %v8958 = vadd.f32 0.0, %v8957
        %v8959 = vpop.f32.mrf.mxu0
        %8960 = vmatprep.mubr.f32.mxu0 0.0
        %8961 = vmatmul.mubr.f32.gmra.mxu0 %v8776
        %v8962 = vpop.f32.mrf.mxu0
        %v8963 = vadd.f32 0.0, %v8962
        %v8964 = vpop.f32.mrf.mxu0
        %8965 = vmatprep.mubr.f32.mxu0 0.0
        %8966 = vmatmul.mubr.f32.gmra.mxu0 %v8777
        %v8967 = vpop.f32.mrf.mxu0
        %v8968 = vadd.f32 0.0, %v8967
        %v8969 = vpop.f32.mrf.mxu0
        %8970 = vdwg.mxu0
        %8971 = vrot.lane.b32.xlu0 %v2406, 32
        %v8972 = vpop.permute.xlu0 %8971
        %8973 = vrot.lane.b32.xlu0 %v2409, 32
        %v8974 = vpop.permute.xlu0 %8973
        %8975 = vrot.lane.b32.xlu0 %v2412, 32
        %v8976 = vpop.permute.xlu0 %8975
        %8977 = vrot.lane.b32.xlu0 %v2415, 32
        %v8978 = vpop.permute.xlu0 %8977
        %8979 = vrot.lane.b32.xlu0 %v2418, 32
        %v8980 = vpop.permute.xlu0 %8979
        %8981 = vrot.lane.b32.xlu0 %v2421, 32
        %v8982 = vpop.permute.xlu0 %8981
        %8983 = vrot.lane.b32.xlu0 %v2424, 32
        %v8984 = vpop.permute.xlu0 %8983
        %8985 = vrot.lane.b32.xlu0 %v2427, 32
        %v8986 = vpop.permute.xlu0 %8985
        %8987 = vrot.lane.b32.xlu0 %v2430, 32
        %v8988 = vpop.permute.xlu0 %8987
        %8989 = vrot.lane.b32.xlu0 %v2433, 32
        %v8990 = vpop.permute.xlu0 %8989
        %8991 = vrot.lane.b32.xlu0 %v2436, 32
        %v8992 = vpop.permute.xlu0 %8991
        %8993 = vrot.lane.b32.xlu0 %v2439, 32
        %v8994 = vpop.permute.xlu0 %8993
        %8995 = vrot.lane.b32.xlu0 %v2442, 32
        %v8996 = vpop.permute.xlu0 %8995
        %8997 = vrot.lane.b32.xlu0 %v2445, 32
        %v8998 = vpop.permute.xlu0 %8997
        %8999 = vrot.lane.b32.xlu0 %v2448, 32
        %v9000 = vpop.permute.xlu0 %8999
        %9001 = vrot.lane.b32.xlu0 %v2451, 32
        %v9002 = vpop.permute.xlu0 %9001
        %9003 = vrot.lane.b32.xlu0 %v1700, 32
        %v9004 = vpop.permute.xlu0 %9003
        %9005 = vrot.lane.b32.xlu0 %v1706, 32
        %v9006 = vpop.permute.xlu0 %9005
        %9007 = vrot.lane.b32.xlu0 %v1712, 32
        %v9008 = vpop.permute.xlu0 %9007
        %9009 = vrot.lane.b32.xlu0 %v1718, 32
        %v9010 = vpop.permute.xlu0 %9009
        %9011 = vrot.lane.b32.xlu0 %v1724, 32
        %v9012 = vpop.permute.xlu0 %9011
        %9013 = vrot.lane.b32.xlu0 %v1730, 32
        %v9014 = vpop.permute.xlu0 %9013
        %9015 = vrot.lane.b32.xlu0 %v1736, 32
        %v9016 = vpop.permute.xlu0 %9015
        %9017 = vrot.lane.b32.xlu0 %v1742, 32
        %v9018 = vpop.permute.xlu0 %9017
        %9019 = vrot.lane.b32.xlu0 %v1748, 32
        %v9020 = vpop.permute.xlu0 %9019
        %9021 = vrot.lane.b32.xlu0 %v1754, 32
        %v9022 = vpop.permute.xlu0 %9021
        %9023 = vrot.lane.b32.xlu0 %v1760, 32
        %v9024 = vpop.permute.xlu0 %9023
        %9025 = vrot.lane.b32.xlu0 %v1766, 32
        %v9026 = vpop.permute.xlu0 %9025
        %9027 = vrot.lane.b32.xlu0 %v1772, 32
        %v9028 = vpop.permute.xlu0 %9027
        %9029 = vrot.lane.b32.xlu0 %v1778, 32
        %v9030 = vpop.permute.xlu0 %9029
        %9031 = vrot.lane.b32.xlu0 %v1784, 32
        %v9032 = vpop.permute.xlu0 %9031
        %9033 = vrot.lane.b32.xlu0 %v1790, 32
        %v9034 = vpop.permute.xlu0 %9033
        %v9035 = vsel %vm2452, %v8972, 0
        %v9037 = vsel %vm2452, %v8974, 0
        %v9039 = vsel %vm2452, %v8976, 0
        %v9041 = vsel %vm2452, %v8978, 0
        %v9043 = vsel %vm2452, %v8980, 0
        %v9045 = vsel %vm2452, %v8982, 0
        %v9047 = vsel %vm2452, %v8984, 0
        %v9049 = vsel %vm2452, %v8986, 0
        %v9051 = vsel %vm2452, %v8988, 0
        %v9053 = vsel %vm2452, %v8990, 0
        %v9055 = vsel %vm2452, %v8992, 0
        %v9057 = vsel %vm2452, %v8994, 0
        %v9059 = vsel %vm2452, %v8996, 0
        %v9061 = vsel %vm2452, %v8998, 0
        %v9063 = vsel %vm2452, %v9000, 0
        %v9065 = vsel %vm2452, %v9002, 0
        %v9067 = vsel %vm2452, %v9004, 0
        %v9069 = vsel %vm2452, %v9006, 0
        %v9071 = vsel %vm2452, %v9008, 0
        %v9073 = vsel %vm2452, %v9010, 0
        %v9075 = vsel %vm2452, %v9012, 0
        %v9077 = vsel %vm2452, %v9014, 0
        %v9079 = vsel %vm2452, %v9016, 0
        %v9081 = vsel %vm2452, %v9018, 0
        %v9083 = vsel %vm2452, %v9020, 0
        %v9085 = vsel %vm2452, %v9022, 0
        %v9087 = vsel %vm2452, %v9024, 0
        %v9089 = vsel %vm2452, %v9026, 0
        %v9091 = vsel %vm2452, %v9028, 0
        %v9093 = vsel %vm2452, %v9030, 0
        %v9095 = vsel %vm2452, %v9032, 0
        %v9097 = vsel %vm2452, %v9034, 0
        %9099 = vmatprep.subr.mxu0 0.0
        %9100 = vmatpush1.xpose.msra.mxu0 %v9097
        %9101 = vmatprep.subr.mxu0 0.0
        %9102 = vmatpush1.xpose.msra.mxu0 %v9095
        %9103 = vmatprep.subr.mxu0 0.0
        %9104 = vmatpush1.xpose.msra.mxu0 %v9093
        %9105 = vmatprep.subr.mxu0 0.0
        %9106 = vmatpush1.xpose.msra.mxu0 %v9091
        %9107 = vmatprep.subr.mxu0 0.0
        %9108 = vmatpush1.xpose.msra.mxu0 %v9089
        %9109 = vmatprep.subr.mxu0 0.0
        %9110 = vmatpush1.xpose.msra.mxu0 %v9087
        %9111 = vmatprep.subr.mxu0 0.0
        %9112 = vmatpush1.xpose.msra.mxu0 %v9085
        %9113 = vmatprep.subr.mxu0 0.0
        %9114 = vmatpush1.xpose.msra.mxu0 %v9083
        %9115 = vmatprep.subr.mxu0 0.0
        %9116 = vmatpush1.xpose.msra.mxu0 %v9081
        %9117 = vmatprep.subr.mxu0 0.0
        %9118 = vmatpush1.xpose.msra.mxu0 %v9079
        %9119 = vmatprep.subr.mxu0 0.0
        %9120 = vmatpush1.xpose.msra.mxu0 %v9077
        %9121 = vmatprep.subr.mxu0 0.0
        %9122 = vmatpush1.xpose.msra.mxu0 %v9075
        %9123 = vmatprep.subr.mxu0 0.0
        %9124 = vmatpush1.xpose.msra.mxu0 %v9073
        %9125 = vmatprep.subr.mxu0 0.0
        %9126 = vmatpush1.xpose.msra.mxu0 %v9071
        %9127 = vmatprep.subr.mxu0 0.0
        %9128 = vmatpush1.xpose.msra.mxu0 %v9069
        %9129 = vmatprep.subr.mxu0 0.0
        %9130 = vmatpush1.xpose.msra.mxu0 %v9067
        %9131 = vmatprep.subr.mxu0 0.0
        %9132 = vmatpush2.xpose.msra.mxu0 0.0
        %9133 = vmatprep.subr.mxu0 0.0
        %9134 = vmatpush2.xpose.msra.mxu0 0.0
        %9135 = vmatprep.subr.mxu0 0.0
        %9136 = vmatpush2.xpose.msra.mxu0 0.0
        %9137 = vmatprep.subr.mxu0 0.0
        %9138 = vmatpush2.xpose.msra.mxu0 0.0
        %9139 = vmatprep.subr.mxu0 0.0
        %9140 = vmatpush2.xpose.msra.mxu0 0.0
        %9141 = vmatprep.subr.mxu0 0.0
        %9142 = vmatpush2.xpose.msra.mxu0 0.0
        %9143 = vmatprep.subr.mxu0 0.0
        %9144 = vmatpush2.xpose.msra.mxu0 0.0
        %9145 = vmatprep.subr.mxu0 0.0
        %9146 = vmatpush2.xpose.msra.mxu0 0.0
        %9147 = vmatprep.subr.mxu0 0.0
        %9148 = vmatpush2.xpose.msra.mxu0 0.0
        %9149 = vmatprep.subr.mxu0 0.0
        %9150 = vmatpush2.xpose.msra.mxu0 0.0
        %9151 = vmatprep.subr.mxu0 0.0
        %9152 = vmatpush2.xpose.msra.mxu0 0.0
        %9153 = vmatprep.subr.mxu0 0.0
        %9154 = vmatpush2.xpose.msra.mxu0 0.0
        %9155 = vmatprep.subr.mxu0 0.0
        %9156 = vmatpush2.xpose.msra.mxu0 0.0
        %9157 = vmatprep.subr.mxu0 0.0
        %9158 = vmatpush2.xpose.msra.mxu0 0.0
        %9159 = vmatprep.subr.mxu0 0.0
        %9160 = vmatpush2.xpose.msra.mxu0 0.0
        %9161 = vmatprep.subr.mxu0 0.0
        %9162 = vmatpush2.xpose.msra.mxu0 0.0
        %9163 = vmatprep.mubr.f32.mxu0 0.0
        %9164 = vmatmul.mubr.f32.gmra.mxu0 %v9035
        %v9165 = vpop.f32.mrf.mxu0
        %v9166 = vadd.f32 0.0, %v9165
        %v9167 = vpop.f32.mrf.mxu0
        %9168 = vmatprep.mubr.f32.mxu0 0.0
        %9169 = vmatmul.mubr.f32.gmra.mxu0 %v9037
        %v9170 = vpop.f32.mrf.mxu0
        %v9171 = vadd.f32 0.0, %v9170
        %v9172 = vpop.f32.mrf.mxu0
        %9173 = vmatprep.mubr.f32.mxu0 0.0
        %9174 = vmatmul.mubr.f32.gmra.mxu0 %v9039
        %v9175 = vpop.f32.mrf.mxu0
        %v9176 = vadd.f32 0.0, %v9175
        %v9177 = vpop.f32.mrf.mxu0
        %9178 = vmatprep.mubr.f32.mxu0 0.0
        %9179 = vmatmul.mubr.f32.gmra.mxu0 %v9041
        %v9180 = vpop.f32.mrf.mxu0
        %v9181 = vadd.f32 0.0, %v9180
        %v9182 = vpop.f32.mrf.mxu0
        %9183 = vmatprep.mubr.f32.mxu0 0.0
        %9184 = vmatmul.mubr.f32.gmra.mxu0 %v9043
        %v9185 = vpop.f32.mrf.mxu0
        %v9186 = vadd.f32 0.0, %v9185
        %v9187 = vpop.f32.mrf.mxu0
        %9188 = vmatprep.mubr.f32.mxu0 0.0
        %9189 = vmatmul.mubr.f32.gmra.mxu0 %v9045
        %v9190 = vpop.f32.mrf.mxu0
        %v9191 = vadd.f32 0.0, %v9190
        %v9192 = vpop.f32.mrf.mxu0
        %9193 = vmatprep.mubr.f32.mxu0 0.0
        %9194 = vmatmul.mubr.f32.gmra.mxu0 %v9047
        %v9195 = vpop.f32.mrf.mxu0
        %v9196 = vadd.f32 0.0, %v9195
        %v9197 = vpop.f32.mrf.mxu0
        %9198 = vmatprep.mubr.f32.mxu0 0.0
        %9199 = vmatmul.mubr.f32.gmra.mxu0 %v9049
        %v9200 = vpop.f32.mrf.mxu0
        %v9201 = vadd.f32 0.0, %v9200
        %v9202 = vpop.f32.mrf.mxu0
        %9203 = vmatprep.mubr.f32.mxu0 0.0
        %9204 = vmatmul.mubr.f32.gmra.mxu0 %v9051
        %v9205 = vpop.f32.mrf.mxu0
        %v9206 = vadd.f32 0.0, %v9205
        %v9207 = vpop.f32.mrf.mxu0
        %9208 = vmatprep.mubr.f32.mxu0 0.0
        %9209 = vmatmul.mubr.f32.gmra.mxu0 %v9053
        %v9210 = vpop.f32.mrf.mxu0
        %v9211 = vadd.f32 0.0, %v9210
        %v9212 = vpop.f32.mrf.mxu0
        %9213 = vmatprep.mubr.f32.mxu0 0.0
        %9214 = vmatmul.mubr.f32.gmra.mxu0 %v9055
        %v9215 = vpop.f32.mrf.mxu0
        %v9216 = vadd.f32 0.0, %v9215
        %v9217 = vpop.f32.mrf.mxu0
        %9218 = vmatprep.mubr.f32.mxu0 0.0
        %9219 = vmatmul.mubr.f32.gmra.mxu0 %v9057
        %v9220 = vpop.f32.mrf.mxu0
        %v9221 = vadd.f32 0.0, %v9220
        %v9222 = vpop.f32.mrf.mxu0
        %9223 = vmatprep.mubr.f32.mxu0 0.0
        %9224 = vmatmul.mubr.f32.gmra.mxu0 %v9059
        %v9225 = vpop.f32.mrf.mxu0
        %v9226 = vadd.f32 0.0, %v9225
        %v9227 = vpop.f32.mrf.mxu0
        %9228 = vmatprep.mubr.f32.mxu0 0.0
        %9229 = vmatmul.mubr.f32.gmra.mxu0 %v9061
        %v9230 = vpop.f32.mrf.mxu0
        %v9231 = vadd.f32 0.0, %v9230
        %v9232 = vpop.f32.mrf.mxu0
        %9233 = vmatprep.mubr.f32.mxu0 0.0
        %9234 = vmatmul.mubr.f32.gmra.mxu0 %v9063
        %v9235 = vpop.f32.mrf.mxu0
        %v9236 = vadd.f32 0.0, %v9235
        %v9237 = vpop.f32.mrf.mxu0
        %9238 = vmatprep.mubr.f32.mxu0 0.0
        %9239 = vmatmul.mubr.f32.gmra.mxu0 %v9065
        %v9240 = vpop.f32.mrf.mxu0
        %v9241 = vadd.f32 0.0, %v9240
        %v9242 = vpop.f32.mrf.mxu0
        %9243 = vdwg.mxu0
        %9244 = vmax.xlane.f32.xlu0 %v9166
        %v9245 = vpop.xlane.xlu0 %9244
        %9246 = vmax.xlane.f32.xlu0 %v9171
        %v9247 = vpop.xlane.xlu0 %9246
        %9248 = vmax.xlane.f32.xlu0 %v9176
        %v9249 = vpop.xlane.xlu0 %9248
        %9250 = vmax.xlane.f32.xlu0 %v9181
        %v9251 = vpop.xlane.xlu0 %9250
        %9252 = vmax.xlane.f32.xlu0 %v9186
        %v9253 = vpop.xlane.xlu0 %9252
        %9254 = vmax.xlane.f32.xlu0 %v9191
        %v9255 = vpop.xlane.xlu0 %9254
        %9256 = vmax.xlane.f32.xlu0 %v9196
        %v9257 = vpop.xlane.xlu0 %9256
        %9258 = vmax.xlane.f32.xlu0 %v9201
        %v9259 = vpop.xlane.xlu0 %9258
        %9260 = vmax.xlane.f32.xlu0 %v9206
        %v9261 = vpop.xlane.xlu0 %9260
        %9262 = vmax.xlane.f32.xlu0 %v9211
        %v9263 = vpop.xlane.xlu0 %9262
        %9264 = vmax.xlane.f32.xlu0 %v9216
        %v9265 = vpop.xlane.xlu0 %9264
        %9266 = vmax.xlane.f32.xlu0 %v9221
        %v9267 = vpop.xlane.xlu0 %9266
        %9268 = vmax.xlane.f32.xlu0 %v9226
        %v9269 = vpop.xlane.xlu0 %9268
        %9270 = vmax.xlane.f32.xlu0 %v9231
        %v9271 = vpop.xlane.xlu0 %9270
        %9272 = vmax.xlane.f32.xlu0 %v9236
        %v9273 = vpop.xlane.xlu0 %9272
        %9274 = vmax.xlane.f32.xlu0 %v9241
        %v9275 = vpop.xlane.xlu0 %9274
        %v9276 = vsub.f32 %v9166, %v9245
        %v9277 = vsub.f32 %v9171, %v9247
        %v9278 = vsub.f32 %v9176, %v9249
        %v9279 = vsub.f32 %v9181, %v9251
        %v9280 = vsub.f32 %v9186, %v9253
        %v9281 = vsub.f32 %v9191, %v9255
        %v9282 = vsub.f32 %v9196, %v9257
        %v9283 = vsub.f32 %v9201, %v9259
        %v9284 = vsub.f32 %v9206, %v9261
        %v9285 = vsub.f32 %v9211, %v9263
        %v9286 = vsub.f32 %v9216, %v9265
        %v9287 = vsub.f32 %v9221, %v9267
        %v9288 = vsub.f32 %v9226, %v9269
        %v9289 = vsub.f32 %v9231, %v9271
        %v9290 = vsub.f32 %v9236, %v9273
        %v9291 = vsub.f32 %v9241, %v9275
        %v9292 = vmul.f32 %v9276, 1.442695
        %v9293 = vpow.pop %v9292
        %v9294 = vmul.f32 %v9277, 1.442695
        %v9295 = vpow.pop %v9294
        %v9296 = vmul.f32 %v9278, 1.442695
        %v9297 = vpow.pop %v9296
        %v9298 = vmul.f32 %v9279, 1.442695
        %v9299 = vpow.pop %v9298
        %v9300 = vmul.f32 %v9280, 1.442695
        %v9301 = vpow.pop %v9300
        %v9302 = vmul.f32 %v9281, 1.442695
        %v9303 = vpow.pop %v9302
        %v9304 = vmul.f32 %v9282, 1.442695
        %v9305 = vpow.pop %v9304
        %v9306 = vmul.f32 %v9283, 1.442695
        %v9307 = vpow.pop %v9306
        %v9308 = vmul.f32 %v9284, 1.442695
        %v9309 = vpow.pop %v9308
        %v9310 = vmul.f32 %v9285, 1.442695
        %v9311 = vpow.pop %v9310
        %v9312 = vmul.f32 %v9286, 1.442695
        %v9313 = vpow.pop %v9312
        %v9314 = vmul.f32 %v9287, 1.442695
        %v9315 = vpow.pop %v9314
        %v9316 = vmul.f32 %v9288, 1.442695
        %v9317 = vpow.pop %v9316
        %v9318 = vmul.f32 %v9289, 1.442695
        %v9319 = vpow.pop %v9318
        %v9320 = vmul.f32 %v9290, 1.442695
        %v9321 = vpow.pop %v9320
        %v9322 = vmul.f32 %v9291, 1.442695
        %v9323 = vpow.pop %v9322
        %9324 = vadd.xlane.f32.xlu0 %v9293
        %v9325 = vpop.xlane.xlu0 %9324
        %9326 = vadd.xlane.f32.xlu0 %v9295
        %v9327 = vpop.xlane.xlu0 %9326
        %9328 = vadd.xlane.f32.xlu0 %v9297
        %v9329 = vpop.xlane.xlu0 %9328
        %9330 = vadd.xlane.f32.xlu0 %v9299
        %v9331 = vpop.xlane.xlu0 %9330
        %9332 = vadd.xlane.f32.xlu0 %v9301
        %v9333 = vpop.xlane.xlu0 %9332
        %9334 = vadd.xlane.f32.xlu0 %v9303
        %v9335 = vpop.xlane.xlu0 %9334
        %9336 = vadd.xlane.f32.xlu0 %v9305
        %v9337 = vpop.xlane.xlu0 %9336
        %9338 = vadd.xlane.f32.xlu0 %v9307
        %v9339 = vpop.xlane.xlu0 %9338
        %9340 = vadd.xlane.f32.xlu0 %v9309
        %v9341 = vpop.xlane.xlu0 %9340
        %9342 = vadd.xlane.f32.xlu0 %v9311
        %v9343 = vpop.xlane.xlu0 %9342
        %9344 = vadd.xlane.f32.xlu0 %v9313
        %v9345 = vpop.xlane.xlu0 %9344
        %9346 = vadd.xlane.f32.xlu0 %v9315
        %v9347 = vpop.xlane.xlu0 %9346
        %9348 = vadd.xlane.f32.xlu0 %v9317
        %v9349 = vpop.xlane.xlu0 %9348
        %9350 = vadd.xlane.f32.xlu0 %v9319
        %v9351 = vpop.xlane.xlu0 %9350
        %9352 = vadd.xlane.f32.xlu0 %v9321
        %v9353 = vpop.xlane.xlu0 %9352
        %9354 = vadd.xlane.f32.xlu0 %v9323
        %v9355 = vpop.xlane.xlu0 %9354
        %v9356 = vrcp.pop %v9325
        %v9357 = vrcp.pop %v9327
        %v9358 = vrcp.pop %v9329
        %v9359 = vrcp.pop %v9331
        %v9360 = vrcp.pop %v9333
        %v9361 = vrcp.pop %v9335
        %v9362 = vrcp.pop %v9337
        %v9363 = vrcp.pop %v9339
        %v9364 = vrcp.pop %v9341
        %v9365 = vrcp.pop %v9343
        %v9366 = vrcp.pop %v9345
        %v9367 = vrcp.pop %v9347
        %v9368 = vrcp.pop %v9349
        %v9369 = vrcp.pop %v9351
        %v9370 = vrcp.pop %v9353
        %v9371 = vrcp.pop %v9355
        %v9372 = vmul.f32 %v9293, %v9356
        %v9373 = vmul.f32 %v9295, %v9357
        %v9374 = vmul.f32 %v9297, %v9358
        %v9375 = vmul.f32 %v9299, %v9359
        %v9376 = vmul.f32 %v9301, %v9360
        %v9377 = vmul.f32 %v9303, %v9361
        %v9378 = vmul.f32 %v9305, %v9362
        %v9379 = vmul.f32 %v9307, %v9363
        %v9380 = vmul.f32 %v9309, %v9364
        %v9381 = vmul.f32 %v9311, %v9365
        %v9382 = vmul.f32 %v9313, %v9366
        %v9383 = vmul.f32 %v9315, %v9367
        %v9384 = vmul.f32 %v9317, %v9368
        %v9385 = vmul.f32 %v9319, %v9369
        %v9386 = vmul.f32 %v9321, %v9370
        %v9387 = vmul.f32 %v9323, %v9371
        %9388 = vrot.lane.b32.xlu0 %v2326, 32
        %v9389 = vpop.permute.xlu0 %9388
        %9390 = vrot.lane.b32.xlu0 %v2331, 32
        %v9391 = vpop.permute.xlu0 %9390
        %9392 = vrot.lane.b32.xlu0 %v2336, 32
        %v9393 = vpop.permute.xlu0 %9392
        %9394 = vrot.lane.b32.xlu0 %v2341, 32
        %v9395 = vpop.permute.xlu0 %9394
        %9396 = vrot.lane.b32.xlu0 %v2346, 32
        %v9397 = vpop.permute.xlu0 %9396
        %9398 = vrot.lane.b32.xlu0 %v2351, 32
        %v9399 = vpop.permute.xlu0 %9398
        %9400 = vrot.lane.b32.xlu0 %v2356, 32
        %v9401 = vpop.permute.xlu0 %9400
        %9402 = vrot.lane.b32.xlu0 %v2361, 32
        %v9403 = vpop.permute.xlu0 %9402
        %9404 = vrot.lane.b32.xlu0 %v2366, 32
        %v9405 = vpop.permute.xlu0 %9404
        %9406 = vrot.lane.b32.xlu0 %v2371, 32
        %v9407 = vpop.permute.xlu0 %9406
        %9408 = vrot.lane.b32.xlu0 %v2376, 32
        %v9409 = vpop.permute.xlu0 %9408
        %9410 = vrot.lane.b32.xlu0 %v2381, 32
        %v9411 = vpop.permute.xlu0 %9410
        %9412 = vrot.lane.b32.xlu0 %v2386, 32
        %v9413 = vpop.permute.xlu0 %9412
        %9414 = vrot.lane.b32.xlu0 %v2391, 32
        %v9415 = vpop.permute.xlu0 %9414
        %9416 = vrot.lane.b32.xlu0 %v2396, 32
        %v9417 = vpop.permute.xlu0 %9416
        %9418 = vrot.lane.b32.xlu0 %v2401, 32
        %v9419 = vpop.permute.xlu0 %9418
        %9436 = vmatprep.subr.mxu0 0.0
        %9437 = vmatpush1.msra.mxu0 %v9419
        %9438 = vmatprep.subr.mxu0 0.0
        %9439 = vmatpush1.msra.mxu0 %v9417
        %9440 = vmatprep.subr.mxu0 0.0
        %9441 = vmatpush1.msra.mxu0 %v9415
        %9442 = vmatprep.subr.mxu0 0.0
        %9443 = vmatpush1.msra.mxu0 %v9413
        %9444 = vmatprep.subr.mxu0 0.0
        %9445 = vmatpush1.msra.mxu0 %v9411
        %9446 = vmatprep.subr.mxu0 0.0
        %9447 = vmatpush1.msra.mxu0 %v9409
        %9448 = vmatprep.subr.mxu0 0.0
        %9449 = vmatpush1.msra.mxu0 %v9407
        %9450 = vmatprep.subr.mxu0 0.0
        %9451 = vmatpush1.msra.mxu0 %v9405
        %9452 = vmatprep.subr.mxu0 0.0
        %9453 = vmatpush1.msra.mxu0 %v9403
        %9454 = vmatprep.subr.mxu0 0.0
        %9455 = vmatpush1.msra.mxu0 %v9401
        %9456 = vmatprep.subr.mxu0 0.0
        %9457 = vmatpush1.msra.mxu0 %v9399
        %9458 = vmatprep.subr.mxu0 0.0
        %9459 = vmatpush1.msra.mxu0 %v9397
        %9460 = vmatprep.subr.mxu0 0.0
        %9461 = vmatpush1.msra.mxu0 %v9395
        %9462 = vmatprep.subr.mxu0 0.0
        %9463 = vmatpush1.msra.mxu0 %v9393
        %9464 = vmatprep.subr.mxu0 0.0
        %9465 = vmatpush1.msra.mxu0 %v9391
        %9466 = vmatprep.subr.mxu0 0.0
        %9467 = vmatpush1.msra.mxu0 %v9389
        %9468 = vmatprep.subr.mxu0 0.0
        %9469 = vmatpush2.msra.mxu0 0.0
        %9470 = vmatprep.subr.mxu0 0.0
        %9471 = vmatpush2.msra.mxu0 0.0
        %9472 = vmatprep.subr.mxu0 0.0
        %9473 = vmatpush2.msra.mxu0 0.0
        %9474 = vmatprep.subr.mxu0 0.0
        %9475 = vmatpush2.msra.mxu0 0.0
        %9476 = vmatprep.subr.mxu0 0.0
        %9477 = vmatpush2.msra.mxu0 0.0
        %9478 = vmatprep.subr.mxu0 0.0
        %9479 = vmatpush2.msra.mxu0 0.0
        %9480 = vmatprep.subr.mxu0 0.0
        %9481 = vmatpush2.msra.mxu0 0.0
        %9482 = vmatprep.subr.mxu0 0.0
        %9483 = vmatpush2.msra.mxu0 0.0
        %9484 = vmatprep.subr.mxu0 0.0
        %9485 = vmatpush2.msra.mxu0 0.0
        %9486 = vmatprep.subr.mxu0 0.0
        %9487 = vmatpush2.msra.mxu0 0.0
        %9488 = vmatprep.subr.mxu0 0.0
        %9489 = vmatpush2.msra.mxu0 0.0
        %9490 = vmatprep.subr.mxu0 0.0
        %9491 = vmatpush2.msra.mxu0 0.0
        %9492 = vmatprep.subr.mxu0 0.0
        %9493 = vmatpush2.msra.mxu0 0.0
        %9494 = vmatprep.subr.mxu0 0.0
        %9495 = vmatpush2.msra.mxu0 0.0
        %9496 = vmatprep.subr.mxu0 0.0
        %9497 = vmatpush2.msra.mxu0 0.0
        %9498 = vmatprep.subr.mxu0 0.0
        %9499 = vmatpush2.msra.mxu0 0.0
        %9500 = vmatprep.mubr.f32.mxu0 0.0
        %9501 = vmatmul.mubr.f32.gmra.mxu0 %v9372
        %v9502 = vpop.f32.mrf.mxu0
        %v9503 = vadd.f32 0.0, %v9502
        %v9504 = vpop.f32.mrf.mxu0
        %9505 = vmatprep.mubr.f32.mxu0 0.0
        %9506 = vmatmul.mubr.f32.gmra.mxu0 %v9373
        %v9507 = vpop.f32.mrf.mxu0
        %v9508 = vadd.f32 0.0, %v9507
        %v9509 = vpop.f32.mrf.mxu0
        %9510 = vmatprep.mubr.f32.mxu0 0.0
        %9511 = vmatmul.mubr.f32.gmra.mxu0 %v9374
        %v9512 = vpop.f32.mrf.mxu0
        %v9513 = vadd.f32 0.0, %v9512
        %v9514 = vpop.f32.mrf.mxu0
        %9515 = vmatprep.mubr.f32.mxu0 0.0
        %9516 = vmatmul.mubr.f32.gmra.mxu0 %v9375
        %v9517 = vpop.f32.mrf.mxu0
        %v9518 = vadd.f32 0.0, %v9517
        %v9519 = vpop.f32.mrf.mxu0
        %9520 = vmatprep.mubr.f32.mxu0 0.0
        %9521 = vmatmul.mubr.f32.gmra.mxu0 %v9376
        %v9522 = vpop.f32.mrf.mxu0
        %v9523 = vadd.f32 0.0, %v9522
        %v9524 = vpop.f32.mrf.mxu0
        %9525 = vmatprep.mubr.f32.mxu0 0.0
        %9526 = vmatmul.mubr.f32.gmra.mxu0 %v9377
        %v9527 = vpop.f32.mrf.mxu0
        %v9528 = vadd.f32 0.0, %v9527
        %v9529 = vpop.f32.mrf.mxu0
        %9530 = vmatprep.mubr.f32.mxu0 0.0
        %9531 = vmatmul.mubr.f32.gmra.mxu0 %v9378
        %v9532 = vpop.f32.mrf.mxu0
        %v9533 = vadd.f32 0.0, %v9532
        %v9534 = vpop.f32.mrf.mxu0
        %9535 = vmatprep.mubr.f32.mxu0 0.0
        %9536 = vmatmul.mubr.f32.gmra.mxu0 %v9379
        %v9537 = vpop.f32.mrf.mxu0
        %v9538 = vadd.f32 0.0, %v9537
        %v9539 = vpop.f32.mrf.mxu0
        %9540 = vmatprep.mubr.f32.mxu0 0.0
        %9541 = vmatmul.mubr.f32.gmra.mxu0 %v9380
        %v9542 = vpop.f32.mrf.mxu0
        %v9543 = vadd.f32 0.0, %v9542
        %v9544 = vpop.f32.mrf.mxu0
        %9545 = vmatprep.mubr.f32.mxu0 0.0
        %9546 = vmatmul.mubr.f32.gmra.mxu0 %v9381
        %v9547 = vpop.f32.mrf.mxu0
        %v9548 = vadd.f32 0.0, %v9547
        %v9549 = vpop.f32.mrf.mxu0
        %9550 = vmatprep.mubr.f32.mxu0 0.0
        %9551 = vmatmul.mubr.f32.gmra.mxu0 %v9382
        %v9552 = vpop.f32.mrf.mxu0
        %v9553 = vadd.f32 0.0, %v9552
        %v9554 = vpop.f32.mrf.mxu0
        %9555 = vmatprep.mubr.f32.mxu0 0.0
        %9556 = vmatmul.mubr.f32.gmra.mxu0 %v9383
        %v9557 = vpop.f32.mrf.mxu0
        %v9558 = vadd.f32 0.0, %v9557
        %v9559 = vpop.f32.mrf.mxu0
        %9560 = vmatprep.mubr.f32.mxu0 0.0
        %9561 = vmatmul.mubr.f32.gmra.mxu0 %v9384
        %v9562 = vpop.f32.mrf.mxu0
        %v9563 = vadd.f32 0.0, %v9562
        %v9564 = vpop.f32.mrf.mxu0
        %9565 = vmatprep.mubr.f32.mxu0 0.0
        %9566 = vmatmul.mubr.f32.gmra.mxu0 %v9385
        %v9567 = vpop.f32.mrf.mxu0
        %v9568 = vadd.f32 0.0, %v9567
        %v9569 = vpop.f32.mrf.mxu0
        %9570 = vmatprep.mubr.f32.mxu0 0.0
        %9571 = vmatmul.mubr.f32.gmra.mxu0 %v9386
        %v9572 = vpop.f32.mrf.mxu0
        %v9573 = vadd.f32 0.0, %v9572
        %v9574 = vpop.f32.mrf.mxu0
        %9575 = vmatprep.mubr.f32.mxu0 0.0
        %9576 = vmatmul.mubr.f32.gmra.mxu0 %v9387
        %v9577 = vpop.f32.mrf.mxu0
        %v9578 = vadd.f32 0.0, %v9577
        %v9579 = vpop.f32.mrf.mxu0
        %9580 = vdwg.mxu0
        %9597 = vrot.lane.b32.xlu0 %v3531, 32
        %v9598 = vpop.permute.xlu0 %9597
        %9599 = vrot.lane.b32.xlu0 %v3536, 32
        %v9600 = vpop.permute.xlu0 %9599
        %9601 = vrot.lane.b32.xlu0 %v3541, 32
        %v9602 = vpop.permute.xlu0 %9601
        %9603 = vrot.lane.b32.xlu0 %v3546, 32
        %v9604 = vpop.permute.xlu0 %9603
        %9605 = vrot.lane.b32.xlu0 %v3551, 32
        %v9606 = vpop.permute.xlu0 %9605
        %9607 = vrot.lane.b32.xlu0 %v3556, 32
        %v9608 = vpop.permute.xlu0 %9607
        %9609 = vrot.lane.b32.xlu0 %v3561, 32
        %v9610 = vpop.permute.xlu0 %9609
        %9611 = vrot.lane.b32.xlu0 %v3566, 32
        %v9612 = vpop.permute.xlu0 %9611
        %9613 = vrot.lane.b32.xlu0 %v3571, 32
        %v9614 = vpop.permute.xlu0 %9613
        %9615 = vrot.lane.b32.xlu0 %v3576, 32
        %v9616 = vpop.permute.xlu0 %9615
        %9617 = vrot.lane.b32.xlu0 %v3581, 32
        %v9618 = vpop.permute.xlu0 %9617
        %9619 = vrot.lane.b32.xlu0 %v3586, 32
        %v9620 = vpop.permute.xlu0 %9619
        %9621 = vrot.lane.b32.xlu0 %v3591, 32
        %v9622 = vpop.permute.xlu0 %9621
        %9623 = vrot.lane.b32.xlu0 %v3596, 32
        %v9624 = vpop.permute.xlu0 %9623
        %9625 = vrot.lane.b32.xlu0 %v3601, 32
        %v9626 = vpop.permute.xlu0 %9625
        %9627 = vrot.lane.b32.xlu0 %v3606, 32
        %v9628 = vpop.permute.xlu0 %9627
        %9661 = vrot.lane.b32.xlu0 %v4141, 64
        %v9662 = vpop.permute.xlu0 %9661
        %9663 = vrot.lane.b32.xlu0 %v4146, 64
        %v9664 = vpop.permute.xlu0 %9663
        %9665 = vrot.lane.b32.xlu0 %v4151, 64
        %v9666 = vpop.permute.xlu0 %9665
        %9667 = vrot.lane.b32.xlu0 %v4156, 64
        %v9668 = vpop.permute.xlu0 %9667
        %9669 = vrot.lane.b32.xlu0 %v4161, 64
        %v9670 = vpop.permute.xlu0 %9669
        %9671 = vrot.lane.b32.xlu0 %v4166, 64
        %v9672 = vpop.permute.xlu0 %9671
        %9673 = vrot.lane.b32.xlu0 %v4171, 64
        %v9674 = vpop.permute.xlu0 %9673
        %9675 = vrot.lane.b32.xlu0 %v4176, 64
        %v9676 = vpop.permute.xlu0 %9675
        %9677 = vrot.lane.b32.xlu0 %v4181, 64
        %v9678 = vpop.permute.xlu0 %9677
        %9679 = vrot.lane.b32.xlu0 %v4186, 64
        %v9680 = vpop.permute.xlu0 %9679
        %9681 = vrot.lane.b32.xlu0 %v4191, 64
        %v9682 = vpop.permute.xlu0 %9681
        %9683 = vrot.lane.b32.xlu0 %v4196, 64
        %v9684 = vpop.permute.xlu0 %9683
        %9685 = vrot.lane.b32.xlu0 %v4201, 64
        %v9686 = vpop.permute.xlu0 %9685
        %9687 = vrot.lane.b32.xlu0 %v4206, 64
        %v9688 = vpop.permute.xlu0 %9687
        %9689 = vrot.lane.b32.xlu0 %v4211, 64
        %v9690 = vpop.permute.xlu0 %9689
        %9691 = vrot.lane.b32.xlu0 %v4216, 64
        %v9692 = vpop.permute.xlu0 %9691
        %9725 = vrot.lane.b32.xlu0 %v4751, 96
        %v9726 = vpop.permute.xlu0 %9725
        %9727 = vrot.lane.b32.xlu0 %v4756, 96
        %v9728 = vpop.permute.xlu0 %9727
        %9729 = vrot.lane.b32.xlu0 %v4761, 96
        %v9730 = vpop.permute.xlu0 %9729
        %9731 = vrot.lane.b32.xlu0 %v4766, 96
        %v9732 = vpop.permute.xlu0 %9731
        %9733 = vrot.lane.b32.xlu0 %v4771, 96
        %v9734 = vpop.permute.xlu0 %9733
        %9735 = vrot.lane.b32.xlu0 %v4776, 96
        %v9736 = vpop.permute.xlu0 %9735
        %9737 = vrot.lane.b32.xlu0 %v4781, 96
        %v9738 = vpop.permute.xlu0 %9737
        %9739 = vrot.lane.b32.xlu0 %v4786, 96
        %v9740 = vpop.permute.xlu0 %9739
        %9741 = vrot.lane.b32.xlu0 %v4791, 96
        %v9742 = vpop.permute.xlu0 %9741
        %9743 = vrot.lane.b32.xlu0 %v4796, 96
        %v9744 = vpop.permute.xlu0 %9743
        %9745 = vrot.lane.b32.xlu0 %v4801, 96
        %v9746 = vpop.permute.xlu0 %9745
        %9747 = vrot.lane.b32.xlu0 %v4806, 96
        %v9748 = vpop.permute.xlu0 %9747
        %9749 = vrot.lane.b32.xlu0 %v4811, 96
        %v9750 = vpop.permute.xlu0 %9749
        %9751 = vrot.lane.b32.xlu0 %v4816, 96
        %v9752 = vpop.permute.xlu0 %9751
        %9753 = vrot.lane.b32.xlu0 %v4821, 96
        %v9754 = vpop.permute.xlu0 %9753
        %9755 = vrot.lane.b32.xlu0 %v4826, 96
        %v9756 = vpop.permute.xlu0 %9755
        %9789 = vrot.lane.b32.xlu0 %v5907, 32
        %v9790 = vpop.permute.xlu0 %9789
        %9791 = vrot.lane.b32.xlu0 %v5912, 32
        %v9792 = vpop.permute.xlu0 %9791
        %9793 = vrot.lane.b32.xlu0 %v5917, 32
        %v9794 = vpop.permute.xlu0 %9793
        %9795 = vrot.lane.b32.xlu0 %v5922, 32
        %v9796 = vpop.permute.xlu0 %9795
        %9797 = vrot.lane.b32.xlu0 %v5927, 32
        %v9798 = vpop.permute.xlu0 %9797
        %9799 = vrot.lane.b32.xlu0 %v5932, 32
        %v9800 = vpop.permute.xlu0 %9799
        %9801 = vrot.lane.b32.xlu0 %v5937, 32
        %v9802 = vpop.permute.xlu0 %9801
        %9803 = vrot.lane.b32.xlu0 %v5942, 32
        %v9804 = vpop.permute.xlu0 %9803
        %9805 = vrot.lane.b32.xlu0 %v5947, 32
        %v9806 = vpop.permute.xlu0 %9805
        %9807 = vrot.lane.b32.xlu0 %v5952, 32
        %v9808 = vpop.permute.xlu0 %9807
        %9809 = vrot.lane.b32.xlu0 %v5957, 32
        %v9810 = vpop.permute.xlu0 %9809
        %9811 = vrot.lane.b32.xlu0 %v5962, 32
        %v9812 = vpop.permute.xlu0 %9811
        %9813 = vrot.lane.b32.xlu0 %v5967, 32
        %v9814 = vpop.permute.xlu0 %9813
        %9815 = vrot.lane.b32.xlu0 %v5972, 32
        %v9816 = vpop.permute.xlu0 %9815
        %9817 = vrot.lane.b32.xlu0 %v5977, 32
        %v9818 = vpop.permute.xlu0 %9817
        %9819 = vrot.lane.b32.xlu0 %v5982, 32
        %v9820 = vpop.permute.xlu0 %9819
        %9853 = vrot.lane.b32.xlu0 %v6517, 64
        %v9854 = vpop.permute.xlu0 %9853
        %9855 = vrot.lane.b32.xlu0 %v6522, 64
        %v9856 = vpop.permute.xlu0 %9855
        %9857 = vrot.lane.b32.xlu0 %v6527, 64
        %v9858 = vpop.permute.xlu0 %9857
        %9859 = vrot.lane.b32.xlu0 %v6532, 64
        %v9860 = vpop.permute.xlu0 %9859
        %9861 = vrot.lane.b32.xlu0 %v6537, 64
        %v9862 = vpop.permute.xlu0 %9861
        %9863 = vrot.lane.b32.xlu0 %v6542, 64
        %v9864 = vpop.permute.xlu0 %9863
        %9865 = vrot.lane.b32.xlu0 %v6547, 64
        %v9866 = vpop.permute.xlu0 %9865
        %9867 = vrot.lane.b32.xlu0 %v6552, 64
        %v9868 = vpop.permute.xlu0 %9867
        %9869 = vrot.lane.b32.xlu0 %v6557, 64
        %v9870 = vpop.permute.xlu0 %9869
        %9871 = vrot.lane.b32.xlu0 %v6562, 64
        %v9872 = vpop.permute.xlu0 %9871
        %9873 = vrot.lane.b32.xlu0 %v6567, 64
        %v9874 = vpop.permute.xlu0 %9873
        %9875 = vrot.lane.b32.xlu0 %v6572, 64
        %v9876 = vpop.permute.xlu0 %9875
        %9877 = vrot.lane.b32.xlu0 %v6577, 64
        %v9878 = vpop.permute.xlu0 %9877
        %9879 = vrot.lane.b32.xlu0 %v6582, 64
        %v9880 = vpop.permute.xlu0 %9879
        %9881 = vrot.lane.b32.xlu0 %v6587, 64
        %v9882 = vpop.permute.xlu0 %9881
        %9883 = vrot.lane.b32.xlu0 %v6592, 64
        %v9884 = vpop.permute.xlu0 %9883
        %9917 = vrot.lane.b32.xlu0 %v7127, 96
        %v9918 = vpop.permute.xlu0 %9917
        %9919 = vrot.lane.b32.xlu0 %v7132, 96
        %v9920 = vpop.permute.xlu0 %9919
        %9921 = vrot.lane.b32.xlu0 %v7137, 96
        %v9922 = vpop.permute.xlu0 %9921
        %9923 = vrot.lane.b32.xlu0 %v7142, 96
        %v9924 = vpop.permute.xlu0 %9923
        %9925 = vrot.lane.b32.xlu0 %v7147, 96
        %v9926 = vpop.permute.xlu0 %9925
        %9927 = vrot.lane.b32.xlu0 %v7152, 96
        %v9928 = vpop.permute.xlu0 %9927
        %9929 = vrot.lane.b32.xlu0 %v7157, 96
        %v9930 = vpop.permute.xlu0 %9929
        %9931 = vrot.lane.b32.xlu0 %v7162, 96
        %v9932 = vpop.permute.xlu0 %9931
        %9933 = vrot.lane.b32.xlu0 %v7167, 96
        %v9934 = vpop.permute.xlu0 %9933
        %9935 = vrot.lane.b32.xlu0 %v7172, 96
        %v9936 = vpop.permute.xlu0 %9935
        %9937 = vrot.lane.b32.xlu0 %v7177, 96
        %v9938 = vpop.permute.xlu0 %9937
        %9939 = vrot.lane.b32.xlu0 %v7182, 96
        %v9940 = vpop.permute.xlu0 %9939
        %9941 = vrot.lane.b32.xlu0 %v7187, 96
        %v9942 = vpop.permute.xlu0 %9941
        %9943 = vrot.lane.b32.xlu0 %v7192, 96
        %v9944 = vpop.permute.xlu0 %9943
        %9945 = vrot.lane.b32.xlu0 %v7197, 96
        %v9946 = vpop.permute.xlu0 %9945
        %9947 = vrot.lane.b32.xlu0 %v7202, 96
        %v9948 = vpop.permute.xlu0 %9947
        %9981 = vrot.lane.b32.xlu0 %v8283, 32
        %v9982 = vpop.permute.xlu0 %9981
        %9983 = vrot.lane.b32.xlu0 %v8288, 32
        %v9984 = vpop.permute.xlu0 %9983
        %9985 = vrot.lane.b32.xlu0 %v8293, 32
        %v9986 = vpop.permute.xlu0 %9985
        %9987 = vrot.lane.b32.xlu0 %v8298, 32
        %v9988 = vpop.permute.xlu0 %9987
        %9989 = vrot.lane.b32.xlu0 %v8303, 32
        %v9990 = vpop.permute.xlu0 %9989
        %9991 = vrot.lane.b32.xlu0 %v8308, 32
        %v9992 = vpop.permute.xlu0 %9991
        %9993 = vrot.lane.b32.xlu0 %v8313, 32
        %v9994 = vpop.permute.xlu0 %9993
        %9995 = vrot.lane.b32.xlu0 %v8318, 32
        %v9996 = vpop.permute.xlu0 %9995
        %9997 = vrot.lane.b32.xlu0 %v8323, 32
        %v9998 = vpop.permute.xlu0 %9997
        %9999 = vrot.lane.b32.xlu0 %v8328, 32
        %v10000 = vpop.permute.xlu0 %9999
        %10001 = vrot.lane.b32.xlu0 %v8333, 32
        %v10002 = vpop.permute.xlu0 %10001
        %10003 = vrot.lane.b32.xlu0 %v8338, 32
        %v10004 = vpop.permute.xlu0 %10003
        %10005 = vrot.lane.b32.xlu0 %v8343, 32
        %v10006 = vpop.permute.xlu0 %10005
        %10007 = vrot.lane.b32.xlu0 %v8348, 32
        %v10008 = vpop.permute.xlu0 %10007
        %10009 = vrot.lane.b32.xlu0 %v8353, 32
        %v10010 = vpop.permute.xlu0 %10009
        %10011 = vrot.lane.b32.xlu0 %v8358, 32
        %v10012 = vpop.permute.xlu0 %10011
        %10045 = vrot.lane.b32.xlu0 %v8893, 64
        %v10046 = vpop.permute.xlu0 %10045
        %10047 = vrot.lane.b32.xlu0 %v8898, 64
        %v10048 = vpop.permute.xlu0 %10047
        %10049 = vrot.lane.b32.xlu0 %v8903, 64
        %v10050 = vpop.permute.xlu0 %10049
        %10051 = vrot.lane.b32.xlu0 %v8908, 64
        %v10052 = vpop.permute.xlu0 %10051
        %10053 = vrot.lane.b32.xlu0 %v8913, 64
        %v10054 = vpop.permute.xlu0 %10053
        %10055 = vrot.lane.b32.xlu0 %v8918, 64
        %v10056 = vpop.permute.xlu0 %10055
        %10057 = vrot.lane.b32.xlu0 %v8923, 64
        %v10058 = vpop.permute.xlu0 %10057
        %10059 = vrot.lane.b32.xlu0 %v8928, 64
        %v10060 = vpop.permute.xlu0 %10059
        %10061 = vrot.lane.b32.xlu0 %v8933, 64
        %v10062 = vpop.permute.xlu0 %10061
        %10063 = vrot.lane.b32.xlu0 %v8938, 64
        %v10064 = vpop.permute.xlu0 %10063
        %10065 = vrot.lane.b32.xlu0 %v8943, 64
        %v10066 = vpop.permute.xlu0 %10065
        %10067 = vrot.lane.b32.xlu0 %v8948, 64
        %v10068 = vpop.permute.xlu0 %10067
        %10069 = vrot.lane.b32.xlu0 %v8953, 64
        %v10070 = vpop.permute.xlu0 %10069
        %10071 = vrot.lane.b32.xlu0 %v8958, 64
        %v10072 = vpop.permute.xlu0 %10071
        %10073 = vrot.lane.b32.xlu0 %v8963, 64
        %v10074 = vpop.permute.xlu0 %10073
        %10075 = vrot.lane.b32.xlu0 %v8968, 64
        %v10076 = vpop.permute.xlu0 %10075
        %10109 = vrot.lane.b32.xlu0 %v9503, 96
        %v10110 = vpop.permute.xlu0 %10109
        %10111 = vrot.lane.b32.xlu0 %v9508, 96
        %v10112 = vpop.permute.xlu0 %10111
        %10113 = vrot.lane.b32.xlu0 %v9513, 96
        %v10114 = vpop.permute.xlu0 %10113
        %10115 = vrot.lane.b32.xlu0 %v9518, 96
        %v10116 = vpop.permute.xlu0 %10115
        %10117 = vrot.lane.b32.xlu0 %v9523, 96
        %v10118 = vpop.permute.xlu0 %10117
        %10119 = vrot.lane.b32.xlu0 %v9528, 96
        %v10120 = vpop.permute.xlu0 %10119
        %10121 = vrot.lane.b32.xlu0 %v9533, 96
        %v10122 = vpop.permute.xlu0 %10121
        %10123 = vrot.lane.b32.xlu0 %v9538, 96
        %v10124 = vpop.permute.xlu0 %10123
        %10125 = vrot.lane.b32.xlu0 %v9543, 96
        %v10126 = vpop.permute.xlu0 %10125
        %10127 = vrot.lane.b32.xlu0 %v9548, 96
        %v10128 = vpop.permute.xlu0 %10127
        %10129 = vrot.lane.b32.xlu0 %v9553, 96
        %v10130 = vpop.permute.xlu0 %10129
        %10131 = vrot.lane.b32.xlu0 %v9558, 96
        %v10132 = vpop.permute.xlu0 %10131
        %10133 = vrot.lane.b32.xlu0 %v9563, 96
        %v10134 = vpop.permute.xlu0 %10133
        %10135 = vrot.lane.b32.xlu0 %v9568, 96
        %v10136 = vpop.permute.xlu0 %10135
        %10137 = vrot.lane.b32.xlu0 %v9573, 96
        %v10138 = vpop.permute.xlu0 %10137
        %10139 = vrot.lane.b32.xlu0 %v9578, 96
        %v10140 = vpop.permute.xlu0 %10139
        %v10157 = vsel %vm2452, %v2905, %v9598
        %v10158 = vsel %vm2452, %v2910, %v9600
        %v10159 = vsel %vm2452, %v2915, %v9602
        %v10160 = vsel %vm2452, %v2920, %v9604
        %v10161 = vsel %vm2452, %v2925, %v9606
        %v10162 = vsel %vm2452, %v2930, %v9608
        %v10163 = vsel %vm2452, %v2935, %v9610
        %v10164 = vsel %vm2452, %v2940, %v9612
        %v10165 = vsel %vm2452, %v2945, %v9614
        %v10166 = vsel %vm2452, %v2950, %v9616
        %v10167 = vsel %vm2452, %v2955, %v9618
        %v10168 = vsel %vm2452, %v2960, %v9620
        %v10169 = vsel %vm2452, %v2965, %v9622
        %v10170 = vsel %vm2452, %v2970, %v9624
        %v10171 = vsel %vm2452, %v2975, %v9626
        %v10172 = vsel %vm2452, %v2980, %v9628
        %vm10173 = vcmask 523264
        %v10174 = vsel %vm10173, %v10157, %v9662
        %v10175 = vsel %vm10173, %v10158, %v9664
        %v10176 = vsel %vm10173, %v10159, %v9666
        %v10177 = vsel %vm10173, %v10160, %v9668
        %v10178 = vsel %vm10173, %v10161, %v9670
        %v10179 = vsel %vm10173, %v10162, %v9672
        %v10180 = vsel %vm10173, %v10163, %v9674
        %v10181 = vsel %vm10173, %v10164, %v9676
        %v10182 = vsel %vm10173, %v10165, %v9678
        %v10183 = vsel %vm10173, %v10166, %v9680
        %v10184 = vsel %vm10173, %v10167, %v9682
        %v10185 = vsel %vm10173, %v10168, %v9684
        %v10186 = vsel %vm10173, %v10169, %v9686
        %v10187 = vsel %vm10173, %v10170, %v9688
        %v10188 = vsel %vm10173, %v10171, %v9690
        %v10189 = vsel %vm10173, %v10172, %v9692
        %vm10190 = vcmask 785408
        %v10191 = vsel %vm10190, %v10174, %v9726
        %v10192 = vsel %vm10190, %v10175, %v9728
        %v10193 = vsel %vm10190, %v10176, %v9730
        %v10194 = vsel %vm10190, %v10177, %v9732
        %v10195 = vsel %vm10190, %v10178, %v9734
        %v10196 = vsel %vm10190, %v10179, %v9736
        %v10197 = vsel %vm10190, %v10180, %v9738
        %v10198 = vsel %vm10190, %v10181, %v9740
        %v10199 = vsel %vm10190, %v10182, %v9742
        %v10200 = vsel %vm10190, %v10183, %v9744
        %v10201 = vsel %vm10190, %v10184, %v9746
        %v10202 = vsel %vm10190, %v10185, %v9748
        %v10203 = vsel %vm10190, %v10186, %v9750
        %v10204 = vsel %vm10190, %v10187, %v9752
        %v10205 = vsel %vm10190, %v10188, %v9754
        %v10206 = vsel %vm10190, %v10189, %v9756
        %v10207 = vsel %vm2452, %v5281, %v9790
        %v10208 = vsel %vm2452, %v5286, %v9792
        %v10209 = vsel %vm2452, %v5291, %v9794
        %v10210 = vsel %vm2452, %v5296, %v9796
        %v10211 = vsel %vm2452, %v5301, %v9798
        %v10212 = vsel %vm2452, %v5306, %v9800
        %v10213 = vsel %vm2452, %v5311, %v9802
        %v10214 = vsel %vm2452, %v5316, %v9804
        %v10215 = vsel %vm2452, %v5321, %v9806
        %v10216 = vsel %vm2452, %v5326, %v9808
        %v10217 = vsel %vm2452, %v5331, %v9810
        %v10218 = vsel %vm2452, %v5336, %v9812
        %v10219 = vsel %vm2452, %v5341, %v9814
        %v10220 = vsel %vm2452, %v5346, %v9816
        %v10221 = vsel %vm2452, %v5351, %v9818
        %v10222 = vsel %vm2452, %v5356, %v9820
        %v10223 = vsel %vm10173, %v10207, %v9854
        %v10224 = vsel %vm10173, %v10208, %v9856
        %v10225 = vsel %vm10173, %v10209, %v9858
        %v10226 = vsel %vm10173, %v10210, %v9860
        %v10227 = vsel %vm10173, %v10211, %v9862
        %v10228 = vsel %vm10173, %v10212, %v9864
        %v10229 = vsel %vm10173, %v10213, %v9866
        %v10230 = vsel %vm10173, %v10214, %v9868
        %v10231 = vsel %vm10173, %v10215, %v9870
        %v10232 = vsel %vm10173, %v10216, %v9872
        %v10233 = vsel %vm10173, %v10217, %v9874
        %v10234 = vsel %vm10173, %v10218, %v9876
        %v10235 = vsel %vm10173, %v10219, %v9878
        %v10236 = vsel %vm10173, %v10220, %v9880
        %v10237 = vsel %vm10173, %v10221, %v9882
        %v10238 = vsel %vm10173, %v10222, %v9884
        %v10239 = vsel %vm10190, %v10223, %v9918
        %v10240 = vsel %vm10190, %v10224, %v9920
        %v10241 = vsel %vm10190, %v10225, %v9922
        %v10242 = vsel %vm10190, %v10226, %v9924
        %v10243 = vsel %vm10190, %v10227, %v9926
        %v10244 = vsel %vm10190, %v10228, %v9928
        %v10245 = vsel %vm10190, %v10229, %v9930
        %v10246 = vsel %vm10190, %v10230, %v9932
        %v10247 = vsel %vm10190, %v10231, %v9934
        %v10248 = vsel %vm10190, %v10232, %v9936
        %v10249 = vsel %vm10190, %v10233, %v9938
        %v10250 = vsel %vm10190, %v10234, %v9940
        %v10251 = vsel %vm10190, %v10235, %v9942
        %v10252 = vsel %vm10190, %v10236, %v9944
        %v10253 = vsel %vm10190, %v10237, %v9946
        %v10254 = vsel %vm10190, %v10238, %v9948
        %v10255 = vsel %vm2452, %v7657, %v9982
        %v10256 = vsel %vm2452, %v7662, %v9984
        %v10257 = vsel %vm2452, %v7667, %v9986
        %v10258 = vsel %vm2452, %v7672, %v9988
        %v10259 = vsel %vm2452, %v7677, %v9990
        %v10260 = vsel %vm2452, %v7682, %v9992
        %v10261 = vsel %vm2452, %v7687, %v9994
        %v10262 = vsel %vm2452, %v7692, %v9996
        %v10263 = vsel %vm2452, %v7697, %v9998
        %v10264 = vsel %vm2452, %v7702, %v10000
        %v10265 = vsel %vm2452, %v7707, %v10002
        %v10266 = vsel %vm2452, %v7712, %v10004
        %v10267 = vsel %vm2452, %v7717, %v10006
        %v10268 = vsel %vm2452, %v7722, %v10008
        %v10269 = vsel %vm2452, %v7727, %v10010
        %v10270 = vsel %vm2452, %v7732, %v10012
        %v10271 = vsel %vm10173, %v10255, %v10046
        %v10272 = vsel %vm10173, %v10256, %v10048
        %v10273 = vsel %vm10173, %v10257, %v10050
        %v10274 = vsel %vm10173, %v10258, %v10052
        %v10275 = vsel %vm10173, %v10259, %v10054
        %v10276 = vsel %vm10173, %v10260, %v10056
        %v10277 = vsel %vm10173, %v10261, %v10058
        %v10278 = vsel %vm10173, %v10262, %v10060
        %v10279 = vsel %vm10173, %v10263, %v10062
        %v10280 = vsel %vm10173, %v10264, %v10064
        %v10281 = vsel %vm10173, %v10265, %v10066
        %v10282 = vsel %vm10173, %v10266, %v10068
        %v10283 = vsel %vm10173, %v10267, %v10070
        %v10284 = vsel %vm10173, %v10268, %v10072
        %v10285 = vsel %vm10173, %v10269, %v10074
        %v10286 = vsel %vm10173, %v10270, %v10076
        %v10287 = vsel %vm10190, %v10271, %v10110
        %v10288 = vsel %vm10190, %v10272, %v10112
        %v10289 = vsel %vm10190, %v10273, %v10114
        %v10290 = vsel %vm10190, %v10274, %v10116
        %v10291 = vsel %vm10190, %v10275, %v10118
        %v10292 = vsel %vm10190, %v10276, %v10120
        %v10293 = vsel %vm10190, %v10277, %v10122
        %v10294 = vsel %vm10190, %v10278, %v10124
        %v10295 = vsel %vm10190, %v10279, %v10126
        %v10296 = vsel %vm10190, %v10280, %v10128
        %v10297 = vsel %vm10190, %v10281, %v10130
        %v10298 = vsel %vm10190, %v10282, %v10132
        %v10299 = vsel %vm10190, %v10283, %v10134
        %v10300 = vsel %vm10190, %v10284, %v10136
        %v10301 = vsel %vm10190, %v10285, %v10138
        %v10302 = vsel %vm10190, %v10286, %v10140
        %v10303 = vld [vmem:[#allocation8] sm:$0xff]
        %v10304 = vld [vmem:[#allocation8 + $0x8] sm:$0xff]
        %v10305 = vld [vmem:[#allocation8 + $0x10] sm:$0xff]
        %v10306 = vld [vmem:[#allocation8 + $0x18] sm:$0xff]
        %v10307 = vld [vmem:[#allocation8 + $0x20] sm:$0xff]
        %v10308 = vld [vmem:[#allocation8 + $0x28] sm:$0xff]
        %v10309 = vld [vmem:[#allocation8 + $0x30] sm:$0xff]
        %v10310 = vld [vmem:[#allocation8 + $0x38] sm:$0xff]
        %v10311 = vld [vmem:[#allocation8 + $0x40] sm:$0xff]
        %v10312 = vld [vmem:[#allocation8 + $0x48] sm:$0xff]
        %v10313 = vld [vmem:[#allocation8 + $0x50] sm:$0xff]
        %v10314 = vld [vmem:[#allocation8 + $0x58] sm:$0xff]
        %v10315 = vld [vmem:[#allocation8 + $0x60] sm:$0xff]
        %v10316 = vld [vmem:[#allocation8 + $0x68] sm:$0xff]
        %v10317 = vld [vmem:[#allocation8 + $0x70] sm:$0xff]
        %v10318 = vld [vmem:[#allocation8 + $0x78] sm:$0xff]
        %v10319 = vld [vmem:[#allocation8 + $0x80] sm:$0xff]
        %v10320 = vld [vmem:[#allocation8 + $0x88] sm:$0xff]
        %v10321 = vld [vmem:[#allocation8 + $0x90] sm:$0xff]
        %v10322 = vld [vmem:[#allocation8 + $0x98] sm:$0xff]
        %v10323 = vld [vmem:[#allocation8 + $0xa0] sm:$0xff]
        %v10324 = vld [vmem:[#allocation8 + $0xa8] sm:$0xff]
        %v10325 = vld [vmem:[#allocation8 + $0xb0] sm:$0xff]
        %v10326 = vld [vmem:[#allocation8 + $0xb8] sm:$0xff]
        %v10327 = vld [vmem:[#allocation8 + $0xc0] sm:$0xff]
        %v10328 = vld [vmem:[#allocation8 + $0xc8] sm:$0xff]
        %v10329 = vld [vmem:[#allocation8 + $0xd0] sm:$0xff]
        %v10330 = vld [vmem:[#allocation8 + $0xd8] sm:$0xff]
        %v10331 = vld [vmem:[#allocation8 + $0xe0] sm:$0xff]
        %v10332 = vld [vmem:[#allocation8 + $0xe8] sm:$0xff]
        %v10333 = vld [vmem:[#allocation8 + $0xf0] sm:$0xff]
        %v10334 = vld [vmem:[#allocation8 + $0xf8] sm:$0xff]
        %v10335 = vld [vmem:[#allocation8 + $0x100] sm:$0xff]
        %v10336 = vld [vmem:[#allocation8 + $0x108] sm:$0xff]
        %v10337 = vld [vmem:[#allocation8 + $0x110] sm:$0xff]
        %v10338 = vld [vmem:[#allocation8 + $0x118] sm:$0xff]
        %v10339 = vld [vmem:[#allocation8 + $0x120] sm:$0xff]
        %v10340 = vld [vmem:[#allocation8 + $0x128] sm:$0xff]
        %v10341 = vld [vmem:[#allocation8 + $0x130] sm:$0xff]
        %v10342 = vld [vmem:[#allocation8 + $0x138] sm:$0xff]
        %v10343 = vld [vmem:[#allocation8 + $0x140] sm:$0xff]
        %v10344 = vld [vmem:[#allocation8 + $0x148] sm:$0xff]
        %v10345 = vld [vmem:[#allocation8 + $0x150] sm:$0xff]
        %v10346 = vld [vmem:[#allocation8 + $0x158] sm:$0xff]
        %v10347 = vld [vmem:[#allocation8 + $0x160] sm:$0xff]
        %v10348 = vld [vmem:[#allocation8 + $0x168] sm:$0xff]
        %v10349 = vld [vmem:[#allocation8 + $0x170] sm:$0xff]
        %v10350 = vld [vmem:[#allocation8 + $0x178] sm:$0xff]
        %v10351 = vld [vmem:[#allocation8 + $0x180] sm:$0xff]
        %v10352 = vld [vmem:[#allocation8 + $0x188] sm:$0xff]
        %v10353 = vld [vmem:[#allocation8 + $0x190] sm:$0xff]
        %v10354 = vld [vmem:[#allocation8 + $0x198] sm:$0xff]
        %v10355 = vld [vmem:[#allocation8 + $0x1a0] sm:$0xff]
        %v10356 = vld [vmem:[#allocation8 + $0x1a8] sm:$0xff]
        %v10357 = vld [vmem:[#allocation8 + $0x1b0] sm:$0xff]
        %v10358 = vld [vmem:[#allocation8 + $0x1b8] sm:$0xff]
        %v10359 = vld [vmem:[#allocation8 + $0x1c0] sm:$0xff]
        %v10360 = vld [vmem:[#allocation8 + $0x1c8] sm:$0xff]
        %v10361 = vld [vmem:[#allocation8 + $0x1d0] sm:$0xff]
        %v10362 = vld [vmem:[#allocation8 + $0x1d8] sm:$0xff]
        %v10363 = vld [vmem:[#allocation8 + $0x1e0] sm:$0xff]
        %v10364 = vld [vmem:[#allocation8 + $0x1e8] sm:$0xff]
        %v10365 = vld [vmem:[#allocation8 + $0x1f0] sm:$0xff]
        %v10366 = vld [vmem:[#allocation8 + $0x1f8] sm:$0xff]
        %v10367 = vld [vmem:[#allocation8 + $0x200] sm:$0xff]
        %v10368 = vld [vmem:[#allocation8 + $0x208] sm:$0xff]
        %v10369 = vld [vmem:[#allocation8 + $0x210] sm:$0xff]
        %v10370 = vld [vmem:[#allocation8 + $0x218] sm:$0xff]
        %v10371 = vld [vmem:[#allocation8 + $0x220] sm:$0xff]
        %v10372 = vld [vmem:[#allocation8 + $0x228] sm:$0xff]
        %v10373 = vld [vmem:[#allocation8 + $0x230] sm:$0xff]
        %v10374 = vld [vmem:[#allocation8 + $0x238] sm:$0xff]
        %v10375 = vld [vmem:[#allocation8 + $0x240] sm:$0xff]
        %v10376 = vld [vmem:[#allocation8 + $0x248] sm:$0xff]
        %v10377 = vld [vmem:[#allocation8 + $0x250] sm:$0xff]
        %v10378 = vld [vmem:[#allocation8 + $0x258] sm:$0xff]
        %v10379 = vld [vmem:[#allocation8 + $0x260] sm:$0xff]
        %v10380 = vld [vmem:[#allocation8 + $0x268] sm:$0xff]
        %v10381 = vld [vmem:[#allocation8 + $0x270] sm:$0xff]
        %v10382 = vld [vmem:[#allocation8 + $0x278] sm:$0xff]
        %v10383 = vld [vmem:[#allocation8 + $0x280] sm:$0xff]
        %v10384 = vld [vmem:[#allocation8 + $0x288] sm:$0xff]
        %v10385 = vld [vmem:[#allocation8 + $0x290] sm:$0xff]
        %v10386 = vld [vmem:[#allocation8 + $0x298] sm:$0xff]
        %v10387 = vld [vmem:[#allocation8 + $0x2a0] sm:$0xff]
        %v10388 = vld [vmem:[#allocation8 + $0x2a8] sm:$0xff]
        %v10389 = vld [vmem:[#allocation8 + $0x2b0] sm:$0xff]
        %v10390 = vld [vmem:[#allocation8 + $0x2b8] sm:$0xff]
        %v10391 = vld [vmem:[#allocation8 + $0x2c0] sm:$0xff]
        %v10392 = vld [vmem:[#allocation8 + $0x2c8] sm:$0xff]
        %v10393 = vld [vmem:[#allocation8 + $0x2d0] sm:$0xff]
        %v10394 = vld [vmem:[#allocation8 + $0x2d8] sm:$0xff]
        %v10395 = vld [vmem:[#allocation8 + $0x2e0] sm:$0xff]
        %v10396 = vld [vmem:[#allocation8 + $0x2e8] sm:$0xff]
        %v10397 = vld [vmem:[#allocation8 + $0x2f0] sm:$0xff]
        %v10398 = vld [vmem:[#allocation8 + $0x2f8] sm:$0xff]
        %v10399 = vld [vmem:[#allocation8 + $0x300] sm:$0xff]
        %v10400 = vld [vmem:[#allocation8 + $0x308] sm:$0xff]
        %v10401 = vld [vmem:[#allocation8 + $0x310] sm:$0xff]
        %v10402 = vld [vmem:[#allocation8 + $0x318] sm:$0xff]
        %v10403 = vld [vmem:[#allocation8 + $0x320] sm:$0xff]
        %v10404 = vld [vmem:[#allocation8 + $0x328] sm:$0xff]
        %v10405 = vld [vmem:[#allocation8 + $0x330] sm:$0xff]
        %v10406 = vld [vmem:[#allocation8 + $0x338] sm:$0xff]
        %v10407 = vld [vmem:[#allocation8 + $0x340] sm:$0xff]
        %v10408 = vld [vmem:[#allocation8 + $0x348] sm:$0xff]
        %v10409 = vld [vmem:[#allocation8 + $0x350] sm:$0xff]
        %v10410 = vld [vmem:[#allocation8 + $0x358] sm:$0xff]
        %v10411 = vld [vmem:[#allocation8 + $0x360] sm:$0xff]
        %v10412 = vld [vmem:[#allocation8 + $0x368] sm:$0xff]
        %v10413 = vld [vmem:[#allocation8 + $0x370] sm:$0xff]
        %v10414 = vld [vmem:[#allocation8 + $0x378] sm:$0xff]
        %v10415 = vld [vmem:[#allocation8 + $0x380] sm:$0xff]
        %v10416 = vld [vmem:[#allocation8 + $0x388] sm:$0xff]
        %v10417 = vld [vmem:[#allocation8 + $0x390] sm:$0xff]
        %v10418 = vld [vmem:[#allocation8 + $0x398] sm:$0xff]
        %v10419 = vld [vmem:[#allocation8 + $0x3a0] sm:$0xff]
        %v10420 = vld [vmem:[#allocation8 + $0x3a8] sm:$0xff]
        %v10421 = vld [vmem:[#allocation8 + $0x3b0] sm:$0xff]
        %v10422 = vld [vmem:[#allocation8 + $0x3b8] sm:$0xff]
        %v10423 = vld [vmem:[#allocation8 + $0x3c0] sm:$0xff]
        %v10424 = vld [vmem:[#allocation8 + $0x3c8] sm:$0xff]
        %v10425 = vld [vmem:[#allocation8 + $0x3d0] sm:$0xff]
        %v10426 = vld [vmem:[#allocation8 + $0x3d8] sm:$0xff]
        %v10427 = vld [vmem:[#allocation8 + $0x3e0] sm:$0xff]
        %v10428 = vld [vmem:[#allocation8 + $0x3e8] sm:$0xff]
        %v10429 = vld [vmem:[#allocation8 + $0x3f0] sm:$0xff]
        %v10430 = vld [vmem:[#allocation8 + $0x3f8] sm:$0xff]
        %v10431 = vld [vmem:[#allocation8 + $0x400] sm:$0xff]
        %v10432 = vld [vmem:[#allocation8 + $0x408] sm:$0xff]
        %v10433 = vld [vmem:[#allocation8 + $0x410] sm:$0xff]
        %v10434 = vld [vmem:[#allocation8 + $0x418] sm:$0xff]
        %v10435 = vld [vmem:[#allocation8 + $0x420] sm:$0xff]
        %v10436 = vld [vmem:[#allocation8 + $0x428] sm:$0xff]
        %v10437 = vld [vmem:[#allocation8 + $0x430] sm:$0xff]
        %v10438 = vld [vmem:[#allocation8 + $0x438] sm:$0xff]
        %v10439 = vld [vmem:[#allocation8 + $0x440] sm:$0xff]
        %v10440 = vld [vmem:[#allocation8 + $0x448] sm:$0xff]
        %v10441 = vld [vmem:[#allocation8 + $0x450] sm:$0xff]
        %v10442 = vld [vmem:[#allocation8 + $0x458] sm:$0xff]
        %v10443 = vld [vmem:[#allocation8 + $0x460] sm:$0xff]
        %v10444 = vld [vmem:[#allocation8 + $0x468] sm:$0xff]
        %v10445 = vld [vmem:[#allocation8 + $0x470] sm:$0xff]
        %v10446 = vld [vmem:[#allocation8 + $0x478] sm:$0xff]
        %v10447 = vld [vmem:[#allocation10] sm:$0x7]
        %v10449 = vlaneseq
        %v10450 = vshrl.u32 %v10449, 7
        %v10451 = vsub.s32 0, %v10450
        %v10452 = vrot.slane %v10447, %v10451
        %v10453 = vlaneseq
        %v10454 = vshrl.u32 %v10453, 7
        %v10455 = vsub.s32 1, %v10454
        %v10456 = vrot.slane %v10447, %v10455
        %v10457 = vlaneseq
        %v10458 = vshrl.u32 %v10457, 7
        %v10459 = vsub.s32 2, %v10458
        %v10460 = vrot.slane %v10447, %v10459
        %10464 = vmatprep.subr.mxu0 %v10349
        %10465 = vmatpush1.msra.mxu0 %v10348
        %10466 = vmatprep.subr.mxu0 %v10346
        %10467 = vmatpush1.msra.mxu0 %v10345
        %10468 = vmatprep.subr.mxu0 %v10343
        %10469 = vmatpush1.msra.mxu0 %v10342
        %10470 = vmatprep.subr.mxu0 %v10340
        %10471 = vmatpush1.msra.mxu0 %v10339
        %10472 = vmatprep.subr.mxu0 %v10337
        %10473 = vmatpush1.msra.mxu0 %v10336
        %10474 = vmatprep.subr.mxu0 %v10334
        %10475 = vmatpush1.msra.mxu0 %v10333
        %10476 = vmatprep.subr.mxu0 %v10331
        %10477 = vmatpush1.msra.mxu0 %v10330
        %10478 = vmatprep.subr.mxu0 %v10328
        %10479 = vmatpush1.msra.mxu0 %v10327
        %10480 = vmatprep.subr.mxu0 %v10325
        %10481 = vmatpush1.msra.mxu0 %v10324
        %10482 = vmatprep.subr.mxu0 %v10322
        %10483 = vmatpush1.msra.mxu0 %v10321
        %10484 = vmatprep.subr.mxu0 %v10319
        %10485 = vmatpush1.msra.mxu0 %v10318
        %10486 = vmatprep.subr.mxu0 %v10316
        %10487 = vmatpush1.msra.mxu0 %v10315
        %10488 = vmatprep.subr.mxu0 %v10313
        %10489 = vmatpush1.msra.mxu0 %v10312
        %10490 = vmatprep.subr.mxu0 %v10310
        %10491 = vmatpush1.msra.mxu0 %v10309
        %10492 = vmatprep.subr.mxu0 %v10307
        %10493 = vmatpush1.msra.mxu0 %v10306
        %10494 = vmatprep.subr.mxu0 %v10304
        %10495 = vmatpush1.msra.mxu0 %v10303
        %10496 = vmatprep.subr.mxu0 %v10397
        %10497 = vmatpush2.msra.mxu0 %v10396
        %10498 = vmatprep.subr.mxu0 %v10394
        %10499 = vmatpush2.msra.mxu0 %v10393
        %10500 = vmatprep.subr.mxu0 %v10391
        %10501 = vmatpush2.msra.mxu0 %v10390
        %10502 = vmatprep.subr.mxu0 %v10388
        %10503 = vmatpush2.msra.mxu0 %v10387
        %10504 = vmatprep.subr.mxu0 %v10385
        %10505 = vmatpush2.msra.mxu0 %v10384
        %10506 = vmatprep.subr.mxu0 %v10382
        %10507 = vmatpush2.msra.mxu0 %v10381
        %10508 = vmatprep.subr.mxu0 %v10379
        %10509 = vmatpush2.msra.mxu0 %v10378
        %10510 = vmatprep.subr.mxu0 %v10376
        %10511 = vmatpush2.msra.mxu0 %v10375
        %10512 = vmatprep.subr.mxu0 %v10373
        %10513 = vmatpush2.msra.mxu0 %v10372
        %10514 = vmatprep.subr.mxu0 %v10370
        %10515 = vmatpush2.msra.mxu0 %v10369
        %10516 = vmatprep.subr.mxu0 %v10367
        %10517 = vmatpush2.msra.mxu0 %v10366
        %10518 = vmatprep.subr.mxu0 %v10364
        %10519 = vmatpush2.msra.mxu0 %v10363
        %10520 = vmatprep.subr.mxu0 %v10361
        %10521 = vmatpush2.msra.mxu0 %v10360
        %10522 = vmatprep.subr.mxu0 %v10358
        %10523 = vmatpush2.msra.mxu0 %v10357
        %10524 = vmatprep.subr.mxu0 %v10355
        %10525 = vmatpush2.msra.mxu0 %v10354
        %10526 = vmatprep.subr.mxu0 %v10352
        %10527 = vmatpush2.msra.mxu0 %v10351
        %10528 = vmatprep.mubr.f32.mxu0 %v10239
        %10529 = vmatmul.mubr.f32.gmra.mxu0 %v10191
        %v10530 = vpop.f32.mrf.mxu0
        %v10531 = vadd.f32 %v10452, %v10530
        %v10532 = vpop.f32.mrf.mxu0
        %v10533 = vadd.f32 %v10456, %v10532
        %10534 = vmatprep.mubr.f32.mxu0 %v10240
        %10535 = vmatmul.mubr.f32.gmra.mxu0 %v10192
        %v10536 = vpop.f32.mrf.mxu0
        %v10537 = vadd.f32 %v10452, %v10536
        %v10538 = vpop.f32.mrf.mxu0
        %v10539 = vadd.f32 %v10456, %v10538
        %10540 = vmatprep.mubr.f32.mxu0 %v10241
        %10541 = vmatmul.mubr.f32.gmra.mxu0 %v10193
        %v10542 = vpop.f32.mrf.mxu0
        %v10543 = vadd.f32 %v10452, %v10542
        %v10544 = vpop.f32.mrf.mxu0
        %v10545 = vadd.f32 %v10456, %v10544
        %10546 = vmatprep.mubr.f32.mxu0 %v10242
        %10547 = vmatmul.mubr.f32.gmra.mxu0 %v10194
        %v10548 = vpop.f32.mrf.mxu0
        %v10549 = vadd.f32 %v10452, %v10548
        %v10550 = vpop.f32.mrf.mxu0
        %v10551 = vadd.f32 %v10456, %v10550
        %10552 = vmatprep.mubr.f32.mxu0 %v10243
        %10553 = vmatmul.mubr.f32.gmra.mxu0 %v10195
        %v10554 = vpop.f32.mrf.mxu0
        %v10555 = vadd.f32 %v10452, %v10554
        %v10556 = vpop.f32.mrf.mxu0
        %v10557 = vadd.f32 %v10456, %v10556
        %10558 = vmatprep.mubr.f32.mxu0 %v10244
        %10559 = vmatmul.mubr.f32.gmra.mxu0 %v10196
        %v10560 = vpop.f32.mrf.mxu0
        %v10561 = vadd.f32 %v10452, %v10560
        %v10562 = vpop.f32.mrf.mxu0
        %v10563 = vadd.f32 %v10456, %v10562
        %10564 = vmatprep.mubr.f32.mxu0 %v10245
        %10565 = vmatmul.mubr.f32.gmra.mxu0 %v10197
        %v10566 = vpop.f32.mrf.mxu0
        %v10567 = vadd.f32 %v10452, %v10566
        %v10568 = vpop.f32.mrf.mxu0
        %v10569 = vadd.f32 %v10456, %v10568
        %10570 = vmatprep.mubr.f32.mxu0 %v10246
        %10571 = vmatmul.mubr.f32.gmra.mxu0 %v10198
        %v10572 = vpop.f32.mrf.mxu0
        %v10573 = vadd.f32 %v10452, %v10572
        %v10574 = vpop.f32.mrf.mxu0
        %v10575 = vadd.f32 %v10456, %v10574
        %10576 = vmatprep.mubr.f32.mxu0 %v10247
        %10577 = vmatmul.mubr.f32.gmra.mxu0 %v10199
        %v10578 = vpop.f32.mrf.mxu0
        %v10579 = vadd.f32 %v10452, %v10578
        %v10580 = vpop.f32.mrf.mxu0
        %v10581 = vadd.f32 %v10456, %v10580
        %10582 = vmatprep.mubr.f32.mxu0 %v10248
        %10583 = vmatmul.mubr.f32.gmra.mxu0 %v10200
        %v10584 = vpop.f32.mrf.mxu0
        %v10585 = vadd.f32 %v10452, %v10584
        %v10586 = vpop.f32.mrf.mxu0
        %v10587 = vadd.f32 %v10456, %v10586
        %10588 = vmatprep.mubr.f32.mxu0 %v10249
        %10589 = vmatmul.mubr.f32.gmra.mxu0 %v10201
        %v10590 = vpop.f32.mrf.mxu0
        %v10591 = vadd.f32 %v10452, %v10590
        %v10592 = vpop.f32.mrf.mxu0
        %v10593 = vadd.f32 %v10456, %v10592
        %10594 = vmatprep.mubr.f32.mxu0 %v10250
        %10595 = vmatmul.mubr.f32.gmra.mxu0 %v10202
        %v10596 = vpop.f32.mrf.mxu0
        %v10597 = vadd.f32 %v10452, %v10596
        %v10598 = vpop.f32.mrf.mxu0
        %v10599 = vadd.f32 %v10456, %v10598
        %10600 = vmatprep.mubr.f32.mxu0 %v10251
        %10601 = vmatmul.mubr.f32.gmra.mxu0 %v10203
        %v10602 = vpop.f32.mrf.mxu0
        %v10603 = vadd.f32 %v10452, %v10602
        %v10604 = vpop.f32.mrf.mxu0
        %v10605 = vadd.f32 %v10456, %v10604
        %10606 = vmatprep.mubr.f32.mxu0 %v10252
        %10607 = vmatmul.mubr.f32.gmra.mxu0 %v10204
        %v10608 = vpop.f32.mrf.mxu0
        %v10609 = vadd.f32 %v10452, %v10608
        %v10610 = vpop.f32.mrf.mxu0
        %v10611 = vadd.f32 %v10456, %v10610
        %10612 = vmatprep.mubr.f32.mxu0 %v10253
        %10613 = vmatmul.mubr.f32.gmra.mxu0 %v10205
        %v10614 = vpop.f32.mrf.mxu0
        %v10615 = vadd.f32 %v10452, %v10614
        %v10616 = vpop.f32.mrf.mxu0
        %v10617 = vadd.f32 %v10456, %v10616
        %10618 = vmatprep.mubr.f32.mxu0 %v10254
        %10619 = vmatmul.mubr.f32.gmra.mxu0 %v10206
        %v10620 = vpop.f32.mrf.mxu0
        %v10621 = vadd.f32 %v10452, %v10620
        %v10622 = vpop.f32.mrf.mxu0
        %v10623 = vadd.f32 %v10456, %v10622
        %10624 = vdwg.mxu0
        %10625 = vmatprep.subr.mxu0 %v10445
        %10626 = vmatpush1.msra.mxu0 %v10444
        %10627 = vmatprep.subr.mxu0 %v10442
        %10628 = vmatpush1.msra.mxu0 %v10441
        %10629 = vmatprep.subr.mxu0 %v10439
        %10630 = vmatpush1.msra.mxu0 %v10438
        %10631 = vmatprep.subr.mxu0 %v10436
        %10632 = vmatpush1.msra.mxu0 %v10435
        %10633 = vmatprep.subr.mxu0 %v10433
        %10634 = vmatpush1.msra.mxu0 %v10432
        %10635 = vmatprep.subr.mxu0 %v10430
        %10636 = vmatpush1.msra.mxu0 %v10429
        %10637 = vmatprep.subr.mxu0 %v10427
        %10638 = vmatpush1.msra.mxu0 %v10426
        %10639 = vmatprep.subr.mxu0 %v10424
        %10640 = vmatpush1.msra.mxu0 %v10423
        %10641 = vmatprep.subr.mxu0 %v10421
        %10642 = vmatpush1.msra.mxu0 %v10420
        %10643 = vmatprep.subr.mxu0 %v10418
        %10644 = vmatpush1.msra.mxu0 %v10417
        %10645 = vmatprep.subr.mxu0 %v10415
        %10646 = vmatpush1.msra.mxu0 %v10414
        %10647 = vmatprep.subr.mxu0 %v10412
        %10648 = vmatpush1.msra.mxu0 %v10411
        %10649 = vmatprep.subr.mxu0 %v10409
        %10650 = vmatpush1.msra.mxu0 %v10408
        %10651 = vmatprep.subr.mxu0 %v10406
        %10652 = vmatpush1.msra.mxu0 %v10405
        %10653 = vmatprep.subr.mxu0 %v10403
        %10654 = vmatpush1.msra.mxu0 %v10402
        %10655 = vmatprep.subr.mxu0 %v10400
        %10656 = vmatpush1.msra.mxu0 %v10399
        %10657 = vmatprep.subr.mxu0 0.0
        %10658 = vmatpush2.msra.mxu0 0.0
        %10659 = vmatprep.subr.mxu0 0.0
        %10660 = vmatpush2.msra.mxu0 0.0
        %10661 = vmatprep.subr.mxu0 0.0
        %10662 = vmatpush2.msra.mxu0 0.0
        %10663 = vmatprep.subr.mxu0 0.0
        %10664 = vmatpush2.msra.mxu0 0.0
        %10665 = vmatprep.subr.mxu0 0.0
        %10666 = vmatpush2.msra.mxu0 0.0
        %10667 = vmatprep.subr.mxu0 0.0
        %10668 = vmatpush2.msra.mxu0 0.0
        %10669 = vmatprep.subr.mxu0 0.0
        %10670 = vmatpush2.msra.mxu0 0.0
        %10671 = vmatprep.subr.mxu0 0.0
        %10672 = vmatpush2.msra.mxu0 0.0
        %10673 = vmatprep.subr.mxu0 0.0
        %10674 = vmatpush2.msra.mxu0 0.0
        %10675 = vmatprep.subr.mxu0 0.0
        %10676 = vmatpush2.msra.mxu0 0.0
        %10677 = vmatprep.subr.mxu0 0.0
        %10678 = vmatpush2.msra.mxu0 0.0
        %10679 = vmatprep.subr.mxu0 0.0
        %10680 = vmatpush2.msra.mxu0 0.0
        %10681 = vmatprep.subr.mxu0 0.0
        %10682 = vmatpush2.msra.mxu0 0.0
        %10683 = vmatprep.subr.mxu0 0.0
        %10684 = vmatpush2.msra.mxu0 0.0
        %10685 = vmatprep.subr.mxu0 0.0
        %10686 = vmatpush2.msra.mxu0 0.0
        %10687 = vmatprep.subr.mxu0 0.0
        %10688 = vmatpush2.msra.mxu0 0.0
        %10689 = vmatprep.mubr.f32.mxu0 0.0
        %10690 = vmatmul.mubr.f32.gmra.mxu0 %v10287
        %v10691 = vpop.f32.mrf.mxu0
        %v10692 = vadd.f32 %v10531, %v10691
        %v10693 = vpop.f32.mrf.mxu0
        %v10694 = vadd.f32 %v10533, %v10693
        %10695 = vmatprep.mubr.f32.mxu0 0.0
        %10696 = vmatmul.mubr.f32.gmra.mxu0 %v10288
        %v10697 = vpop.f32.mrf.mxu0
        %v10698 = vadd.f32 %v10537, %v10697
        %v10699 = vpop.f32.mrf.mxu0
        %v10700 = vadd.f32 %v10539, %v10699
        %10701 = vmatprep.mubr.f32.mxu0 0.0
        %10702 = vmatmul.mubr.f32.gmra.mxu0 %v10289
        %v10703 = vpop.f32.mrf.mxu0
        %v10704 = vadd.f32 %v10543, %v10703
        %v10705 = vpop.f32.mrf.mxu0
        %v10706 = vadd.f32 %v10545, %v10705
        %10707 = vmatprep.mubr.f32.mxu0 0.0
        %10708 = vmatmul.mubr.f32.gmra.mxu0 %v10290
        %v10709 = vpop.f32.mrf.mxu0
        %v10710 = vadd.f32 %v10549, %v10709
        %v10711 = vpop.f32.mrf.mxu0
        %v10712 = vadd.f32 %v10551, %v10711
        %10713 = vmatprep.mubr.f32.mxu0 0.0
        %10714 = vmatmul.mubr.f32.gmra.mxu0 %v10291
        %v10715 = vpop.f32.mrf.mxu0
        %v10716 = vadd.f32 %v10555, %v10715
        %v10717 = vpop.f32.mrf.mxu0
        %v10718 = vadd.f32 %v10557, %v10717
        %10719 = vmatprep.mubr.f32.mxu0 0.0
        %10720 = vmatmul.mubr.f32.gmra.mxu0 %v10292
        %v10721 = vpop.f32.mrf.mxu0
        %v10722 = vadd.f32 %v10561, %v10721
        %v10723 = vpop.f32.mrf.mxu0
        %v10724 = vadd.f32 %v10563, %v10723
        %10725 = vmatprep.mubr.f32.mxu0 0.0
        %10726 = vmatmul.mubr.f32.gmra.mxu0 %v10293
        %v10727 = vpop.f32.mrf.mxu0
        %v10728 = vadd.f32 %v10567, %v10727
        %v10729 = vpop.f32.mrf.mxu0
        %v10730 = vadd.f32 %v10569, %v10729
        %10731 = vmatprep.mubr.f32.mxu0 0.0
        %10732 = vmatmul.mubr.f32.gmra.mxu0 %v10294
        %v10733 = vpop.f32.mrf.mxu0
        %v10734 = vadd.f32 %v10573, %v10733
        %v10735 = vpop.f32.mrf.mxu0
        %v10736 = vadd.f32 %v10575, %v10735
        %10737 = vmatprep.mubr.f32.mxu0 0.0
        %10738 = vmatmul.mubr.f32.gmra.mxu0 %v10295
        %v10739 = vpop.f32.mrf.mxu0
        %v10740 = vadd.f32 %v10579, %v10739
        %v10741 = vpop.f32.mrf.mxu0
        %v10742 = vadd.f32 %v10581, %v10741
        %10743 = vmatprep.mubr.f32.mxu0 0.0
        %10744 = vmatmul.mubr.f32.gmra.mxu0 %v10296
        %v10745 = vpop.f32.mrf.mxu0
        %v10746 = vadd.f32 %v10585, %v10745
        %v10747 = vpop.f32.mrf.mxu0
        %v10748 = vadd.f32 %v10587, %v10747
        %10749 = vmatprep.mubr.f32.mxu0 0.0
        %10750 = vmatmul.mubr.f32.gmra.mxu0 %v10297
        %v10751 = vpop.f32.mrf.mxu0
        %v10752 = vadd.f32 %v10591, %v10751
        %v10753 = vpop.f32.mrf.mxu0
        %v10754 = vadd.f32 %v10593, %v10753
        %10755 = vmatprep.mubr.f32.mxu0 0.0
        %10756 = vmatmul.mubr.f32.gmra.mxu0 %v10298
        %v10757 = vpop.f32.mrf.mxu0
        %v10758 = vadd.f32 %v10597, %v10757
        %v10759 = vpop.f32.mrf.mxu0
        %v10760 = vadd.f32 %v10599, %v10759
        %10761 = vmatprep.mubr.f32.mxu0 0.0
        %10762 = vmatmul.mubr.f32.gmra.mxu0 %v10299
        %v10763 = vpop.f32.mrf.mxu0
        %v10764 = vadd.f32 %v10603, %v10763
        %v10765 = vpop.f32.mrf.mxu0
        %v10766 = vadd.f32 %v10605, %v10765
        %10767 = vmatprep.mubr.f32.mxu0 0.0
        %10768 = vmatmul.mubr.f32.gmra.mxu0 %v10300
        %v10769 = vpop.f32.mrf.mxu0
        %v10770 = vadd.f32 %v10609, %v10769
        %v10771 = vpop.f32.mrf.mxu0
        %v10772 = vadd.f32 %v10611, %v10771
        %10773 = vmatprep.mubr.f32.mxu0 0.0
        %10774 = vmatmul.mubr.f32.gmra.mxu0 %v10301
        %v10775 = vpop.f32.mrf.mxu0
        %v10776 = vadd.f32 %v10615, %v10775
        %v10777 = vpop.f32.mrf.mxu0
        %v10778 = vadd.f32 %v10617, %v10777
        %10779 = vmatprep.mubr.f32.mxu0 0.0
        %10780 = vmatmul.mubr.f32.gmra.mxu0 %v10302
        %v10781 = vpop.f32.mrf.mxu0
        %v10782 = vadd.f32 %v10621, %v10781
        %v10783 = vpop.f32.mrf.mxu0
        %v10784 = vadd.f32 %v10623, %v10783
        %10785 = vdwg.mxu0
        %10786 = vmatprep.subr.mxu0 0.0
        %10787 = vmatpush1.msra.mxu0 %v10350
        %10788 = vmatprep.subr.mxu0 0.0
        %10789 = vmatpush1.msra.mxu0 %v10347
        %10790 = vmatprep.subr.mxu0 0.0
        %10791 = vmatpush1.msra.mxu0 %v10344
        %10792 = vmatprep.subr.mxu0 0.0
        %10793 = vmatpush1.msra.mxu0 %v10341
        %10794 = vmatprep.subr.mxu0 0.0
        %10795 = vmatpush1.msra.mxu0 %v10338
        %10796 = vmatprep.subr.mxu0 0.0
        %10797 = vmatpush1.msra.mxu0 %v10335
        %10798 = vmatprep.subr.mxu0 0.0
        %10799 = vmatpush1.msra.mxu0 %v10332
        %10800 = vmatprep.subr.mxu0 0.0
        %10801 = vmatpush1.msra.mxu0 %v10329
        %10802 = vmatprep.subr.mxu0 0.0
        %10803 = vmatpush1.msra.mxu0 %v10326
        %10804 = vmatprep.subr.mxu0 0.0
        %10805 = vmatpush1.msra.mxu0 %v10323
        %10806 = vmatprep.subr.mxu0 0.0
        %10807 = vmatpush1.msra.mxu0 %v10320
        %10808 = vmatprep.subr.mxu0 0.0
        %10809 = vmatpush1.msra.mxu0 %v10317
        %10810 = vmatprep.subr.mxu0 0.0
        %10811 = vmatpush1.msra.mxu0 %v10314
        %10812 = vmatprep.subr.mxu0 0.0
        %10813 = vmatpush1.msra.mxu0 %v10311
        %10814 = vmatprep.subr.mxu0 0.0
        %10815 = vmatpush1.msra.mxu0 %v10308
        %10816 = vmatprep.subr.mxu0 0.0
        %10817 = vmatpush1.msra.mxu0 %v10305
        %10818 = vmatprep.subr.mxu0 0.0
        %10819 = vmatpush2.msra.mxu0 %v10398
        %10820 = vmatprep.subr.mxu0 0.0
        %10821 = vmatpush2.msra.mxu0 %v10395
        %10822 = vmatprep.subr.mxu0 0.0
        %10823 = vmatpush2.msra.mxu0 %v10392
        %10824 = vmatprep.subr.mxu0 0.0
        %10825 = vmatpush2.msra.mxu0 %v10389
        %10826 = vmatprep.subr.mxu0 0.0
        %10827 = vmatpush2.msra.mxu0 %v10386
        %10828 = vmatprep.subr.mxu0 0.0
        %10829 = vmatpush2.msra.mxu0 %v10383
        %10830 = vmatprep.subr.mxu0 0.0
        %10831 = vmatpush2.msra.mxu0 %v10380
        %10832 = vmatprep.subr.mxu0 0.0
        %10833 = vmatpush2.msra.mxu0 %v10377
        %10834 = vmatprep.subr.mxu0 0.0
        %10835 = vmatpush2.msra.mxu0 %v10374
        %10836 = vmatprep.subr.mxu0 0.0
        %10837 = vmatpush2.msra.mxu0 %v10371
        %10838 = vmatprep.subr.mxu0 0.0
        %10839 = vmatpush2.msra.mxu0 %v10368
        %10840 = vmatprep.subr.mxu0 0.0
        %10841 = vmatpush2.msra.mxu0 %v10365
        %10842 = vmatprep.subr.mxu0 0.0
        %10843 = vmatpush2.msra.mxu0 %v10362
        %10844 = vmatprep.subr.mxu0 0.0
        %10845 = vmatpush2.msra.mxu0 %v10359
        %10846 = vmatprep.subr.mxu0 0.0
        %10847 = vmatpush2.msra.mxu0 %v10356
        %10848 = vmatprep.subr.mxu0 0.0
        %10849 = vmatpush2.msra.mxu0 %v10353
        %10850 = vmatprep.mubr.f32.mxu0 %v10239
        %10851 = vmatmul.mubr.f32.gmra.mxu0 %v10191
        %v10852 = vpop.f32.mrf.mxu0
        %v10853 = vadd.f32 %v10460, %v10852
        %v10854 = vpop.f32.mrf.mxu0
        %10855 = vmatprep.mubr.f32.mxu0 %v10240
        %10856 = vmatmul.mubr.f32.gmra.mxu0 %v10192
        %v10857 = vpop.f32.mrf.mxu0
        %v10858 = vadd.f32 %v10460, %v10857
        %v10859 = vpop.f32.mrf.mxu0
        %10860 = vmatprep.mubr.f32.mxu0 %v10241
        %10861 = vmatmul.mubr.f32.gmra.mxu0 %v10193
        %v10862 = vpop.f32.mrf.mxu0
        %v10863 = vadd.f32 %v10460, %v10862
        %v10864 = vpop.f32.mrf.mxu0
        %10865 = vmatprep.mubr.f32.mxu0 %v10242
        %10866 = vmatmul.mubr.f32.gmra.mxu0 %v10194
        %v10867 = vpop.f32.mrf.mxu0
        %v10868 = vadd.f32 %v10460, %v10867
        %v10869 = vpop.f32.mrf.mxu0
        %10870 = vmatprep.mubr.f32.mxu0 %v10243
        %10871 = vmatmul.mubr.f32.gmra.mxu0 %v10195
        %v10872 = vpop.f32.mrf.mxu0
        %v10873 = vadd.f32 %v10460, %v10872
        %v10874 = vpop.f32.mrf.mxu0
        %10875 = vmatprep.mubr.f32.mxu0 %v10244
        %10876 = vmatmul.mubr.f32.gmra.mxu0 %v10196
        %v10877 = vpop.f32.mrf.mxu0
        %v10878 = vadd.f32 %v10460, %v10877
        %v10879 = vpop.f32.mrf.mxu0
        %10880 = vmatprep.mubr.f32.mxu0 %v10245
        %10881 = vmatmul.mubr.f32.gmra.mxu0 %v10197
        %v10882 = vpop.f32.mrf.mxu0
        %v10883 = vadd.f32 %v10460, %v10882
        %v10884 = vpop.f32.mrf.mxu0
        %10885 = vmatprep.mubr.f32.mxu0 %v10246
        %10886 = vmatmul.mubr.f32.gmra.mxu0 %v10198
        %v10887 = vpop.f32.mrf.mxu0
        %v10888 = vadd.f32 %v10460, %v10887
        %v10889 = vpop.f32.mrf.mxu0
        %10890 = vmatprep.mubr.f32.mxu0 %v10247
        %10891 = vmatmul.mubr.f32.gmra.mxu0 %v10199
        %v10892 = vpop.f32.mrf.mxu0
        %v10893 = vadd.f32 %v10460, %v10892
        %v10894 = vpop.f32.mrf.mxu0
        %10895 = vmatprep.mubr.f32.mxu0 %v10248
        %10896 = vmatmul.mubr.f32.gmra.mxu0 %v10200
        %v10897 = vpop.f32.mrf.mxu0
        %v10898 = vadd.f32 %v10460, %v10897
        %v10899 = vpop.f32.mrf.mxu0
        %10900 = vmatprep.mubr.f32.mxu0 %v10249
        %10901 = vmatmul.mubr.f32.gmra.mxu0 %v10201
        %v10902 = vpop.f32.mrf.mxu0
        %v10903 = vadd.f32 %v10460, %v10902
        %v10904 = vpop.f32.mrf.mxu0
        %10905 = vmatprep.mubr.f32.mxu0 %v10250
        %10906 = vmatmul.mubr.f32.gmra.mxu0 %v10202
        %v10907 = vpop.f32.mrf.mxu0
        %v10908 = vadd.f32 %v10460, %v10907
        %v10909 = vpop.f32.mrf.mxu0
        %10910 = vmatprep.mubr.f32.mxu0 %v10251
        %10911 = vmatmul.mubr.f32.gmra.mxu0 %v10203
        %v10912 = vpop.f32.mrf.mxu0
        %v10913 = vadd.f32 %v10460, %v10912
        %v10914 = vpop.f32.mrf.mxu0
        %10915 = vmatprep.mubr.f32.mxu0 %v10252
        %10916 = vmatmul.mubr.f32.gmra.mxu0 %v10204
        %v10917 = vpop.f32.mrf.mxu0
        %v10918 = vadd.f32 %v10460, %v10917
        %v10919 = vpop.f32.mrf.mxu0
        %10920 = vmatprep.mubr.f32.mxu0 %v10253
        %10921 = vmatmul.mubr.f32.gmra.mxu0 %v10205
        %v10922 = vpop.f32.mrf.mxu0
        %v10923 = vadd.f32 %v10460, %v10922
        %v10924 = vpop.f32.mrf.mxu0
        %10925 = vmatprep.mubr.f32.mxu0 %v10254
        %10926 = vmatmul.mubr.f32.gmra.mxu0 %v10206
        %v10927 = vpop.f32.mrf.mxu0
        %v10928 = vadd.f32 %v10460, %v10927
        %v10929 = vpop.f32.mrf.mxu0
        %10930 = vdwg.mxu0
        %10931 = vmatprep.subr.mxu0 0.0
        %10932 = vmatpush1.msra.mxu0 %v10446
        %10933 = vmatprep.subr.mxu0 0.0
        %10934 = vmatpush1.msra.mxu0 %v10443
        %10935 = vmatprep.subr.mxu0 0.0
        %10936 = vmatpush1.msra.mxu0 %v10440
        %10937 = vmatprep.subr.mxu0 0.0
        %10938 = vmatpush1.msra.mxu0 %v10437
        %10939 = vmatprep.subr.mxu0 0.0
        %10940 = vmatpush1.msra.mxu0 %v10434
        %10941 = vmatprep.subr.mxu0 0.0
        %10942 = vmatpush1.msra.mxu0 %v10431
        %10943 = vmatprep.subr.mxu0 0.0
        %10944 = vmatpush1.msra.mxu0 %v10428
        %10945 = vmatprep.subr.mxu0 0.0
        %10946 = vmatpush1.msra.mxu0 %v10425
        %10947 = vmatprep.subr.mxu0 0.0
        %10948 = vmatpush1.msra.mxu0 %v10422
        %10949 = vmatprep.subr.mxu0 0.0
        %10950 = vmatpush1.msra.mxu0 %v10419
        %10951 = vmatprep.subr.mxu0 0.0
        %10952 = vmatpush1.msra.mxu0 %v10416
        %10953 = vmatprep.subr.mxu0 0.0
        %10954 = vmatpush1.msra.mxu0 %v10413
        %10955 = vmatprep.subr.mxu0 0.0
        %10956 = vmatpush1.msra.mxu0 %v10410
        %10957 = vmatprep.subr.mxu0 0.0
        %10958 = vmatpush1.msra.mxu0 %v10407
        %10959 = vmatprep.subr.mxu0 0.0
        %10960 = vmatpush1.msra.mxu0 %v10404
        %10961 = vmatprep.subr.mxu0 0.0
        %10962 = vmatpush1.msra.mxu0 %v10401
        %10963 = vmatprep.subr.mxu0 0.0
        %10964 = vmatpush2.msra.mxu0 0.0
        %10965 = vmatprep.subr.mxu0 0.0
        %10966 = vmatpush2.msra.mxu0 0.0
        %10967 = vmatprep.subr.mxu0 0.0
        %10968 = vmatpush2.msra.mxu0 0.0
        %10969 = vmatprep.subr.mxu0 0.0
        %10970 = vmatpush2.msra.mxu0 0.0
        %10971 = vmatprep.subr.mxu0 0.0
        %10972 = vmatpush2.msra.mxu0 0.0
        %10973 = vmatprep.subr.mxu0 0.0
        %10974 = vmatpush2.msra.mxu0 0.0
        %10975 = vmatprep.subr.mxu0 0.0
        %10976 = vmatpush2.msra.mxu0 0.0
        %10977 = vmatprep.subr.mxu0 0.0
        %10978 = vmatpush2.msra.mxu0 0.0
        %10979 = vmatprep.subr.mxu0 0.0
        %10980 = vmatpush2.msra.mxu0 0.0
        %10981 = vmatprep.subr.mxu0 0.0
        %10982 = vmatpush2.msra.mxu0 0.0
        %10983 = vmatprep.subr.mxu0 0.0
        %10984 = vmatpush2.msra.mxu0 0.0
        %10985 = vmatprep.subr.mxu0 0.0
        %10986 = vmatpush2.msra.mxu0 0.0
        %10987 = vmatprep.subr.mxu0 0.0
        %10988 = vmatpush2.msra.mxu0 0.0
        %10989 = vmatprep.subr.mxu0 0.0
        %10990 = vmatpush2.msra.mxu0 0.0
        %10991 = vmatprep.subr.mxu0 0.0
        %10992 = vmatpush2.msra.mxu0 0.0
        %10993 = vmatprep.subr.mxu0 0.0
        %10994 = vmatpush2.msra.mxu0 0.0
        %10995 = vmatprep.mubr.f32.mxu0 0.0
        %10996 = vmatmul.mubr.f32.gmra.mxu0 %v10287
        %v10997 = vpop.f32.mrf.mxu0
        %v10998 = vadd.f32 %v10853, %v10997
        %v10999 = vpop.f32.mrf.mxu0
        %11000 = vmatprep.mubr.f32.mxu0 0.0
        %11001 = vmatmul.mubr.f32.gmra.mxu0 %v10288
        %v11002 = vpop.f32.mrf.mxu0
        %v11003 = vadd.f32 %v10858, %v11002
        %v11004 = vpop.f32.mrf.mxu0
        %11005 = vmatprep.mubr.f32.mxu0 0.0
        %11006 = vmatmul.mubr.f32.gmra.mxu0 %v10289
        %v11007 = vpop.f32.mrf.mxu0
        %v11008 = vadd.f32 %v10863, %v11007
        %v11009 = vpop.f32.mrf.mxu0
        %11010 = vmatprep.mubr.f32.mxu0 0.0
        %11011 = vmatmul.mubr.f32.gmra.mxu0 %v10290
        %v11012 = vpop.f32.mrf.mxu0
        %v11013 = vadd.f32 %v10868, %v11012
        %v11014 = vpop.f32.mrf.mxu0
        %11015 = vmatprep.mubr.f32.mxu0 0.0
        %11016 = vmatmul.mubr.f32.gmra.mxu0 %v10291
        %v11017 = vpop.f32.mrf.mxu0
        %v11018 = vadd.f32 %v10873, %v11017
        %v11019 = vpop.f32.mrf.mxu0
        %11020 = vmatprep.mubr.f32.mxu0 0.0
        %11021 = vmatmul.mubr.f32.gmra.mxu0 %v10292
        %v11022 = vpop.f32.mrf.mxu0
        %v11023 = vadd.f32 %v10878, %v11022
        %v11024 = vpop.f32.mrf.mxu0
        %11025 = vmatprep.mubr.f32.mxu0 0.0
        %11026 = vmatmul.mubr.f32.gmra.mxu0 %v10293
        %v11027 = vpop.f32.mrf.mxu0
        %v11028 = vadd.f32 %v10883, %v11027
        %v11029 = vpop.f32.mrf.mxu0
        %11030 = vmatprep.mubr.f32.mxu0 0.0
        %11031 = vmatmul.mubr.f32.gmra.mxu0 %v10294
        %v11032 = vpop.f32.mrf.mxu0
        %v11033 = vadd.f32 %v10888, %v11032
        %v11034 = vpop.f32.mrf.mxu0
        %11035 = vmatprep.mubr.f32.mxu0 0.0
        %11036 = vmatmul.mubr.f32.gmra.mxu0 %v10295
        %v11037 = vpop.f32.mrf.mxu0
        %v11038 = vadd.f32 %v10893, %v11037
        %v11039 = vpop.f32.mrf.mxu0
        %11040 = vmatprep.mubr.f32.mxu0 0.0
        %11041 = vmatmul.mubr.f32.gmra.mxu0 %v10296
        %v11042 = vpop.f32.mrf.mxu0
        %v11043 = vadd.f32 %v10898, %v11042
        %v11044 = vpop.f32.mrf.mxu0
        %11045 = vmatprep.mubr.f32.mxu0 0.0
        %11046 = vmatmul.mubr.f32.gmra.mxu0 %v10297
        %v11047 = vpop.f32.mrf.mxu0
        %v11048 = vadd.f32 %v10903, %v11047
        %v11049 = vpop.f32.mrf.mxu0
        %11050 = vmatprep.mubr.f32.mxu0 0.0
        %11051 = vmatmul.mubr.f32.gmra.mxu0 %v10298
        %v11052 = vpop.f32.mrf.mxu0
        %v11053 = vadd.f32 %v10908, %v11052
        %v11054 = vpop.f32.mrf.mxu0
        %11055 = vmatprep.mubr.f32.mxu0 0.0
        %11056 = vmatmul.mubr.f32.gmra.mxu0 %v10299
        %v11057 = vpop.f32.mrf.mxu0
        %v11058 = vadd.f32 %v10913, %v11057
        %v11059 = vpop.f32.mrf.mxu0
        %11060 = vmatprep.mubr.f32.mxu0 0.0
        %11061 = vmatmul.mubr.f32.gmra.mxu0 %v10300
        %v11062 = vpop.f32.mrf.mxu0
        %v11063 = vadd.f32 %v10918, %v11062
        %v11064 = vpop.f32.mrf.mxu0
        %11065 = vmatprep.mubr.f32.mxu0 0.0
        %11066 = vmatmul.mubr.f32.gmra.mxu0 %v10301
        %v11067 = vpop.f32.mrf.mxu0
        %v11068 = vadd.f32 %v10923, %v11067
        %v11069 = vpop.f32.mrf.mxu0
        %11070 = vmatprep.mubr.f32.mxu0 0.0
        %11071 = vmatmul.mubr.f32.gmra.mxu0 %v10302
        %v11072 = vpop.f32.mrf.mxu0
        %v11073 = vadd.f32 %v10928, %v11072
        %v11074 = vpop.f32.mrf.mxu0
        %11075 = vdwg.mxu0
        %11076 = vst [vmem:[%s296] sm:$0xff] %v10692
        %11077 = vst [vmem:[%s296 + $0x8] sm:$0xff] %v10694
        %11078 = vst [vmem:[%s296 + $0x10] sm:$0xff] %v10998
        %11079 = vst [vmem:[%s296 + $0x18] sm:$0xff] %v10698
        %11080 = vst [vmem:[%s296 + $0x20] sm:$0xff] %v10700
        %11081 = vst [vmem:[%s296 + $0x28] sm:$0xff] %v11003
        %11082 = vst [vmem:[%s296 + $0x30] sm:$0xff] %v10704
        %11083 = vst [vmem:[%s296 + $0x38] sm:$0xff] %v10706
        %11084 = vst [vmem:[%s296 + $0x40] sm:$0xff] %v11008
        %11085 = vst [vmem:[%s296 + $0x48] sm:$0xff] %v10710
        %11086 = vst [vmem:[%s296 + $0x50] sm:$0xff] %v10712
        %11087 = vst [vmem:[%s296 + $0x58] sm:$0xff] %v11013
        %11088 = vst [vmem:[%s296 + $0x60] sm:$0xff] %v10716
        %11089 = vst [vmem:[%s296 + $0x68] sm:$0xff] %v10718
        %11090 = vst [vmem:[%s296 + $0x70] sm:$0xff] %v11018
        %11091 = vst [vmem:[%s296 + $0x78] sm:$0xff] %v10722
        %11092 = vst [vmem:[%s296 + $0x80] sm:$0xff] %v10724
        %11093 = vst [vmem:[%s296 + $0x88] sm:$0xff] %v11023
        %11094 = vst [vmem:[%s296 + $0x90] sm:$0xff] %v10728
        %11095 = vst [vmem:[%s296 + $0x98] sm:$0xff] %v10730
        %11096 = vst [vmem:[%s296 + $0xa0] sm:$0xff] %v11028
        %11097 = vst [vmem:[%s296 + $0xa8] sm:$0xff] %v10734
        %11098 = vst [vmem:[%s296 + $0xb0] sm:$0xff] %v10736
        %11099 = vst [vmem:[%s296 + $0xb8] sm:$0xff] %v11033
        %11100 = vst [vmem:[%s296 + $0xc0] sm:$0xff] %v10740
        %11101 = vst [vmem:[%s296 + $0xc8] sm:$0xff] %v10742
        %11102 = vst [vmem:[%s296 + $0xd0] sm:$0xff] %v11038
        %11103 = vst [vmem:[%s296 + $0xd8] sm:$0xff] %v10746
        %11104 = vst [vmem:[%s296 + $0xe0] sm:$0xff] %v10748
        %11105 = vst [vmem:[%s296 + $0xe8] sm:$0xff] %v11043
        %11106 = vst [vmem:[%s296 + $0xf0] sm:$0xff] %v10752
        %11107 = vst [vmem:[%s296 + $0xf8] sm:$0xff] %v10754
        %11108 = vst [vmem:[%s296 + $0x100] sm:$0xff] %v11048
        %11109 = vst [vmem:[%s296 + $0x108] sm:$0xff] %v10758
        %11110 = vst [vmem:[%s296 + $0x110] sm:$0xff] %v10760
        %11111 = vst [vmem:[%s296 + $0x118] sm:$0xff] %v11053
        %11112 = vst [vmem:[%s296 + $0x120] sm:$0xff] %v10764
        %11113 = vst [vmem:[%s296 + $0x128] sm:$0xff] %v10766
        %11114 = vst [vmem:[%s296 + $0x130] sm:$0xff] %v11058
        %11115 = vst [vmem:[%s296 + $0x138] sm:$0xff] %v10770
        %11116 = vst [vmem:[%s296 + $0x140] sm:$0xff] %v10772
        %11117 = vst [vmem:[%s296 + $0x148] sm:$0xff] %v11063
        %11118 = vst [vmem:[%s296 + $0x150] sm:$0xff] %v10776
        %11119 = vst [vmem:[%s296 + $0x158] sm:$0xff] %v10778
        %11120 = vst [vmem:[%s296 + $0x160] sm:$0xff] %v11068
        %11121 = vst [vmem:[%s296 + $0x168] sm:$0xff] %v10782
        %11122 = vst [vmem:[%s296 + $0x170] sm:$0xff] %v10784
        %11123 = vst [vmem:[%s296 + $0x178] sm:$0xff] %v11073
        %s11124 = sand.u32 %s142, 1
        %s11125 = scalar_lea.sflag [#allocation4], %s11124
        %s11126 = sand.u32 %s142, 1
        %s11127 = smul.addr %s11126, 384
        %s11128 = scalar_lea.vmem [#allocation11], %s11127
        // Predicated region
        $region61: #{tpu_custom_call.1} parent=39 // pred_check
          %p11129 = pneg %p152
        $region62: #{tpu_custom_call.1} parent=39 // pred_check_branch
          %11131 = sbr.rel (%p11129) target = $region64
        $region63: #{tpu_custom_call.1} parent=39 // pred_region
          %s11133 = ssub.s32 6144, 6144
          %11134 = vsyncadd %s11125, %s11133
          %s11135 = smul.addr %s24, 48
          %s11136 = smul.addr %s11135, 128
          %s11137 = scalar_lea.hbm %s5, %s11136
          %s11138 = sshll.u32 %s11128, 4
          %s11139 = int_to_ptr.vmem [resolvable:$true] %s11138
          %11144 = dma.vmem_to_hbm [thread:$0]  %s11139, 6144, %s11137, %s11125, 384, 384, 24
        $region64: #{tpu_custom_call.1} parent=39 // pred_fallthru
          _
      $region40: #{tpu_custom_call.1} parent=5 // pred_fallthru
        _
      %p11145 = scmp.le.s32.totalorder 2, %s19
      // Predicated region
      $region65: #{tpu_custom_call.1} parent=5 // pred_check
        %p11146 = pneg %p11145
      $region66: #{tpu_custom_call.1} parent=5 // pred_check_branch
        %11148 = sbr.rel (%p11146) target = $region68
      $region67: #{tpu_custom_call.1} parent=5 // pred_region
        %s11149 = ssub.s32 %s19, 2
        // Predicated region
        $region69: #{tpu_custom_call.1} parent=67 // pred_check
          %p11150 = pneg %p158
        $region70: #{tpu_custom_call.1} parent=67 // pred_check_branch
          %11152 = sbr.rel (%p11150) target = $region72
        $region71: #{tpu_custom_call.1} parent=67 // pred_region
          %s11153 = sand.u32 %s143, 1
          %s11154 = scalar_lea.sflag [#allocation4], %s11153
          %s11155 = sand.u32 %s143, 1
          %s11156 = smul.addr %s11155, 384
          %s11157 = scalar_lea.vmem [#allocation11], %s11156
          %11158 = dma.done %s11154, 6144
        $region72: #{tpu_custom_call.1} parent=67 // pred_fallthru
          _
      $region68: #{tpu_custom_call.1} parent=5 // pred_fallthru
        _
    $region6: #{tpu_custom_call.1} parent=1 // loop_footer
      %s23 = sadd.s32 1, %s19
    $region7: #{tpu_custom_call.1} parent=1 // loop_footer_branch
      %18 = sbr.rel target = $region3
    $region8: #{tpu_custom_call.1} parent=1 // loop_exit
      _
    %11159 = vsyncpa [#allocation3], 1
    %s11160 = scalar_lea.sflag [#allocation3], 1
    %11161 = vsyncpa %s11160, 1
    %11162 = vsyncpa [#allocation6], 1
    %11163 = vsyncpa [#allocation9], 1
    %11164 = vsyncpa [#allocation4], 1
    %s11165 = scalar_lea.sflag [#allocation4], 1
    %11166 = vsyncpa %s11165, 1

</llo_original>
